<compile_context>
chip_gen: v6e
topology: v6e:2x2x1
jax: 0.10.0
libtpu: 0.0.40
codegen_flags: <defaults>
</compile_context>

<pallas_src>
import jax
import jax.numpy as jnp
from jax.experimental import pallas as pl
from jax.experimental.pallas import tpu as pltpu

F32 = jnp.float32
BF16 = jnp.bfloat16
PAD = 8  # sublane-aligned halo offset inside the padded activation scratches


# --------------------------- weight preparation -----------------------------

def fold_bn(gamma, beta, mean, var, conv_bias=None, eps=1e-5):
    scale = gamma / jnp.sqrt(var + eps)
    cb = conv_bias if conv_bias is not None else 0.0
    bias = (cb - mean) * scale + beta
    return scale, bias


def _fold_conv3(w_pt, scale):
    """(Cout, Cin, 3) torch layout -> (3*Cin, Cout) bf16, BN scale folded."""
    w = jnp.transpose(w_pt, (2, 1, 0)) * scale[None, None, :]   # (3, Cin, Cout)
    k, cin, cout = w.shape
    return w.reshape(k * cin, cout).astype(BF16)


# ------------------------- fused forward (builder) ---------------------------

def build_fused_forward(params, batch, length, embedding_size):
    # ---- one-time weight folding (hoisted out of the jitted forward) ----
    c0 = params['conv1_w'].shape[0]                              # 64
    s0, b0 = fold_bn(*params['bn1'], conv_bias=params['conv1_b'])
    w_stem = jnp.transpose(params['conv1_w'], (2, 1, 0)).reshape(7, c0)
    w_stem = jnp.pad(w_stem * s0[None, :], ((0, 1), (0, 0))).astype(BF16)  # (8,64)
    b_stem = b0.reshape(1, c0).astype(F32)

    weights = [w_stem, b_stem]
    blocks = []
    cur_l, cur_c = length, c0
    for li in range(1, 5):
        for bp in params[f'layer{li}']:
            stride = bp['stride']
            planes, cin = bp['conv1_w'].shape[0], bp['conv1_w'].shape[1]
            assert cin == cur_c
            lout = (cur_l - 1) // stride + 1
            s1, c1b = fold_bn(*bp['bn1'])
            s2, c2b = fold_bn(*bp['bn2'])
            w1 = _fold_conv3(bp['conv1_w'], s1)                  # (3*cin, planes)
            w2 = _fold_conv3(bp['conv2_w'], s2)                  # (3*planes, planes)
            if bp['has_shortcut']:
                ssc, scb = fold_bn(*bp['sc_bn'])
                wsc = (jnp.transpose(bp['sc_w'], (2, 1, 0))[0]
                       * ssc[None, :]).astype(BF16)              # (cin, planes)
                w2 = jnp.concatenate([w2, wsc], axis=0)          # fold shortcut
                c2b = c2b + scb
            meta = dict(lin=cur_l, lout=lout, cin=cin, planes=planes,
                        stride=stride, shortcut=bp['has_shortcut'],
                        widx=len(weights), sel_idx=None)
            weights += [w1, c1b.reshape(1, planes).astype(F32),
                        w2, c2b.reshape(1, planes).astype(F32)]
            if stride != 1:
                # 0/1 selection matrix that picks rows 0, stride, 2*stride,...
                sel = (jnp.arange(cur_l)[None, :] ==
                       stride * jnp.arange(lout)[:, None]).astype(BF16)
                meta['sel_idx'] = len(weights)
                weights.append(sel)                              # (lout, lin)
            blocks.append(meta)
            cur_l, cur_c = lout, planes

    assert params['fc_w'].shape[1] == cur_c
    w_fc = jnp.transpose(params['fc_w'], (2, 1, 0)).reshape(
        cur_c, embedding_size).astype(BF16)
    b_fc = params['fc_b'].reshape(1, embedding_size).astype(F32)
    fc_idx = len(weights)
    weights += [w_fc, b_fc]
    n_w = len(weights)
    l_final = cur_l

    # Two halo-padded f32 scratch buffers per block (total ~220 KB VMEM).
    scratch_shapes = []
    for blk in blocks:
        blk['xscr'] = len(scratch_shapes)
        scratch_shapes.append(pltpu.VMEM((blk['lin'] + 2 * PAD, blk['cin']), F32))
        blk['hscr'] = len(scratch_shapes)
        scratch_shapes.append(pltpu.VMEM((blk['lout'] + 2 * PAD, blk['planes']), F32))

    def kernel(*refs):
        a_ref = refs[0]
        w = refs[1:1 + n_w]
        o_ref = refs[1 + n_w]
        scr = refs[2 + n_w:]

        # Stem: conv1d(1->64, k=7, pad=3) + BN + ReLU as a K=8 im2col matmul.
        x = jnp.dot(a_ref[...], w[0][...], preferred_element_type=F32)
        x = jnp.maximum(x + w[1][...], 0.0)                      # (L, 64) f32

        for blk in blocks:
            lin, lout = blk['lin'], blk['lout']
            cin, planes = blk['cin'], blk['planes']
            w1, b1 = w[blk['widx']], w[blk['widx'] + 1]
            w2, b2 = w[blk['widx'] + 2], w[blk['widx'] + 3]
            xp, hp = scr[blk['xscr']], scr[blk['hscr']]

            # Halo-padded input: x at the aligned offset PAD, zeros in the two
            # aligned 8-row halo bands that the conv actually reads.
            xp[0:PAD, :] = jnp.zeros((PAD, cin), F32)
            xp[PAD + lin:PAD + lin + PAD, :] = jnp.zeros((PAD, cin), F32)
            xp[PAD:PAD + lin, :] = x

            # conv1 (k=3, pad=1) + BN1 + ReLU: one K-concatenated MXU matmul
            # at unit stride (stride-2 downsampling handled below).
            a1 = jnp.concatenate(
                [xp[PAD - 1:PAD - 1 + lin, :],
                 xp[PAD:PAD + lin, :],
                 xp[PAD + 1:PAD + 1 + lin, :]], axis=1).astype(BF16)
            h = jnp.dot(a1, w1[...], preferred_element_type=F32) + b1[...]
            h = jnp.maximum(h, 0.0)                              # (lin, planes)

            if blk['stride'] != 1:
                # Downsample rows with a constant 0/1 selection matmul (MXU,
                # no strided VMEM access); reuse it for the shortcut input.
                sel = w[blk['sel_idx']][...]                     # (lout, lin)
                h = jnp.dot(sel, h.astype(BF16), preferred_element_type=F32)
                x_sc = jnp.dot(sel, x.astype(BF16), preferred_element_type=F32)
            else:
                x_sc = x                                         # identity path

            # conv2 (k=3, pad=1) + BN2 (+ folded 1x1-conv shortcut): one matmul.
            hp[0:PAD, :] = jnp.zeros((PAD, planes), F32)
            hp[PAD + lout:PAD + lout + PAD, :] = jnp.zeros((PAD, planes), F32)
            hp[PAD:PAD + lout, :] = h

            parts = [hp[PAD - 1:PAD - 1 + lout, :],
                     hp[PAD:PAD + lout, :],
                     hp[PAD + 1:PAD + 1 + lout, :]]
            if blk['shortcut']:
                parts.append(x_sc)        # K-concat the shortcut-conv input
            a2 = jnp.concatenate(parts, axis=1).astype(BF16)
            y = jnp.dot(a2, w2[...], preferred_element_type=F32) + b2[...]
            if not blk['shortcut']:
                y = y + x_sc              # identity residual, f32
            x = jnp.maximum(y, 0.0)       # (lout, planes)

        # fc: 1x1 conv with bias -> (L/8, embedding) f32, lane-dense output.
        out = jnp.dot(x.astype(BF16), w[fc_idx][...],
                      preferred_element_type=F32) + w[fc_idx + 1][...]
        o_ref[...] = out.astype(o_ref.dtype)

    in_specs = [pl.BlockSpec((None, length, 8), lambda n: (n, 0, 0))]
    in_specs += [pl.BlockSpec(wt.shape, lambda n: (0, 0)) for wt in weights]

    fused = pl.pallas_call(
        kernel,
        out_shape=jax.ShapeDtypeStruct((batch, l_final, embedding_size), F32),
        grid=(batch,),
        in_specs=in_specs,
        out_specs=pl.BlockSpec((None, l_final, embedding_size),
                               lambda n: (n, 0, 0)),
        scratch_shapes=scratch_shapes,
        compiler_params=pltpu.CompilerParams(
            dimension_semantics=("parallel",)),
    )

    @jax.jit
    def forward(x_ncl):
        # NCL (batch, 1, L) -> tiny (batch, L, 8) bf16 im2col for the stem.
        xs = x_ncl[:, 0, :]                                      # (N, L)
        xpad = jnp.pad(xs, ((0, 0), (3, 4)))
        a = jnp.stack([xpad[:, k:k + length] for k in range(8)],
                      axis=-1).astype(BF16)
        out = fused(a, *weights)                                 # (N, L/8, emb)
        return jnp.transpose(out, (0, 2, 1))                     # NLC -> NCL

    return forward


# ------------------------------- parameters ---------------------------------

def _conv_w(key, cout, cin, k):
    fan_in = cin * k
    return (jax.random.normal(key, (cout, cin, k), F32)
            / jnp.sqrt(float(fan_in)))


def _bn_params(c):
    # PyTorch defaults: weight=1, bias=0, running_mean=0, running_var=1
    return (jnp.ones((c,), F32), jnp.zeros((c,), F32),
            jnp.zeros((c,), F32), jnp.ones((c,), F32))


def _basic_block_params(keys, in_planes, planes, stride):
    p = {
        'stride': stride,
        'conv1_w': _conv_w(next(keys), planes, in_planes, 3),
        'bn1': _bn_params(planes),
        'conv2_w': _conv_w(next(keys), planes, planes, 3),
        'bn2': _bn_params(planes),
        'has_shortcut': (stride != 1) or (in_planes != planes),
    }
    if p['has_shortcut']:
        p['sc_w'] = _conv_w(next(keys), planes, in_planes, 1)
        p['sc_bn'] = _bn_params(planes)
    return p


def init_params(key, num_blocks, embedding_size=128):
    keys = iter(jax.random.split(key, 256))
    params = {
        'conv1_w': _conv_w(next(keys), 64, 1, 7),
        'conv1_b': 0.01 * jax.random.normal(next(keys), (64,), F32),
        'bn1': _bn_params(64),
    }
    in_planes = 64
    for li, (planes, nb, stride) in enumerate(
            zip([64, 128, 256, 512], num_blocks, [1, 2, 2, 2]), start=1):
        blocks = []
        strides = [stride] + [1] * (nb - 1)
        for s in strides:
            blocks.append(_basic_block_params(keys, in_planes, planes, s))
            in_planes = planes  # expansion = 1
        params[f'layer{li}'] = blocks
    params['fc_w'] = _conv_w(next(keys), embedding_size, 512, 1)
    params['fc_b'] = 0.01 * jax.random.normal(next(keys),
                                              (embedding_size,), F32)
    return params


# ---------------------------------- main ------------------------------------

if __name__ == "__main__":
    key = jax.random.PRNGKey(0)
    num_blocks = [1, 1, 1, 1]          # small synthetic configuration
    embedding_size = 128
    N, L = 2, 64

    params = init_params(key, num_blocks, embedding_size)
    x = jax.random.normal(jax.random.fold_in(key, 12345), (N, 1, L), F32)

    fwd = build_fused_forward(params, N, L, embedding_size)
    out = jax.block_until_ready(fwd(x))
    assert out.shape == (N, embedding_size, L // 8), out.shape
    assert bool(jnp.all(jnp.isfinite(out)))
    print("KERNEL_OK")
</pallas_src>

<mosaic_0001>
module attributes {stable_mosaic.version = 11 : i64} {
  func.func @kernel(%arg0: i32, %arg1: memref<1x64x8xbf16, #tpu.memory_space<vmem>>, %arg2: memref<8x64xbf16, #tpu.memory_space<vmem>>, %arg3: memref<1x64xf32, #tpu.memory_space<vmem>>, %arg4: memref<192x64xbf16, #tpu.memory_space<vmem>>, %arg5: memref<1x64xf32, #tpu.memory_space<vmem>>, %arg6: memref<192x64xbf16, #tpu.memory_space<vmem>>, %arg7: memref<1x64xf32, #tpu.memory_space<vmem>>, %arg8: memref<192x128xbf16, #tpu.memory_space<vmem>>, %arg9: memref<1x128xf32, #tpu.memory_space<vmem>>, %arg10: memref<448x128xbf16, #tpu.memory_space<vmem>>, %arg11: memref<1x128xf32, #tpu.memory_space<vmem>>, %arg12: memref<32x64xbf16, #tpu.memory_space<vmem>>, %arg13: memref<384x256xbf16, #tpu.memory_space<vmem>>, %arg14: memref<1x256xf32, #tpu.memory_space<vmem>>, %arg15: memref<896x256xbf16, #tpu.memory_space<vmem>>, %arg16: memref<1x256xf32, #tpu.memory_space<vmem>>, %arg17: memref<16x32xbf16, #tpu.memory_space<vmem>>, %arg18: memref<768x512xbf16, #tpu.memory_space<vmem>>, %arg19: memref<1x512xf32, #tpu.memory_space<vmem>>, %arg20: memref<1792x512xbf16, #tpu.memory_space<vmem>>, %arg21: memref<1x512xf32, #tpu.memory_space<vmem>>, %arg22: memref<8x16xbf16, #tpu.memory_space<vmem>>, %arg23: memref<512x128xbf16, #tpu.memory_space<vmem>>, %arg24: memref<1x128xf32, #tpu.memory_space<vmem>>, %arg25: memref<1x8x128xf32, #tpu.memory_space<vmem>>, %arg26: memref<80x64xf32, #tpu.memory_space<vmem>>, %arg27: memref<80x64xf32, #tpu.memory_space<vmem>>, %arg28: memref<80x64xf32, #tpu.memory_space<vmem>>, %arg29: memref<48x128xf32, #tpu.memory_space<vmem>>, %arg30: memref<48x128xf32, #tpu.memory_space<vmem>>, %arg31: memref<32x256xf32, #tpu.memory_space<vmem>>, %arg32: memref<32x256xf32, #tpu.memory_space<vmem>>, %arg33: memref<24x512xf32, #tpu.memory_space<vmem>>) attributes {dimension_semantics = [#tpu.dimension_semantics<parallel>], iteration_bounds = array<i64: 2>, scalar_prefetch = 0 : i64, scratch_operands = 8 : i64, tpu.core_type = #tpu.core_type<tc>, window_params = [{transform_indices = @transform_0, window_bounds = array<i64: 1, 64, 8>}, {pipeline_mode = #tpu.pipeline_mode<synchronous>, transform_indices = @transform_1, window_bounds = array<i64: 8, 64>}, {pipeline_mode = #tpu.pipeline_mode<synchronous>, transform_indices = @transform_2, window_bounds = array<i64: 1, 64>}, {pipeline_mode = #tpu.pipeline_mode<synchronous>, transform_indices = @transform_3, window_bounds = array<i64: 192, 64>}, {pipeline_mode = #tpu.pipeline_mode<synchronous>, transform_indices = @transform_4, window_bounds = array<i64: 1, 64>}, {pipeline_mode = #tpu.pipeline_mode<synchronous>, transform_indices = @transform_5, window_bounds = array<i64: 192, 64>}, {pipeline_mode = #tpu.pipeline_mode<synchronous>, transform_indices = @transform_6, window_bounds = array<i64: 1, 64>}, {pipeline_mode = #tpu.pipeline_mode<synchronous>, transform_indices = @transform_7, window_bounds = array<i64: 192, 128>}, {pipeline_mode = #tpu.pipeline_mode<synchronous>, transform_indices = @transform_8, window_bounds = array<i64: 1, 128>}, {pipeline_mode = #tpu.pipeline_mode<synchronous>, transform_indices = @transform_9, window_bounds = array<i64: 448, 128>}, {pipeline_mode = #tpu.pipeline_mode<synchronous>, transform_indices = @transform_10, window_bounds = array<i64: 1, 128>}, {pipeline_mode = #tpu.pipeline_mode<synchronous>, transform_indices = @transform_11, window_bounds = array<i64: 32, 64>}, {pipeline_mode = #tpu.pipeline_mode<synchronous>, transform_indices = @transform_12, window_bounds = array<i64: 384, 256>}, {pipeline_mode = #tpu.pipeline_mode<synchronous>, transform_indices = @transform_13, window_bounds = array<i64: 1, 256>}, {pipeline_mode = #tpu.pipeline_mode<synchronous>, transform_indices = @transform_14, window_bounds = array<i64: 896, 256>}, {pipeline_mode = #tpu.pipeline_mode<synchronous>, transform_indices = @transform_15, window_bounds = array<i64: 1, 256>}, {pipeline_mode = #tpu.pipeline_mode<synchronous>, transform_indices = @transform_16, window_bounds = array<i64: 16, 32>}, {pipeline_mode = #tpu.pipeline_mode<synchronous>, transform_indices = @transform_17, window_bounds = array<i64: 768, 512>}, {pipeline_mode = #tpu.pipeline_mode<synchronous>, transform_indices = @transform_18, window_bounds = array<i64: 1, 512>}, {pipeline_mode = #tpu.pipeline_mode<synchronous>, transform_indices = @transform_19, window_bounds = array<i64: 1792, 512>}, {pipeline_mode = #tpu.pipeline_mode<synchronous>, transform_indices = @transform_20, window_bounds = array<i64: 1, 512>}, {pipeline_mode = #tpu.pipeline_mode<synchronous>, transform_indices = @transform_21, window_bounds = array<i64: 8, 16>}, {pipeline_mode = #tpu.pipeline_mode<synchronous>, transform_indices = @transform_22, window_bounds = array<i64: 512, 128>}, {pipeline_mode = #tpu.pipeline_mode<synchronous>, transform_indices = @transform_23, window_bounds = array<i64: 1, 128>}, {transform_indices = @transform_24, window_bounds = array<i64: 1, 8, 128>}]} {
    %c0 = arith.constant 0 : index
    %c0_0 = arith.constant 0 : index
    %c0_1 = arith.constant 0 : index
    %0 = vector.load %arg1[%c0, %c0_0, %c0_1] : memref<1x64x8xbf16, #tpu.memory_space<vmem>>, vector<1x64x8xbf16>
    %1 = vector.shape_cast %0 : vector<1x64x8xbf16> to vector<64x8xbf16>
    %c0_2 = arith.constant 0 : index
    %c0_3 = arith.constant 0 : index
    %2 = vector.load %arg2[%c0_2, %c0_3] : memref<8x64xbf16, #tpu.memory_space<vmem>>, vector<8x64xbf16>
    %cst = arith.constant dense<0.000000e+00> : vector<64x64xf32>
    %3 = tpu.matmul %1, %2, %cst {dimension_numbers = #tpu.dot_dimension_numbers<[1], [0], [0], [1], [0, 0, 1, 1], [], []>} : vector<64x8xbf16>, vector<8x64xbf16>, vector<64x64xf32> -> vector<64x64xf32>
    %c0_4 = arith.constant 0 : index
    %c0_5 = arith.constant 0 : index
    %4 = vector.load %arg3[%c0_4, %c0_5] : memref<1x64xf32, #tpu.memory_space<vmem>>, vector<1x64xf32>
    %5 = vector.broadcast %4 : vector<1x64xf32> to vector<64x64xf32>
    %6 = arith.addf %3, %5 : vector<64x64xf32>
    %cst_6 = arith.constant 0.000000e+00 : f32
    %7 = vector.broadcast %cst_6 : f32 to vector<64x64xf32>
    %8 = arith.maximumf %6, %7 : vector<64x64xf32>
    %cst_7 = arith.constant 0.000000e+00 : f32
    %9 = vector.broadcast %cst_7 : f32 to vector<8x64xf32>
    %c0_8 = arith.constant 0 : index
    %c0_9 = arith.constant 0 : index
    %10 = vector.load %arg26[%c0_8, %c0_9] : memref<80x64xf32, #tpu.memory_space<vmem>>, vector<8x64xf32>
    tpu.vector_store %arg26[%c0_8, %c0_9], %9 {strides = array<i32>} : memref<80x64xf32, #tpu.memory_space<vmem>>, vector<8x64xf32>,
    %cst_10 = arith.constant 0.000000e+00 : f32
    %11 = vector.broadcast %cst_10 : f32 to vector<8x64xf32>
    %c72 = arith.constant 72 : index
    %c0_11 = arith.constant 0 : index
    %12 = vector.load %arg26[%c72, %c0_11] : memref<80x64xf32, #tpu.memory_space<vmem>>, vector<8x64xf32>
    tpu.vector_store %arg26[%c72, %c0_11], %11 {strides = array<i32>} : memref<80x64xf32, #tpu.memory_space<vmem>>, vector<8x64xf32>,
    %c8 = arith.constant 8 : index
    %c0_12 = arith.constant 0 : index
    %13 = vector.load %arg26[%c8, %c0_12] : memref<80x64xf32, #tpu.memory_space<vmem>>, vector<64x64xf32>
    tpu.vector_store %arg26[%c8, %c0_12], %8 {strides = array<i32>} : memref<80x64xf32, #tpu.memory_space<vmem>>, vector<64x64xf32>,
    %c7 = arith.constant 7 : index
    %c0_13 = arith.constant 0 : index
    %14 = vector.load %arg26[%c7, %c0_13] : memref<80x64xf32, #tpu.memory_space<vmem>>, vector<64x64xf32>
    %c8_14 = arith.constant 8 : index
    %c0_15 = arith.constant 0 : index
    %15 = vector.load %arg26[%c8_14, %c0_15] : memref<80x64xf32, #tpu.memory_space<vmem>>, vector<64x64xf32>
    %c9 = arith.constant 9 : index
    %c0_16 = arith.constant 0 : index
    %16 = vector.load %arg26[%c9, %c0_16] : memref<80x64xf32, #tpu.memory_space<vmem>>, vector<64x64xf32>
    %17 = tpu.concatenate %14, %15, %16 in 1 : vector<64x64xf32>, vector<64x64xf32>, vector<64x64xf32> -> vector<64x192xf32>
    %18 = arith.truncf %17 : vector<64x192xf32> to vector<64x192xbf16>
    %c0_17 = arith.constant 0 : index
    %c0_18 = arith.constant 0 : index
    %19 = vector.load %arg4[%c0_17, %c0_18] : memref<192x64xbf16, #tpu.memory_space<vmem>>, vector<192x64xbf16>
    %cst_19 = arith.constant dense<0.000000e+00> : vector<64x64xf32>
    %20 = tpu.matmul %18, %19, %cst_19 {dimension_numbers = #tpu.dot_dimension_numbers<[1], [0], [0], [1], [0, 0, 1, 1], [], []>} : vector<64x192xbf16>, vector<192x64xbf16>, vector<64x64xf32> -> vector<64x64xf32>
    %c0_20 = arith.constant 0 : index
    %c0_21 = arith.constant 0 : index
    %21 = vector.load %arg5[%c0_20, %c0_21] : memref<1x64xf32, #tpu.memory_space<vmem>>, vector<1x64xf32>
    %22 = vector.broadcast %21 : vector<1x64xf32> to vector<64x64xf32>
    %23 = arith.addf %20, %22 : vector<64x64xf32>
    %cst_22 = arith.constant 0.000000e+00 : f32
    %24 = vector.broadcast %cst_22 : f32 to vector<64x64xf32>
    %25 = arith.maximumf %23, %24 : vector<64x64xf32>
    %cst_23 = arith.constant 0.000000e+00 : f32
    %26 = vector.broadcast %cst_23 : f32 to vector<8x64xf32>
    %c0_24 = arith.constant 0 : index
    %c0_25 = arith.constant 0 : index
    %27 = vector.load %arg27[%c0_24, %c0_25] : memref<80x64xf32, #tpu.memory_space<vmem>>, vector<8x64xf32>
    tpu.vector_store %arg27[%c0_24, %c0_25], %26 {strides = array<i32>} : memref<80x64xf32, #tpu.memory_space<vmem>>, vector<8x64xf32>,
    %cst_26 = arith.constant 0.000000e+00 : f32
    %28 = vector.broadcast %cst_26 : f32 to vector<8x64xf32>
    %c72_27 = arith.constant 72 : index
    %c0_28 = arith.constant 0 : index
    %29 = vector.load %arg27[%c72_27, %c0_28] : memref<80x64xf32, #tpu.memory_space<vmem>>, vector<8x64xf32>
    tpu.vector_store %arg27[%c72_27, %c0_28], %28 {strides = array<i32>} : memref<80x64xf32, #tpu.memory_space<vmem>>, vector<8x64xf32>,
    %c8_29 = arith.constant 8 : index
    %c0_30 = arith.constant 0 : index
    %30 = vector.load %arg27[%c8_29, %c0_30] : memref<80x64xf32, #tpu.memory_space<vmem>>, vector<64x64xf32>
    tpu.vector_store %arg27[%c8_29, %c0_30], %25 {strides = array<i32>} : memref<80x64xf32, #tpu.memory_space<vmem>>, vector<64x64xf32>,
    %c7_31 = arith.constant 7 : index
    %c0_32 = arith.constant 0 : index
    %31 = vector.load %arg27[%c7_31, %c0_32] : memref<80x64xf32, #tpu.memory_space<vmem>>, vector<64x64xf32>
    %c8_33 = arith.constant 8 : index
    %c0_34 = arith.constant 0 : index
    %32 = vector.load %arg27[%c8_33, %c0_34] : memref<80x64xf32, #tpu.memory_space<vmem>>, vector<64x64xf32>
    %c9_35 = arith.constant 9 : index
    %c0_36 = arith.constant 0 : index
    %33 = vector.load %arg27[%c9_35, %c0_36] : memref<80x64xf32, #tpu.memory_space<vmem>>, vector<64x64xf32>
    %34 = tpu.concatenate %31, %32, %33 in 1 : vector<64x64xf32>, vector<64x64xf32>, vector<64x64xf32> -> vector<64x192xf32>
    %35 = arith.truncf %34 : vector<64x192xf32> to vector<64x192xbf16>
    %c0_37 = arith.constant 0 : index
    %c0_38 = arith.constant 0 : index
    %36 = vector.load %arg6[%c0_37, %c0_38] : memref<192x64xbf16, #tpu.memory_space<vmem>>, vector<192x64xbf16>
    %cst_39 = arith.constant dense<0.000000e+00> : vector<64x64xf32>
    %37 = tpu.matmul %35, %36, %cst_39 {dimension_numbers = #tpu.dot_dimension_numbers<[1], [0], [0], [1], [0, 0, 1, 1], [], []>} : vector<64x192xbf16>, vector<192x64xbf16>, vector<64x64xf32> -> vector<64x64xf32>
    %c0_40 = arith.constant 0 : index
    %c0_41 = arith.constant 0 : index
    %38 = vector.load %arg7[%c0_40, %c0_41] : memref<1x64xf32, #tpu.memory_space<vmem>>, vector<1x64xf32>
    %39 = vector.broadcast %38 : vector<1x64xf32> to vector<64x64xf32>
    %40 = arith.addf %37, %39 : vector<64x64xf32>
    %41 = arith.addf %40, %8 : vector<64x64xf32>
    %cst_42 = arith.constant 0.000000e+00 : f32
    %42 = vector.broadcast %cst_42 : f32 to vector<64x64xf32>
    %43 = arith.maximumf %41, %42 : vector<64x64xf32>
    %cst_43 = arith.constant 0.000000e+00 : f32
    %44 = vector.broadcast %cst_43 : f32 to vector<8x64xf32>
    %c0_44 = arith.constant 0 : index
    %c0_45 = arith.constant 0 : index
    %45 = vector.load %arg28[%c0_44, %c0_45] : memref<80x64xf32, #tpu.memory_space<vmem>>, vector<8x64xf32>
    tpu.vector_store %arg28[%c0_44, %c0_45], %44 {strides = array<i32>} : memref<80x64xf32, #tpu.memory_space<vmem>>, vector<8x64xf32>,
    %cst_46 = arith.constant 0.000000e+00 : f32
    %46 = vector.broadcast %cst_46 : f32 to vector<8x64xf32>
    %c72_47 = arith.constant 72 : index
    %c0_48 = arith.constant 0 : index
    %47 = vector.load %arg28[%c72_47, %c0_48] : memref<80x64xf32, #tpu.memory_space<vmem>>, vector<8x64xf32>
    tpu.vector_store %arg28[%c72_47, %c0_48], %46 {strides = array<i32>} : memref<80x64xf32, #tpu.memory_space<vmem>>, vector<8x64xf32>,
    %c8_49 = arith.constant 8 : index
    %c0_50 = arith.constant 0 : index
    %48 = vector.load %arg28[%c8_49, %c0_50] : memref<80x64xf32, #tpu.memory_space<vmem>>, vector<64x64xf32>
    tpu.vector_store %arg28[%c8_49, %c0_50], %43 {strides = array<i32>} : memref<80x64xf32, #tpu.memory_space<vmem>>, vector<64x64xf32>,
    %c7_51 = arith.constant 7 : index
    %c0_52 = arith.constant 0 : index
    %49 = vector.load %arg28[%c7_51, %c0_52] : memref<80x64xf32, #tpu.memory_space<vmem>>, vector<64x64xf32>
    %c8_53 = arith.constant 8 : index
    %c0_54 = arith.constant 0 : index
    %50 = vector.load %arg28[%c8_53, %c0_54] : memref<80x64xf32, #tpu.memory_space<vmem>>, vector<64x64xf32>
    %c9_55 = arith.constant 9 : index
    %c0_56 = arith.constant 0 : index
    %51 = vector.load %arg28[%c9_55, %c0_56] : memref<80x64xf32, #tpu.memory_space<vmem>>, vector<64x64xf32>
    %52 = tpu.concatenate %49, %50, %51 in 1 : vector<64x64xf32>, vector<64x64xf32>, vector<64x64xf32> -> vector<64x192xf32>
    %53 = arith.truncf %52 : vector<64x192xf32> to vector<64x192xbf16>
    %c0_57 = arith.constant 0 : index
    %c0_58 = arith.constant 0 : index
    %54 = vector.load %arg8[%c0_57, %c0_58] : memref<192x128xbf16, #tpu.memory_space<vmem>>, vector<192x128xbf16>
    %cst_59 = arith.constant dense<0.000000e+00> : vector<64x128xf32>
    %55 = tpu.matmul %53, %54, %cst_59 {dimension_numbers = #tpu.dot_dimension_numbers<[1], [0], [0], [1], [0, 0, 1, 1], [], []>} : vector<64x192xbf16>, vector<192x128xbf16>, vector<64x128xf32> -> vector<64x128xf32>
    %c0_60 = arith.constant 0 : index
    %c0_61 = arith.constant 0 : index
    %56 = vector.load %arg9[%c0_60, %c0_61] : memref<1x128xf32, #tpu.memory_space<vmem>>, vector<1x128xf32>
    %57 = vector.broadcast %56 : vector<1x128xf32> to vector<64x128xf32>
    %58 = arith.addf %55, %57 : vector<64x128xf32>
    %cst_62 = arith.constant 0.000000e+00 : f32
    %59 = vector.broadcast %cst_62 : f32 to vector<64x128xf32>
    %60 = arith.maximumf %58, %59 : vector<64x128xf32>
    %c0_63 = arith.constant 0 : index
    %c0_64 = arith.constant 0 : index
    %61 = vector.load %arg12[%c0_63, %c0_64] : memref<32x64xbf16, #tpu.memory_space<vmem>>, vector<32x64xbf16>
    %62 = arith.truncf %60 : vector<64x128xf32> to vector<64x128xbf16>
    %cst_65 = arith.constant dense<0.000000e+00> : vector<32x128xf32>
    %63 = tpu.matmul %61, %62, %cst_65 {dimension_numbers = #tpu.dot_dimension_numbers<[1], [0], [0], [1], [0, 0, 1, 1], [], []>} : vector<32x64xbf16>, vector<64x128xbf16>, vector<32x128xf32> -> vector<32x128xf32>
    %64 = arith.truncf %43 : vector<64x64xf32> to vector<64x64xbf16>
    %cst_66 = arith.constant dense<0.000000e+00> : vector<32x64xf32>
    %65 = tpu.matmul %61, %64, %cst_66 {dimension_numbers = #tpu.dot_dimension_numbers<[1], [0], [0], [1], [0, 0, 1, 1], [], []>} : vector<32x64xbf16>, vector<64x64xbf16>, vector<32x64xf32> -> vector<32x64xf32>
    %cst_67 = arith.constant 0.000000e+00 : f32
    %66 = vector.broadcast %cst_67 : f32 to vector<8x128xf32>
    %c0_68 = arith.constant 0 : index
    %c0_69 = arith.constant 0 : index
    %67 = vector.load %arg29[%c0_68, %c0_69] : memref<48x128xf32, #tpu.memory_space<vmem>>, vector<8x128xf32>
    tpu.vector_store %arg29[%c0_68, %c0_69], %66 {strides = array<i32>} : memref<48x128xf32, #tpu.memory_space<vmem>>, vector<8x128xf32>,
    %cst_70 = arith.constant 0.000000e+00 : f32
    %68 = vector.broadcast %cst_70 : f32 to vector<8x128xf32>
    %c40 = arith.constant 40 : index
    %c0_71 = arith.constant 0 : index
    %69 = vector.load %arg29[%c40, %c0_71] : memref<48x128xf32, #tpu.memory_space<vmem>>, vector<8x128xf32>
    tpu.vector_store %arg29[%c40, %c0_71], %68 {strides = array<i32>} : memref<48x128xf32, #tpu.memory_space<vmem>>, vector<8x128xf32>,
    %c8_72 = arith.constant 8 : index
    %c0_73 = arith.constant 0 : index
    %70 = vector.load %arg29[%c8_72, %c0_73] : memref<48x128xf32, #tpu.memory_space<vmem>>, vector<32x128xf32>
    tpu.vector_store %arg29[%c8_72, %c0_73], %63 {strides = array<i32>} : memref<48x128xf32, #tpu.memory_space<vmem>>, vector<32x128xf32>,
    %c7_74 = arith.constant 7 : index
    %c0_75 = arith.constant 0 : index
    %71 = vector.load %arg29[%c7_74, %c0_75] : memref<48x128xf32, #tpu.memory_space<vmem>>, vector<32x128xf32>
    %c8_76 = arith.constant 8 : index
    %c0_77 = arith.constant 0 : index
    %72 = vector.load %arg29[%c8_76, %c0_77] : memref<48x128xf32, #tpu.memory_space<vmem>>, vector<32x128xf32>
    %c9_78 = arith.constant 9 : index
    %c0_79 = arith.constant 0 : index
    %73 = vector.load %arg29[%c9_78, %c0_79] : memref<48x128xf32, #tpu.memory_space<vmem>>, vector<32x128xf32>
    %74 = tpu.concatenate %71, %72, %73, %65 in 1 : vector<32x128xf32>, vector<32x128xf32>, vector<32x128xf32>, vector<32x64xf32> -> vector<32x448xf32>
    %75 = arith.truncf %74 : vector<32x448xf32> to vector<32x448xbf16>
    %c0_80 = arith.constant 0 : index
    %c0_81 = arith.constant 0 : index
    %76 = vector.load %arg10[%c0_80, %c0_81] : memref<448x128xbf16, #tpu.memory_space<vmem>>, vector<448x128xbf16>
    %cst_82 = arith.constant dense<0.000000e+00> : vector<32x128xf32>
    %77 = tpu.matmul %75, %76, %cst_82 {dimension_numbers = #tpu.dot_dimension_numbers<[1], [0], [0], [1], [0, 0, 1, 1], [], []>} : vector<32x448xbf16>, vector<448x128xbf16>, vector<32x128xf32> -> vector<32x128xf32>
    %c0_83 = arith.constant 0 : index
    %c0_84 = arith.constant 0 : index
    %78 = vector.load %arg11[%c0_83, %c0_84] : memref<1x128xf32, #tpu.memory_space<vmem>>, vector<1x128xf32>
    %79 = vector.broadcast %78 : vector<1x128xf32> to vector<32x128xf32>
    %80 = arith.addf %77, %79 : vector<32x128xf32>
    %cst_85 = arith.constant 0.000000e+00 : f32
    %81 = vector.broadcast %cst_85 : f32 to vector<32x128xf32>
    %82 = arith.maximumf %80, %81 : vector<32x128xf32>
    %cst_86 = arith.constant 0.000000e+00 : f32
    %83 = vector.broadcast %cst_86 : f32 to vector<8x128xf32>
    %c0_87 = arith.constant 0 : index
    %c0_88 = arith.constant 0 : index
    %84 = vector.load %arg30[%c0_87, %c0_88] : memref<48x128xf32, #tpu.memory_space<vmem>>, vector<8x128xf32>
    tpu.vector_store %arg30[%c0_87, %c0_88], %83 {strides = array<i32>} : memref<48x128xf32, #tpu.memory_space<vmem>>, vector<8x128xf32>,
    %cst_89 = arith.constant 0.000000e+00 : f32
    %85 = vector.broadcast %cst_89 : f32 to vector<8x128xf32>
    %c40_90 = arith.constant 40 : index
    %c0_91 = arith.constant 0 : index
    %86 = vector.load %arg30[%c40_90, %c0_91] : memref<48x128xf32, #tpu.memory_space<vmem>>, vector<8x128xf32>
    tpu.vector_store %arg30[%c40_90, %c0_91], %85 {strides = array<i32>} : memref<48x128xf32, #tpu.memory_space<vmem>>, vector<8x128xf32>,
    %c8_92 = arith.constant 8 : index
    %c0_93 = arith.constant 0 : index
    %87 = vector.load %arg30[%c8_92, %c0_93] : memref<48x128xf32, #tpu.memory_space<vmem>>, vector<32x128xf32>
    tpu.vector_store %arg30[%c8_92, %c0_93], %82 {strides = array<i32>} : memref<48x128xf32, #tpu.memory_space<vmem>>, vector<32x128xf32>,
    %c7_94 = arith.constant 7 : index
    %c0_95 = arith.constant 0 : index
    %88 = vector.load %arg30[%c7_94, %c0_95] : memref<48x128xf32, #tpu.memory_space<vmem>>, vector<32x128xf32>
    %c8_96 = arith.constant 8 : index
    %c0_97 = arith.constant 0 : index
    %89 = vector.load %arg30[%c8_96, %c0_97] : memref<48x128xf32, #tpu.memory_space<vmem>>, vector<32x128xf32>
    %c9_98 = arith.constant 9 : index
    %c0_99 = arith.constant 0 : index
    %90 = vector.load %arg30[%c9_98, %c0_99] : memref<48x128xf32, #tpu.memory_space<vmem>>, vector<32x128xf32>
    %91 = tpu.concatenate %88, %89, %90 in 1 : vector<32x128xf32>, vector<32x128xf32>, vector<32x128xf32> -> vector<32x384xf32>
    %92 = arith.truncf %91 : vector<32x384xf32> to vector<32x384xbf16>
    %c0_100 = arith.constant 0 : index
    %c0_101 = arith.constant 0 : index
    %93 = vector.load %arg13[%c0_100, %c0_101] : memref<384x256xbf16, #tpu.memory_space<vmem>>, vector<384x256xbf16>
    %cst_102 = arith.constant dense<0.000000e+00> : vector<32x256xf32>
    %94 = tpu.matmul %92, %93, %cst_102 {dimension_numbers = #tpu.dot_dimension_numbers<[1], [0], [0], [1], [0, 0, 1, 1], [], []>} : vector<32x384xbf16>, vector<384x256xbf16>, vector<32x256xf32> -> vector<32x256xf32>
    %c0_103 = arith.constant 0 : index
    %c0_104 = arith.constant 0 : index
    %95 = vector.load %arg14[%c0_103, %c0_104] : memref<1x256xf32, #tpu.memory_space<vmem>>, vector<1x256xf32>
    %96 = vector.broadcast %95 : vector<1x256xf32> to vector<32x256xf32>
    %97 = arith.addf %94, %96 : vector<32x256xf32>
    %cst_105 = arith.constant 0.000000e+00 : f32
    %98 = vector.broadcast %cst_105 : f32 to vector<32x256xf32>
    %99 = arith.maximumf %97, %98 : vector<32x256xf32>
    %c0_106 = arith.constant 0 : index
    %c0_107 = arith.constant 0 : index
    %100 = vector.load %arg17[%c0_106, %c0_107] : memref<16x32xbf16, #tpu.memory_space<vmem>>, vector<16x32xbf16>
    %101 = arith.truncf %99 : vector<32x256xf32> to vector<32x256xbf16>
    %cst_108 = arith.constant dense<0.000000e+00> : vector<16x256xf32>
    %102 = tpu.matmul %100, %101, %cst_108 {dimension_numbers = #tpu.dot_dimension_numbers<[1], [0], [0], [1], [0, 0, 1, 1], [], []>} : vector<16x32xbf16>, vector<32x256xbf16>, vector<16x256xf32> -> vector<16x256xf32>
    %103 = arith.truncf %82 : vector<32x128xf32> to vector<32x128xbf16>
    %cst_109 = arith.constant dense<0.000000e+00> : vector<16x128xf32>
    %104 = tpu.matmul %100, %103, %cst_109 {dimension_numbers = #tpu.dot_dimension_numbers<[1], [0], [0], [1], [0, 0, 1, 1], [], []>} : vector<16x32xbf16>, vector<32x128xbf16>, vector<16x128xf32> -> vector<16x128xf32>
    %cst_110 = arith.constant 0.000000e+00 : f32
    %105 = vector.broadcast %cst_110 : f32 to vector<8x256xf32>
    %c0_111 = arith.constant 0 : index
    %c0_112 = arith.constant 0 : index
    %106 = vector.load %arg31[%c0_111, %c0_112] : memref<32x256xf32, #tpu.memory_space<vmem>>, vector<8x256xf32>
    tpu.vector_store %arg31[%c0_111, %c0_112], %105 {strides = array<i32>} : memref<32x256xf32, #tpu.memory_space<vmem>>, vector<8x256xf32>,
    %cst_113 = arith.constant 0.000000e+00 : f32
    %107 = vector.broadcast %cst_113 : f32 to vector<8x256xf32>
    %c24 = arith.constant 24 : index
    %c0_114 = arith.constant 0 : index
    %108 = vector.load %arg31[%c24, %c0_114] : memref<32x256xf32, #tpu.memory_space<vmem>>, vector<8x256xf32>
    tpu.vector_store %arg31[%c24, %c0_114], %107 {strides = array<i32>} : memref<32x256xf32, #tpu.memory_space<vmem>>, vector<8x256xf32>,
    %c8_115 = arith.constant 8 : index
    %c0_116 = arith.constant 0 : index
    %109 = vector.load %arg31[%c8_115, %c0_116] : memref<32x256xf32, #tpu.memory_space<vmem>>, vector<16x256xf32>
    tpu.vector_store %arg31[%c8_115, %c0_116], %102 {strides = array<i32>} : memref<32x256xf32, #tpu.memory_space<vmem>>, vector<16x256xf32>,
    %c7_117 = arith.constant 7 : index
    %c0_118 = arith.constant 0 : index
    %110 = vector.load %arg31[%c7_117, %c0_118] : memref<32x256xf32, #tpu.memory_space<vmem>>, vector<16x256xf32>
    %c8_119 = arith.constant 8 : index
    %c0_120 = arith.constant 0 : index
    %111 = vector.load %arg31[%c8_119, %c0_120] : memref<32x256xf32, #tpu.memory_space<vmem>>, vector<16x256xf32>
    %c9_121 = arith.constant 9 : index
    %c0_122 = arith.constant 0 : index
    %112 = vector.load %arg31[%c9_121, %c0_122] : memref<32x256xf32, #tpu.memory_space<vmem>>, vector<16x256xf32>
    %113 = tpu.concatenate %110, %111, %112, %104 in 1 : vector<16x256xf32>, vector<16x256xf32>, vector<16x256xf32>, vector<16x128xf32> -> vector<16x896xf32>
    %114 = arith.truncf %113 : vector<16x896xf32> to vector<16x896xbf16>
    %c0_123 = arith.constant 0 : index
    %c0_124 = arith.constant 0 : index
    %115 = vector.load %arg15[%c0_123, %c0_124] : memref<896x256xbf16, #tpu.memory_space<vmem>>, vector<896x256xbf16>
    %cst_125 = arith.constant dense<0.000000e+00> : vector<16x256xf32>
    %116 = tpu.matmul %114, %115, %cst_125 {dimension_numbers = #tpu.dot_dimension_numbers<[1], [0], [0], [1], [0, 0, 1, 1], [], []>} : vector<16x896xbf16>, vector<896x256xbf16>, vector<16x256xf32> -> vector<16x256xf32>
    %c0_126 = arith.constant 0 : index
    %c0_127 = arith.constant 0 : index
    %117 = vector.load %arg16[%c0_126, %c0_127] : memref<1x256xf32, #tpu.memory_space<vmem>>, vector<1x256xf32>
    %118 = vector.broadcast %117 : vector<1x256xf32> to vector<16x256xf32>
    %119 = arith.addf %116, %118 : vector<16x256xf32>
    %cst_128 = arith.constant 0.000000e+00 : f32
    %120 = vector.broadcast %cst_128 : f32 to vector<16x256xf32>
    %121 = arith.maximumf %119, %120 : vector<16x256xf32>
    %cst_129 = arith.constant 0.000000e+00 : f32
    %122 = vector.broadcast %cst_129 : f32 to vector<8x256xf32>
    %c0_130 = arith.constant 0 : index
    %c0_131 = arith.constant 0 : index
    %123 = vector.load %arg32[%c0_130, %c0_131] : memref<32x256xf32, #tpu.memory_space<vmem>>, vector<8x256xf32>
    tpu.vector_store %arg32[%c0_130, %c0_131], %122 {strides = array<i32>} : memref<32x256xf32, #tpu.memory_space<vmem>>, vector<8x256xf32>,
    %cst_132 = arith.constant 0.000000e+00 : f32
    %124 = vector.broadcast %cst_132 : f32 to vector<8x256xf32>
    %c24_133 = arith.constant 24 : index
    %c0_134 = arith.constant 0 : index
    %125 = vector.load %arg32[%c24_133, %c0_134] : memref<32x256xf32, #tpu.memory_space<vmem>>, vector<8x256xf32>
    tpu.vector_store %arg32[%c24_133, %c0_134], %124 {strides = array<i32>} : memref<32x256xf32, #tpu.memory_space<vmem>>, vector<8x256xf32>,
    %c8_135 = arith.constant 8 : index
    %c0_136 = arith.constant 0 : index
    %126 = vector.load %arg32[%c8_135, %c0_136] : memref<32x256xf32, #tpu.memory_space<vmem>>, vector<16x256xf32>
    tpu.vector_store %arg32[%c8_135, %c0_136], %121 {strides = array<i32>} : memref<32x256xf32, #tpu.memory_space<vmem>>, vector<16x256xf32>,
    %c7_137 = arith.constant 7 : index
    %c0_138 = arith.constant 0 : index
    %127 = vector.load %arg32[%c7_137, %c0_138] : memref<32x256xf32, #tpu.memory_space<vmem>>, vector<16x256xf32>
    %c8_139 = arith.constant 8 : index
    %c0_140 = arith.constant 0 : index
    %128 = vector.load %arg32[%c8_139, %c0_140] : memref<32x256xf32, #tpu.memory_space<vmem>>, vector<16x256xf32>
    %c9_141 = arith.constant 9 : index
    %c0_142 = arith.constant 0 : index
    %129 = vector.load %arg32[%c9_141, %c0_142] : memref<32x256xf32, #tpu.memory_space<vmem>>, vector<16x256xf32>
    %130 = tpu.concatenate %127, %128, %129 in 1 : vector<16x256xf32>, vector<16x256xf32>, vector<16x256xf32> -> vector<16x768xf32>
    %131 = arith.truncf %130 : vector<16x768xf32> to vector<16x768xbf16>
    %c0_143 = arith.constant 0 : index
    %c0_144 = arith.constant 0 : index
    %132 = vector.load %arg18[%c0_143, %c0_144] : memref<768x512xbf16, #tpu.memory_space<vmem>>, vector<768x512xbf16>
    %cst_145 = arith.constant dense<0.000000e+00> : vector<16x512xf32>
    %133 = tpu.matmul %131, %132, %cst_145 {dimension_numbers = #tpu.dot_dimension_numbers<[1], [0], [0], [1], [0, 0, 1, 1], [], []>} : vector<16x768xbf16>, vector<768x512xbf16>, vector<16x512xf32> -> vector<16x512xf32>
    %c0_146 = arith.constant 0 : index
    %c0_147 = arith.constant 0 : index
    %134 = vector.load %arg19[%c0_146, %c0_147] : memref<1x512xf32, #tpu.memory_space<vmem>>, vector<1x512xf32>
    %135 = vector.broadcast %134 : vector<1x512xf32> to vector<16x512xf32>
    %136 = arith.addf %133, %135 : vector<16x512xf32>
    %cst_148 = arith.constant 0.000000e+00 : f32
    %137 = vector.broadcast %cst_148 : f32 to vector<16x512xf32>
    %138 = arith.maximumf %136, %137 : vector<16x512xf32>
    %c0_149 = arith.constant 0 : index
    %c0_150 = arith.constant 0 : index
    %139 = vector.load %arg22[%c0_149, %c0_150] : memref<8x16xbf16, #tpu.memory_space<vmem>>, vector<8x16xbf16>
    %140 = arith.truncf %138 : vector<16x512xf32> to vector<16x512xbf16>
    %cst_151 = arith.constant dense<0.000000e+00> : vector<8x512xf32>
    %141 = tpu.matmul %139, %140, %cst_151 {dimension_numbers = #tpu.dot_dimension_numbers<[1], [0], [0], [1], [0, 0, 1, 1], [], []>} : vector<8x16xbf16>, vector<16x512xbf16>, vector<8x512xf32> -> vector<8x512xf32>
    %142 = arith.truncf %121 : vector<16x256xf32> to vector<16x256xbf16>
    %cst_152 = arith.constant dense<0.000000e+00> : vector<8x256xf32>
    %143 = tpu.matmul %139, %142, %cst_152 {dimension_numbers = #tpu.dot_dimension_numbers<[1], [0], [0], [1], [0, 0, 1, 1], [], []>} : vector<8x16xbf16>, vector<16x256xbf16>, vector<8x256xf32> -> vector<8x256xf32>
    %cst_153 = arith.constant 0.000000e+00 : f32
    %144 = vector.broadcast %cst_153 : f32 to vector<8x512xf32>
    %c0_154 = arith.constant 0 : index
    %c0_155 = arith.constant 0 : index
    %145 = vector.load %arg33[%c0_154, %c0_155] : memref<24x512xf32, #tpu.memory_space<vmem>>, vector<8x512xf32>
    tpu.vector_store %arg33[%c0_154, %c0_155], %144 {strides = array<i32>} : memref<24x512xf32, #tpu.memory_space<vmem>>, vector<8x512xf32>,
    %cst_156 = arith.constant 0.000000e+00 : f32
    %146 = vector.broadcast %cst_156 : f32 to vector<8x512xf32>
    %c16 = arith.constant 16 : index
    %c0_157 = arith.constant 0 : index
    %147 = vector.load %arg33[%c16, %c0_157] : memref<24x512xf32, #tpu.memory_space<vmem>>, vector<8x512xf32>
    tpu.vector_store %arg33[%c16, %c0_157], %146 {strides = array<i32>} : memref<24x512xf32, #tpu.memory_space<vmem>>, vector<8x512xf32>,
    %c8_158 = arith.constant 8 : index
    %c0_159 = arith.constant 0 : index
    %148 = vector.load %arg33[%c8_158, %c0_159] : memref<24x512xf32, #tpu.memory_space<vmem>>, vector<8x512xf32>
    tpu.vector_store %arg33[%c8_158, %c0_159], %141 {strides = array<i32>} : memref<24x512xf32, #tpu.memory_space<vmem>>, vector<8x512xf32>,
    %c7_160 = arith.constant 7 : index
    %c0_161 = arith.constant 0 : index
    %149 = vector.load %arg33[%c7_160, %c0_161] : memref<24x512xf32, #tpu.memory_space<vmem>>, vector<8x512xf32>
    %c8_162 = arith.constant 8 : index
    %c0_163 = arith.constant 0 : index
    %150 = vector.load %arg33[%c8_162, %c0_163] : memref<24x512xf32, #tpu.memory_space<vmem>>, vector<8x512xf32>
    %c9_164 = arith.constant 9 : index
    %c0_165 = arith.constant 0 : index
    %151 = vector.load %arg33[%c9_164, %c0_165] : memref<24x512xf32, #tpu.memory_space<vmem>>, vector<8x512xf32>
    %152 = tpu.concatenate %149, %150, %151, %143 in 1 : vector<8x512xf32>, vector<8x512xf32>, vector<8x512xf32>, vector<8x256xf32> -> vector<8x1792xf32>
    %153 = arith.truncf %152 : vector<8x1792xf32> to vector<8x1792xbf16>
    %c0_166 = arith.constant 0 : index
    %c0_167 = arith.constant 0 : index
    %154 = vector.load %arg20[%c0_166, %c0_167] : memref<1792x512xbf16, #tpu.memory_space<vmem>>, vector<1792x512xbf16>
    %cst_168 = arith.constant dense<0.000000e+00> : vector<8x512xf32>
    %155 = tpu.matmul %153, %154, %cst_168 {dimension_numbers = #tpu.dot_dimension_numbers<[1], [0], [0], [1], [0, 0, 1, 1], [], []>} : vector<8x1792xbf16>, vector<1792x512xbf16>, vector<8x512xf32> -> vector<8x512xf32>
    %c0_169 = arith.constant 0 : index
    %c0_170 = arith.constant 0 : index
    %156 = vector.load %arg21[%c0_169, %c0_170] : memref<1x512xf32, #tpu.memory_space<vmem>>, vector<1x512xf32>
    %157 = vector.broadcast %156 : vector<1x512xf32> to vector<8x512xf32>
    %158 = arith.addf %155, %157 : vector<8x512xf32>
    %cst_171 = arith.constant 0.000000e+00 : f32
    %159 = vector.broadcast %cst_171 : f32 to vector<8x512xf32>
    %160 = arith.maximumf %158, %159 : vector<8x512xf32>
    %161 = arith.truncf %160 : vector<8x512xf32> to vector<8x512xbf16>
    %c0_172 = arith.constant 0 : index
    %c0_173 = arith.constant 0 : index
    %162 = vector.load %arg23[%c0_172, %c0_173] : memref<512x128xbf16, #tpu.memory_space<vmem>>, vector<512x128xbf16>
    %cst_174 = arith.constant dense<0.000000e+00> : vector<8x128xf32>
    %163 = tpu.matmul %161, %162, %cst_174 {dimension_numbers = #tpu.dot_dimension_numbers<[1], [0], [0], [1], [0, 0, 1, 1], [], []>} : vector<8x512xbf16>, vector<512x128xbf16>, vector<8x128xf32> -> vector<8x128xf32>
    %c0_175 = arith.constant 0 : index
    %c0_176 = arith.constant 0 : index
    %164 = vector.load %arg24[%c0_175, %c0_176] : memref<1x128xf32, #tpu.memory_space<vmem>>, vector<1x128xf32>
    %165 = vector.broadcast %164 : vector<1x128xf32> to vector<8x128xf32>
    %166 = arith.addf %163, %165 : vector<8x128xf32>
    %c0_177 = arith.constant 0 : index
    %c0_178 = arith.constant 0 : index
    %c0_179 = arith.constant 0 : index
    %167 = vector.load %arg25[%c0_177, %c0_178, %c0_179] : memref<1x8x128xf32, #tpu.memory_space<vmem>>, vector<1x8x128xf32>
    %168 = vector.shape_cast %167 : vector<1x8x128xf32> to vector<8x128xf32>
    %169 = vector.shape_cast %166 : vector<8x128xf32> to vector<1x8x128xf32>
    tpu.vector_store %arg25[%c0_177, %c0_178, %c0_179], %169 {strides = array<i32>} : memref<1x8x128xf32, #tpu.memory_space<vmem>>, vector<1x8x128xf32>,
    return
  }
  func.func @transform_0(%arg0: i32) -> (i32, i32, i32) {
    %c0_i32 = arith.constant 0 : i32
    %c0_i32_0 = arith.constant 0 : i32
    %c0_i32_1 = arith.constant 0 : i32
    return %arg0, %c0_i32, %c0_i32_0 : i32, i32, i32
  }
  func.func @transform_1(%arg0: i32) -> (i32, i32) {
    %c0_i32 = arith.constant 0 : i32
    %c0_i32_0 = arith.constant 0 : i32
    %c0_i32_1 = arith.constant 0 : i32
    return %c0_i32, %c0_i32_0 : i32, i32
  }
  func.func @transform_2(%arg0: i32) -> (i32, i32) {
    %c0_i32 = arith.constant 0 : i32
    %c0_i32_0 = arith.constant 0 : i32
    %c0_i32_1 = arith.constant 0 : i32
    return %c0_i32, %c0_i32_0 : i32, i32
  }
  func.func @transform_3(%arg0: i32) -> (i32, i32) {
    %c0_i32 = arith.constant 0 : i32
    %c0_i32_0 = arith.constant 0 : i32
    %c0_i32_1 = arith.constant 0 : i32
    return %c0_i32, %c0_i32_0 : i32, i32
  }
  func.func @transform_4(%arg0: i32) -> (i32, i32) {
    %c0_i32 = arith.constant 0 : i32
    %c0_i32_0 = arith.constant 0 : i32
    %c0_i32_1 = arith.constant 0 : i32
    return %c0_i32, %c0_i32_0 : i32, i32
  }
  func.func @transform_5(%arg0: i32) -> (i32, i32) {
    %c0_i32 = arith.constant 0 : i32
    %c0_i32_0 = arith.constant 0 : i32
    %c0_i32_1 = arith.constant 0 : i32
    return %c0_i32, %c0_i32_0 : i32, i32
  }
  func.func @transform_6(%arg0: i32) -> (i32, i32) {
    %c0_i32 = arith.constant 0 : i32
    %c0_i32_0 = arith.constant 0 : i32
    %c0_i32_1 = arith.constant 0 : i32
    return %c0_i32, %c0_i32_0 : i32, i32
  }
  func.func @transform_7(%arg0: i32) -> (i32, i32) {
    %c0_i32 = arith.constant 0 : i32
    %c0_i32_0 = arith.constant 0 : i32
    %c0_i32_1 = arith.constant 0 : i32
    return %c0_i32, %c0_i32_0 : i32, i32
  }
  func.func @transform_8(%arg0: i32) -> (i32, i32) {
    %c0_i32 = arith.constant 0 : i32
    %c0_i32_0 = arith.constant 0 : i32
    %c0_i32_1 = arith.constant 0 : i32
    return %c0_i32, %c0_i32_0 : i32, i32
  }
  func.func @transform_9(%arg0: i32) -> (i32, i32) {
    %c0_i32 = arith.constant 0 : i32
    %c0_i32_0 = arith.constant 0 : i32
    %c0_i32_1 = arith.constant 0 : i32
    return %c0_i32, %c0_i32_0 : i32, i32
  }
  func.func @transform_10(%arg0: i32) -> (i32, i32) {
    %c0_i32 = arith.constant 0 : i32
    %c0_i32_0 = arith.constant 0 : i32
    %c0_i32_1 = arith.constant 0 : i32
    return %c0_i32, %c0_i32_0 : i32, i32
  }
  func.func @transform_11(%arg0: i32) -> (i32, i32) {
    %c0_i32 = arith.constant 0 : i32
    %c0_i32_0 = arith.constant 0 : i32
    %c0_i32_1 = arith.constant 0 : i32
    return %c0_i32, %c0_i32_0 : i32, i32
  }
  func.func @transform_12(%arg0: i32) -> (i32, i32) {
    %c0_i32 = arith.constant 0 : i32
    %c0_i32_0 = arith.constant 0 : i32
    %c0_i32_1 = arith.constant 0 : i32
    return %c0_i32, %c0_i32_0 : i32, i32
  }
  func.func @transform_13(%arg0: i32) -> (i32, i32) {
    %c0_i32 = arith.constant 0 : i32
    %c0_i32_0 = arith.constant 0 : i32
    %c0_i32_1 = arith.constant 0 : i32
    return %c0_i32, %c0_i32_0 : i32, i32
  }
  func.func @transform_14(%arg0: i32) -> (i32, i32) {
    %c0_i32 = arith.constant 0 : i32
    %c0_i32_0 = arith.constant 0 : i32
    %c0_i32_1 = arith.constant 0 : i32
    return %c0_i32, %c0_i32_0 : i32, i32
  }
  func.func @transform_15(%arg0: i32) -> (i32, i32) {
    %c0_i32 = arith.constant 0 : i32
    %c0_i32_0 = arith.constant 0 : i32
    %c0_i32_1 = arith.constant 0 : i32
    return %c0_i32, %c0_i32_0 : i32, i32
  }
  func.func @transform_16(%arg0: i32) -> (i32, i32) {
    %c0_i32 = arith.constant 0 : i32
    %c0_i32_0 = arith.constant 0 : i32
    %c0_i32_1 = arith.constant 0 : i32
    return %c0_i32, %c0_i32_0 : i32, i32
  }
  func.func @transform_17(%arg0: i32) -> (i32, i32) {
    %c0_i32 = arith.constant 0 : i32
    %c0_i32_0 = arith.constant 0 : i32
    %c0_i32_1 = arith.constant 0 : i32
    return %c0_i32, %c0_i32_0 : i32, i32
  }
  func.func @transform_18(%arg0: i32) -> (i32, i32) {
    %c0_i32 = arith.constant 0 : i32
    %c0_i32_0 = arith.constant 0 : i32
    %c0_i32_1 = arith.constant 0 : i32
    return %c0_i32, %c0_i32_0 : i32, i32
  }
  func.func @transform_19(%arg0: i32) -> (i32, i32) {
    %c0_i32 = arith.constant 0 : i32
    %c0_i32_0 = arith.constant 0 : i32
    %c0_i32_1 = arith.constant 0 : i32
    return %c0_i32, %c0_i32_0 : i32, i32
  }
  func.func @transform_20(%arg0: i32) -> (i32, i32) {
    %c0_i32 = arith.constant 0 : i32
    %c0_i32_0 = arith.constant 0 : i32
    %c0_i32_1 = arith.constant 0 : i32
    return %c0_i32, %c0_i32_0 : i32, i32
  }
  func.func @transform_21(%arg0: i32) -> (i32, i32) {
    %c0_i32 = arith.constant 0 : i32
    %c0_i32_0 = arith.constant 0 : i32
    %c0_i32_1 = arith.constant 0 : i32
    return %c0_i32, %c0_i32_0 : i32, i32
  }
  func.func @transform_22(%arg0: i32) -> (i32, i32) {
    %c0_i32 = arith.constant 0 : i32
    %c0_i32_0 = arith.constant 0 : i32
    %c0_i32_1 = arith.constant 0 : i32
    return %c0_i32, %c0_i32_0 : i32, i32
  }
  func.func @transform_23(%arg0: i32) -> (i32, i32) {
    %c0_i32 = arith.constant 0 : i32
    %c0_i32_0 = arith.constant 0 : i32
    %c0_i32_1 = arith.constant 0 : i32
    return %c0_i32, %c0_i32_0 : i32, i32
  }
  func.func @transform_24(%arg0: i32) -> (i32, i32, i32) {
    %c0_i32 = arith.constant 0 : i32
    %c0_i32_0 = arith.constant 0 : i32
    %c0_i32_1 = arith.constant 0 : i32
    return %arg0, %c0_i32, %c0_i32_0 : i32, i32, i32
  }
}

</mosaic_0001>

<llo_original>
// kernel: forward.1
$region0: #{forward.1}
  #allocation0 [shape = 'u32[]', space=smem, size = 0x4, offset = 0x4, fixed_abs, tag = 'smem constant byte address 0x4 - core index']
  #allocation1 [shape = 'u32[144,128]{1,0:T(1,128)}', space=vmem, size = 0x12000, scoped, tag = 'internal scratch']
  #allocation2 [shape = 'f32[80,64]{1,0:T(8,128)}', space=vmem, size = 0xa000, scoped, tag = 'scratch operand']
  #allocation3 [shape = 'f32[80,64]{1,0:T(8,128)}', space=vmem, size = 0xa000, scoped, tag = 'scratch operand']
  #allocation4 [shape = 'f32[80,64]{1,0:T(8,128)}', space=vmem, size = 0xa000, scoped, tag = 'scratch operand']
  #allocation5 [shape = 'f32[48,128]{1,0:T(8,128)}', space=vmem, size = 0x6000, scoped, tag = 'scratch operand']
  #allocation6 [shape = 'f32[48,128]{1,0:T(8,128)}', space=vmem, size = 0x6000, scoped, tag = 'scratch operand']
  #allocation7 [shape = 'f32[32,256]{1,0:T(8,128)}', space=vmem, size = 0x8000, scoped, tag = 'scratch operand']
  #allocation8 [shape = 'f32[32,256]{1,0:T(8,128)}', space=vmem, size = 0x8000, scoped, tag = 'scratch operand']
  #allocation9 [shape = 'f32[24,512]{1,0:T(8,128)}', space=vmem, size = 0xc000, scoped, tag = 'scratch operand']
  %s0 = inlined_call_operand.vmem [shape: bf16[2,64,8], index: 0, kind: input, shape index: {}]
  %s1 = inlined_call_operand.hbm [shape: bf16[8,64], index: 1, kind: input, shape index: {}]
  %s2 = inlined_call_operand.hbm [shape: f32[1,64], index: 2, kind: input, shape index: {}]
  %s3 = inlined_call_operand.hbm [shape: bf16[192,64], index: 3, kind: input, shape index: {}]
  %s4 = inlined_call_operand.vmem [shape: f32[1,64], index: 4, kind: input, shape index: {}, may-alias: {4,6}]
  %s5 = inlined_call_operand.hbm [shape: bf16[192,64], index: 5, kind: input, shape index: {}]
  %s6 = inlined_call_operand.vmem [shape: f32[1,64], index: 6, kind: input, shape index: {}, may-alias: {4,6}]
  %s7 = inlined_call_operand.hbm [shape: bf16[192,128], index: 7, kind: input, shape index: {}]
  %s8 = inlined_call_operand.vmem [shape: f32[1,128], index: 8, kind: input, shape index: {}, may-alias: {8,10}]
  %s9 = inlined_call_operand.hbm [shape: bf16[448,128], index: 9, kind: input, shape index: {}]
  %s10 = inlined_call_operand.vmem [shape: f32[1,128], index: 10, kind: input, shape index: {}, may-alias: {8,10}]
  %s11 = inlined_call_operand.hbm [shape: bf16[32,64], index: 11, kind: input, shape index: {}]
  %s12 = inlined_call_operand.hbm [shape: bf16[384,256], index: 12, kind: input, shape index: {}]
  %s13 = inlined_call_operand.vmem [shape: f32[1,256], index: 13, kind: input, shape index: {}, may-alias: {13,15}]
  %s14 = inlined_call_operand.hbm [shape: bf16[896,256], index: 14, kind: input, shape index: {}]
  %s15 = inlined_call_operand.vmem [shape: f32[1,256], index: 15, kind: input, shape index: {}, may-alias: {13,15}]
  %s16 = inlined_call_operand.hbm [shape: bf16[16,32], index: 16, kind: input, shape index: {}]
  %s17 = inlined_call_operand.hbm [shape: bf16[768,512], index: 17, kind: input, shape index: {}]
  %s18 = inlined_call_operand.vmem [shape: f32[1,512], index: 18, kind: input, shape index: {}, may-alias: {18,20}]
  %s19 = inlined_call_operand.hbm [shape: bf16[1792,512], index: 19, kind: input, shape index: {}]
  %s20 = inlined_call_operand.vmem [shape: f32[1,512], index: 20, kind: input, shape index: {}, may-alias: {18,20}]
  %s21 = inlined_call_operand.hbm [shape: bf16[8,16], index: 21, kind: input, shape index: {}]
  %s22 = inlined_call_operand.hbm [shape: bf16[512,128], index: 22, kind: input, shape index: {}]
  %s23 = inlined_call_operand.hbm [shape: f32[1,128], index: 23, kind: input, shape index: {}]
  %s24 = inlined_call_operand.hbm [shape: f32[2,8,128], index: 24, kind: output, shape index: {}]
  %s25 = sld [smem:[#allocation0]]
  $region189: #{forward.1} parent=0
    _
  %s27 = ssub.s32 1, %s25
  %s28 = scalar_select 0, %s27, %s25
  $region1: #{forward.1} parent=0
    #allocation10 [shape = 'u8[2048]{0}', space=vmem, size = 0x800, scoped, tag = 'input window, operand 1, single buffered']
    #allocation11 [shape = 's32[2]{0}', space=sflag, size = 0x8, scoped, tag = 'scoped memory for forward.1']
    #allocation12 [shape = 's32[2]{0}', space=sflag, size = 0x8, scoped, tag = 'scoped memory for forward.1']
    #allocation13 [shape = 'u8[512]{0}', space=vmem, size = 0x400, scoped, tag = 'input window, operand 2, single buffered']
    #allocation14 [shape = 's32[1]{0}', space=sflag, size = 0x4, scoped, tag = 'scoped memory for forward.1']
    #allocation15 [shape = 'u8[49152]{0}', space=vmem, size = 0xc000, scoped, tag = 'input window, operand 3, single buffered']
    #allocation16 [shape = 'u8[49152]{0}', space=vmem, size = 0xc000, scoped, tag = 'input window, operand 5, single buffered']
    #allocation17 [shape = 's32[1]{0}', space=sflag, size = 0x4, scoped, tag = 'scoped memory for forward.1']
    #allocation18 [shape = 'u8[49152]{0}', space=vmem, size = 0xc000, scoped, tag = 'input window, operand 7, single buffered']
    #allocation19 [shape = 'u8[114688]{0}', space=vmem, size = 0x1c000, scoped, tag = 'input window, operand 9, single buffered']
    #allocation20 [shape = 's32[1]{0}', space=sflag, size = 0x4, scoped, tag = 'scoped memory for forward.1']
    #allocation21 [shape = 'u8[8192]{0}', space=vmem, size = 0x2000, scoped, tag = 'input window, operand 11, single buffered']
    #allocation22 [shape = 'u8[196608]{0}', space=vmem, size = 0x30000, scoped, tag = 'input window, operand 12, single buffered']
    #allocation23 [shape = 's32[1]{0}', space=sflag, size = 0x4, scoped, tag = 'scoped memory for forward.1']
    #allocation24 [shape = 'u8[458752]{0}', space=vmem, size = 0x70000, scoped, tag = 'input window, operand 14, single buffered']
    #allocation25 [shape = 'u8[4096]{0}', space=vmem, size = 0x1000, scoped, tag = 'input window, operand 16, single buffered']
    #allocation26 [shape = 's32[1]{0}', space=sflag, size = 0x4, scoped, tag = 'scoped memory for forward.1']
    #allocation27 [shape = 'u8[786432]{0}', space=vmem, size = 0xc0000, scoped, tag = 'input window, operand 17, single buffered']
    #allocation28 [shape = 'u8[1835008]{0}', space=vmem, size = 0x1c0000, scoped, tag = 'input window, operand 19, single buffered']
    #allocation29 [shape = 's32[1]{0}', space=sflag, size = 0x4, scoped, tag = 'scoped memory for forward.1']
    #allocation30 [shape = 'u8[2048]{0}', space=vmem, size = 0x800, scoped, tag = 'input window, operand 21, single buffered']
    #allocation31 [shape = 'u8[131072]{0}', space=vmem, size = 0x20000, scoped, tag = 'input window, operand 22, single buffered']
    #allocation32 [shape = 's32[1]{0}', space=sflag, size = 0x4, scoped, tag = 'scoped memory for forward.1']
    #allocation33 [shape = 'u8[512]{0}', space=vmem, size = 0x400, scoped, tag = 'input window, operand 23, single buffered']
    #allocation34 [shape = 'u8[8192]{0}', space=vmem, size = 0x2000, scoped, tag = 'output window, operand 0']
    %29 = vsyncpa [#allocation11], 0
    %30 = vsyncpa [#allocation14], 0
    %31 = vsyncpa [#allocation17], 0
    %32 = vsyncpa [#allocation20], 0
    %33 = vsyncpa [#allocation23], 0
    %34 = vsyncpa [#allocation26], 0
    %35 = vsyncpa [#allocation29], 0
    %36 = vsyncpa [#allocation32], 0
    %37 = vsyncpa [#allocation12], 0
    %s38 = scalar_lea.sflag [#allocation12], 1
    %39 = vsyncpa %s38, 0
    loop: start=0, step=1, limit=4
    $region2: #{forward.1} parent=1 // loop_pre_header
      _
    $region3: #{forward.1} parent=1 // loop_header
      %s41 = sphi 0, %s45
      %p42 = scmp.ge.s32.totalorder %s41, 4
      %s51 = sphi 0, %s53
      %s54 = sphi 0, %s51
      %s55 = sphi 0, %s54
      %s71 = sphi 0, %s55
      %s75 = sphi 0, %s75
      %s77 = sphi 0, %s75
      %s78 = sphi 0, %s77
      %s92 = sphi 0, %s78
      %s96 = sphi 0, %s96
      %s98 = sphi 0, %s96
      %s99 = sphi 0, %s98
      %s113 = sphi 0, %s99
      %s117 = sphi 0, %s117
      %s119 = sphi 0, %s117
      %s120 = sphi 0, %s119
      %s134 = sphi 0, %s120
      %s138 = sphi 0, %s138
      %s140 = sphi 0, %s138
      %s141 = sphi 0, %s140
      %s155 = sphi 0, %s141
      %s159 = sphi 0, %s159
      %s161 = sphi 0, %s159
      %s162 = sphi 0, %s161
      %s176 = sphi 0, %s162
      %s180 = sphi 0, %s180
      %s182 = sphi 0, %s180
      %s183 = sphi 0, %s182
      %s197 = sphi 0, %s183
      %s201 = sphi 0, %s201
      %s203 = sphi 0, %s201
      %s204 = sphi 0, %s203
      %s218 = sphi 0, %s204
      %s222 = sphi 0, %s222
      %s224 = sphi 0, %s222
      %s225 = sphi 0, %s224
      %s239 = sphi 0, %s225
      %s243 = sphi 0, %s243
      %s245 = sphi 0, %s243
      %s246 = sphi 0, %s245
      %s260 = sphi 0, %s246
      %s264 = sphi 0, %s264
      %s266 = sphi 0, %s264
      %s267 = sphi 0, %s266
      %s281 = sphi 0, %s267
      %s285 = sphi 0, %s285
      %s287 = sphi 0, %s285
      %s288 = sphi 0, %s287
      %s302 = sphi 0, %s288
      %s306 = sphi 0, %s306
      %s308 = sphi 0, %s306
      %s309 = sphi 0, %s308
      %s323 = sphi 0, %s309
      %s327 = sphi 0, %s327
      %s329 = sphi 0, %s327
      %s330 = sphi 0, %s329
      %s344 = sphi 0, %s330
      %s348 = sphi 0, %s348
      %s350 = sphi 0, %s348
      %s351 = sphi 0, %s350
      %s365 = sphi 0, %s351
      %s369 = sphi 0, %s369
      %s371 = sphi 0, %s369
      %s372 = sphi 0, %s371
      %s386 = sphi 0, %s372
      %s390 = sphi 0, %s390
      %s392 = sphi 0, %s390
      %s393 = sphi 0, %s392
      %s407 = sphi 0, %s393
      %s411 = sphi 0, %s411
      %s413 = sphi 0, %s411
      %s414 = sphi 0, %s413
      %s428 = sphi 0, %s414
      %s432 = sphi 0, %s432
      %s434 = sphi 0, %s432
      %s435 = sphi 0, %s434
      %s449 = sphi 0, %s435
      %s453 = sphi 0, %s453
      %s455 = sphi 0, %s453
      %s456 = sphi 0, %s455
      %s470 = sphi 0, %s456
      %s474 = sphi 0, %s474
      %s476 = sphi 0, %s474
      %s477 = sphi 0, %s476
      %s491 = sphi 0, %s477
      %s495 = sphi 0, %s495
      %s497 = sphi 0, %s495
      %s498 = sphi 0, %s497
      %s512 = sphi 0, %s498
      %s516 = sphi 0, %s516
      %s518 = sphi 0, %s516
      %s519 = sphi 0, %s518
      %s533 = sphi 0, %s519
      %s537 = sphi 0, %s537
      %s539 = sphi 0, %s537
      %s540 = sphi 0, %s539
      %s554 = sphi 0, %s540
      %s560 = sphi 0, %s562
      %s563 = sphi 0, %s560
      %s564 = sphi 0, %s563
      %s580 = sphi 0, %s564
    $region4: #{forward.1} parent=1 // loop_header_branch
      %44 = sbr.rel (%p42) target = $region8
    $region5: #{forward.1} parent=1 // loop_body
      %s46 = ssub.s32 %s41, 1
      %s47 = ssub.s32 %s41, 2
      %s48 = sadd.s32 %s41, 1
      %s49 = ssub.s32 %s41, %s48
      %p50 = scmp.eq.s32.totalorder %s49, 0
      %s52 = sadd.s32 %s51, 1
      %s53 = scalar_select %p50, %s51, %s52
      %p56 = pneg %p50
      %p57 = scmp.eq.s32.totalorder %s41, 1
      %p58 = por %p56, %p57
      %p59 = scmp.ne.s32.totalorder %s51, %s54
      %p60 = scmp.eq.s32.totalorder %s41, 0
      %p61 = por %p59, %p60
      %p62 = scmp.ne.s32.totalorder %s51, %s54
      %p63 = scmp.eq.s32.totalorder %s46, 1
      %p64 = por %p62, %p63
      %p65 = scmp.ne.s32.totalorder %s54, %s55
      %p66 = scmp.eq.s32.totalorder %s46, 0
      %p67 = por %p65, %p66
      %p68 = scmp.ne.s32.totalorder %s54, %s55
      %p69 = scmp.eq.s32.totalorder %s47, 1
      %p70 = por %p68, %p69
      %p72 = scmp.ne.s32.totalorder %s55, %s71
      %p73 = scmp.eq.s32.totalorder %s47, 0
      %p74 = por %p72, %p73
      %s76 = sadd.s32 %s75, 1
      %p79 = scmp.eq.s32.totalorder %s41, 1
      %p80 = scmp.ne.s32.totalorder %s75, %s77
      %p81 = scmp.eq.s32.totalorder %s41, 0
      %p82 = por %p80, %p81
      %p83 = scmp.ne.s32.totalorder %s75, %s77
      %p84 = scmp.eq.s32.totalorder %s46, 1
      %p85 = por %p83, %p84
      %p86 = scmp.ne.s32.totalorder %s77, %s78
      %p87 = scmp.eq.s32.totalorder %s46, 0
      %p88 = por %p86, %p87
      %p89 = scmp.ne.s32.totalorder %s77, %s78
      %p90 = scmp.eq.s32.totalorder %s47, 1
      %p91 = por %p89, %p90
      %p93 = scmp.ne.s32.totalorder %s78, %s92
      %p94 = scmp.eq.s32.totalorder %s47, 0
      %p95 = por %p93, %p94
      %s97 = sadd.s32 %s96, 1
      %p100 = scmp.eq.s32.totalorder %s41, 1
      %p101 = scmp.ne.s32.totalorder %s96, %s98
      %p102 = scmp.eq.s32.totalorder %s41, 0
      %p103 = por %p101, %p102
      %p104 = scmp.ne.s32.totalorder %s96, %s98
      %p105 = scmp.eq.s32.totalorder %s46, 1
      %p106 = por %p104, %p105
      %p107 = scmp.ne.s32.totalorder %s98, %s99
      %p108 = scmp.eq.s32.totalorder %s46, 0
      %p109 = por %p107, %p108
      %p110 = scmp.ne.s32.totalorder %s98, %s99
      %p111 = scmp.eq.s32.totalorder %s47, 1
      %p112 = por %p110, %p111
      %p114 = scmp.ne.s32.totalorder %s99, %s113
      %p115 = scmp.eq.s32.totalorder %s47, 0
      %p116 = por %p114, %p115
      %s118 = sadd.s32 %s117, 1
      %p121 = scmp.eq.s32.totalorder %s41, 1
      %p122 = scmp.ne.s32.totalorder %s117, %s119
      %p123 = scmp.eq.s32.totalorder %s41, 0
      %p124 = por %p122, %p123
      %p125 = scmp.ne.s32.totalorder %s117, %s119
      %p126 = scmp.eq.s32.totalorder %s46, 1
      %p127 = por %p125, %p126
      %p128 = scmp.ne.s32.totalorder %s119, %s120
      %p129 = scmp.eq.s32.totalorder %s46, 0
      %p130 = por %p128, %p129
      %p131 = scmp.ne.s32.totalorder %s119, %s120
      %p132 = scmp.eq.s32.totalorder %s47, 1
      %p133 = por %p131, %p132
      %p135 = scmp.ne.s32.totalorder %s120, %s134
      %p136 = scmp.eq.s32.totalorder %s47, 0
      %p137 = por %p135, %p136
      %s139 = sadd.s32 %s138, 1
      %p142 = scmp.eq.s32.totalorder %s41, 1
      %p143 = scmp.ne.s32.totalorder %s138, %s140
      %p144 = scmp.eq.s32.totalorder %s41, 0
      %p145 = por %p143, %p144
      %p146 = scmp.ne.s32.totalorder %s138, %s140
      %p147 = scmp.eq.s32.totalorder %s46, 1
      %p148 = por %p146, %p147
      %p149 = scmp.ne.s32.totalorder %s140, %s141
      %p150 = scmp.eq.s32.totalorder %s46, 0
      %p151 = por %p149, %p150
      %p152 = scmp.ne.s32.totalorder %s140, %s141
      %p153 = scmp.eq.s32.totalorder %s47, 1
      %p154 = por %p152, %p153
      %p156 = scmp.ne.s32.totalorder %s141, %s155
      %p157 = scmp.eq.s32.totalorder %s47, 0
      %p158 = por %p156, %p157
      %s160 = sadd.s32 %s159, 1
      %p163 = scmp.eq.s32.totalorder %s41, 1
      %p164 = scmp.ne.s32.totalorder %s159, %s161
      %p165 = scmp.eq.s32.totalorder %s41, 0
      %p166 = por %p164, %p165
      %p167 = scmp.ne.s32.totalorder %s159, %s161
      %p168 = scmp.eq.s32.totalorder %s46, 1
      %p169 = por %p167, %p168
      %p170 = scmp.ne.s32.totalorder %s161, %s162
      %p171 = scmp.eq.s32.totalorder %s46, 0
      %p172 = por %p170, %p171
      %p173 = scmp.ne.s32.totalorder %s161, %s162
      %p174 = scmp.eq.s32.totalorder %s47, 1
      %p175 = por %p173, %p174
      %p177 = scmp.ne.s32.totalorder %s162, %s176
      %p178 = scmp.eq.s32.totalorder %s47, 0
      %p179 = por %p177, %p178
      %s181 = sadd.s32 %s180, 1
      %p184 = scmp.eq.s32.totalorder %s41, 1
      %p185 = scmp.ne.s32.totalorder %s180, %s182
      %p186 = scmp.eq.s32.totalorder %s41, 0
      %p187 = por %p185, %p186
      %p188 = scmp.ne.s32.totalorder %s180, %s182
      %p189 = scmp.eq.s32.totalorder %s46, 1
      %p190 = por %p188, %p189
      %p191 = scmp.ne.s32.totalorder %s182, %s183
      %p192 = scmp.eq.s32.totalorder %s46, 0
      %p193 = por %p191, %p192
      %p194 = scmp.ne.s32.totalorder %s182, %s183
      %p195 = scmp.eq.s32.totalorder %s47, 1
      %p196 = por %p194, %p195
      %p198 = scmp.ne.s32.totalorder %s183, %s197
      %p199 = scmp.eq.s32.totalorder %s47, 0
      %p200 = por %p198, %p199
      %s202 = sadd.s32 %s201, 1
      %p205 = scmp.eq.s32.totalorder %s41, 1
      %p206 = scmp.ne.s32.totalorder %s201, %s203
      %p207 = scmp.eq.s32.totalorder %s41, 0
      %p208 = por %p206, %p207
      %p209 = scmp.ne.s32.totalorder %s201, %s203
      %p210 = scmp.eq.s32.totalorder %s46, 1
      %p211 = por %p209, %p210
      %p212 = scmp.ne.s32.totalorder %s203, %s204
      %p213 = scmp.eq.s32.totalorder %s46, 0
      %p214 = por %p212, %p213
      %p215 = scmp.ne.s32.totalorder %s203, %s204
      %p216 = scmp.eq.s32.totalorder %s47, 1
      %p217 = por %p215, %p216
      %p219 = scmp.ne.s32.totalorder %s204, %s218
      %p220 = scmp.eq.s32.totalorder %s47, 0
      %p221 = por %p219, %p220
      %s223 = sadd.s32 %s222, 1
      %p226 = scmp.eq.s32.totalorder %s41, 1
      %p227 = scmp.ne.s32.totalorder %s222, %s224
      %p228 = scmp.eq.s32.totalorder %s41, 0
      %p229 = por %p227, %p228
      %p230 = scmp.ne.s32.totalorder %s222, %s224
      %p231 = scmp.eq.s32.totalorder %s46, 1
      %p232 = por %p230, %p231
      %p233 = scmp.ne.s32.totalorder %s224, %s225
      %p234 = scmp.eq.s32.totalorder %s46, 0
      %p235 = por %p233, %p234
      %p236 = scmp.ne.s32.totalorder %s224, %s225
      %p237 = scmp.eq.s32.totalorder %s47, 1
      %p238 = por %p236, %p237
      %p240 = scmp.ne.s32.totalorder %s225, %s239
      %p241 = scmp.eq.s32.totalorder %s47, 0
      %p242 = por %p240, %p241
      %s244 = sadd.s32 %s243, 1
      %p247 = scmp.eq.s32.totalorder %s41, 1
      %p248 = scmp.ne.s32.totalorder %s243, %s245
      %p249 = scmp.eq.s32.totalorder %s41, 0
      %p250 = por %p248, %p249
      %p251 = scmp.ne.s32.totalorder %s243, %s245
      %p252 = scmp.eq.s32.totalorder %s46, 1
      %p253 = por %p251, %p252
      %p254 = scmp.ne.s32.totalorder %s245, %s246
      %p255 = scmp.eq.s32.totalorder %s46, 0
      %p256 = por %p254, %p255
      %p257 = scmp.ne.s32.totalorder %s245, %s246
      %p258 = scmp.eq.s32.totalorder %s47, 1
      %p259 = por %p257, %p258
      %p261 = scmp.ne.s32.totalorder %s246, %s260
      %p262 = scmp.eq.s32.totalorder %s47, 0
      %p263 = por %p261, %p262
      %s265 = sadd.s32 %s264, 1
      %p268 = scmp.eq.s32.totalorder %s41, 1
      %p269 = scmp.ne.s32.totalorder %s264, %s266
      %p270 = scmp.eq.s32.totalorder %s41, 0
      %p271 = por %p269, %p270
      %p272 = scmp.ne.s32.totalorder %s264, %s266
      %p273 = scmp.eq.s32.totalorder %s46, 1
      %p274 = por %p272, %p273
      %p275 = scmp.ne.s32.totalorder %s266, %s267
      %p276 = scmp.eq.s32.totalorder %s46, 0
      %p277 = por %p275, %p276
      %p278 = scmp.ne.s32.totalorder %s266, %s267
      %p279 = scmp.eq.s32.totalorder %s47, 1
      %p280 = por %p278, %p279
      %p282 = scmp.ne.s32.totalorder %s267, %s281
      %p283 = scmp.eq.s32.totalorder %s47, 0
      %p284 = por %p282, %p283
      %s286 = sadd.s32 %s285, 1
      %p289 = scmp.eq.s32.totalorder %s41, 1
      %p290 = scmp.ne.s32.totalorder %s285, %s287
      %p291 = scmp.eq.s32.totalorder %s41, 0
      %p292 = por %p290, %p291
      %p293 = scmp.ne.s32.totalorder %s285, %s287
      %p294 = scmp.eq.s32.totalorder %s46, 1
      %p295 = por %p293, %p294
      %p296 = scmp.ne.s32.totalorder %s287, %s288
      %p297 = scmp.eq.s32.totalorder %s46, 0
      %p298 = por %p296, %p297
      %p299 = scmp.ne.s32.totalorder %s287, %s288
      %p300 = scmp.eq.s32.totalorder %s47, 1
      %p301 = por %p299, %p300
      %p303 = scmp.ne.s32.totalorder %s288, %s302
      %p304 = scmp.eq.s32.totalorder %s47, 0
      %p305 = por %p303, %p304
      %s307 = sadd.s32 %s306, 1
      %p310 = scmp.eq.s32.totalorder %s41, 1
      %p311 = scmp.ne.s32.totalorder %s306, %s308
      %p312 = scmp.eq.s32.totalorder %s41, 0
      %p313 = por %p311, %p312
      %p314 = scmp.ne.s32.totalorder %s306, %s308
      %p315 = scmp.eq.s32.totalorder %s46, 1
      %p316 = por %p314, %p315
      %p317 = scmp.ne.s32.totalorder %s308, %s309
      %p318 = scmp.eq.s32.totalorder %s46, 0
      %p319 = por %p317, %p318
      %p320 = scmp.ne.s32.totalorder %s308, %s309
      %p321 = scmp.eq.s32.totalorder %s47, 1
      %p322 = por %p320, %p321
      %p324 = scmp.ne.s32.totalorder %s309, %s323
      %p325 = scmp.eq.s32.totalorder %s47, 0
      %p326 = por %p324, %p325
      %s328 = sadd.s32 %s327, 1
      %p331 = scmp.eq.s32.totalorder %s41, 1
      %p332 = scmp.ne.s32.totalorder %s327, %s329
      %p333 = scmp.eq.s32.totalorder %s41, 0
      %p334 = por %p332, %p333
      %p335 = scmp.ne.s32.totalorder %s327, %s329
      %p336 = scmp.eq.s32.totalorder %s46, 1
      %p337 = por %p335, %p336
      %p338 = scmp.ne.s32.totalorder %s329, %s330
      %p339 = scmp.eq.s32.totalorder %s46, 0
      %p340 = por %p338, %p339
      %p341 = scmp.ne.s32.totalorder %s329, %s330
      %p342 = scmp.eq.s32.totalorder %s47, 1
      %p343 = por %p341, %p342
      %p345 = scmp.ne.s32.totalorder %s330, %s344
      %p346 = scmp.eq.s32.totalorder %s47, 0
      %p347 = por %p345, %p346
      %s349 = sadd.s32 %s348, 1
      %p352 = scmp.eq.s32.totalorder %s41, 1
      %p353 = scmp.ne.s32.totalorder %s348, %s350
      %p354 = scmp.eq.s32.totalorder %s41, 0
      %p355 = por %p353, %p354
      %p356 = scmp.ne.s32.totalorder %s348, %s350
      %p357 = scmp.eq.s32.totalorder %s46, 1
      %p358 = por %p356, %p357
      %p359 = scmp.ne.s32.totalorder %s350, %s351
      %p360 = scmp.eq.s32.totalorder %s46, 0
      %p361 = por %p359, %p360
      %p362 = scmp.ne.s32.totalorder %s350, %s351
      %p363 = scmp.eq.s32.totalorder %s47, 1
      %p364 = por %p362, %p363
      %p366 = scmp.ne.s32.totalorder %s351, %s365
      %p367 = scmp.eq.s32.totalorder %s47, 0
      %p368 = por %p366, %p367
      %s370 = sadd.s32 %s369, 1
      %p373 = scmp.eq.s32.totalorder %s41, 1
      %p374 = scmp.ne.s32.totalorder %s369, %s371
      %p375 = scmp.eq.s32.totalorder %s41, 0
      %p376 = por %p374, %p375
      %p377 = scmp.ne.s32.totalorder %s369, %s371
      %p378 = scmp.eq.s32.totalorder %s46, 1
      %p379 = por %p377, %p378
      %p380 = scmp.ne.s32.totalorder %s371, %s372
      %p381 = scmp.eq.s32.totalorder %s46, 0
      %p382 = por %p380, %p381
      %p383 = scmp.ne.s32.totalorder %s371, %s372
      %p384 = scmp.eq.s32.totalorder %s47, 1
      %p385 = por %p383, %p384
      %p387 = scmp.ne.s32.totalorder %s372, %s386
      %p388 = scmp.eq.s32.totalorder %s47, 0
      %p389 = por %p387, %p388
      %s391 = sadd.s32 %s390, 1
      %p394 = scmp.eq.s32.totalorder %s41, 1
      %p395 = scmp.ne.s32.totalorder %s390, %s392
      %p396 = scmp.eq.s32.totalorder %s41, 0
      %p397 = por %p395, %p396
      %p398 = scmp.ne.s32.totalorder %s390, %s392
      %p399 = scmp.eq.s32.totalorder %s46, 1
      %p400 = por %p398, %p399
      %p401 = scmp.ne.s32.totalorder %s392, %s393
      %p402 = scmp.eq.s32.totalorder %s46, 0
      %p403 = por %p401, %p402
      %p404 = scmp.ne.s32.totalorder %s392, %s393
      %p405 = scmp.eq.s32.totalorder %s47, 1
      %p406 = por %p404, %p405
      %p408 = scmp.ne.s32.totalorder %s393, %s407
      %p409 = scmp.eq.s32.totalorder %s47, 0
      %p410 = por %p408, %p409
      %s412 = sadd.s32 %s411, 1
      %p415 = scmp.eq.s32.totalorder %s41, 1
      %p416 = scmp.ne.s32.totalorder %s411, %s413
      %p417 = scmp.eq.s32.totalorder %s41, 0
      %p418 = por %p416, %p417
      %p419 = scmp.ne.s32.totalorder %s411, %s413
      %p420 = scmp.eq.s32.totalorder %s46, 1
      %p421 = por %p419, %p420
      %p422 = scmp.ne.s32.totalorder %s413, %s414
      %p423 = scmp.eq.s32.totalorder %s46, 0
      %p424 = por %p422, %p423
      %p425 = scmp.ne.s32.totalorder %s413, %s414
      %p426 = scmp.eq.s32.totalorder %s47, 1
      %p427 = por %p425, %p426
      %p429 = scmp.ne.s32.totalorder %s414, %s428
      %p430 = scmp.eq.s32.totalorder %s47, 0
      %p431 = por %p429, %p430
      %s433 = sadd.s32 %s432, 1
      %p436 = scmp.eq.s32.totalorder %s41, 1
      %p437 = scmp.ne.s32.totalorder %s432, %s434
      %p438 = scmp.eq.s32.totalorder %s41, 0
      %p439 = por %p437, %p438
      %p440 = scmp.ne.s32.totalorder %s432, %s434
      %p441 = scmp.eq.s32.totalorder %s46, 1
      %p442 = por %p440, %p441
      %p443 = scmp.ne.s32.totalorder %s434, %s435
      %p444 = scmp.eq.s32.totalorder %s46, 0
      %p445 = por %p443, %p444
      %p446 = scmp.ne.s32.totalorder %s434, %s435
      %p447 = scmp.eq.s32.totalorder %s47, 1
      %p448 = por %p446, %p447
      %p450 = scmp.ne.s32.totalorder %s435, %s449
      %p451 = scmp.eq.s32.totalorder %s47, 0
      %p452 = por %p450, %p451
      %s454 = sadd.s32 %s453, 1
      %p457 = scmp.eq.s32.totalorder %s41, 1
      %p458 = scmp.ne.s32.totalorder %s453, %s455
      %p459 = scmp.eq.s32.totalorder %s41, 0
      %p460 = por %p458, %p459
      %p461 = scmp.ne.s32.totalorder %s453, %s455
      %p462 = scmp.eq.s32.totalorder %s46, 1
      %p463 = por %p461, %p462
      %p464 = scmp.ne.s32.totalorder %s455, %s456
      %p465 = scmp.eq.s32.totalorder %s46, 0
      %p466 = por %p464, %p465
      %p467 = scmp.ne.s32.totalorder %s455, %s456
      %p468 = scmp.eq.s32.totalorder %s47, 1
      %p469 = por %p467, %p468
      %p471 = scmp.ne.s32.totalorder %s456, %s470
      %p472 = scmp.eq.s32.totalorder %s47, 0
      %p473 = por %p471, %p472
      %s475 = sadd.s32 %s474, 1
      %p478 = scmp.eq.s32.totalorder %s41, 1
      %p479 = scmp.ne.s32.totalorder %s474, %s476
      %p480 = scmp.eq.s32.totalorder %s41, 0
      %p481 = por %p479, %p480
      %p482 = scmp.ne.s32.totalorder %s474, %s476
      %p483 = scmp.eq.s32.totalorder %s46, 1
      %p484 = por %p482, %p483
      %p485 = scmp.ne.s32.totalorder %s476, %s477
      %p486 = scmp.eq.s32.totalorder %s46, 0
      %p487 = por %p485, %p486
      %p488 = scmp.ne.s32.totalorder %s476, %s477
      %p489 = scmp.eq.s32.totalorder %s47, 1
      %p490 = por %p488, %p489
      %p492 = scmp.ne.s32.totalorder %s477, %s491
      %p493 = scmp.eq.s32.totalorder %s47, 0
      %p494 = por %p492, %p493
      %s496 = sadd.s32 %s495, 1
      %p499 = scmp.eq.s32.totalorder %s41, 1
      %p500 = scmp.ne.s32.totalorder %s495, %s497
      %p501 = scmp.eq.s32.totalorder %s41, 0
      %p502 = por %p500, %p501
      %p503 = scmp.ne.s32.totalorder %s495, %s497
      %p504 = scmp.eq.s32.totalorder %s46, 1
      %p505 = por %p503, %p504
      %p506 = scmp.ne.s32.totalorder %s497, %s498
      %p507 = scmp.eq.s32.totalorder %s46, 0
      %p508 = por %p506, %p507
      %p509 = scmp.ne.s32.totalorder %s497, %s498
      %p510 = scmp.eq.s32.totalorder %s47, 1
      %p511 = por %p509, %p510
      %p513 = scmp.ne.s32.totalorder %s498, %s512
      %p514 = scmp.eq.s32.totalorder %s47, 0
      %p515 = por %p513, %p514
      %s517 = sadd.s32 %s516, 1
      %p520 = scmp.eq.s32.totalorder %s41, 1
      %p521 = scmp.ne.s32.totalorder %s516, %s518
      %p522 = scmp.eq.s32.totalorder %s41, 0
      %p523 = por %p521, %p522
      %p524 = scmp.ne.s32.totalorder %s516, %s518
      %p525 = scmp.eq.s32.totalorder %s46, 1
      %p526 = por %p524, %p525
      %p527 = scmp.ne.s32.totalorder %s518, %s519
      %p528 = scmp.eq.s32.totalorder %s46, 0
      %p529 = por %p527, %p528
      %p530 = scmp.ne.s32.totalorder %s518, %s519
      %p531 = scmp.eq.s32.totalorder %s47, 1
      %p532 = por %p530, %p531
      %p534 = scmp.ne.s32.totalorder %s519, %s533
      %p535 = scmp.eq.s32.totalorder %s47, 0
      %p536 = por %p534, %p535
      %s538 = sadd.s32 %s537, 1
      %p541 = scmp.eq.s32.totalorder %s41, 1
      %p542 = scmp.ne.s32.totalorder %s537, %s539
      %p543 = scmp.eq.s32.totalorder %s41, 0
      %p544 = por %p542, %p543
      %p545 = scmp.ne.s32.totalorder %s537, %s539
      %p546 = scmp.eq.s32.totalorder %s46, 1
      %p547 = por %p545, %p546
      %p548 = scmp.ne.s32.totalorder %s539, %s540
      %p549 = scmp.eq.s32.totalorder %s46, 0
      %p550 = por %p548, %p549
      %p551 = scmp.ne.s32.totalorder %s539, %s540
      %p552 = scmp.eq.s32.totalorder %s47, 1
      %p553 = por %p551, %p552
      %p555 = scmp.ne.s32.totalorder %s540, %s554
      %p556 = scmp.eq.s32.totalorder %s47, 0
      %p557 = por %p555, %p556
      %s558 = ssub.s32 %s41, %s48
      %p559 = scmp.eq.s32.totalorder %s558, 0
      %s561 = sadd.s32 %s560, 1
      %s562 = scalar_select %p559, %s560, %s561
      %p565 = pneg %p559
      %p566 = scmp.eq.s32.totalorder %s41, 1
      %p567 = por %p565, %p566
      %p568 = scmp.ne.s32.totalorder %s560, %s563
      %p569 = scmp.eq.s32.totalorder %s41, 0
      %p570 = por %p568, %p569
      %p571 = scmp.ne.s32.totalorder %s560, %s563
      %p572 = scmp.eq.s32.totalorder %s46, 1
      %p573 = por %p571, %p572
      %p574 = scmp.ne.s32.totalorder %s563, %s564
      %p575 = scmp.eq.s32.totalorder %s46, 0
      %p576 = por %p574, %p575
      %p577 = scmp.ne.s32.totalorder %s563, %s564
      %p578 = scmp.eq.s32.totalorder %s47, 1
      %p579 = por %p577, %p578
      %p581 = scmp.ne.s32.totalorder %s564, %s580
      %p582 = scmp.eq.s32.totalorder %s47, 0
      %p583 = por %p581, %p582
      %p584 = scmp.le.s32.totalorder 1, %s41
      %p585 = scmp.lt.s32.totalorder %s41, 3
      %p586 = pnand %p584, %p585
      %p587 = pneg %p586
      // Predicated region
      $region9: #{forward.1} parent=5 // pred_check
        _
      $region10: #{forward.1} parent=5 // pred_check_branch
        %589 = sbr.rel (%p586) target = $region12
      $region11: #{forward.1} parent=5 // pred_region
        %s590 = ssub.s32 %s41, 1
        // Predicated region
        $region13: #{forward.1} parent=11 // pred_check
          %p591 = pneg %p88
        $region14: #{forward.1} parent=11 // pred_check_branch
          %593 = sbr.rel (%p591) target = $region16
        $region15: #{forward.1} parent=11 // pred_region
          %s595 = ssub.s32 64, 64
          %596 = vsyncadd [#allocation11], %s595
          %s598 = sshll.u32 [#allocation10], 4
          %s599 = int_to_ptr.vmem [resolvable:$true] %s598
          %601 = dma.hbm_to_vmem [thread:$0]  %s1, 64, %s599, [#allocation11]
        $region16: #{forward.1} parent=11 // pred_fallthru
          _
        // Predicated region
        $region17: #{forward.1} parent=11 // pred_check
          %p602 = pneg %p109
        $region18: #{forward.1} parent=11 // pred_check_branch
          %604 = sbr.rel (%p602) target = $region20
        $region19: #{forward.1} parent=11 // pred_region
          %s606 = ssub.s32 16, 16
          %607 = vsyncadd [#allocation14], %s606
          %s609 = sshll.u32 [#allocation13], 4
          %s610 = int_to_ptr.vmem [resolvable:$true] %s609
          %612 = dma.hbm_to_vmem [thread:$0]  %s2, 16, %s610, [#allocation14]
        $region20: #{forward.1} parent=11 // pred_fallthru
          _
        // Predicated region
        $region21: #{forward.1} parent=11 // pred_check
          %p613 = pneg %p130
        $region22: #{forward.1} parent=11 // pred_check_branch
          %615 = sbr.rel (%p613) target = $region24
        $region23: #{forward.1} parent=11 // pred_region
          %s617 = ssub.s32 1536, 1536
          %618 = vsyncadd [#allocation14], %s617
          %s619 = sshll.u32 [#allocation15], 4
          %s620 = int_to_ptr.vmem [resolvable:$true] %s619
          %625 = dma.hbm_to_vmem [thread:$0]  %s3, 1536, %s620, [#allocation14], 64, 64, 4
        $region24: #{forward.1} parent=11 // pred_fallthru
          _
        // Predicated region
        $region25: #{forward.1} parent=11 // pred_check
          %p626 = pneg %p151
        $region26: #{forward.1} parent=11 // pred_check_branch
          %628 = sbr.rel (%p626) target = $region28
        $region27: #{forward.1} parent=11 // pred_region
          _
        $region28: #{forward.1} parent=11 // pred_fallthru
          _
        // Predicated region
        $region29: #{forward.1} parent=11 // pred_check
          %p629 = pneg %p172
        $region30: #{forward.1} parent=11 // pred_check_branch
          %631 = sbr.rel (%p629) target = $region32
        $region31: #{forward.1} parent=11 // pred_region
          %s633 = ssub.s32 1536, 1536
          %634 = vsyncadd [#allocation17], %s633
          %s635 = sshll.u32 [#allocation16], 4
          %s636 = int_to_ptr.vmem [resolvable:$true] %s635
          %641 = dma.hbm_to_vmem [thread:$0]  %s5, 1536, %s636, [#allocation17], 64, 64, 4
        $region32: #{forward.1} parent=11 // pred_fallthru
          _
        // Predicated region
        $region33: #{forward.1} parent=11 // pred_check
          %p642 = pneg %p193
        $region34: #{forward.1} parent=11 // pred_check_branch
          %644 = sbr.rel (%p642) target = $region36
        $region35: #{forward.1} parent=11 // pred_region
          _
        $region36: #{forward.1} parent=11 // pred_fallthru
          _
        // Predicated region
        $region37: #{forward.1} parent=11 // pred_check
          %p645 = pneg %p214
        $region38: #{forward.1} parent=11 // pred_check_branch
          %647 = sbr.rel (%p645) target = $region40
        $region39: #{forward.1} parent=11 // pred_region
          %s649 = ssub.s32 1536, 1536
          %650 = vsyncadd [#allocation17], %s649
          %s651 = sshll.u32 [#allocation18], 4
          %s652 = int_to_ptr.vmem [resolvable:$true] %s651
          %657 = dma.hbm_to_vmem [thread:$0]  %s7, 1536, %s652, [#allocation17], 64, 64, 4
        $region40: #{forward.1} parent=11 // pred_fallthru
          _
        // Predicated region
        $region41: #{forward.1} parent=11 // pred_check
          %p658 = pneg %p235
        $region42: #{forward.1} parent=11 // pred_check_branch
          %660 = sbr.rel (%p658) target = $region44
        $region43: #{forward.1} parent=11 // pred_region
          _
        $region44: #{forward.1} parent=11 // pred_fallthru
          _
        // Predicated region
        $region45: #{forward.1} parent=11 // pred_check
          %p661 = pneg %p256
        $region46: #{forward.1} parent=11 // pred_check_branch
          %663 = sbr.rel (%p661) target = $region48
        $region47: #{forward.1} parent=11 // pred_region
          %s665 = ssub.s32 3584, 3584
          %666 = vsyncadd [#allocation20], %s665
          %s667 = sshll.u32 [#allocation19], 4
          %s668 = int_to_ptr.vmem [resolvable:$true] %s667
          %673 = dma.hbm_to_vmem [thread:$0]  %s9, 3584, %s668, [#allocation20], 64, 64, 4
        $region48: #{forward.1} parent=11 // pred_fallthru
          _
        // Predicated region
        $region49: #{forward.1} parent=11 // pred_check
          %p674 = pneg %p277
        $region50: #{forward.1} parent=11 // pred_check_branch
          %676 = sbr.rel (%p674) target = $region52
        $region51: #{forward.1} parent=11 // pred_region
          _
        $region52: #{forward.1} parent=11 // pred_fallthru
          _
        // Predicated region
        $region53: #{forward.1} parent=11 // pred_check
          %p677 = pneg %p298
        $region54: #{forward.1} parent=11 // pred_check_branch
          %679 = sbr.rel (%p677) target = $region56
        $region55: #{forward.1} parent=11 // pred_region
          %s681 = ssub.s32 256, 256
          %682 = vsyncadd [#allocation20], %s681
          %s683 = sshll.u32 [#allocation21], 4
          %s684 = int_to_ptr.vmem [resolvable:$true] %s683
          %689 = dma.hbm_to_vmem [thread:$0]  %s11, 256, %s684, [#allocation20], 64, 64, 4
        $region56: #{forward.1} parent=11 // pred_fallthru
          _
        // Predicated region
        $region57: #{forward.1} parent=11 // pred_check
          %p690 = pneg %p319
        $region58: #{forward.1} parent=11 // pred_check_branch
          %692 = sbr.rel (%p690) target = $region60
        $region59: #{forward.1} parent=11 // pred_region
          %s694 = ssub.s32 6144, 6144
          %695 = vsyncadd [#allocation23], %s694
          %s696 = sshll.u32 [#allocation22], 4
          %s697 = int_to_ptr.vmem [resolvable:$true] %s696
          %702 = dma.hbm_to_vmem [thread:$0]  %s12, 6144, %s697, [#allocation23], 128, 128, 8
        $region60: #{forward.1} parent=11 // pred_fallthru
          _
        // Predicated region
        $region61: #{forward.1} parent=11 // pred_check
          %p703 = pneg %p340
        $region62: #{forward.1} parent=11 // pred_check_branch
          %705 = sbr.rel (%p703) target = $region64
        $region63: #{forward.1} parent=11 // pred_region
          _
        $region64: #{forward.1} parent=11 // pred_fallthru
          _
        // Predicated region
        $region65: #{forward.1} parent=11 // pred_check
          %p706 = pneg %p361
        $region66: #{forward.1} parent=11 // pred_check_branch
          %708 = sbr.rel (%p706) target = $region68
        $region67: #{forward.1} parent=11 // pred_region
          %s710 = ssub.s32 14336, 14336
          %711 = vsyncadd [#allocation23], %s710
          %s712 = sshll.u32 [#allocation24], 4
          %s713 = int_to_ptr.vmem [resolvable:$true] %s712
          %718 = dma.hbm_to_vmem [thread:$0]  %s14, 14336, %s713, [#allocation23], 128, 128, 8
        $region68: #{forward.1} parent=11 // pred_fallthru
          _
        // Predicated region
        $region69: #{forward.1} parent=11 // pred_check
          %p719 = pneg %p382
        $region70: #{forward.1} parent=11 // pred_check_branch
          %721 = sbr.rel (%p719) target = $region72
        $region71: #{forward.1} parent=11 // pred_region
          _
        $region72: #{forward.1} parent=11 // pred_fallthru
          _
        // Predicated region
        $region73: #{forward.1} parent=11 // pred_check
          %p722 = pneg %p403
        $region74: #{forward.1} parent=11 // pred_check_branch
          %724 = sbr.rel (%p722) target = $region76
        $region75: #{forward.1} parent=11 // pred_region
          %s726 = ssub.s32 128, 128
          %727 = vsyncadd [#allocation26], %s726
          %s728 = sshll.u32 [#allocation25], 4
          %s729 = int_to_ptr.vmem [resolvable:$true] %s728
          %734 = dma.hbm_to_vmem [thread:$0]  %s16, 128, %s729, [#allocation26], 64, 64, 4
        $region76: #{forward.1} parent=11 // pred_fallthru
          _
        // Predicated region
        $region77: #{forward.1} parent=11 // pred_check
          %p735 = pneg %p424
        $region78: #{forward.1} parent=11 // pred_check_branch
          %737 = sbr.rel (%p735) target = $region80
        $region79: #{forward.1} parent=11 // pred_region
          %s739 = ssub.s32 24576, 24576
          %740 = vsyncadd [#allocation26], %s739
          %s741 = sshll.u32 [#allocation27], 4
          %s742 = int_to_ptr.vmem [resolvable:$true] %s741
          %747 = dma.hbm_to_vmem [thread:$0]  %s17, 24576, %s742, [#allocation26], 256, 256, 16
        $region80: #{forward.1} parent=11 // pred_fallthru
          _
        // Predicated region
        $region81: #{forward.1} parent=11 // pred_check
          %p748 = pneg %p445
        $region82: #{forward.1} parent=11 // pred_check_branch
          %750 = sbr.rel (%p748) target = $region84
        $region83: #{forward.1} parent=11 // pred_region
          _
        $region84: #{forward.1} parent=11 // pred_fallthru
          _
        // Predicated region
        $region85: #{forward.1} parent=11 // pred_check
          %p751 = pneg %p466
        $region86: #{forward.1} parent=11 // pred_check_branch
          %753 = sbr.rel (%p751) target = $region88
        $region87: #{forward.1} parent=11 // pred_region
          %s755 = ssub.s32 57344, 57344
          %756 = vsyncadd [#allocation29], %s755
          %s757 = sshll.u32 [#allocation28], 4
          %s758 = int_to_ptr.vmem [resolvable:$true] %s757
          %763 = dma.hbm_to_vmem [thread:$0]  %s19, 57344, %s758, [#allocation29], 256, 256, 16
        $region88: #{forward.1} parent=11 // pred_fallthru
          _
        // Predicated region
        $region89: #{forward.1} parent=11 // pred_check
          %p764 = pneg %p487
        $region90: #{forward.1} parent=11 // pred_check_branch
          %766 = sbr.rel (%p764) target = $region92
        $region91: #{forward.1} parent=11 // pred_region
          _
        $region92: #{forward.1} parent=11 // pred_fallthru
          _
        // Predicated region
        $region93: #{forward.1} parent=11 // pred_check
          %p767 = pneg %p508
        $region94: #{forward.1} parent=11 // pred_check_branch
          %769 = sbr.rel (%p767) target = $region96
        $region95: #{forward.1} parent=11 // pred_region
          %s771 = ssub.s32 64, 64
          %772 = vsyncadd [#allocation29], %s771
          %s774 = sshll.u32 [#allocation30], 4
          %s775 = int_to_ptr.vmem [resolvable:$true] %s774
          %777 = dma.hbm_to_vmem [thread:$0]  %s21, 64, %s775, [#allocation29]
        $region96: #{forward.1} parent=11 // pred_fallthru
          _
        // Predicated region
        $region97: #{forward.1} parent=11 // pred_check
          %p778 = pneg %p529
        $region98: #{forward.1} parent=11 // pred_check_branch
          %780 = sbr.rel (%p778) target = $region100
        $region99: #{forward.1} parent=11 // pred_region
          %s782 = ssub.s32 4096, 4096
          %783 = vsyncadd [#allocation32], %s782
          %s784 = sshll.u32 [#allocation31], 4
          %s785 = int_to_ptr.vmem [resolvable:$true] %s784
          %790 = dma.hbm_to_vmem [thread:$0]  %s22, 4096, %s785, [#allocation32], 64, 64, 4
        $region100: #{forward.1} parent=11 // pred_fallthru
          _
        // Predicated region
        $region101: #{forward.1} parent=11 // pred_check
          %p791 = pneg %p550
        $region102: #{forward.1} parent=11 // pred_check_branch
          %793 = sbr.rel (%p791) target = $region104
        $region103: #{forward.1} parent=11 // pred_region
          %s795 = ssub.s32 16, 16
          %796 = vsyncadd [#allocation32], %s795
          %s798 = sshll.u32 [#allocation33], 4
          %s799 = int_to_ptr.vmem [resolvable:$true] %s798
          %801 = dma.hbm_to_vmem [thread:$0]  %s23, 16, %s799, [#allocation32]
        $region104: #{forward.1} parent=11 // pred_fallthru
          _
      $region12: #{forward.1} parent=5 // pred_fallthru
        _
      %p802 = scmp.lt.s32.totalorder %s41, 2
      // Predicated region
      $region105: #{forward.1} parent=5 // pred_check
        %p803 = pneg %p802
      $region106: #{forward.1} parent=5 // pred_check_branch
        %805 = sbr.rel (%p803) target = $region108
      $region107: #{forward.1} parent=5 // pred_region
        // Predicated region
        $region109: #{forward.1} parent=107 // pred_check
          %p806 = pneg %p61
        $region110: #{forward.1} parent=107 // pred_check_branch
          %808 = sbr.rel (%p806) target = $region112
        $region111: #{forward.1} parent=107 // pred_region
          %p809 = scmp.lt.s32.totalorder %s41, 1
          %s810 = scalar_select %p809, %s41, 1
          %s811 = smul.addr %s810, 8
          %s812 = smul.addr %s811, 4
          %s813 = scalar_lea.vmem %s0, %s812
        $region112: #{forward.1} parent=107 // pred_fallthru
          _
      $region108: #{forward.1} parent=5 // pred_fallthru
        _
      %p814 = scmp.le.s32.totalorder 1, %s41
      %p815 = scmp.lt.s32.totalorder %s41, 3
      %p816 = pnand %p814, %p815
      %p817 = pneg %p816
      // Predicated region
      $region113: #{forward.1} parent=5 // pred_check
        _
      $region114: #{forward.1} parent=5 // pred_check_branch
        %819 = sbr.rel (%p816) target = $region116
      $region115: #{forward.1} parent=5 // pred_region
        %s820 = ssub.s32 %s41, 1
        // Predicated region
        $region117: #{forward.1} parent=115 // pred_check
          %p821 = pneg %p88
        $region118: #{forward.1} parent=115 // pred_check_branch
          %823 = sbr.rel (%p821) target = $region120
        $region119: #{forward.1} parent=115 // pred_region
          %824 = dma.done [#allocation11], 64
        $region120: #{forward.1} parent=115 // pred_fallthru
          _
        // Predicated region
        $region121: #{forward.1} parent=115 // pred_check
          %p825 = pneg %p109
        $region122: #{forward.1} parent=115 // pred_check_branch
          %827 = sbr.rel (%p825) target = $region124
        $region123: #{forward.1} parent=115 // pred_region
          %828 = dma.done [#allocation14], 16
        $region124: #{forward.1} parent=115 // pred_fallthru
          _
        // Predicated region
        $region125: #{forward.1} parent=115 // pred_check
          %p829 = pneg %p130
        $region126: #{forward.1} parent=115 // pred_check_branch
          %831 = sbr.rel (%p829) target = $region128
        $region127: #{forward.1} parent=115 // pred_region
          %832 = dma.done [#allocation14], 1536
        $region128: #{forward.1} parent=115 // pred_fallthru
          _
        // Predicated region
        $region129: #{forward.1} parent=115 // pred_check
          %p833 = pneg %p172
        $region130: #{forward.1} parent=115 // pred_check_branch
          %835 = sbr.rel (%p833) target = $region132
        $region131: #{forward.1} parent=115 // pred_region
          %836 = dma.done [#allocation17], 1536
        $region132: #{forward.1} parent=115 // pred_fallthru
          _
        // Predicated region
        $region133: #{forward.1} parent=115 // pred_check
          %p837 = pneg %p214
        $region134: #{forward.1} parent=115 // pred_check_branch
          %839 = sbr.rel (%p837) target = $region136
        $region135: #{forward.1} parent=115 // pred_region
          %840 = dma.done [#allocation17], 1536
        $region136: #{forward.1} parent=115 // pred_fallthru
          _
        // Predicated region
        $region137: #{forward.1} parent=115 // pred_check
          %p841 = pneg %p256
        $region138: #{forward.1} parent=115 // pred_check_branch
          %843 = sbr.rel (%p841) target = $region140
        $region139: #{forward.1} parent=115 // pred_region
          %844 = dma.done [#allocation20], 3584
        $region140: #{forward.1} parent=115 // pred_fallthru
          _
        // Predicated region
        $region141: #{forward.1} parent=115 // pred_check
          %p845 = pneg %p298
        $region142: #{forward.1} parent=115 // pred_check_branch
          %847 = sbr.rel (%p845) target = $region144
        $region143: #{forward.1} parent=115 // pred_region
          %848 = dma.done [#allocation20], 256
        $region144: #{forward.1} parent=115 // pred_fallthru
          _
        // Predicated region
        $region145: #{forward.1} parent=115 // pred_check
          %p849 = pneg %p319
        $region146: #{forward.1} parent=115 // pred_check_branch
          %851 = sbr.rel (%p849) target = $region148
        $region147: #{forward.1} parent=115 // pred_region
          %852 = dma.done [#allocation23], 6144
        $region148: #{forward.1} parent=115 // pred_fallthru
          _
        // Predicated region
        $region149: #{forward.1} parent=115 // pred_check
          %p853 = pneg %p361
        $region150: #{forward.1} parent=115 // pred_check_branch
          %855 = sbr.rel (%p853) target = $region152
        $region151: #{forward.1} parent=115 // pred_region
          %856 = dma.done [#allocation23], 14336
        $region152: #{forward.1} parent=115 // pred_fallthru
          _
        // Predicated region
        $region153: #{forward.1} parent=115 // pred_check
          %p857 = pneg %p403
        $region154: #{forward.1} parent=115 // pred_check_branch
          %859 = sbr.rel (%p857) target = $region156
        $region155: #{forward.1} parent=115 // pred_region
          %860 = dma.done [#allocation26], 128
        $region156: #{forward.1} parent=115 // pred_fallthru
          _
        // Predicated region
        $region157: #{forward.1} parent=115 // pred_check
          %p861 = pneg %p424
        $region158: #{forward.1} parent=115 // pred_check_branch
          %863 = sbr.rel (%p861) target = $region160
        $region159: #{forward.1} parent=115 // pred_region
          %864 = dma.done [#allocation26], 24576
        $region160: #{forward.1} parent=115 // pred_fallthru
          _
        // Predicated region
        $region161: #{forward.1} parent=115 // pred_check
          %p865 = pneg %p466
        $region162: #{forward.1} parent=115 // pred_check_branch
          %867 = sbr.rel (%p865) target = $region164
        $region163: #{forward.1} parent=115 // pred_region
          %868 = dma.done [#allocation29], 57344
        $region164: #{forward.1} parent=115 // pred_fallthru
          _
        // Predicated region
        $region165: #{forward.1} parent=115 // pred_check
          %p869 = pneg %p508
        $region166: #{forward.1} parent=115 // pred_check_branch
          %871 = sbr.rel (%p869) target = $region168
        $region167: #{forward.1} parent=115 // pred_region
          %872 = dma.done [#allocation29], 64
        $region168: #{forward.1} parent=115 // pred_fallthru
          _
        // Predicated region
        $region169: #{forward.1} parent=115 // pred_check
          %p873 = pneg %p529
        $region170: #{forward.1} parent=115 // pred_check_branch
          %875 = sbr.rel (%p873) target = $region172
        $region171: #{forward.1} parent=115 // pred_region
          %876 = dma.done [#allocation32], 4096
        $region172: #{forward.1} parent=115 // pred_fallthru
          _
        // Predicated region
        $region173: #{forward.1} parent=115 // pred_check
          %p877 = pneg %p550
        $region174: #{forward.1} parent=115 // pred_check_branch
          %879 = sbr.rel (%p877) target = $region176
        $region175: #{forward.1} parent=115 // pred_region
          %880 = dma.done [#allocation32], 16
        $region176: #{forward.1} parent=115 // pred_fallthru
          _
        %p881 = scmp.lt.s32.totalorder %s46, 1
        %s882 = scalar_select %p881, %s46, 1
        %s883 = smul.addr %s882, 8
        %s884 = smul.addr %s883, 4
        %s885 = scalar_lea.vmem %s0, %s884
        %p886 = pneg %p67
        %p887 = pneg %p64
        %p888 = pneg %p88
        %p889 = pneg %p85
        %p890 = pneg %p109
        %p891 = pneg %p106
        %p892 = pneg %p130
        %p893 = pneg %p127
        %p894 = pneg %p151
        %p895 = pneg %p148
        %p896 = pneg %p172
        %p897 = pneg %p169
        %p898 = pneg %p193
        %p899 = pneg %p190
        %p900 = pneg %p214
        %p901 = pneg %p211
        %p902 = pneg %p235
        %p903 = pneg %p232
        %p904 = pneg %p256
        %p905 = pneg %p253
        %p906 = pneg %p277
        %p907 = pneg %p274
        %p908 = pneg %p298
        %p909 = pneg %p295
        %p910 = pneg %p319
        %p911 = pneg %p316
        %p912 = pneg %p340
        %p913 = pneg %p337
        %p914 = pneg %p361
        %p915 = pneg %p358
        %p916 = pneg %p382
        %p917 = pneg %p379
        %p918 = pneg %p403
        %p919 = pneg %p400
        %p920 = pneg %p424
        %p921 = pneg %p421
        %p922 = pneg %p445
        %p923 = pneg %p442
        %p924 = pneg %p466
        %p925 = pneg %p463
        %p926 = pneg %p487
        %p927 = pneg %p484
        %p928 = pneg %p508
        %p929 = pneg %p505
        %p930 = pneg %p529
        %p931 = pneg %p526
        %p932 = pneg %p550
        %p933 = pneg %p547
        %p934 = pneg %p576
        %p935 = pneg %p573
        %s936 = sand.u32 %s563, 1
        %s937 = scalar_lea.sflag [#allocation12], %s936
        %s938 = sand.u32 %s563, 1
        %s939 = smul.addr %s938, 8
        %s940 = scalar_lea.vmem [#allocation34], %s939
        %p941 = scmp.lt.s32.totalorder %s46, 1
        %s942 = scalar_select %p941, %s46, 1
        %s943 = smul.addr %s942, 8
        %s944 = smul.addr %s943, 4
        %s945 = scalar_lea.vmem %s0, %s944
        %v947 = vld [vmem:[%s945] sm:$0xf]
        %v948 = vld [vmem:[%s945 + $0x4] sm:$0xf]
        %v949 = vld [vmem:[%s945 + $0x8] sm:$0xf]
        %v950 = vld [vmem:[%s945 + $0xc] sm:$0xf]
        %v951 = vld [vmem:[%s945 + $0x10] sm:$0xf]
        %v952 = vld [vmem:[%s945 + $0x14] sm:$0xf]
        %v953 = vld [vmem:[%s945 + $0x18] sm:$0xf]
        %v954 = vld [vmem:[%s945 + $0x1c] sm:$0xf]
        %v955 = vld [vmem:[#allocation10] sm:$0xf]
        %v956 = vld [vmem:[#allocation13] sm:$0x1]
        %v958 = vlaneseq
        %v959 = vshrl.u32 %v958, 7
        %v960 = vsub.s32 0, %v959
        %v961 = vrot.slane %v956, %v960
        %v971 = vunpack.c.l.b16 %v947
        %v972 = vunpack.c.l.b16 %v948
        %v973 = vunpack.c.l.b16 %v949
        %v974 = vunpack.c.l.b16 %v950
        %v975 = vunpack.c.l.b16 %v951
        %v976 = vunpack.c.l.b16 %v952
        %v977 = vunpack.c.l.b16 %v953
        %v978 = vunpack.c.l.b16 %v954
        %v979 = vpack.c.b16 %v972, %v971
        %v980 = vpack.c.b16 %v974, %v973
        %v981 = vpack.c.b16 %v976, %v975
        %v982 = vpack.c.b16 %v978, %v977
        %vm983 = vcmask 64512
        %v985 = vsel %vm983, %v979, 0
        %v988 = vsel %vm983, %v980, 0
        %v991 = vsel %vm983, %v981, 0
        %v994 = vsel %vm983, %v982, 0
        %vm996 = vcmask 1043456
        %v998 = vsel %vm996, %v955, 0
        %1000 = vmatprep.subr.bf16.mxu0 0
        %1001 = vmatpush1.bf16.msra.mxu0 0
        %1002 = vmatprep.subr.bf16.mxu0 0
        %1003 = vmatpush1.bf16.msra.mxu0 0
        %1004 = vmatprep.subr.bf16.mxu0 0
        %1005 = vmatpush1.bf16.msra.mxu0 0
        %1006 = vmatprep.subr.bf16.mxu0 0
        %1007 = vmatpush1.bf16.msra.mxu0 0
        %1008 = vmatprep.subr.bf16.mxu0 0
        %1009 = vmatpush1.bf16.msra.mxu0 0
        %1010 = vmatprep.subr.bf16.mxu0 0
        %1011 = vmatpush1.bf16.msra.mxu0 0
        %1012 = vmatprep.subr.bf16.mxu0 0
        %1013 = vmatpush1.bf16.msra.mxu0 0
        %1014 = vmatprep.subr.bf16.mxu0 0
        %1015 = vmatpush1.bf16.msra.mxu0 %v998
        %1016 = vmatprep.subr.bf16.mxu0 0
        %1017 = vmatpush2.bf16.msra.mxu0 0
        %1018 = vmatprep.subr.bf16.mxu0 0
        %1019 = vmatpush2.bf16.msra.mxu0 0
        %1020 = vmatprep.subr.bf16.mxu0 0
        %1021 = vmatpush2.bf16.msra.mxu0 0
        %1022 = vmatprep.subr.bf16.mxu0 0
        %1023 = vmatpush2.bf16.msra.mxu0 0
        %1024 = vmatprep.subr.bf16.mxu0 0
        %1025 = vmatpush2.bf16.msra.mxu0 0
        %1026 = vmatprep.subr.bf16.mxu0 0
        %1027 = vmatpush2.bf16.msra.mxu0 0
        %1028 = vmatprep.subr.bf16.mxu0 0
        %1029 = vmatpush2.bf16.msra.mxu0 0
        %1030 = vmatprep.subr.bf16.mxu0 0
        %1031 = vmatpush2.bf16.msra.mxu0 0
        %1032 = vmatprep.mubr.bf16.mxu0 0
        %1033 = vmatmul.mubr.bf16.gmra.mxu0 %v985
        %v1034 = vpop.f32.mrf.mxu0
        %v1035 = vadd.f32 %v961, %v1034
        %v1036 = vpop.f32.mrf.mxu0
        %v1037 = vpop.f32.mrf.mxu0
        %v1038 = vadd.f32 %v961, %v1037
        %v1039 = vpop.f32.mrf.mxu0
        %1040 = vmatprep.mubr.bf16.mxu0 0
        %1041 = vmatmul.mubr.bf16.gmra.mxu0 %v988
        %v1042 = vpop.f32.mrf.mxu0
        %v1043 = vadd.f32 %v961, %v1042
        %v1044 = vpop.f32.mrf.mxu0
        %v1045 = vpop.f32.mrf.mxu0
        %v1046 = vadd.f32 %v961, %v1045
        %v1047 = vpop.f32.mrf.mxu0
        %1048 = vmatprep.mubr.bf16.mxu0 0
        %1049 = vmatmul.mubr.bf16.gmra.mxu0 %v991
        %v1050 = vpop.f32.mrf.mxu0
        %v1051 = vadd.f32 %v961, %v1050
        %v1052 = vpop.f32.mrf.mxu0
        %v1053 = vpop.f32.mrf.mxu0
        %v1054 = vadd.f32 %v961, %v1053
        %v1055 = vpop.f32.mrf.mxu0
        %1056 = vmatprep.mubr.bf16.mxu0 0
        %1057 = vmatmul.mubr.bf16.gmra.mxu0 %v994
        %v1058 = vpop.f32.mrf.mxu0
        %v1059 = vadd.f32 %v961, %v1058
        %v1060 = vpop.f32.mrf.mxu0
        %v1061 = vpop.f32.mrf.mxu0
        %v1062 = vadd.f32 %v961, %v1061
        %v1063 = vpop.f32.mrf.mxu0
        %1064 = vdwg.mxu0
        %v1065 = vmax.f32 %v1035, 0.0
        %v1066 = vmax.f32 %v1038, 0.0
        %v1067 = vmax.f32 %v1043, 0.0
        %v1068 = vmax.f32 %v1046, 0.0
        %v1069 = vmax.f32 %v1051, 0.0
        %v1070 = vmax.f32 %v1054, 0.0
        %v1071 = vmax.f32 %v1059, 0.0
        %v1072 = vmax.f32 %v1062, 0.0
        %vm1073 = vcmask 523264
        %1074 = vst.msk [vmem:[#allocation2] sm:$0xff] %vm1073, 0.0
        %1075 = vst.msk [vmem:[#allocation2 + $0x48] sm:$0xff] %vm1073, 0.0
        %1076 = vst.msk [vmem:[#allocation2 + $0x8] sm:$0xff] %vm1073, %v1065
        %1077 = vst.msk [vmem:[#allocation2 + $0x10] sm:$0xff] %vm1073, %v1066
        %1078 = vst.msk [vmem:[#allocation2 + $0x18] sm:$0xff] %vm1073, %v1067
        %1079 = vst.msk [vmem:[#allocation2 + $0x20] sm:$0xff] %vm1073, %v1068
        %1080 = vst.msk [vmem:[#allocation2 + $0x28] sm:$0xff] %vm1073, %v1069
        %1081 = vst.msk [vmem:[#allocation2 + $0x30] sm:$0xff] %vm1073, %v1070
        %1082 = vst.msk [vmem:[#allocation2 + $0x38] sm:$0xff] %vm1073, %v1071
        %1083 = vst.msk [vmem:[#allocation2 + $0x40] sm:$0xff] %vm1073, %v1072
        %v1084 = vld [vmem:[#allocation2 + $0x7] sm:$0xff]
        %v1085 = vld [vmem:[#allocation2 + $0xf] sm:$0xff]
        %v1086 = vld [vmem:[#allocation2 + $0x17] sm:$0xff]
        %v1087 = vld [vmem:[#allocation2 + $0x1f] sm:$0xff]
        %v1088 = vld [vmem:[#allocation2 + $0x27] sm:$0xff]
        %v1089 = vld [vmem:[#allocation2 + $0x2f] sm:$0xff]
        %v1090 = vld [vmem:[#allocation2 + $0x37] sm:$0xff]
        %v1091 = vld [vmem:[#allocation2 + $0x3f] sm:$0xff]
        %v1092 = vld [vmem:[#allocation2 + $0x8] sm:$0xff]
        %v1093 = vld [vmem:[#allocation2 + $0x10] sm:$0xff]
        %v1094 = vld [vmem:[#allocation2 + $0x18] sm:$0xff]
        %v1095 = vld [vmem:[#allocation2 + $0x20] sm:$0xff]
        %v1096 = vld [vmem:[#allocation2 + $0x28] sm:$0xff]
        %v1097 = vld [vmem:[#allocation2 + $0x30] sm:$0xff]
        %v1098 = vld [vmem:[#allocation2 + $0x38] sm:$0xff]
        %v1099 = vld [vmem:[#allocation2 + $0x40] sm:$0xff]
        %v1100 = vld [vmem:[#allocation2 + $0x9] sm:$0xff]
        %v1101 = vld [vmem:[#allocation2 + $0x11] sm:$0xff]
        %v1102 = vld [vmem:[#allocation2 + $0x19] sm:$0xff]
        %v1103 = vld [vmem:[#allocation2 + $0x21] sm:$0xff]
        %v1104 = vld [vmem:[#allocation2 + $0x29] sm:$0xff]
        %v1105 = vld [vmem:[#allocation2 + $0x31] sm:$0xff]
        %v1106 = vld [vmem:[#allocation2 + $0x39] sm:$0xff]
        %v1107 = vld [vmem:[#allocation2 + $0x41] sm:$0xff]
        %1116 = vrot.lane.b32.xlu0 %v1092, 64
        %v1117 = vpop.permute.xlu0 %1116
        %1118 = vrot.lane.b32.xlu0 %v1093, 64
        %v1119 = vpop.permute.xlu0 %1118
        %1120 = vrot.lane.b32.xlu0 %v1094, 64
        %v1121 = vpop.permute.xlu0 %1120
        %1122 = vrot.lane.b32.xlu0 %v1095, 64
        %v1123 = vpop.permute.xlu0 %1122
        %1124 = vrot.lane.b32.xlu0 %v1096, 64
        %v1125 = vpop.permute.xlu0 %1124
        %1126 = vrot.lane.b32.xlu0 %v1097, 64
        %v1127 = vpop.permute.xlu0 %1126
        %1128 = vrot.lane.b32.xlu0 %v1098, 64
        %v1129 = vpop.permute.xlu0 %1128
        %1130 = vrot.lane.b32.xlu0 %v1099, 64
        %v1131 = vpop.permute.xlu0 %1130
        %v1140 = vsel %vm1073, %v1084, %v1117
        %v1141 = vsel %vm1073, %v1085, %v1119
        %v1142 = vsel %vm1073, %v1086, %v1121
        %v1143 = vsel %vm1073, %v1087, %v1123
        %v1144 = vsel %vm1073, %v1088, %v1125
        %v1145 = vsel %vm1073, %v1089, %v1127
        %v1146 = vsel %vm1073, %v1090, %v1129
        %v1147 = vsel %vm1073, %v1091, %v1131
        %v1148 = vpack.c.bf16 %v1141, %v1140
        %v1149 = vpack.c.bf16 %v1101, %v1100
        %v1150 = vpack.c.bf16 %v1143, %v1142
        %v1151 = vpack.c.bf16 %v1103, %v1102
        %v1152 = vpack.c.bf16 %v1145, %v1144
        %v1153 = vpack.c.bf16 %v1105, %v1104
        %v1154 = vpack.c.bf16 %v1147, %v1146
        %v1155 = vpack.c.bf16 %v1107, %v1106
        %v1156 = vld [vmem:[#allocation15] sm:$0xf]
        %v1157 = vld [vmem:[#allocation15 + $0x4] sm:$0xf]
        %v1158 = vld [vmem:[#allocation15 + $0x8] sm:$0xf]
        %v1159 = vld [vmem:[#allocation15 + $0xc] sm:$0xf]
        %v1160 = vld [vmem:[#allocation15 + $0x10] sm:$0xf]
        %v1161 = vld [vmem:[#allocation15 + $0x14] sm:$0xf]
        %v1162 = vld [vmem:[#allocation15 + $0x18] sm:$0xf]
        %v1163 = vld [vmem:[#allocation15 + $0x1c] sm:$0xf]
        %v1164 = vld [vmem:[#allocation15 + $0x20] sm:$0xf]
        %v1165 = vld [vmem:[#allocation15 + $0x24] sm:$0xf]
        %v1166 = vld [vmem:[#allocation15 + $0x28] sm:$0xf]
        %v1167 = vld [vmem:[#allocation15 + $0x2c] sm:$0xf]
        %v1168 = vld [vmem:[#allocation15 + $0x30] sm:$0xf]
        %v1169 = vld [vmem:[#allocation15 + $0x34] sm:$0xf]
        %v1170 = vld [vmem:[#allocation15 + $0x38] sm:$0xf]
        %v1171 = vld [vmem:[#allocation15 + $0x3c] sm:$0xf]
        %v1172 = vld [vmem:[#allocation15 + $0x40] sm:$0xf]
        %v1173 = vld [vmem:[#allocation15 + $0x44] sm:$0xf]
        %v1174 = vld [vmem:[#allocation15 + $0x48] sm:$0xf]
        %v1175 = vld [vmem:[#allocation15 + $0x4c] sm:$0xf]
        %v1176 = vld [vmem:[#allocation15 + $0x50] sm:$0xf]
        %v1177 = vld [vmem:[#allocation15 + $0x54] sm:$0xf]
        %v1178 = vld [vmem:[#allocation15 + $0x58] sm:$0xf]
        %v1179 = vld [vmem:[#allocation15 + $0x5c] sm:$0xf]
        %v1180 = vld [vmem:[%s4] sm:$0x1]
        %v1182 = vlaneseq
        %v1183 = vshrl.u32 %v1182, 7
        %v1184 = vsub.s32 0, %v1183
        %v1185 = vrot.slane %v1180, %v1184
        %v1211 = vunpack.c.l.b16 %v1156
        %v1212 = vunpack.c.l.b16 %v1157
        %v1213 = vunpack.c.l.b16 %v1158
        %v1214 = vunpack.c.l.b16 %v1159
        %v1215 = vunpack.c.l.b16 %v1160
        %v1216 = vunpack.c.l.b16 %v1161
        %v1217 = vunpack.c.l.b16 %v1162
        %v1218 = vunpack.c.l.b16 %v1163
        %v1219 = vunpack.c.l.b16 %v1164
        %v1220 = vunpack.c.l.b16 %v1165
        %v1221 = vunpack.c.l.b16 %v1166
        %v1222 = vunpack.c.l.b16 %v1167
        %v1223 = vunpack.c.l.b16 %v1168
        %v1224 = vunpack.c.l.b16 %v1169
        %v1225 = vunpack.c.l.b16 %v1170
        %v1226 = vunpack.c.l.b16 %v1171
        %v1227 = vunpack.c.l.b16 %v1172
        %v1228 = vunpack.c.l.b16 %v1173
        %v1229 = vunpack.c.l.b16 %v1174
        %v1230 = vunpack.c.l.b16 %v1175
        %v1231 = vunpack.c.l.b16 %v1176
        %v1232 = vunpack.c.l.b16 %v1177
        %v1233 = vunpack.c.l.b16 %v1178
        %v1234 = vunpack.c.l.b16 %v1179
        %v1235 = vpack.c.b16 %v1212, %v1211
        %v1236 = vpack.c.b16 %v1214, %v1213
        %v1237 = vpack.c.b16 %v1216, %v1215
        %v1238 = vpack.c.b16 %v1218, %v1217
        %v1239 = vpack.c.b16 %v1220, %v1219
        %v1240 = vpack.c.b16 %v1222, %v1221
        %v1241 = vpack.c.b16 %v1224, %v1223
        %v1242 = vpack.c.b16 %v1226, %v1225
        %v1243 = vpack.c.b16 %v1228, %v1227
        %v1244 = vpack.c.b16 %v1230, %v1229
        %v1245 = vpack.c.b16 %v1232, %v1231
        %v1246 = vpack.c.b16 %v1234, %v1233
        %v1260 = vsel %vm1073, %v1149, 0
        %v1263 = vsel %vm1073, %v1151, 0
        %v1266 = vsel %vm1073, %v1153, 0
        %v1269 = vsel %vm1073, %v1155, 0
        %1271 = vmatprep.subr.bf16.mxu0 0
        %1272 = vmatpush1.bf16.msra.mxu0 %v1242
        %1273 = vmatprep.subr.bf16.mxu0 0
        %1274 = vmatpush1.bf16.msra.mxu0 %v1241
        %1275 = vmatprep.subr.bf16.mxu0 0
        %1276 = vmatpush1.bf16.msra.mxu0 %v1240
        %1277 = vmatprep.subr.bf16.mxu0 0
        %1278 = vmatpush1.bf16.msra.mxu0 %v1239
        %1279 = vmatprep.subr.bf16.mxu0 0
        %1280 = vmatpush1.bf16.msra.mxu0 %v1238
        %1281 = vmatprep.subr.bf16.mxu0 0
        %1282 = vmatpush1.bf16.msra.mxu0 %v1237
        %1283 = vmatprep.subr.bf16.mxu0 0
        %1284 = vmatpush1.bf16.msra.mxu0 %v1236
        %1285 = vmatprep.subr.bf16.mxu0 0
        %1286 = vmatpush1.bf16.msra.mxu0 %v1235
        %1287 = vmatprep.subr.bf16.mxu0 0
        %1288 = vmatpush2.bf16.msra.mxu0 0
        %1289 = vmatprep.subr.bf16.mxu0 0
        %1290 = vmatpush2.bf16.msra.mxu0 0
        %1291 = vmatprep.subr.bf16.mxu0 0
        %1292 = vmatpush2.bf16.msra.mxu0 0
        %1293 = vmatprep.subr.bf16.mxu0 0
        %1294 = vmatpush2.bf16.msra.mxu0 0
        %1295 = vmatprep.subr.bf16.mxu0 0
        %1296 = vmatpush2.bf16.msra.mxu0 %v1246
        %1297 = vmatprep.subr.bf16.mxu0 0
        %1298 = vmatpush2.bf16.msra.mxu0 %v1245
        %1299 = vmatprep.subr.bf16.mxu0 0
        %1300 = vmatpush2.bf16.msra.mxu0 %v1244
        %1301 = vmatprep.subr.bf16.mxu0 0
        %1302 = vmatpush2.bf16.msra.mxu0 %v1243
        %1303 = vmatprep.mubr.bf16.mxu0 %v1260
        %1304 = vmatmul.mubr.bf16.gmra.mxu0 %v1148
        %v1305 = vpop.f32.mrf.mxu0
        %v1306 = vadd.f32 %v1185, %v1305
        %v1307 = vpop.f32.mrf.mxu0
        %v1308 = vpop.f32.mrf.mxu0
        %v1309 = vadd.f32 %v1185, %v1308
        %v1310 = vpop.f32.mrf.mxu0
        %1311 = vmatprep.mubr.bf16.mxu0 %v1263
        %1312 = vmatmul.mubr.bf16.gmra.mxu0 %v1150
        %v1313 = vpop.f32.mrf.mxu0
        %v1314 = vadd.f32 %v1185, %v1313
        %v1315 = vpop.f32.mrf.mxu0
        %v1316 = vpop.f32.mrf.mxu0
        %v1317 = vadd.f32 %v1185, %v1316
        %v1318 = vpop.f32.mrf.mxu0
        %1319 = vmatprep.mubr.bf16.mxu0 %v1266
        %1320 = vmatmul.mubr.bf16.gmra.mxu0 %v1152
        %v1321 = vpop.f32.mrf.mxu0
        %v1322 = vadd.f32 %v1185, %v1321
        %v1323 = vpop.f32.mrf.mxu0
        %v1324 = vpop.f32.mrf.mxu0
        %v1325 = vadd.f32 %v1185, %v1324
        %v1326 = vpop.f32.mrf.mxu0
        %1327 = vmatprep.mubr.bf16.mxu0 %v1269
        %1328 = vmatmul.mubr.bf16.gmra.mxu0 %v1154
        %v1329 = vpop.f32.mrf.mxu0
        %v1330 = vadd.f32 %v1185, %v1329
        %v1331 = vpop.f32.mrf.mxu0
        %v1332 = vpop.f32.mrf.mxu0
        %v1333 = vadd.f32 %v1185, %v1332
        %v1334 = vpop.f32.mrf.mxu0
        %1335 = vdwg.mxu0
        %v1336 = vmax.f32 %v1306, 0.0
        %v1337 = vmax.f32 %v1309, 0.0
        %v1338 = vmax.f32 %v1314, 0.0
        %v1339 = vmax.f32 %v1317, 0.0
        %v1340 = vmax.f32 %v1322, 0.0
        %v1341 = vmax.f32 %v1325, 0.0
        %v1342 = vmax.f32 %v1330, 0.0
        %v1343 = vmax.f32 %v1333, 0.0
        %1344 = vst.msk [vmem:[#allocation3] sm:$0xff] %vm1073, 0.0
        %1345 = vst.msk [vmem:[#allocation3 + $0x48] sm:$0xff] %vm1073, 0.0
        %1346 = vst.msk [vmem:[#allocation3 + $0x8] sm:$0xff] %vm1073, %v1336
        %1347 = vst.msk [vmem:[#allocation3 + $0x10] sm:$0xff] %vm1073, %v1337
        %1348 = vst.msk [vmem:[#allocation3 + $0x18] sm:$0xff] %vm1073, %v1338
        %1349 = vst.msk [vmem:[#allocation3 + $0x20] sm:$0xff] %vm1073, %v1339
        %1350 = vst.msk [vmem:[#allocation3 + $0x28] sm:$0xff] %vm1073, %v1340
        %1351 = vst.msk [vmem:[#allocation3 + $0x30] sm:$0xff] %vm1073, %v1341
        %1352 = vst.msk [vmem:[#allocation3 + $0x38] sm:$0xff] %vm1073, %v1342
        %1353 = vst.msk [vmem:[#allocation3 + $0x40] sm:$0xff] %vm1073, %v1343
        %v1354 = vld [vmem:[#allocation3 + $0x7] sm:$0xff]
        %v1355 = vld [vmem:[#allocation3 + $0xf] sm:$0xff]
        %v1356 = vld [vmem:[#allocation3 + $0x17] sm:$0xff]
        %v1357 = vld [vmem:[#allocation3 + $0x1f] sm:$0xff]
        %v1358 = vld [vmem:[#allocation3 + $0x27] sm:$0xff]
        %v1359 = vld [vmem:[#allocation3 + $0x2f] sm:$0xff]
        %v1360 = vld [vmem:[#allocation3 + $0x37] sm:$0xff]
        %v1361 = vld [vmem:[#allocation3 + $0x3f] sm:$0xff]
        %v1362 = vld [vmem:[#allocation3 + $0x8] sm:$0xff]
        %v1363 = vld [vmem:[#allocation3 + $0x10] sm:$0xff]
        %v1364 = vld [vmem:[#allocation3 + $0x18] sm:$0xff]
        %v1365 = vld [vmem:[#allocation3 + $0x20] sm:$0xff]
        %v1366 = vld [vmem:[#allocation3 + $0x28] sm:$0xff]
        %v1367 = vld [vmem:[#allocation3 + $0x30] sm:$0xff]
        %v1368 = vld [vmem:[#allocation3 + $0x38] sm:$0xff]
        %v1369 = vld [vmem:[#allocation3 + $0x40] sm:$0xff]
        %v1370 = vld [vmem:[#allocation3 + $0x9] sm:$0xff]
        %v1371 = vld [vmem:[#allocation3 + $0x11] sm:$0xff]
        %v1372 = vld [vmem:[#allocation3 + $0x19] sm:$0xff]
        %v1373 = vld [vmem:[#allocation3 + $0x21] sm:$0xff]
        %v1374 = vld [vmem:[#allocation3 + $0x29] sm:$0xff]
        %v1375 = vld [vmem:[#allocation3 + $0x31] sm:$0xff]
        %v1376 = vld [vmem:[#allocation3 + $0x39] sm:$0xff]
        %v1377 = vld [vmem:[#allocation3 + $0x41] sm:$0xff]
        %1386 = vrot.lane.b32.xlu0 %v1362, 64
        %v1387 = vpop.permute.xlu0 %1386
        %1388 = vrot.lane.b32.xlu0 %v1363, 64
        %v1389 = vpop.permute.xlu0 %1388
        %1390 = vrot.lane.b32.xlu0 %v1364, 64
        %v1391 = vpop.permute.xlu0 %1390
        %1392 = vrot.lane.b32.xlu0 %v1365, 64
        %v1393 = vpop.permute.xlu0 %1392
        %1394 = vrot.lane.b32.xlu0 %v1366, 64
        %v1395 = vpop.permute.xlu0 %1394
        %1396 = vrot.lane.b32.xlu0 %v1367, 64
        %v1397 = vpop.permute.xlu0 %1396
        %1398 = vrot.lane.b32.xlu0 %v1368, 64
        %v1399 = vpop.permute.xlu0 %1398
        %1400 = vrot.lane.b32.xlu0 %v1369, 64
        %v1401 = vpop.permute.xlu0 %1400
        %v1410 = vsel %vm1073, %v1354, %v1387
        %v1411 = vsel %vm1073, %v1355, %v1389
        %v1412 = vsel %vm1073, %v1356, %v1391
        %v1413 = vsel %vm1073, %v1357, %v1393
        %v1414 = vsel %vm1073, %v1358, %v1395
        %v1415 = vsel %vm1073, %v1359, %v1397
        %v1416 = vsel %vm1073, %v1360, %v1399
        %v1417 = vsel %vm1073, %v1361, %v1401
        %v1418 = vpack.c.bf16 %v1411, %v1410
        %v1419 = vpack.c.bf16 %v1371, %v1370
        %v1420 = vpack.c.bf16 %v1413, %v1412
        %v1421 = vpack.c.bf16 %v1373, %v1372
        %v1422 = vpack.c.bf16 %v1415, %v1414
        %v1423 = vpack.c.bf16 %v1375, %v1374
        %v1424 = vpack.c.bf16 %v1417, %v1416
        %v1425 = vpack.c.bf16 %v1377, %v1376
        %v1426 = vld [vmem:[#allocation16] sm:$0xf]
        %v1427 = vld [vmem:[#allocation16 + $0x4] sm:$0xf]
        %v1428 = vld [vmem:[#allocation16 + $0x8] sm:$0xf]
        %v1429 = vld [vmem:[#allocation16 + $0xc] sm:$0xf]
        %v1430 = vld [vmem:[#allocation16 + $0x10] sm:$0xf]
        %v1431 = vld [vmem:[#allocation16 + $0x14] sm:$0xf]
        %v1432 = vld [vmem:[#allocation16 + $0x18] sm:$0xf]
        %v1433 = vld [vmem:[#allocation16 + $0x1c] sm:$0xf]
        %v1434 = vld [vmem:[#allocation16 + $0x20] sm:$0xf]
        %v1435 = vld [vmem:[#allocation16 + $0x24] sm:$0xf]
        %v1436 = vld [vmem:[#allocation16 + $0x28] sm:$0xf]
        %v1437 = vld [vmem:[#allocation16 + $0x2c] sm:$0xf]
        %v1438 = vld [vmem:[#allocation16 + $0x30] sm:$0xf]
        %v1439 = vld [vmem:[#allocation16 + $0x34] sm:$0xf]
        %v1440 = vld [vmem:[#allocation16 + $0x38] sm:$0xf]
        %v1441 = vld [vmem:[#allocation16 + $0x3c] sm:$0xf]
        %v1442 = vld [vmem:[#allocation16 + $0x40] sm:$0xf]
        %v1443 = vld [vmem:[#allocation16 + $0x44] sm:$0xf]
        %v1444 = vld [vmem:[#allocation16 + $0x48] sm:$0xf]
        %v1445 = vld [vmem:[#allocation16 + $0x4c] sm:$0xf]
        %v1446 = vld [vmem:[#allocation16 + $0x50] sm:$0xf]
        %v1447 = vld [vmem:[#allocation16 + $0x54] sm:$0xf]
        %v1448 = vld [vmem:[#allocation16 + $0x58] sm:$0xf]
        %v1449 = vld [vmem:[#allocation16 + $0x5c] sm:$0xf]
        %v1450 = vld [vmem:[%s6] sm:$0x1]
        %v1452 = vlaneseq
        %v1453 = vshrl.u32 %v1452, 7
        %v1454 = vsub.s32 0, %v1453
        %v1455 = vrot.slane %v1450, %v1454
        %v1481 = vunpack.c.l.b16 %v1426
        %v1482 = vunpack.c.l.b16 %v1427
        %v1483 = vunpack.c.l.b16 %v1428
        %v1484 = vunpack.c.l.b16 %v1429
        %v1485 = vunpack.c.l.b16 %v1430
        %v1486 = vunpack.c.l.b16 %v1431
        %v1487 = vunpack.c.l.b16 %v1432
        %v1488 = vunpack.c.l.b16 %v1433
        %v1489 = vunpack.c.l.b16 %v1434
        %v1490 = vunpack.c.l.b16 %v1435
        %v1491 = vunpack.c.l.b16 %v1436
        %v1492 = vunpack.c.l.b16 %v1437
        %v1493 = vunpack.c.l.b16 %v1438
        %v1494 = vunpack.c.l.b16 %v1439
        %v1495 = vunpack.c.l.b16 %v1440
        %v1496 = vunpack.c.l.b16 %v1441
        %v1497 = vunpack.c.l.b16 %v1442
        %v1498 = vunpack.c.l.b16 %v1443
        %v1499 = vunpack.c.l.b16 %v1444
        %v1500 = vunpack.c.l.b16 %v1445
        %v1501 = vunpack.c.l.b16 %v1446
        %v1502 = vunpack.c.l.b16 %v1447
        %v1503 = vunpack.c.l.b16 %v1448
        %v1504 = vunpack.c.l.b16 %v1449
        %v1505 = vpack.c.b16 %v1482, %v1481
        %v1506 = vpack.c.b16 %v1484, %v1483
        %v1507 = vpack.c.b16 %v1486, %v1485
        %v1508 = vpack.c.b16 %v1488, %v1487
        %v1509 = vpack.c.b16 %v1490, %v1489
        %v1510 = vpack.c.b16 %v1492, %v1491
        %v1511 = vpack.c.b16 %v1494, %v1493
        %v1512 = vpack.c.b16 %v1496, %v1495
        %v1513 = vpack.c.b16 %v1498, %v1497
        %v1514 = vpack.c.b16 %v1500, %v1499
        %v1515 = vpack.c.b16 %v1502, %v1501
        %v1516 = vpack.c.b16 %v1504, %v1503
        %v1530 = vsel %vm1073, %v1419, 0
        %v1533 = vsel %vm1073, %v1421, 0
        %v1536 = vsel %vm1073, %v1423, 0
        %v1539 = vsel %vm1073, %v1425, 0
        %1541 = vmatprep.subr.bf16.mxu0 0
        %1542 = vmatpush1.bf16.msra.mxu0 %v1512
        %1543 = vmatprep.subr.bf16.mxu0 0
        %1544 = vmatpush1.bf16.msra.mxu0 %v1511
        %1545 = vmatprep.subr.bf16.mxu0 0
        %1546 = vmatpush1.bf16.msra.mxu0 %v1510
        %1547 = vmatprep.subr.bf16.mxu0 0
        %1548 = vmatpush1.bf16.msra.mxu0 %v1509
        %1549 = vmatprep.subr.bf16.mxu0 0
        %1550 = vmatpush1.bf16.msra.mxu0 %v1508
        %1551 = vmatprep.subr.bf16.mxu0 0
        %1552 = vmatpush1.bf16.msra.mxu0 %v1507
        %1553 = vmatprep.subr.bf16.mxu0 0
        %1554 = vmatpush1.bf16.msra.mxu0 %v1506
        %1555 = vmatprep.subr.bf16.mxu0 0
        %1556 = vmatpush1.bf16.msra.mxu0 %v1505
        %1557 = vmatprep.subr.bf16.mxu0 0
        %1558 = vmatpush2.bf16.msra.mxu0 0
        %1559 = vmatprep.subr.bf16.mxu0 0
        %1560 = vmatpush2.bf16.msra.mxu0 0
        %1561 = vmatprep.subr.bf16.mxu0 0
        %1562 = vmatpush2.bf16.msra.mxu0 0
        %1563 = vmatprep.subr.bf16.mxu0 0
        %1564 = vmatpush2.bf16.msra.mxu0 0
        %1565 = vmatprep.subr.bf16.mxu0 0
        %1566 = vmatpush2.bf16.msra.mxu0 %v1516
        %1567 = vmatprep.subr.bf16.mxu0 0
        %1568 = vmatpush2.bf16.msra.mxu0 %v1515
        %1569 = vmatprep.subr.bf16.mxu0 0
        %1570 = vmatpush2.bf16.msra.mxu0 %v1514
        %1571 = vmatprep.subr.bf16.mxu0 0
        %1572 = vmatpush2.bf16.msra.mxu0 %v1513
        %1573 = vmatprep.mubr.bf16.mxu0 %v1530
        %1574 = vmatmul.mubr.bf16.gmra.mxu0 %v1418
        %v1575 = vpop.f32.mrf.mxu0
        %v1576 = vadd.f32 %v1455, %v1575
        %v1577 = vpop.f32.mrf.mxu0
        %v1578 = vpop.f32.mrf.mxu0
        %v1579 = vadd.f32 %v1455, %v1578
        %v1580 = vpop.f32.mrf.mxu0
        %1581 = vmatprep.mubr.bf16.mxu0 %v1533
        %1582 = vmatmul.mubr.bf16.gmra.mxu0 %v1420
        %v1583 = vpop.f32.mrf.mxu0
        %v1584 = vadd.f32 %v1455, %v1583
        %v1585 = vpop.f32.mrf.mxu0
        %v1586 = vpop.f32.mrf.mxu0
        %v1587 = vadd.f32 %v1455, %v1586
        %v1588 = vpop.f32.mrf.mxu0
        %1589 = vmatprep.mubr.bf16.mxu0 %v1536
        %1590 = vmatmul.mubr.bf16.gmra.mxu0 %v1422
        %v1591 = vpop.f32.mrf.mxu0
        %v1592 = vadd.f32 %v1455, %v1591
        %v1593 = vpop.f32.mrf.mxu0
        %v1594 = vpop.f32.mrf.mxu0
        %v1595 = vadd.f32 %v1455, %v1594
        %v1596 = vpop.f32.mrf.mxu0
        %1597 = vmatprep.mubr.bf16.mxu0 %v1539
        %1598 = vmatmul.mubr.bf16.gmra.mxu0 %v1424
        %v1599 = vpop.f32.mrf.mxu0
        %v1600 = vadd.f32 %v1455, %v1599
        %v1601 = vpop.f32.mrf.mxu0
        %v1602 = vpop.f32.mrf.mxu0
        %v1603 = vadd.f32 %v1455, %v1602
        %v1604 = vpop.f32.mrf.mxu0
        %1605 = vdwg.mxu0
        %v1606 = vadd.f32 %v1576, %v1065
        %v1607 = vadd.f32 %v1579, %v1066
        %v1608 = vadd.f32 %v1584, %v1067
        %v1609 = vadd.f32 %v1587, %v1068
        %v1610 = vadd.f32 %v1592, %v1069
        %v1611 = vadd.f32 %v1595, %v1070
        %v1612 = vadd.f32 %v1600, %v1071
        %v1613 = vadd.f32 %v1603, %v1072
        %v1614 = vmax.f32 %v1606, 0.0
        %v1615 = vmax.f32 %v1607, 0.0
        %v1616 = vmax.f32 %v1608, 0.0
        %v1617 = vmax.f32 %v1609, 0.0
        %v1618 = vmax.f32 %v1610, 0.0
        %v1619 = vmax.f32 %v1611, 0.0
        %v1620 = vmax.f32 %v1612, 0.0
        %v1621 = vmax.f32 %v1613, 0.0
        %1622 = vst.msk [vmem:[#allocation4] sm:$0xff] %vm1073, 0.0
        %1623 = vst.msk [vmem:[#allocation4 + $0x48] sm:$0xff] %vm1073, 0.0
        %1624 = vst.msk [vmem:[#allocation4 + $0x8] sm:$0xff] %vm1073, %v1614
        %1625 = vst.msk [vmem:[#allocation4 + $0x10] sm:$0xff] %vm1073, %v1615
        %1626 = vst.msk [vmem:[#allocation4 + $0x18] sm:$0xff] %vm1073, %v1616
        %1627 = vst.msk [vmem:[#allocation4 + $0x20] sm:$0xff] %vm1073, %v1617
        %1628 = vst.msk [vmem:[#allocation4 + $0x28] sm:$0xff] %vm1073, %v1618
        %1629 = vst.msk [vmem:[#allocation4 + $0x30] sm:$0xff] %vm1073, %v1619
        %1630 = vst.msk [vmem:[#allocation4 + $0x38] sm:$0xff] %vm1073, %v1620
        %1631 = vst.msk [vmem:[#allocation4 + $0x40] sm:$0xff] %vm1073, %v1621
        %v1632 = vld [vmem:[#allocation4 + $0x7] sm:$0xff]
        %v1633 = vld [vmem:[#allocation4 + $0xf] sm:$0xff]
        %v1634 = vld [vmem:[#allocation4 + $0x17] sm:$0xff]
        %v1635 = vld [vmem:[#allocation4 + $0x1f] sm:$0xff]
        %v1636 = vld [vmem:[#allocation4 + $0x27] sm:$0xff]
        %v1637 = vld [vmem:[#allocation4 + $0x2f] sm:$0xff]
        %v1638 = vld [vmem:[#allocation4 + $0x37] sm:$0xff]
        %v1639 = vld [vmem:[#allocation4 + $0x3f] sm:$0xff]
        %v1640 = vld [vmem:[#allocation4 + $0x8] sm:$0xff]
        %v1641 = vld [vmem:[#allocation4 + $0x10] sm:$0xff]
        %v1642 = vld [vmem:[#allocation4 + $0x18] sm:$0xff]
        %v1643 = vld [vmem:[#allocation4 + $0x20] sm:$0xff]
        %v1644 = vld [vmem:[#allocation4 + $0x28] sm:$0xff]
        %v1645 = vld [vmem:[#allocation4 + $0x30] sm:$0xff]
        %v1646 = vld [vmem:[#allocation4 + $0x38] sm:$0xff]
        %v1647 = vld [vmem:[#allocation4 + $0x40] sm:$0xff]
        %v1648 = vld [vmem:[#allocation4 + $0x9] sm:$0xff]
        %v1649 = vld [vmem:[#allocation4 + $0x11] sm:$0xff]
        %v1650 = vld [vmem:[#allocation4 + $0x19] sm:$0xff]
        %v1651 = vld [vmem:[#allocation4 + $0x21] sm:$0xff]
        %v1652 = vld [vmem:[#allocation4 + $0x29] sm:$0xff]
        %v1653 = vld [vmem:[#allocation4 + $0x31] sm:$0xff]
        %v1654 = vld [vmem:[#allocation4 + $0x39] sm:$0xff]
        %v1655 = vld [vmem:[#allocation4 + $0x41] sm:$0xff]
        %1664 = vrot.lane.b32.xlu0 %v1640, 64
        %v1665 = vpop.permute.xlu0 %1664
        %1666 = vrot.lane.b32.xlu0 %v1641, 64
        %v1667 = vpop.permute.xlu0 %1666
        %1668 = vrot.lane.b32.xlu0 %v1642, 64
        %v1669 = vpop.permute.xlu0 %1668
        %1670 = vrot.lane.b32.xlu0 %v1643, 64
        %v1671 = vpop.permute.xlu0 %1670
        %1672 = vrot.lane.b32.xlu0 %v1644, 64
        %v1673 = vpop.permute.xlu0 %1672
        %1674 = vrot.lane.b32.xlu0 %v1645, 64
        %v1675 = vpop.permute.xlu0 %1674
        %1676 = vrot.lane.b32.xlu0 %v1646, 64
        %v1677 = vpop.permute.xlu0 %1676
        %1678 = vrot.lane.b32.xlu0 %v1647, 64
        %v1679 = vpop.permute.xlu0 %1678
        %v1688 = vsel %vm1073, %v1632, %v1665
        %v1689 = vsel %vm1073, %v1633, %v1667
        %v1690 = vsel %vm1073, %v1634, %v1669
        %v1691 = vsel %vm1073, %v1635, %v1671
        %v1692 = vsel %vm1073, %v1636, %v1673
        %v1693 = vsel %vm1073, %v1637, %v1675
        %v1694 = vsel %vm1073, %v1638, %v1677
        %v1695 = vsel %vm1073, %v1639, %v1679
        %v1696 = vpack.c.bf16 %v1689, %v1688
        %v1697 = vpack.c.bf16 %v1649, %v1648
        %v1698 = vpack.c.bf16 %v1691, %v1690
        %v1699 = vpack.c.bf16 %v1651, %v1650
        %v1700 = vpack.c.bf16 %v1693, %v1692
        %v1701 = vpack.c.bf16 %v1653, %v1652
        %v1702 = vpack.c.bf16 %v1695, %v1694
        %v1703 = vpack.c.bf16 %v1655, %v1654
        %v1704 = vld [vmem:[#allocation18] sm:$0xf]
        %v1705 = vld [vmem:[#allocation18 + $0x4] sm:$0xf]
        %v1706 = vld [vmem:[#allocation18 + $0x8] sm:$0xf]
        %v1707 = vld [vmem:[#allocation18 + $0xc] sm:$0xf]
        %v1708 = vld [vmem:[#allocation18 + $0x10] sm:$0xf]
        %v1709 = vld [vmem:[#allocation18 + $0x14] sm:$0xf]
        %v1710 = vld [vmem:[#allocation18 + $0x18] sm:$0xf]
        %v1711 = vld [vmem:[#allocation18 + $0x1c] sm:$0xf]
        %v1712 = vld [vmem:[#allocation18 + $0x20] sm:$0xf]
        %v1713 = vld [vmem:[#allocation18 + $0x24] sm:$0xf]
        %v1714 = vld [vmem:[#allocation18 + $0x28] sm:$0xf]
        %v1715 = vld [vmem:[#allocation18 + $0x2c] sm:$0xf]
        %v1716 = vld [vmem:[#allocation18 + $0x30] sm:$0xf]
        %v1717 = vld [vmem:[#allocation18 + $0x34] sm:$0xf]
        %v1718 = vld [vmem:[#allocation18 + $0x38] sm:$0xf]
        %v1719 = vld [vmem:[#allocation18 + $0x3c] sm:$0xf]
        %v1720 = vld [vmem:[#allocation18 + $0x40] sm:$0xf]
        %v1721 = vld [vmem:[#allocation18 + $0x44] sm:$0xf]
        %v1722 = vld [vmem:[#allocation18 + $0x48] sm:$0xf]
        %v1723 = vld [vmem:[#allocation18 + $0x4c] sm:$0xf]
        %v1724 = vld [vmem:[#allocation18 + $0x50] sm:$0xf]
        %v1725 = vld [vmem:[#allocation18 + $0x54] sm:$0xf]
        %v1726 = vld [vmem:[#allocation18 + $0x58] sm:$0xf]
        %v1727 = vld [vmem:[#allocation18 + $0x5c] sm:$0xf]
        %v1728 = vld [vmem:[%s8] sm:$0x1]
        %v1730 = vlaneseq
        %v1731 = vshrl.u32 %v1730, 7
        %v1732 = vsub.s32 0, %v1731
        %v1733 = vrot.slane %v1728, %v1732
        %v1759 = vunpack.c.l.b16 %v1704
        %v1760 = vunpack.c.l.b16 %v1705
        %v1761 = vunpack.c.l.b16 %v1706
        %v1762 = vunpack.c.l.b16 %v1707
        %v1763 = vunpack.c.l.b16 %v1708
        %v1764 = vunpack.c.l.b16 %v1709
        %v1765 = vunpack.c.l.b16 %v1710
        %v1766 = vunpack.c.l.b16 %v1711
        %v1767 = vunpack.c.l.b16 %v1712
        %v1768 = vunpack.c.l.b16 %v1713
        %v1769 = vunpack.c.l.b16 %v1714
        %v1770 = vunpack.c.l.b16 %v1715
        %v1771 = vunpack.c.l.b16 %v1716
        %v1772 = vunpack.c.l.b16 %v1717
        %v1773 = vunpack.c.l.b16 %v1718
        %v1774 = vunpack.c.l.b16 %v1719
        %v1775 = vunpack.c.l.b16 %v1720
        %v1776 = vunpack.c.l.b16 %v1721
        %v1777 = vunpack.c.l.b16 %v1722
        %v1778 = vunpack.c.l.b16 %v1723
        %v1779 = vunpack.c.l.b16 %v1724
        %v1780 = vunpack.c.l.b16 %v1725
        %v1781 = vunpack.c.l.b16 %v1726
        %v1782 = vunpack.c.l.b16 %v1727
        %v1783 = vpack.c.b16 %v1760, %v1759
        %v1784 = vpack.c.b16 %v1762, %v1761
        %v1785 = vpack.c.b16 %v1764, %v1763
        %v1786 = vpack.c.b16 %v1766, %v1765
        %v1787 = vpack.c.b16 %v1768, %v1767
        %v1788 = vpack.c.b16 %v1770, %v1769
        %v1789 = vpack.c.b16 %v1772, %v1771
        %v1790 = vpack.c.b16 %v1774, %v1773
        %v1791 = vpack.c.b16 %v1776, %v1775
        %v1792 = vpack.c.b16 %v1778, %v1777
        %v1793 = vpack.c.b16 %v1780, %v1779
        %v1794 = vpack.c.b16 %v1782, %v1781
        %v1808 = vsel %vm1073, %v1697, 0
        %v1811 = vsel %vm1073, %v1699, 0
        %v1814 = vsel %vm1073, %v1701, 0
        %v1817 = vsel %vm1073, %v1703, 0
        %1819 = vmatprep.subr.bf16.mxu0 0
        %1820 = vmatpush1.bf16.msra.mxu0 %v1790
        %1821 = vmatprep.subr.bf16.mxu0 0
        %1822 = vmatpush1.bf16.msra.mxu0 %v1789
        %1823 = vmatprep.subr.bf16.mxu0 0
        %1824 = vmatpush1.bf16.msra.mxu0 %v1788
        %1825 = vmatprep.subr.bf16.mxu0 0
        %1826 = vmatpush1.bf16.msra.mxu0 %v1787
        %1827 = vmatprep.subr.bf16.mxu0 0
        %1828 = vmatpush1.bf16.msra.mxu0 %v1786
        %1829 = vmatprep.subr.bf16.mxu0 0
        %1830 = vmatpush1.bf16.msra.mxu0 %v1785
        %1831 = vmatprep.subr.bf16.mxu0 0
        %1832 = vmatpush1.bf16.msra.mxu0 %v1784
        %1833 = vmatprep.subr.bf16.mxu0 0
        %1834 = vmatpush1.bf16.msra.mxu0 %v1783
        %1835 = vmatprep.subr.bf16.mxu0 0
        %1836 = vmatpush2.bf16.msra.mxu0 0
        %1837 = vmatprep.subr.bf16.mxu0 0
        %1838 = vmatpush2.bf16.msra.mxu0 0
        %1839 = vmatprep.subr.bf16.mxu0 0
        %1840 = vmatpush2.bf16.msra.mxu0 0
        %1841 = vmatprep.subr.bf16.mxu0 0
        %1842 = vmatpush2.bf16.msra.mxu0 0
        %1843 = vmatprep.subr.bf16.mxu0 0
        %1844 = vmatpush2.bf16.msra.mxu0 %v1794
        %1845 = vmatprep.subr.bf16.mxu0 0
        %1846 = vmatpush2.bf16.msra.mxu0 %v1793
        %1847 = vmatprep.subr.bf16.mxu0 0
        %1848 = vmatpush2.bf16.msra.mxu0 %v1792
        %1849 = vmatprep.subr.bf16.mxu0 0
        %1850 = vmatpush2.bf16.msra.mxu0 %v1791
        %1851 = vmatprep.mubr.bf16.mxu0 %v1808
        %1852 = vmatmul.mubr.bf16.gmra.mxu0 %v1696
        %v1853 = vpop.f32.mrf.mxu0
        %v1854 = vadd.f32 %v1733, %v1853
        %v1855 = vpop.f32.mrf.mxu0
        %v1856 = vpop.f32.mrf.mxu0
        %v1857 = vadd.f32 %v1733, %v1856
        %v1858 = vpop.f32.mrf.mxu0
        %1859 = vmatprep.mubr.bf16.mxu0 %v1811
        %1860 = vmatmul.mubr.bf16.gmra.mxu0 %v1698
        %v1861 = vpop.f32.mrf.mxu0
        %v1862 = vadd.f32 %v1733, %v1861
        %v1863 = vpop.f32.mrf.mxu0
        %v1864 = vpop.f32.mrf.mxu0
        %v1865 = vadd.f32 %v1733, %v1864
        %v1866 = vpop.f32.mrf.mxu0
        %1867 = vmatprep.mubr.bf16.mxu0 %v1814
        %1868 = vmatmul.mubr.bf16.gmra.mxu0 %v1700
        %v1869 = vpop.f32.mrf.mxu0
        %v1870 = vadd.f32 %v1733, %v1869
        %v1871 = vpop.f32.mrf.mxu0
        %v1872 = vpop.f32.mrf.mxu0
        %v1873 = vadd.f32 %v1733, %v1872
        %v1874 = vpop.f32.mrf.mxu0
        %1875 = vmatprep.mubr.bf16.mxu0 %v1817
        %1876 = vmatmul.mubr.bf16.gmra.mxu0 %v1702
        %v1877 = vpop.f32.mrf.mxu0
        %v1878 = vadd.f32 %v1733, %v1877
        %v1879 = vpop.f32.mrf.mxu0
        %v1880 = vpop.f32.mrf.mxu0
        %v1881 = vadd.f32 %v1733, %v1880
        %v1882 = vpop.f32.mrf.mxu0
        %1883 = vdwg.mxu0
        %v1884 = vmax.f32 %v1854, 0.0
        %v1885 = vmax.f32 %v1857, 0.0
        %v1886 = vmax.f32 %v1862, 0.0
        %v1887 = vmax.f32 %v1865, 0.0
        %v1888 = vmax.f32 %v1870, 0.0
        %v1889 = vmax.f32 %v1873, 0.0
        %v1890 = vmax.f32 %v1878, 0.0
        %v1891 = vmax.f32 %v1881, 0.0
        %v1892 = vld [vmem:[#allocation21] sm:$0xf]
        %v1893 = vld [vmem:[#allocation21 + $0x4] sm:$0xf]
        %v1894 = vld [vmem:[#allocation21 + $0x8] sm:$0xf]
        %v1895 = vld [vmem:[#allocation21 + $0xc] sm:$0xf]
        %v1896 = vpack.c.bf16 %v1885, %v1884
        %v1897 = vpack.c.bf16 %v1887, %v1886
        %v1898 = vpack.c.bf16 %v1889, %v1888
        %v1899 = vpack.c.bf16 %v1891, %v1890
        %v1904 = vunpack.c.l.b16 %v1892
        %v1905 = vunpack.c.l.b16 %v1893
        %v1906 = vunpack.c.l.b16 %v1894
        %v1907 = vunpack.c.l.b16 %v1895
        %v1908 = vpack.c.b16 %v1905, %v1904
        %v1909 = vpack.c.b16 %v1907, %v1906
        %v1911 = vsel %vm1073, %v1908, 0
        %v1914 = vsel %vm1073, %v1909, 0
        %1916 = vmatprep.subr.bf16.mxu0 0
        %1917 = vmatpush1.bf16.msra.mxu0 0
        %1918 = vmatprep.subr.bf16.mxu0 0
        %1919 = vmatpush1.bf16.msra.mxu0 0
        %1920 = vmatprep.subr.bf16.mxu0 0
        %1921 = vmatpush1.bf16.msra.mxu0 0
        %1922 = vmatprep.subr.bf16.mxu0 0
        %1923 = vmatpush1.bf16.msra.mxu0 0
        %1924 = vmatprep.subr.bf16.mxu0 0
        %1925 = vmatpush1.bf16.msra.mxu0 %v1899
        %1926 = vmatprep.subr.bf16.mxu0 0
        %1927 = vmatpush1.bf16.msra.mxu0 %v1898
        %1928 = vmatprep.subr.bf16.mxu0 0
        %1929 = vmatpush1.bf16.msra.mxu0 %v1897
        %1930 = vmatprep.subr.bf16.mxu0 0
        %1931 = vmatpush1.bf16.msra.mxu0 %v1896
        %1932 = vmatprep.subr.bf16.mxu0 0
        %1933 = vmatpush2.bf16.msra.mxu0 0
        %1934 = vmatprep.subr.bf16.mxu0 0
        %1935 = vmatpush2.bf16.msra.mxu0 0
        %1936 = vmatprep.subr.bf16.mxu0 0
        %1937 = vmatpush2.bf16.msra.mxu0 0
        %1938 = vmatprep.subr.bf16.mxu0 0
        %1939 = vmatpush2.bf16.msra.mxu0 0
        %1940 = vmatprep.subr.bf16.mxu0 0
        %1941 = vmatpush2.bf16.msra.mxu0 0
        %1942 = vmatprep.subr.bf16.mxu0 0
        %1943 = vmatpush2.bf16.msra.mxu0 0
        %1944 = vmatprep.subr.bf16.mxu0 0
        %1945 = vmatpush2.bf16.msra.mxu0 0
        %1946 = vmatprep.subr.bf16.mxu0 0
        %1947 = vmatpush2.bf16.msra.mxu0 0
        %1948 = vmatprep.mubr.bf16.mxu0 0
        %1949 = vmatmul.mubr.bf16.gmra.mxu0 %v1911
        %v1950 = vpop.f32.mrf.mxu0
        %v1951 = vadd.f32 0.0, %v1950
        %v1952 = vpop.f32.mrf.mxu0
        %v1953 = vpop.f32.mrf.mxu0
        %v1954 = vadd.f32 0.0, %v1953
        %v1955 = vpop.f32.mrf.mxu0
        %1956 = vmatprep.mubr.bf16.mxu0 0
        %1957 = vmatmul.mubr.bf16.gmra.mxu0 %v1914
        %v1958 = vpop.f32.mrf.mxu0
        %v1959 = vadd.f32 0.0, %v1958
        %v1960 = vpop.f32.mrf.mxu0
        %v1961 = vpop.f32.mrf.mxu0
        %v1962 = vadd.f32 0.0, %v1961
        %v1963 = vpop.f32.mrf.mxu0
        %1964 = vdwg.mxu0
        %v1965 = vpack.c.bf16 %v1615, %v1614
        %v1966 = vpack.c.bf16 %v1617, %v1616
        %v1967 = vpack.c.bf16 %v1619, %v1618
        %v1968 = vpack.c.bf16 %v1621, %v1620
        %1969 = vmatprep.subr.bf16.mxu0 0
        %1970 = vmatpush1.bf16.msra.mxu0 0
        %1971 = vmatprep.subr.bf16.mxu0 0
        %1972 = vmatpush1.bf16.msra.mxu0 0
        %1973 = vmatprep.subr.bf16.mxu0 0
        %1974 = vmatpush1.bf16.msra.mxu0 0
        %1975 = vmatprep.subr.bf16.mxu0 0
        %1976 = vmatpush1.bf16.msra.mxu0 0
        %1977 = vmatprep.subr.bf16.mxu0 0
        %1978 = vmatpush1.bf16.msra.mxu0 %v1968
        %1979 = vmatprep.subr.bf16.mxu0 0
        %1980 = vmatpush1.bf16.msra.mxu0 %v1967
        %1981 = vmatprep.subr.bf16.mxu0 0
        %1982 = vmatpush1.bf16.msra.mxu0 %v1966
        %1983 = vmatprep.subr.bf16.mxu0 0
        %1984 = vmatpush1.bf16.msra.mxu0 %v1965
        %1985 = vmatprep.subr.bf16.mxu0 0
        %1986 = vmatpush2.bf16.msra.mxu0 0
        %1987 = vmatprep.subr.bf16.mxu0 0
        %1988 = vmatpush2.bf16.msra.mxu0 0
        %1989 = vmatprep.subr.bf16.mxu0 0
        %1990 = vmatpush2.bf16.msra.mxu0 0
        %1991 = vmatprep.subr.bf16.mxu0 0
        %1992 = vmatpush2.bf16.msra.mxu0 0
        %1993 = vmatprep.subr.bf16.mxu0 0
        %1994 = vmatpush2.bf16.msra.mxu0 0
        %1995 = vmatprep.subr.bf16.mxu0 0
        %1996 = vmatpush2.bf16.msra.mxu0 0
        %1997 = vmatprep.subr.bf16.mxu0 0
        %1998 = vmatpush2.bf16.msra.mxu0 0
        %1999 = vmatprep.subr.bf16.mxu0 0
        %2000 = vmatpush2.bf16.msra.mxu0 0
        %2001 = vmatprep.mubr.bf16.mxu0 0
        %2002 = vmatmul.mubr.bf16.gmra.mxu0 %v1911
        %v2003 = vpop.f32.mrf.mxu0
        %v2004 = vadd.f32 0.0, %v2003
        %v2005 = vpop.f32.mrf.mxu0
        %v2006 = vpop.f32.mrf.mxu0
        %v2007 = vadd.f32 0.0, %v2006
        %v2008 = vpop.f32.mrf.mxu0
        %2009 = vmatprep.mubr.bf16.mxu0 0
        %2010 = vmatmul.mubr.bf16.gmra.mxu0 %v1914
        %v2011 = vpop.f32.mrf.mxu0
        %v2012 = vadd.f32 0.0, %v2011
        %v2013 = vpop.f32.mrf.mxu0
        %v2014 = vpop.f32.mrf.mxu0
        %v2015 = vadd.f32 0.0, %v2014
        %v2016 = vpop.f32.mrf.mxu0
        %2017 = vdwg.mxu0
        %2018 = vst [vmem:[#allocation5] sm:$0xff] 0.0
        %2019 = vst [vmem:[#allocation5 + $0x28] sm:$0xff] 0.0
        %2020 = vst [vmem:[#allocation5 + $0x8] sm:$0xff] %v1951
        %2021 = vst [vmem:[#allocation5 + $0x10] sm:$0xff] %v1954
        %2022 = vst [vmem:[#allocation5 + $0x18] sm:$0xff] %v1959
        %2023 = vst [vmem:[#allocation5 + $0x20] sm:$0xff] %v1962
        %v2024 = vld [vmem:[#allocation5 + $0x7] sm:$0xff]
        %v2025 = vld [vmem:[#allocation5 + $0xf] sm:$0xff]
        %v2026 = vld [vmem:[#allocation5 + $0x17] sm:$0xff]
        %v2027 = vld [vmem:[#allocation5 + $0x1f] sm:$0xff]
        %v2028 = vld [vmem:[#allocation5 + $0x8] sm:$0xff]
        %v2029 = vld [vmem:[#allocation5 + $0x10] sm:$0xff]
        %v2030 = vld [vmem:[#allocation5 + $0x18] sm:$0xff]
        %v2031 = vld [vmem:[#allocation5 + $0x20] sm:$0xff]
        %v2032 = vld [vmem:[#allocation5 + $0x9] sm:$0xff]
        %v2033 = vld [vmem:[#allocation5 + $0x11] sm:$0xff]
        %v2034 = vld [vmem:[#allocation5 + $0x19] sm:$0xff]
        %v2035 = vld [vmem:[#allocation5 + $0x21] sm:$0xff]
        %v2036 = vpack.c.bf16 %v2025, %v2024
        %v2037 = vpack.c.bf16 %v2029, %v2028
        %v2038 = vpack.c.bf16 %v2033, %v2032
        %v2039 = vpack.c.bf16 %v2007, %v2004
        %v2040 = vpack.c.bf16 %v2027, %v2026
        %v2041 = vpack.c.bf16 %v2031, %v2030
        %v2042 = vpack.c.bf16 %v2035, %v2034
        %v2043 = vpack.c.bf16 %v2015, %v2012
        %v2044 = vld [vmem:[#allocation19] sm:$0xf]
        %v2045 = vld [vmem:[#allocation19 + $0x4] sm:$0xf]
        %v2046 = vld [vmem:[#allocation19 + $0x8] sm:$0xf]
        %v2047 = vld [vmem:[#allocation19 + $0xc] sm:$0xf]
        %v2048 = vld [vmem:[#allocation19 + $0x10] sm:$0xf]
        %v2049 = vld [vmem:[#allocation19 + $0x14] sm:$0xf]
        %v2050 = vld [vmem:[#allocation19 + $0x18] sm:$0xf]
        %v2051 = vld [vmem:[#allocation19 + $0x1c] sm:$0xf]
        %v2052 = vld [vmem:[#allocation19 + $0x20] sm:$0xf]
        %v2053 = vld [vmem:[#allocation19 + $0x24] sm:$0xf]
        %v2054 = vld [vmem:[#allocation19 + $0x28] sm:$0xf]
        %v2055 = vld [vmem:[#allocation19 + $0x2c] sm:$0xf]
        %v2056 = vld [vmem:[#allocation19 + $0x30] sm:$0xf]
        %v2057 = vld [vmem:[#allocation19 + $0x34] sm:$0xf]
        %v2058 = vld [vmem:[#allocation19 + $0x38] sm:$0xf]
        %v2059 = vld [vmem:[#allocation19 + $0x3c] sm:$0xf]
        %v2060 = vld [vmem:[#allocation19 + $0x40] sm:$0xf]
        %v2061 = vld [vmem:[#allocation19 + $0x44] sm:$0xf]
        %v2062 = vld [vmem:[#allocation19 + $0x48] sm:$0xf]
        %v2063 = vld [vmem:[#allocation19 + $0x4c] sm:$0xf]
        %v2064 = vld [vmem:[#allocation19 + $0x50] sm:$0xf]
        %v2065 = vld [vmem:[#allocation19 + $0x54] sm:$0xf]
        %v2066 = vld [vmem:[#allocation19 + $0x58] sm:$0xf]
        %v2067 = vld [vmem:[#allocation19 + $0x5c] sm:$0xf]
        %v2068 = vld [vmem:[#allocation19 + $0x60] sm:$0xf]
        %v2069 = vld [vmem:[#allocation19 + $0x64] sm:$0xf]
        %v2070 = vld [vmem:[#allocation19 + $0x68] sm:$0xf]
        %v2071 = vld [vmem:[#allocation19 + $0x6c] sm:$0xf]
        %v2072 = vld [vmem:[#allocation19 + $0x70] sm:$0xf]
        %v2073 = vld [vmem:[#allocation19 + $0x74] sm:$0xf]
        %v2074 = vld [vmem:[#allocation19 + $0x78] sm:$0xf]
        %v2075 = vld [vmem:[#allocation19 + $0x7c] sm:$0xf]
        %v2076 = vld [vmem:[#allocation19 + $0x80] sm:$0xf]
        %v2077 = vld [vmem:[#allocation19 + $0x84] sm:$0xf]
        %v2078 = vld [vmem:[#allocation19 + $0x88] sm:$0xf]
        %v2079 = vld [vmem:[#allocation19 + $0x8c] sm:$0xf]
        %v2080 = vld [vmem:[#allocation19 + $0x90] sm:$0xf]
        %v2081 = vld [vmem:[#allocation19 + $0x94] sm:$0xf]
        %v2082 = vld [vmem:[#allocation19 + $0x98] sm:$0xf]
        %v2083 = vld [vmem:[#allocation19 + $0x9c] sm:$0xf]
        %v2084 = vld [vmem:[#allocation19 + $0xa0] sm:$0xf]
        %v2085 = vld [vmem:[#allocation19 + $0xa4] sm:$0xf]
        %v2086 = vld [vmem:[#allocation19 + $0xa8] sm:$0xf]
        %v2087 = vld [vmem:[#allocation19 + $0xac] sm:$0xf]
        %v2088 = vld [vmem:[#allocation19 + $0xb0] sm:$0xf]
        %v2089 = vld [vmem:[#allocation19 + $0xb4] sm:$0xf]
        %v2090 = vld [vmem:[#allocation19 + $0xb8] sm:$0xf]
        %v2091 = vld [vmem:[#allocation19 + $0xbc] sm:$0xf]
        %v2092 = vld [vmem:[#allocation19 + $0xc0] sm:$0xf]
        %v2093 = vld [vmem:[#allocation19 + $0xc4] sm:$0xf]
        %v2094 = vld [vmem:[#allocation19 + $0xc8] sm:$0xf]
        %v2095 = vld [vmem:[#allocation19 + $0xcc] sm:$0xf]
        %v2096 = vld [vmem:[#allocation19 + $0xd0] sm:$0xf]
        %v2097 = vld [vmem:[#allocation19 + $0xd4] sm:$0xf]
        %v2098 = vld [vmem:[#allocation19 + $0xd8] sm:$0xf]
        %v2099 = vld [vmem:[#allocation19 + $0xdc] sm:$0xf]
        %v2100 = vld [vmem:[%s10] sm:$0x1]
        %v2102 = vlaneseq
        %v2103 = vshrl.u32 %v2102, 7
        %v2104 = vsub.s32 0, %v2103
        %v2105 = vrot.slane %v2100, %v2104
        %v2163 = vunpack.c.l.b16 %v2044
        %v2164 = vunpack.c.l.b16 %v2045
        %v2165 = vunpack.c.l.b16 %v2046
        %v2166 = vunpack.c.l.b16 %v2047
        %v2167 = vunpack.c.l.b16 %v2048
        %v2168 = vunpack.c.l.b16 %v2049
        %v2169 = vunpack.c.l.b16 %v2050
        %v2170 = vunpack.c.l.b16 %v2051
        %v2171 = vunpack.c.l.b16 %v2052
        %v2172 = vunpack.c.l.b16 %v2053
        %v2173 = vunpack.c.l.b16 %v2054
        %v2174 = vunpack.c.l.b16 %v2055
        %v2175 = vunpack.c.l.b16 %v2056
        %v2176 = vunpack.c.l.b16 %v2057
        %v2177 = vunpack.c.l.b16 %v2058
        %v2178 = vunpack.c.l.b16 %v2059
        %v2179 = vunpack.c.l.b16 %v2060
        %v2180 = vunpack.c.l.b16 %v2061
        %v2181 = vunpack.c.l.b16 %v2062
        %v2182 = vunpack.c.l.b16 %v2063
        %v2183 = vunpack.c.l.b16 %v2064
        %v2184 = vunpack.c.l.b16 %v2065
        %v2185 = vunpack.c.l.b16 %v2066
        %v2186 = vunpack.c.l.b16 %v2067
        %v2187 = vunpack.c.l.b16 %v2068
        %v2188 = vunpack.c.l.b16 %v2069
        %v2189 = vunpack.c.l.b16 %v2070
        %v2190 = vunpack.c.l.b16 %v2071
        %v2191 = vunpack.c.l.b16 %v2072
        %v2192 = vunpack.c.l.b16 %v2073
        %v2193 = vunpack.c.l.b16 %v2074
        %v2194 = vunpack.c.l.b16 %v2075
        %v2195 = vunpack.c.l.b16 %v2076
        %v2196 = vunpack.c.l.b16 %v2077
        %v2197 = vunpack.c.l.b16 %v2078
        %v2198 = vunpack.c.l.b16 %v2079
        %v2199 = vunpack.c.l.b16 %v2080
        %v2200 = vunpack.c.l.b16 %v2081
        %v2201 = vunpack.c.l.b16 %v2082
        %v2202 = vunpack.c.l.b16 %v2083
        %v2203 = vunpack.c.l.b16 %v2084
        %v2204 = vunpack.c.l.b16 %v2085
        %v2205 = vunpack.c.l.b16 %v2086
        %v2206 = vunpack.c.l.b16 %v2087
        %v2207 = vunpack.c.l.b16 %v2088
        %v2208 = vunpack.c.l.b16 %v2089
        %v2209 = vunpack.c.l.b16 %v2090
        %v2210 = vunpack.c.l.b16 %v2091
        %v2211 = vunpack.c.l.b16 %v2092
        %v2212 = vunpack.c.l.b16 %v2093
        %v2213 = vunpack.c.l.b16 %v2094
        %v2214 = vunpack.c.l.b16 %v2095
        %v2215 = vunpack.c.l.b16 %v2096
        %v2216 = vunpack.c.l.b16 %v2097
        %v2217 = vunpack.c.l.b16 %v2098
        %v2218 = vunpack.c.l.b16 %v2099
        %v2219 = vpack.c.b16 %v2164, %v2163
        %v2220 = vpack.c.b16 %v2166, %v2165
        %v2221 = vpack.c.b16 %v2168, %v2167
        %v2222 = vpack.c.b16 %v2170, %v2169
        %v2223 = vpack.c.b16 %v2172, %v2171
        %v2224 = vpack.c.b16 %v2174, %v2173
        %v2225 = vpack.c.b16 %v2176, %v2175
        %v2226 = vpack.c.b16 %v2178, %v2177
        %v2227 = vpack.c.b16 %v2180, %v2179
        %v2228 = vpack.c.b16 %v2182, %v2181
        %v2229 = vpack.c.b16 %v2184, %v2183
        %v2230 = vpack.c.b16 %v2186, %v2185
        %v2231 = vpack.c.b16 %v2188, %v2187
        %v2232 = vpack.c.b16 %v2190, %v2189
        %v2233 = vpack.c.b16 %v2192, %v2191
        %v2234 = vpack.c.b16 %v2194, %v2193
        %v2235 = vpack.c.b16 %v2196, %v2195
        %v2236 = vpack.c.b16 %v2198, %v2197
        %v2237 = vpack.c.b16 %v2200, %v2199
        %v2238 = vpack.c.b16 %v2202, %v2201
        %v2239 = vpack.c.b16 %v2204, %v2203
        %v2240 = vpack.c.b16 %v2206, %v2205
        %v2241 = vpack.c.b16 %v2208, %v2207
        %v2242 = vpack.c.b16 %v2210, %v2209
        %v2243 = vpack.c.b16 %v2212, %v2211
        %v2244 = vpack.c.b16 %v2214, %v2213
        %v2245 = vpack.c.b16 %v2216, %v2215
        %v2246 = vpack.c.b16 %v2218, %v2217
        %v2276 = vsel %vm1073, %v2039, 0
        %v2279 = vsel %vm1073, %v2043, 0
        %2281 = vmatprep.subr.bf16.mxu0 0
        %2282 = vmatpush1.bf16.msra.mxu0 %v2226
        %2283 = vmatprep.subr.bf16.mxu0 0
        %2284 = vmatpush1.bf16.msra.mxu0 %v2225
        %2285 = vmatprep.subr.bf16.mxu0 0
        %2286 = vmatpush1.bf16.msra.mxu0 %v2224
        %2287 = vmatprep.subr.bf16.mxu0 0
        %2288 = vmatpush1.bf16.msra.mxu0 %v2223
        %2289 = vmatprep.subr.bf16.mxu0 0
        %2290 = vmatpush1.bf16.msra.mxu0 %v2222
        %2291 = vmatprep.subr.bf16.mxu0 0
        %2292 = vmatpush1.bf16.msra.mxu0 %v2221
        %2293 = vmatprep.subr.bf16.mxu0 0
        %2294 = vmatpush1.bf16.msra.mxu0 %v2220
        %2295 = vmatprep.subr.bf16.mxu0 0
        %2296 = vmatpush1.bf16.msra.mxu0 %v2219
        %2297 = vmatprep.subr.bf16.mxu0 0
        %2298 = vmatpush2.bf16.msra.mxu0 %v2234
        %2299 = vmatprep.subr.bf16.mxu0 0
        %2300 = vmatpush2.bf16.msra.mxu0 %v2233
        %2301 = vmatprep.subr.bf16.mxu0 0
        %2302 = vmatpush2.bf16.msra.mxu0 %v2232
        %2303 = vmatprep.subr.bf16.mxu0 0
        %2304 = vmatpush2.bf16.msra.mxu0 %v2231
        %2305 = vmatprep.subr.bf16.mxu0 0
        %2306 = vmatpush2.bf16.msra.mxu0 %v2230
        %2307 = vmatprep.subr.bf16.mxu0 0
        %2308 = vmatpush2.bf16.msra.mxu0 %v2229
        %2309 = vmatprep.subr.bf16.mxu0 0
        %2310 = vmatpush2.bf16.msra.mxu0 %v2228
        %2311 = vmatprep.subr.bf16.mxu0 0
        %2312 = vmatpush2.bf16.msra.mxu0 %v2227
        %2313 = vmatprep.mubr.bf16.mxu0 %v2037
        %2314 = vmatmul.mubr.bf16.gmra.mxu0 %v2036
        %v2315 = vpop.f32.mrf.mxu0
        %v2316 = vadd.f32 %v2105, %v2315
        %v2317 = vpop.f32.mrf.mxu0
        %v2318 = vpop.f32.mrf.mxu0
        %v2319 = vadd.f32 %v2105, %v2318
        %v2320 = vpop.f32.mrf.mxu0
        %2321 = vmatprep.mubr.bf16.mxu0 %v2041
        %2322 = vmatmul.mubr.bf16.gmra.mxu0 %v2040
        %v2323 = vpop.f32.mrf.mxu0
        %v2324 = vadd.f32 %v2105, %v2323
        %v2325 = vpop.f32.mrf.mxu0
        %v2326 = vpop.f32.mrf.mxu0
        %v2327 = vadd.f32 %v2105, %v2326
        %v2328 = vpop.f32.mrf.mxu0
        %2329 = vdwg.mxu0
        %2330 = vmatprep.subr.bf16.mxu0 0
        %2331 = vmatpush1.bf16.msra.mxu0 %v2242
        %2332 = vmatprep.subr.bf16.mxu0 0
        %2333 = vmatpush1.bf16.msra.mxu0 %v2241
        %2334 = vmatprep.subr.bf16.mxu0 0
        %2335 = vmatpush1.bf16.msra.mxu0 %v2240
        %2336 = vmatprep.subr.bf16.mxu0 0
        %2337 = vmatpush1.bf16.msra.mxu0 %v2239
        %2338 = vmatprep.subr.bf16.mxu0 0
        %2339 = vmatpush1.bf16.msra.mxu0 %v2238
        %2340 = vmatprep.subr.bf16.mxu0 0
        %2341 = vmatpush1.bf16.msra.mxu0 %v2237
        %2342 = vmatprep.subr.bf16.mxu0 0
        %2343 = vmatpush1.bf16.msra.mxu0 %v2236
        %2344 = vmatprep.subr.bf16.mxu0 0
        %2345 = vmatpush1.bf16.msra.mxu0 %v2235
        %2346 = vmatprep.subr.bf16.mxu0 0
        %2347 = vmatpush2.bf16.msra.mxu0 0
        %2348 = vmatprep.subr.bf16.mxu0 0
        %2349 = vmatpush2.bf16.msra.mxu0 0
        %2350 = vmatprep.subr.bf16.mxu0 0
        %2351 = vmatpush2.bf16.msra.mxu0 0
        %2352 = vmatprep.subr.bf16.mxu0 0
        %2353 = vmatpush2.bf16.msra.mxu0 0
        %2354 = vmatprep.subr.bf16.mxu0 0
        %2355 = vmatpush2.bf16.msra.mxu0 %v2246
        %2356 = vmatprep.subr.bf16.mxu0 0
        %2357 = vmatpush2.bf16.msra.mxu0 %v2245
        %2358 = vmatprep.subr.bf16.mxu0 0
        %2359 = vmatpush2.bf16.msra.mxu0 %v2244
        %2360 = vmatprep.subr.bf16.mxu0 0
        %2361 = vmatpush2.bf16.msra.mxu0 %v2243
        %2362 = vmatprep.mubr.bf16.mxu0 %v2276
        %2363 = vmatmul.mubr.bf16.gmra.mxu0 %v2038
        %v2364 = vpop.f32.mrf.mxu0
        %v2365 = vadd.f32 %v2316, %v2364
        %v2366 = vpop.f32.mrf.mxu0
        %v2367 = vpop.f32.mrf.mxu0
        %v2368 = vadd.f32 %v2319, %v2367
        %v2369 = vpop.f32.mrf.mxu0
        %2370 = vmatprep.mubr.bf16.mxu0 %v2279
        %2371 = vmatmul.mubr.bf16.gmra.mxu0 %v2042
        %v2372 = vpop.f32.mrf.mxu0
        %v2373 = vadd.f32 %v2324, %v2372
        %v2374 = vpop.f32.mrf.mxu0
        %v2375 = vpop.f32.mrf.mxu0
        %v2376 = vadd.f32 %v2327, %v2375
        %v2377 = vpop.f32.mrf.mxu0
        %2378 = vdwg.mxu0
        %v2379 = vmax.f32 %v2365, 0.0
        %v2380 = vmax.f32 %v2368, 0.0
        %v2381 = vmax.f32 %v2373, 0.0
        %v2382 = vmax.f32 %v2376, 0.0
        %2383 = vst [vmem:[#allocation6] sm:$0xff] 0.0
        %2384 = vst [vmem:[#allocation6 + $0x28] sm:$0xff] 0.0
        %2385 = vst [vmem:[#allocation6 + $0x8] sm:$0xff] %v2379
        %2386 = vst [vmem:[#allocation6 + $0x10] sm:$0xff] %v2380
        %2387 = vst [vmem:[#allocation6 + $0x18] sm:$0xff] %v2381
        %2388 = vst [vmem:[#allocation6 + $0x20] sm:$0xff] %v2382
        %v2389 = vld [vmem:[#allocation6 + $0x7] sm:$0xff]
        %v2390 = vld [vmem:[#allocation6 + $0xf] sm:$0xff]
        %v2391 = vld [vmem:[#allocation6 + $0x17] sm:$0xff]
        %v2392 = vld [vmem:[#allocation6 + $0x1f] sm:$0xff]
        %v2393 = vld [vmem:[#allocation6 + $0x8] sm:$0xff]
        %v2394 = vld [vmem:[#allocation6 + $0x10] sm:$0xff]
        %v2395 = vld [vmem:[#allocation6 + $0x18] sm:$0xff]
        %v2396 = vld [vmem:[#allocation6 + $0x20] sm:$0xff]
        %v2397 = vld [vmem:[#allocation6 + $0x9] sm:$0xff]
        %v2398 = vld [vmem:[#allocation6 + $0x11] sm:$0xff]
        %v2399 = vld [vmem:[#allocation6 + $0x19] sm:$0xff]
        %v2400 = vld [vmem:[#allocation6 + $0x21] sm:$0xff]
        %v2401 = vpack.c.bf16 %v2390, %v2389
        %v2402 = vpack.c.bf16 %v2394, %v2393
        %v2403 = vpack.c.bf16 %v2398, %v2397
        %v2404 = vpack.c.bf16 %v2392, %v2391
        %v2405 = vpack.c.bf16 %v2396, %v2395
        %v2406 = vpack.c.bf16 %v2400, %v2399
        %v2407 = vld [vmem:[#allocation22] sm:$0xff]
        %v2408 = vld [vmem:[#allocation22 + $0x8] sm:$0xff]
        %v2409 = vld [vmem:[#allocation22 + $0x10] sm:$0xff]
        %v2410 = vld [vmem:[#allocation22 + $0x18] sm:$0xff]
        %v2411 = vld [vmem:[#allocation22 + $0x20] sm:$0xff]
        %v2412 = vld [vmem:[#allocation22 + $0x28] sm:$0xff]
        %v2413 = vld [vmem:[#allocation22 + $0x30] sm:$0xff]
        %v2414 = vld [vmem:[#allocation22 + $0x38] sm:$0xff]
        %v2415 = vld [vmem:[#allocation22 + $0x40] sm:$0xff]
        %v2416 = vld [vmem:[#allocation22 + $0x48] sm:$0xff]
        %v2417 = vld [vmem:[#allocation22 + $0x50] sm:$0xff]
        %v2418 = vld [vmem:[#allocation22 + $0x58] sm:$0xff]
        %v2419 = vld [vmem:[#allocation22 + $0x60] sm:$0xff]
        %v2420 = vld [vmem:[#allocation22 + $0x68] sm:$0xff]
        %v2421 = vld [vmem:[#allocation22 + $0x70] sm:$0xff]
        %v2422 = vld [vmem:[#allocation22 + $0x78] sm:$0xff]
        %v2423 = vld [vmem:[#allocation22 + $0x80] sm:$0xff]
        %v2424 = vld [vmem:[#allocation22 + $0x88] sm:$0xff]
        %v2425 = vld [vmem:[#allocation22 + $0x90] sm:$0xff]
        %v2426 = vld [vmem:[#allocation22 + $0x98] sm:$0xff]
        %v2427 = vld [vmem:[#allocation22 + $0xa0] sm:$0xff]
        %v2428 = vld [vmem:[#allocation22 + $0xa8] sm:$0xff]
        %v2429 = vld [vmem:[#allocation22 + $0xb0] sm:$0xff]
        %v2430 = vld [vmem:[#allocation22 + $0xb8] sm:$0xff]
        %v2431 = vld [vmem:[#allocation22 + $0xc0] sm:$0xff]
        %v2432 = vld [vmem:[#allocation22 + $0xc8] sm:$0xff]
        %v2433 = vld [vmem:[#allocation22 + $0xd0] sm:$0xff]
        %v2434 = vld [vmem:[#allocation22 + $0xd8] sm:$0xff]
        %v2435 = vld [vmem:[#allocation22 + $0xe0] sm:$0xff]
        %v2436 = vld [vmem:[#allocation22 + $0xe8] sm:$0xff]
        %v2437 = vld [vmem:[#allocation22 + $0xf0] sm:$0xff]
        %v2438 = vld [vmem:[#allocation22 + $0xf8] sm:$0xff]
        %v2439 = vld [vmem:[#allocation22 + $0x100] sm:$0xff]
        %v2440 = vld [vmem:[#allocation22 + $0x108] sm:$0xff]
        %v2441 = vld [vmem:[#allocation22 + $0x110] sm:$0xff]
        %v2442 = vld [vmem:[#allocation22 + $0x118] sm:$0xff]
        %v2443 = vld [vmem:[#allocation22 + $0x120] sm:$0xff]
        %v2444 = vld [vmem:[#allocation22 + $0x128] sm:$0xff]
        %v2445 = vld [vmem:[#allocation22 + $0x130] sm:$0xff]
        %v2446 = vld [vmem:[#allocation22 + $0x138] sm:$0xff]
        %v2447 = vld [vmem:[#allocation22 + $0x140] sm:$0xff]
        %v2448 = vld [vmem:[#allocation22 + $0x148] sm:$0xff]
        %v2449 = vld [vmem:[#allocation22 + $0x150] sm:$0xff]
        %v2450 = vld [vmem:[#allocation22 + $0x158] sm:$0xff]
        %v2451 = vld [vmem:[#allocation22 + $0x160] sm:$0xff]
        %v2452 = vld [vmem:[#allocation22 + $0x168] sm:$0xff]
        %v2453 = vld [vmem:[#allocation22 + $0x170] sm:$0xff]
        %v2454 = vld [vmem:[#allocation22 + $0x178] sm:$0xff]
        %v2455 = vld [vmem:[%s13] sm:$0x3]
        %v2457 = vlaneseq
        %v2458 = vshrl.u32 %v2457, 7
        %v2459 = vsub.s32 0, %v2458
        %v2460 = vrot.slane %v2455, %v2459
        %v2461 = vlaneseq
        %v2462 = vshrl.u32 %v2461, 7
        %v2463 = vsub.s32 1, %v2462
        %v2464 = vrot.slane %v2455, %v2463
        %v2515 = vunpack.c.l.b16 %v2407
        %v2516 = vunpack.c.h.b16 %v2407
        %v2517 = vunpack.c.l.b16 %v2408
        %v2518 = vunpack.c.h.b16 %v2408
        %v2519 = vunpack.c.l.b16 %v2409
        %v2520 = vunpack.c.h.b16 %v2409
        %v2521 = vunpack.c.l.b16 %v2410
        %v2522 = vunpack.c.h.b16 %v2410
        %v2523 = vunpack.c.l.b16 %v2411
        %v2524 = vunpack.c.h.b16 %v2411
        %v2525 = vunpack.c.l.b16 %v2412
        %v2526 = vunpack.c.h.b16 %v2412
        %v2527 = vunpack.c.l.b16 %v2413
        %v2528 = vunpack.c.h.b16 %v2413
        %v2529 = vunpack.c.l.b16 %v2414
        %v2530 = vunpack.c.h.b16 %v2414
        %v2531 = vunpack.c.l.b16 %v2415
        %v2532 = vunpack.c.h.b16 %v2415
        %v2533 = vunpack.c.l.b16 %v2416
        %v2534 = vunpack.c.h.b16 %v2416
        %v2535 = vunpack.c.l.b16 %v2417
        %v2536 = vunpack.c.h.b16 %v2417
        %v2537 = vunpack.c.l.b16 %v2418
        %v2538 = vunpack.c.h.b16 %v2418
        %v2539 = vunpack.c.l.b16 %v2419
        %v2540 = vunpack.c.h.b16 %v2419
        %v2541 = vunpack.c.l.b16 %v2420
        %v2542 = vunpack.c.h.b16 %v2420
        %v2543 = vunpack.c.l.b16 %v2421
        %v2544 = vunpack.c.h.b16 %v2421
        %v2545 = vunpack.c.l.b16 %v2422
        %v2546 = vunpack.c.h.b16 %v2422
        %v2547 = vunpack.c.l.b16 %v2423
        %v2548 = vunpack.c.h.b16 %v2423
        %v2549 = vunpack.c.l.b16 %v2424
        %v2550 = vunpack.c.h.b16 %v2424
        %v2551 = vunpack.c.l.b16 %v2425
        %v2552 = vunpack.c.h.b16 %v2425
        %v2553 = vunpack.c.l.b16 %v2426
        %v2554 = vunpack.c.h.b16 %v2426
        %v2555 = vunpack.c.l.b16 %v2427
        %v2556 = vunpack.c.h.b16 %v2427
        %v2557 = vunpack.c.l.b16 %v2428
        %v2558 = vunpack.c.h.b16 %v2428
        %v2559 = vunpack.c.l.b16 %v2429
        %v2560 = vunpack.c.h.b16 %v2429
        %v2561 = vunpack.c.l.b16 %v2430
        %v2562 = vunpack.c.h.b16 %v2430
        %v2563 = vunpack.c.l.b16 %v2431
        %v2564 = vunpack.c.h.b16 %v2431
        %v2565 = vunpack.c.l.b16 %v2432
        %v2566 = vunpack.c.h.b16 %v2432
        %v2567 = vunpack.c.l.b16 %v2433
        %v2568 = vunpack.c.h.b16 %v2433
        %v2569 = vunpack.c.l.b16 %v2434
        %v2570 = vunpack.c.h.b16 %v2434
        %v2571 = vunpack.c.l.b16 %v2435
        %v2572 = vunpack.c.h.b16 %v2435
        %v2573 = vunpack.c.l.b16 %v2436
        %v2574 = vunpack.c.h.b16 %v2436
        %v2575 = vunpack.c.l.b16 %v2437
        %v2576 = vunpack.c.h.b16 %v2437
        %v2577 = vunpack.c.l.b16 %v2438
        %v2578 = vunpack.c.h.b16 %v2438
        %v2579 = vunpack.c.l.b16 %v2439
        %v2580 = vunpack.c.h.b16 %v2439
        %v2581 = vunpack.c.l.b16 %v2440
        %v2582 = vunpack.c.h.b16 %v2440
        %v2583 = vunpack.c.l.b16 %v2441
        %v2584 = vunpack.c.h.b16 %v2441
        %v2585 = vunpack.c.l.b16 %v2442
        %v2586 = vunpack.c.h.b16 %v2442
        %v2587 = vunpack.c.l.b16 %v2443
        %v2588 = vunpack.c.h.b16 %v2443
        %v2589 = vunpack.c.l.b16 %v2444
        %v2590 = vunpack.c.h.b16 %v2444
        %v2591 = vunpack.c.l.b16 %v2445
        %v2592 = vunpack.c.h.b16 %v2445
        %v2593 = vunpack.c.l.b16 %v2446
        %v2594 = vunpack.c.h.b16 %v2446
        %v2595 = vunpack.c.l.b16 %v2447
        %v2596 = vunpack.c.h.b16 %v2447
        %v2597 = vunpack.c.l.b16 %v2448
        %v2598 = vunpack.c.h.b16 %v2448
        %v2599 = vunpack.c.l.b16 %v2449
        %v2600 = vunpack.c.h.b16 %v2449
        %v2601 = vunpack.c.l.b16 %v2450
        %v2602 = vunpack.c.h.b16 %v2450
        %v2603 = vunpack.c.l.b16 %v2451
        %v2604 = vunpack.c.h.b16 %v2451
        %v2605 = vunpack.c.l.b16 %v2452
        %v2606 = vunpack.c.h.b16 %v2452
        %v2607 = vunpack.c.l.b16 %v2453
        %v2608 = vunpack.c.h.b16 %v2453
        %v2609 = vunpack.c.l.b16 %v2454
        %v2610 = vunpack.c.h.b16 %v2454
        %v2611 = vpack.c.b16 %v2517, %v2515
        %v2612 = vpack.c.b16 %v2518, %v2516
        %v2613 = vpack.c.b16 %v2521, %v2519
        %v2614 = vpack.c.b16 %v2522, %v2520
        %v2615 = vpack.c.b16 %v2525, %v2523
        %v2616 = vpack.c.b16 %v2526, %v2524
        %v2617 = vpack.c.b16 %v2529, %v2527
        %v2618 = vpack.c.b16 %v2530, %v2528
        %v2619 = vpack.c.b16 %v2533, %v2531
        %v2620 = vpack.c.b16 %v2534, %v2532
        %v2621 = vpack.c.b16 %v2537, %v2535
        %v2622 = vpack.c.b16 %v2538, %v2536
        %v2623 = vpack.c.b16 %v2541, %v2539
        %v2624 = vpack.c.b16 %v2542, %v2540
        %v2625 = vpack.c.b16 %v2545, %v2543
        %v2626 = vpack.c.b16 %v2546, %v2544
        %v2627 = vpack.c.b16 %v2549, %v2547
        %v2628 = vpack.c.b16 %v2550, %v2548
        %v2629 = vpack.c.b16 %v2553, %v2551
        %v2630 = vpack.c.b16 %v2554, %v2552
        %v2631 = vpack.c.b16 %v2557, %v2555
        %v2632 = vpack.c.b16 %v2558, %v2556
        %v2633 = vpack.c.b16 %v2561, %v2559
        %v2634 = vpack.c.b16 %v2562, %v2560
        %v2635 = vpack.c.b16 %v2565, %v2563
        %v2636 = vpack.c.b16 %v2566, %v2564
        %v2637 = vpack.c.b16 %v2569, %v2567
        %v2638 = vpack.c.b16 %v2570, %v2568
        %v2639 = vpack.c.b16 %v2573, %v2571
        %v2640 = vpack.c.b16 %v2574, %v2572
        %v2641 = vpack.c.b16 %v2577, %v2575
        %v2642 = vpack.c.b16 %v2578, %v2576
        %v2643 = vpack.c.b16 %v2581, %v2579
        %v2644 = vpack.c.b16 %v2582, %v2580
        %v2645 = vpack.c.b16 %v2585, %v2583
        %v2646 = vpack.c.b16 %v2586, %v2584
        %v2647 = vpack.c.b16 %v2589, %v2587
        %v2648 = vpack.c.b16 %v2590, %v2588
        %v2649 = vpack.c.b16 %v2593, %v2591
        %v2650 = vpack.c.b16 %v2594, %v2592
        %v2651 = vpack.c.b16 %v2597, %v2595
        %v2652 = vpack.c.b16 %v2598, %v2596
        %v2653 = vpack.c.b16 %v2601, %v2599
        %v2654 = vpack.c.b16 %v2602, %v2600
        %v2655 = vpack.c.b16 %v2605, %v2603
        %v2656 = vpack.c.b16 %v2606, %v2604
        %v2657 = vpack.c.b16 %v2609, %v2607
        %v2658 = vpack.c.b16 %v2610, %v2608
        %2707 = vmatprep.subr.bf16.mxu0 %v2626
        %2708 = vmatpush1.bf16.msra.mxu0 %v2625
        %2709 = vmatprep.subr.bf16.mxu0 %v2624
        %2710 = vmatpush1.bf16.msra.mxu0 %v2623
        %2711 = vmatprep.subr.bf16.mxu0 %v2622
        %2712 = vmatpush1.bf16.msra.mxu0 %v2621
        %2713 = vmatprep.subr.bf16.mxu0 %v2620
        %2714 = vmatpush1.bf16.msra.mxu0 %v2619
        %2715 = vmatprep.subr.bf16.mxu0 %v2618
        %2716 = vmatpush1.bf16.msra.mxu0 %v2617
        %2717 = vmatprep.subr.bf16.mxu0 %v2616
        %2718 = vmatpush1.bf16.msra.mxu0 %v2615
        %2719 = vmatprep.subr.bf16.mxu0 %v2614
        %2720 = vmatpush1.bf16.msra.mxu0 %v2613
        %2721 = vmatprep.subr.bf16.mxu0 %v2612
        %2722 = vmatpush1.bf16.msra.mxu0 %v2611
        %2723 = vmatprep.subr.bf16.mxu0 %v2642
        %2724 = vmatpush2.bf16.msra.mxu0 %v2641
        %2725 = vmatprep.subr.bf16.mxu0 %v2640
        %2726 = vmatpush2.bf16.msra.mxu0 %v2639
        %2727 = vmatprep.subr.bf16.mxu0 %v2638
        %2728 = vmatpush2.bf16.msra.mxu0 %v2637
        %2729 = vmatprep.subr.bf16.mxu0 %v2636
        %2730 = vmatpush2.bf16.msra.mxu0 %v2635
        %2731 = vmatprep.subr.bf16.mxu0 %v2634
        %2732 = vmatpush2.bf16.msra.mxu0 %v2633
        %2733 = vmatprep.subr.bf16.mxu0 %v2632
        %2734 = vmatpush2.bf16.msra.mxu0 %v2631
        %2735 = vmatprep.subr.bf16.mxu0 %v2630
        %2736 = vmatpush2.bf16.msra.mxu0 %v2629
        %2737 = vmatprep.subr.bf16.mxu0 %v2628
        %2738 = vmatpush2.bf16.msra.mxu0 %v2627
        %2739 = vmatprep.mubr.bf16.mxu0 %v2402
        %2740 = vmatmul.mubr.bf16.gmra.mxu0 %v2401
        %v2741 = vpop.f32.mrf.mxu0
        %v2742 = vadd.f32 %v2460, %v2741
        %v2743 = vpop.f32.mrf.mxu0
        %v2744 = vadd.f32 %v2464, %v2743
        %v2745 = vpop.f32.mrf.mxu0
        %v2746 = vadd.f32 %v2460, %v2745
        %v2747 = vpop.f32.mrf.mxu0
        %v2748 = vadd.f32 %v2464, %v2747
        %2749 = vmatprep.mubr.bf16.mxu0 %v2405
        %2750 = vmatmul.mubr.bf16.gmra.mxu0 %v2404
        %v2751 = vpop.f32.mrf.mxu0
        %v2752 = vadd.f32 %v2460, %v2751
        %v2753 = vpop.f32.mrf.mxu0
        %v2754 = vadd.f32 %v2464, %v2753
        %v2755 = vpop.f32.mrf.mxu0
        %v2756 = vadd.f32 %v2460, %v2755
        %v2757 = vpop.f32.mrf.mxu0
        %v2758 = vadd.f32 %v2464, %v2757
        %2759 = vdwg.mxu0
        %2760 = vmatprep.subr.bf16.mxu0 %v2658
        %2761 = vmatpush1.bf16.msra.mxu0 %v2657
        %2762 = vmatprep.subr.bf16.mxu0 %v2656
        %2763 = vmatpush1.bf16.msra.mxu0 %v2655
        %2764 = vmatprep.subr.bf16.mxu0 %v2654
        %2765 = vmatpush1.bf16.msra.mxu0 %v2653
        %2766 = vmatprep.subr.bf16.mxu0 %v2652
        %2767 = vmatpush1.bf16.msra.mxu0 %v2651
        %2768 = vmatprep.subr.bf16.mxu0 %v2650
        %2769 = vmatpush1.bf16.msra.mxu0 %v2649
        %2770 = vmatprep.subr.bf16.mxu0 %v2648
        %2771 = vmatpush1.bf16.msra.mxu0 %v2647
        %2772 = vmatprep.subr.bf16.mxu0 %v2646
        %2773 = vmatpush1.bf16.msra.mxu0 %v2645
        %2774 = vmatprep.subr.bf16.mxu0 %v2644
        %2775 = vmatpush1.bf16.msra.mxu0 %v2643
        %2776 = vmatprep.subr.bf16.mxu0 0
        %2777 = vmatpush2.bf16.msra.mxu0 0
        %2778 = vmatprep.subr.bf16.mxu0 0
        %2779 = vmatpush2.bf16.msra.mxu0 0
        %2780 = vmatprep.subr.bf16.mxu0 0
        %2781 = vmatpush2.bf16.msra.mxu0 0
        %2782 = vmatprep.subr.bf16.mxu0 0
        %2783 = vmatpush2.bf16.msra.mxu0 0
        %2784 = vmatprep.subr.bf16.mxu0 0
        %2785 = vmatpush2.bf16.msra.mxu0 0
        %2786 = vmatprep.subr.bf16.mxu0 0
        %2787 = vmatpush2.bf16.msra.mxu0 0
        %2788 = vmatprep.subr.bf16.mxu0 0
        %2789 = vmatpush2.bf16.msra.mxu0 0
        %2790 = vmatprep.subr.bf16.mxu0 0
        %2791 = vmatpush2.bf16.msra.mxu0 0
        %2792 = vmatprep.mubr.bf16.mxu0 0
        %2793 = vmatmul.mubr.bf16.gmra.mxu0 %v2403
        %v2794 = vpop.f32.mrf.mxu0
        %v2795 = vadd.f32 %v2742, %v2794
        %v2796 = vpop.f32.mrf.mxu0
        %v2797 = vadd.f32 %v2744, %v2796
        %v2798 = vpop.f32.mrf.mxu0
        %v2799 = vadd.f32 %v2746, %v2798
        %v2800 = vpop.f32.mrf.mxu0
        %v2801 = vadd.f32 %v2748, %v2800
        %2802 = vmatprep.mubr.bf16.mxu0 0
        %2803 = vmatmul.mubr.bf16.gmra.mxu0 %v2406
        %v2804 = vpop.f32.mrf.mxu0
        %v2805 = vadd.f32 %v2752, %v2804
        %v2806 = vpop.f32.mrf.mxu0
        %v2807 = vadd.f32 %v2754, %v2806
        %v2808 = vpop.f32.mrf.mxu0
        %v2809 = vadd.f32 %v2756, %v2808
        %v2810 = vpop.f32.mrf.mxu0
        %v2811 = vadd.f32 %v2758, %v2810
        %2812 = vdwg.mxu0
        %v2813 = vmax.f32 %v2795, 0.0
        %v2814 = vmax.f32 %v2797, 0.0
        %v2815 = vmax.f32 %v2799, 0.0
        %v2816 = vmax.f32 %v2801, 0.0
        %v2817 = vmax.f32 %v2805, 0.0
        %v2818 = vmax.f32 %v2807, 0.0
        %v2819 = vmax.f32 %v2809, 0.0
        %v2820 = vmax.f32 %v2811, 0.0
        %v2821 = vld [vmem:[#allocation25] sm:$0xf]
        %v2822 = vld [vmem:[#allocation25 + $0x4] sm:$0xf]
        %v2823 = vpack.c.bf16 %v2815, %v2813
        %v2824 = vpack.c.bf16 %v2816, %v2814
        %v2825 = vpack.c.bf16 %v2819, %v2817
        %v2826 = vpack.c.bf16 %v2820, %v2818
        %v2829 = vunpack.c.l.b16 %v2821
        %v2830 = vunpack.c.l.b16 %v2822
        %v2831 = vpack.c.b16 %v2830, %v2829
        %vm2832 = vcmask 261120
        %v2834 = vsel %vm2832, %v2831, 0
        %2836 = vmatprep.subr.bf16.mxu0 0
        %2837 = vmatpush1.bf16.msra.mxu0 0
        %2838 = vmatprep.subr.bf16.mxu0 0
        %2839 = vmatpush1.bf16.msra.mxu0 0
        %2840 = vmatprep.subr.bf16.mxu0 0
        %2841 = vmatpush1.bf16.msra.mxu0 0
        %2842 = vmatprep.subr.bf16.mxu0 0
        %2843 = vmatpush1.bf16.msra.mxu0 0
        %2844 = vmatprep.subr.bf16.mxu0 0
        %2845 = vmatpush1.bf16.msra.mxu0 0
        %2846 = vmatprep.subr.bf16.mxu0 0
        %2847 = vmatpush1.bf16.msra.mxu0 0
        %2848 = vmatprep.subr.bf16.mxu0 %v2826
        %2849 = vmatpush1.bf16.msra.mxu0 %v2825
        %2850 = vmatprep.subr.bf16.mxu0 %v2824
        %2851 = vmatpush1.bf16.msra.mxu0 %v2823
        %2852 = vmatprep.subr.bf16.mxu0 0
        %2853 = vmatpush2.bf16.msra.mxu0 0
        %2854 = vmatprep.subr.bf16.mxu0 0
        %2855 = vmatpush2.bf16.msra.mxu0 0
        %2856 = vmatprep.subr.bf16.mxu0 0
        %2857 = vmatpush2.bf16.msra.mxu0 0
        %2858 = vmatprep.subr.bf16.mxu0 0
        %2859 = vmatpush2.bf16.msra.mxu0 0
        %2860 = vmatprep.subr.bf16.mxu0 0
        %2861 = vmatpush2.bf16.msra.mxu0 0
        %2862 = vmatprep.subr.bf16.mxu0 0
        %2863 = vmatpush2.bf16.msra.mxu0 0
        %2864 = vmatprep.subr.bf16.mxu0 0
        %2865 = vmatpush2.bf16.msra.mxu0 0
        %2866 = vmatprep.subr.bf16.mxu0 0
        %2867 = vmatpush2.bf16.msra.mxu0 0
        %2868 = vmatprep.mubr.bf16.mxu0 0
        %2869 = vmatmul.mubr.bf16.gmra.mxu0 %v2834
        %v2870 = vpop.f32.mrf.mxu0
        %v2871 = vadd.f32 0.0, %v2870
        %v2872 = vpop.f32.mrf.mxu0
        %v2873 = vadd.f32 0.0, %v2872
        %v2874 = vpop.f32.mrf.mxu0
        %v2875 = vadd.f32 0.0, %v2874
        %v2876 = vpop.f32.mrf.mxu0
        %v2877 = vadd.f32 0.0, %v2876
        %2878 = vdwg.mxu0
        %v2879 = vpack.c.bf16 %v2380, %v2379
        %v2880 = vpack.c.bf16 %v2382, %v2381
        %2881 = vmatprep.subr.bf16.mxu0 0
        %2882 = vmatpush1.bf16.msra.mxu0 0
        %2883 = vmatprep.subr.bf16.mxu0 0
        %2884 = vmatpush1.bf16.msra.mxu0 0
        %2885 = vmatprep.subr.bf16.mxu0 0
        %2886 = vmatpush1.bf16.msra.mxu0 0
        %2887 = vmatprep.subr.bf16.mxu0 0
        %2888 = vmatpush1.bf16.msra.mxu0 0
        %2889 = vmatprep.subr.bf16.mxu0 0
        %2890 = vmatpush1.bf16.msra.mxu0 0
        %2891 = vmatprep.subr.bf16.mxu0 0
        %2892 = vmatpush1.bf16.msra.mxu0 0
        %2893 = vmatprep.subr.bf16.mxu0 0
        %2894 = vmatpush1.bf16.msra.mxu0 %v2880
        %2895 = vmatprep.subr.bf16.mxu0 0
        %2896 = vmatpush1.bf16.msra.mxu0 %v2879
        %2897 = vmatprep.subr.bf16.mxu0 0
        %2898 = vmatpush2.bf16.msra.mxu0 0
        %2899 = vmatprep.subr.bf16.mxu0 0
        %2900 = vmatpush2.bf16.msra.mxu0 0
        %2901 = vmatprep.subr.bf16.mxu0 0
        %2902 = vmatpush2.bf16.msra.mxu0 0
        %2903 = vmatprep.subr.bf16.mxu0 0
        %2904 = vmatpush2.bf16.msra.mxu0 0
        %2905 = vmatprep.subr.bf16.mxu0 0
        %2906 = vmatpush2.bf16.msra.mxu0 0
        %2907 = vmatprep.subr.bf16.mxu0 0
        %2908 = vmatpush2.bf16.msra.mxu0 0
        %2909 = vmatprep.subr.bf16.mxu0 0
        %2910 = vmatpush2.bf16.msra.mxu0 0
        %2911 = vmatprep.subr.bf16.mxu0 0
        %2912 = vmatpush2.bf16.msra.mxu0 0
        %2913 = vmatprep.mubr.bf16.mxu0 0
        %2914 = vmatmul.mubr.bf16.gmra.mxu0 %v2834
        %v2915 = vpop.f32.mrf.mxu0
        %v2916 = vadd.f32 0.0, %v2915
        %v2917 = vpop.f32.mrf.mxu0
        %v2918 = vpop.f32.mrf.mxu0
        %v2919 = vadd.f32 0.0, %v2918
        %v2920 = vpop.f32.mrf.mxu0
        %2921 = vdwg.mxu0
        %2922 = vst [vmem:[#allocation7] sm:$0xff] 0.0
        %2923 = vst [vmem:[#allocation7 + $0x8] sm:$0xff] 0.0
        %2924 = vst [vmem:[#allocation7 + $0x30] sm:$0xff] 0.0
        %2925 = vst [vmem:[#allocation7 + $0x38] sm:$0xff] 0.0
        %2926 = vst [vmem:[#allocation7 + $0x10] sm:$0xff] %v2871
        %2927 = vst [vmem:[#allocation7 + $0x18] sm:$0xff] %v2873
        %2928 = vst [vmem:[#allocation7 + $0x20] sm:$0xff] %v2875
        %2929 = vst [vmem:[#allocation7 + $0x28] sm:$0xff] %v2877
        %v2930 = vld [vmem:[#allocation7] sm:$0x80]
        %v2931 = vld [vmem:[#allocation7 + $0x8] sm:$0x80]
        %v2932 = vld [vmem:[#allocation7 + $0x10] sm:$0xff]
        %v2933 = vld [vmem:[#allocation7 + $0x18] sm:$0xff]
        %v2934 = vld [vmem:[#allocation7 + $0x20] sm:$0x7f]
        %v2935 = vld [vmem:[#allocation7 + $0x28] sm:$0x7f]
        %v2936 = vld [vmem:[#allocation7 + $0x20] sm:$0xff]
        %v2937 = vld [vmem:[#allocation7 + $0x28] sm:$0xff]
        %v2938 = vld [vmem:[#allocation7 + $0x10] sm:$0xfe]
        %v2939 = vld [vmem:[#allocation7 + $0x18] sm:$0xfe]
        %v2940 = vld [vmem:[#allocation7 + $0x20] sm:$0xff]
        %v2941 = vld [vmem:[#allocation7 + $0x28] sm:$0xff]
        %v2942 = vld [vmem:[#allocation7 + $0x30] sm:$0x1]
        %v2943 = vld [vmem:[#allocation7 + $0x38] sm:$0x1]
        %vm2948 = vcmask 1046528
        %v2949 = vrot.slane %v2932, 1
        %v2950 = vrot.slane %v2933, 1
        %v2951 = vrot.slane %v2936, 1
        %v2952 = vsel %vm2948, %v2949, %v2951
        %v2953 = vrot.slane %v2937, 1
        %v2954 = vsel %vm2948, %v2950, %v2953
        %vm2967 = vcmask 1045504
        %v2968 = vrot.slane %v2938, 2
        %v2969 = vrot.slane %v2939, 2
        %v2970 = vrot.slane %v2940, 2
        %v2971 = vsel %vm2967, %v2968, %v2970
        %v2972 = vrot.slane %v2941, 2
        %v2973 = vsel %vm2967, %v2969, %v2972
        %v2974 = vrot.slane %v2942, 2
        %v2975 = vsel %vm2967, %v2970, %v2974
        %v2976 = vrot.slane %v2943, 2
        %v2977 = vsel %vm2967, %v2972, %v2976
        %v2986 = vrot.slane %v2916, 1
        %v2987 = vrot.slane %v2919, 1
        %v2988 = vsel %vm2948, %v2986, %v2987
        %v2992 = vpack.c.bf16 %v2932, %v2930
        %v2993 = vpack.c.bf16 %v2933, %v2931
        %v2994 = vpack.c.bf16 %v2952, %v2949
        %v2995 = vpack.c.bf16 %v2954, %v2950
        %v2996 = vpack.c.bf16 %v2971, %v2968
        %v2997 = vpack.c.bf16 %v2973, %v2969
        %v2998 = vpack.c.bf16 %v2988, %v2986
        %v2999 = vpack.c.bf16 %v2934, %v2934
        %v3000 = vpack.c.bf16 %v2935, %v2935
        %v3001 = vpack.c.bf16 %v2951, %v2951
        %v3002 = vpack.c.bf16 %v2953, %v2953
        %v3003 = vpack.c.bf16 %v2975, %v2975
        %v3004 = vpack.c.bf16 %v2977, %v2977
        %v3005 = vpack.c.bf16 %v2987, %v2987
        %v3006 = vld [vmem:[#allocation24] sm:$0xff]
        %v3007 = vld [vmem:[#allocation24 + $0x8] sm:$0xff]
        %v3008 = vld [vmem:[#allocation24 + $0x10] sm:$0xff]
        %v3009 = vld [vmem:[#allocation24 + $0x18] sm:$0xff]
        %v3010 = vld [vmem:[#allocation24 + $0x20] sm:$0xff]
        %v3011 = vld [vmem:[#allocation24 + $0x28] sm:$0xff]
        %v3012 = vld [vmem:[#allocation24 + $0x30] sm:$0xff]
        %v3013 = vld [vmem:[#allocation24 + $0x38] sm:$0xff]
        %v3014 = vld [vmem:[#allocation24 + $0x40] sm:$0xff]
        %v3015 = vld [vmem:[#allocation24 + $0x48] sm:$0xff]
        %v3016 = vld [vmem:[#allocation24 + $0x50] sm:$0xff]
        %v3017 = vld [vmem:[#allocation24 + $0x58] sm:$0xff]
        %v3018 = vld [vmem:[#allocation24 + $0x60] sm:$0xff]
        %v3019 = vld [vmem:[#allocation24 + $0x68] sm:$0xff]
        %v3020 = vld [vmem:[#allocation24 + $0x70] sm:$0xff]
        %v3021 = vld [vmem:[#allocation24 + $0x78] sm:$0xff]
        %v3022 = vld [vmem:[#allocation24 + $0x80] sm:$0xff]
        %v3023 = vld [vmem:[#allocation24 + $0x88] sm:$0xff]
        %v3024 = vld [vmem:[#allocation24 + $0x90] sm:$0xff]
        %v3025 = vld [vmem:[#allocation24 + $0x98] sm:$0xff]
        %v3026 = vld [vmem:[#allocation24 + $0xa0] sm:$0xff]
        %v3027 = vld [vmem:[#allocation24 + $0xa8] sm:$0xff]
        %v3028 = vld [vmem:[#allocation24 + $0xb0] sm:$0xff]
        %v3029 = vld [vmem:[#allocation24 + $0xb8] sm:$0xff]
        %v3030 = vld [vmem:[#allocation24 + $0xc0] sm:$0xff]
        %v3031 = vld [vmem:[#allocation24 + $0xc8] sm:$0xff]
        %v3032 = vld [vmem:[#allocation24 + $0xd0] sm:$0xff]
        %v3033 = vld [vmem:[#allocation24 + $0xd8] sm:$0xff]
        %v3034 = vld [vmem:[#allocation24 + $0xe0] sm:$0xff]
        %v3035 = vld [vmem:[#allocation24 + $0xe8] sm:$0xff]
        %v3036 = vld [vmem:[#allocation24 + $0xf0] sm:$0xff]
        %v3037 = vld [vmem:[#allocation24 + $0xf8] sm:$0xff]
        %v3038 = vld [vmem:[#allocation24 + $0x100] sm:$0xff]
        %v3039 = vld [vmem:[#allocation24 + $0x108] sm:$0xff]
        %v3040 = vld [vmem:[#allocation24 + $0x110] sm:$0xff]
        %v3041 = vld [vmem:[#allocation24 + $0x118] sm:$0xff]
        %v3042 = vld [vmem:[#allocation24 + $0x120] sm:$0xff]
        %v3043 = vld [vmem:[#allocation24 + $0x128] sm:$0xff]
        %v3044 = vld [vmem:[#allocation24 + $0x130] sm:$0xff]
        %v3045 = vld [vmem:[#allocation24 + $0x138] sm:$0xff]
        %v3046 = vld [vmem:[#allocation24 + $0x140] sm:$0xff]
        %v3047 = vld [vmem:[#allocation24 + $0x148] sm:$0xff]
        %v3048 = vld [vmem:[#allocation24 + $0x150] sm:$0xff]
        %v3049 = vld [vmem:[#allocation24 + $0x158] sm:$0xff]
        %v3050 = vld [vmem:[#allocation24 + $0x160] sm:$0xff]
        %v3051 = vld [vmem:[#allocation24 + $0x168] sm:$0xff]
        %v3052 = vld [vmem:[#allocation24 + $0x170] sm:$0xff]
        %v3053 = vld [vmem:[#allocation24 + $0x178] sm:$0xff]
        %v3054 = vld [vmem:[#allocation24 + $0x180] sm:$0xff]
        %v3055 = vld [vmem:[#allocation24 + $0x188] sm:$0xff]
        %v3056 = vld [vmem:[#allocation24 + $0x190] sm:$0xff]
        %v3057 = vld [vmem:[#allocation24 + $0x198] sm:$0xff]
        %v3058 = vld [vmem:[#allocation24 + $0x1a0] sm:$0xff]
        %v3059 = vld [vmem:[#allocation24 + $0x1a8] sm:$0xff]
        %v3060 = vld [vmem:[#allocation24 + $0x1b0] sm:$0xff]
        %v3061 = vld [vmem:[#allocation24 + $0x1b8] sm:$0xff]
        %v3062 = vld [vmem:[#allocation24 + $0x1c0] sm:$0xff]
        %v3063 = vld [vmem:[#allocation24 + $0x1c8] sm:$0xff]
        %v3064 = vld [vmem:[#allocation24 + $0x1d0] sm:$0xff]
        %v3065 = vld [vmem:[#allocation24 + $0x1d8] sm:$0xff]
        %v3066 = vld [vmem:[#allocation24 + $0x1e0] sm:$0xff]
        %v3067 = vld [vmem:[#allocation24 + $0x1e8] sm:$0xff]
        %v3068 = vld [vmem:[#allocation24 + $0x1f0] sm:$0xff]
        %v3069 = vld [vmem:[#allocation24 + $0x1f8] sm:$0xff]
        %v3070 = vld [vmem:[#allocation24 + $0x200] sm:$0xff]
        %v3071 = vld [vmem:[#allocation24 + $0x208] sm:$0xff]
        %v3072 = vld [vmem:[#allocation24 + $0x210] sm:$0xff]
        %v3073 = vld [vmem:[#allocation24 + $0x218] sm:$0xff]
        %v3074 = vld [vmem:[#allocation24 + $0x220] sm:$0xff]
        %v3075 = vld [vmem:[#allocation24 + $0x228] sm:$0xff]
        %v3076 = vld [vmem:[#allocation24 + $0x230] sm:$0xff]
        %v3077 = vld [vmem:[#allocation24 + $0x238] sm:$0xff]
        %v3078 = vld [vmem:[#allocation24 + $0x240] sm:$0xff]
        %v3079 = vld [vmem:[#allocation24 + $0x248] sm:$0xff]
        %v3080 = vld [vmem:[#allocation24 + $0x250] sm:$0xff]
        %v3081 = vld [vmem:[#allocation24 + $0x258] sm:$0xff]
        %v3082 = vld [vmem:[#allocation24 + $0x260] sm:$0xff]
        %v3083 = vld [vmem:[#allocation24 + $0x268] sm:$0xff]
        %v3084 = vld [vmem:[#allocation24 + $0x270] sm:$0xff]
        %v3085 = vld [vmem:[#allocation24 + $0x278] sm:$0xff]
        %v3086 = vld [vmem:[#allocation24 + $0x280] sm:$0xff]
        %v3087 = vld [vmem:[#allocation24 + $0x288] sm:$0xff]
        %v3088 = vld [vmem:[#allocation24 + $0x290] sm:$0xff]
        %v3089 = vld [vmem:[#allocation24 + $0x298] sm:$0xff]
        %v3090 = vld [vmem:[#allocation24 + $0x2a0] sm:$0xff]
        %v3091 = vld [vmem:[#allocation24 + $0x2a8] sm:$0xff]
        %v3092 = vld [vmem:[#allocation24 + $0x2b0] sm:$0xff]
        %v3093 = vld [vmem:[#allocation24 + $0x2b8] sm:$0xff]
        %v3094 = vld [vmem:[#allocation24 + $0x2c0] sm:$0xff]
        %v3095 = vld [vmem:[#allocation24 + $0x2c8] sm:$0xff]
        %v3096 = vld [vmem:[#allocation24 + $0x2d0] sm:$0xff]
        %v3097 = vld [vmem:[#allocation24 + $0x2d8] sm:$0xff]
        %v3098 = vld [vmem:[#allocation24 + $0x2e0] sm:$0xff]
        %v3099 = vld [vmem:[#allocation24 + $0x2e8] sm:$0xff]
        %v3100 = vld [vmem:[#allocation24 + $0x2f0] sm:$0xff]
        %v3101 = vld [vmem:[#allocation24 + $0x2f8] sm:$0xff]
        %v3102 = vld [vmem:[#allocation24 + $0x300] sm:$0xff]
        %v3103 = vld [vmem:[#allocation24 + $0x308] sm:$0xff]
        %v3104 = vld [vmem:[#allocation24 + $0x310] sm:$0xff]
        %v3105 = vld [vmem:[#allocation24 + $0x318] sm:$0xff]
        %v3106 = vld [vmem:[#allocation24 + $0x320] sm:$0xff]
        %v3107 = vld [vmem:[#allocation24 + $0x328] sm:$0xff]
        %v3108 = vld [vmem:[#allocation24 + $0x330] sm:$0xff]
        %v3109 = vld [vmem:[#allocation24 + $0x338] sm:$0xff]
        %v3110 = vld [vmem:[#allocation24 + $0x340] sm:$0xff]
        %v3111 = vld [vmem:[#allocation24 + $0x348] sm:$0xff]
        %v3112 = vld [vmem:[#allocation24 + $0x350] sm:$0xff]
        %v3113 = vld [vmem:[#allocation24 + $0x358] sm:$0xff]
        %v3114 = vld [vmem:[#allocation24 + $0x360] sm:$0xff]
        %v3115 = vld [vmem:[#allocation24 + $0x368] sm:$0xff]
        %v3116 = vld [vmem:[#allocation24 + $0x370] sm:$0xff]
        %v3117 = vld [vmem:[#allocation24 + $0x378] sm:$0xff]
        %v3118 = vld [vmem:[%s15] sm:$0x3]
        %v3120 = vlaneseq
        %v3121 = vshrl.u32 %v3120, 7
        %v3122 = vsub.s32 0, %v3121
        %v3123 = vrot.slane %v3118, %v3122
        %v3124 = vlaneseq
        %v3125 = vshrl.u32 %v3124, 7
        %v3126 = vsub.s32 1, %v3125
        %v3127 = vrot.slane %v3118, %v3126
        %vm3130 = vsmask.f32 4352
        %v3132 = vshrl.u32 %v2992, 16
        %v3134 = vrot.slane %v3132, 3
        %v3135 = vshll.u32 %v2992, 16
        %v3137 = vrot.slane %v3135, 4
        %v3138 = vor.u32 %v3134, %v3137
        %v3140 = vshrl.u32 %v2999, 16
        %v3142 = vrot.slane %v3140, 3
        %v3143 = vshll.u32 %v2999, 16
        %v3145 = vrot.slane %v3143, 4
        %v3146 = vor.u32 %v3142, %v3145
        %v3147 = vsel %vm3130, %v3138, %v3146
        %v3149 = vshrl.u32 %v2993, 16
        %v3151 = vrot.slane %v3149, 3
        %v3152 = vshll.u32 %v2993, 16
        %v3154 = vrot.slane %v3152, 4
        %v3155 = vor.u32 %v3151, %v3154
        %v3157 = vshrl.u32 %v3000, 16
        %v3159 = vrot.slane %v3157, 3
        %v3160 = vshll.u32 %v3000, 16
        %v3162 = vrot.slane %v3160, 4
        %v3163 = vor.u32 %v3159, %v3162
        %v3164 = vsel %vm3130, %v3155, %v3163
        %v3166 = vshrl.u32 %v2994, 16
        %v3168 = vrot.slane %v3166, 3
        %v3169 = vshll.u32 %v2994, 16
        %v3171 = vrot.slane %v3169, 4
        %v3172 = vor.u32 %v3168, %v3171
        %v3174 = vshrl.u32 %v3001, 16
        %v3176 = vrot.slane %v3174, 3
        %v3177 = vshll.u32 %v3001, 16
        %v3179 = vrot.slane %v3177, 4
        %v3180 = vor.u32 %v3176, %v3179
        %v3181 = vsel %vm3130, %v3172, %v3180
        %v3183 = vshrl.u32 %v2995, 16
        %v3185 = vrot.slane %v3183, 3
        %v3186 = vshll.u32 %v2995, 16
        %v3188 = vrot.slane %v3186, 4
        %v3189 = vor.u32 %v3185, %v3188
        %v3191 = vshrl.u32 %v3002, 16
        %v3193 = vrot.slane %v3191, 3
        %v3194 = vshll.u32 %v3002, 16
        %v3196 = vrot.slane %v3194, 4
        %v3197 = vor.u32 %v3193, %v3196
        %v3198 = vsel %vm3130, %v3189, %v3197
        %v3200 = vshrl.u32 %v2996, 16
        %v3202 = vrot.slane %v3200, 3
        %v3203 = vshll.u32 %v2996, 16
        %v3205 = vrot.slane %v3203, 4
        %v3206 = vor.u32 %v3202, %v3205
        %v3208 = vshrl.u32 %v3003, 16
        %v3210 = vrot.slane %v3208, 3
        %v3211 = vshll.u32 %v3003, 16
        %v3213 = vrot.slane %v3211, 4
        %v3214 = vor.u32 %v3210, %v3213
        %v3215 = vsel %vm3130, %v3206, %v3214
        %v3217 = vshrl.u32 %v2997, 16
        %v3219 = vrot.slane %v3217, 3
        %v3220 = vshll.u32 %v2997, 16
        %v3222 = vrot.slane %v3220, 4
        %v3223 = vor.u32 %v3219, %v3222
        %v3225 = vshrl.u32 %v3004, 16
        %v3227 = vrot.slane %v3225, 3
        %v3228 = vshll.u32 %v3004, 16
        %v3230 = vrot.slane %v3228, 4
        %v3231 = vor.u32 %v3227, %v3230
        %v3232 = vsel %vm3130, %v3223, %v3231
        %v3234 = vshrl.u32 %v2998, 16
        %v3236 = vrot.slane %v3234, 3
        %v3237 = vshll.u32 %v2998, 16
        %v3239 = vrot.slane %v3237, 4
        %v3240 = vor.u32 %v3236, %v3239
        %v3242 = vshrl.u32 %v3005, 16
        %v3244 = vrot.slane %v3242, 3
        %v3245 = vshll.u32 %v3005, 16
        %v3247 = vrot.slane %v3245, 4
        %v3248 = vor.u32 %v3244, %v3247
        %v3249 = vsel %vm3130, %v3240, %v3248
        %v3369 = vunpack.c.l.b16 %v3006
        %v3370 = vunpack.c.h.b16 %v3006
        %v3371 = vunpack.c.l.b16 %v3007
        %v3372 = vunpack.c.h.b16 %v3007
        %v3373 = vunpack.c.l.b16 %v3008
        %v3374 = vunpack.c.h.b16 %v3008
        %v3375 = vunpack.c.l.b16 %v3009
        %v3376 = vunpack.c.h.b16 %v3009
        %v3377 = vunpack.c.l.b16 %v3010
        %v3378 = vunpack.c.h.b16 %v3010
        %v3379 = vunpack.c.l.b16 %v3011
        %v3380 = vunpack.c.h.b16 %v3011
        %v3381 = vunpack.c.l.b16 %v3012
        %v3382 = vunpack.c.h.b16 %v3012
        %v3383 = vunpack.c.l.b16 %v3013
        %v3384 = vunpack.c.h.b16 %v3013
        %v3385 = vunpack.c.l.b16 %v3014
        %v3386 = vunpack.c.h.b16 %v3014
        %v3387 = vunpack.c.l.b16 %v3015
        %v3388 = vunpack.c.h.b16 %v3015
        %v3389 = vunpack.c.l.b16 %v3016
        %v3390 = vunpack.c.h.b16 %v3016
        %v3391 = vunpack.c.l.b16 %v3017
        %v3392 = vunpack.c.h.b16 %v3017
        %v3393 = vunpack.c.l.b16 %v3018
        %v3394 = vunpack.c.h.b16 %v3018
        %v3395 = vunpack.c.l.b16 %v3019
        %v3396 = vunpack.c.h.b16 %v3019
        %v3397 = vunpack.c.l.b16 %v3020
        %v3398 = vunpack.c.h.b16 %v3020
        %v3399 = vunpack.c.l.b16 %v3021
        %v3400 = vunpack.c.h.b16 %v3021
        %v3401 = vunpack.c.l.b16 %v3022
        %v3402 = vunpack.c.h.b16 %v3022
        %v3403 = vunpack.c.l.b16 %v3023
        %v3404 = vunpack.c.h.b16 %v3023
        %v3405 = vunpack.c.l.b16 %v3024
        %v3406 = vunpack.c.h.b16 %v3024
        %v3407 = vunpack.c.l.b16 %v3025
        %v3408 = vunpack.c.h.b16 %v3025
        %v3409 = vunpack.c.l.b16 %v3026
        %v3410 = vunpack.c.h.b16 %v3026
        %v3411 = vunpack.c.l.b16 %v3027
        %v3412 = vunpack.c.h.b16 %v3027
        %v3413 = vunpack.c.l.b16 %v3028
        %v3414 = vunpack.c.h.b16 %v3028
        %v3415 = vunpack.c.l.b16 %v3029
        %v3416 = vunpack.c.h.b16 %v3029
        %v3417 = vunpack.c.l.b16 %v3030
        %v3418 = vunpack.c.h.b16 %v3030
        %v3419 = vunpack.c.l.b16 %v3031
        %v3420 = vunpack.c.h.b16 %v3031
        %v3421 = vunpack.c.l.b16 %v3032
        %v3422 = vunpack.c.h.b16 %v3032
        %v3423 = vunpack.c.l.b16 %v3033
        %v3424 = vunpack.c.h.b16 %v3033
        %v3425 = vunpack.c.l.b16 %v3034
        %v3426 = vunpack.c.h.b16 %v3034
        %v3427 = vunpack.c.l.b16 %v3035
        %v3428 = vunpack.c.h.b16 %v3035
        %v3429 = vunpack.c.l.b16 %v3036
        %v3430 = vunpack.c.h.b16 %v3036
        %v3431 = vunpack.c.l.b16 %v3037
        %v3432 = vunpack.c.h.b16 %v3037
        %v3433 = vunpack.c.l.b16 %v3038
        %v3434 = vunpack.c.h.b16 %v3038
        %v3435 = vunpack.c.l.b16 %v3039
        %v3436 = vunpack.c.h.b16 %v3039
        %v3437 = vunpack.c.l.b16 %v3040
        %v3438 = vunpack.c.h.b16 %v3040
        %v3439 = vunpack.c.l.b16 %v3041
        %v3440 = vunpack.c.h.b16 %v3041
        %v3441 = vunpack.c.l.b16 %v3042
        %v3442 = vunpack.c.h.b16 %v3042
        %v3443 = vunpack.c.l.b16 %v3043
        %v3444 = vunpack.c.h.b16 %v3043
        %v3445 = vunpack.c.l.b16 %v3044
        %v3446 = vunpack.c.h.b16 %v3044
        %v3447 = vunpack.c.l.b16 %v3045
        %v3448 = vunpack.c.h.b16 %v3045
        %v3449 = vunpack.c.l.b16 %v3046
        %v3450 = vunpack.c.h.b16 %v3046
        %v3451 = vunpack.c.l.b16 %v3047
        %v3452 = vunpack.c.h.b16 %v3047
        %v3453 = vunpack.c.l.b16 %v3048
        %v3454 = vunpack.c.h.b16 %v3048
        %v3455 = vunpack.c.l.b16 %v3049
        %v3456 = vunpack.c.h.b16 %v3049
        %v3457 = vunpack.c.l.b16 %v3050
        %v3458 = vunpack.c.h.b16 %v3050
        %v3459 = vunpack.c.l.b16 %v3051
        %v3460 = vunpack.c.h.b16 %v3051
        %v3461 = vunpack.c.l.b16 %v3052
        %v3462 = vunpack.c.h.b16 %v3052
        %v3463 = vunpack.c.l.b16 %v3053
        %v3464 = vunpack.c.h.b16 %v3053
        %v3465 = vunpack.c.l.b16 %v3054
        %v3466 = vunpack.c.h.b16 %v3054
        %v3467 = vunpack.c.l.b16 %v3055
        %v3468 = vunpack.c.h.b16 %v3055
        %v3469 = vunpack.c.l.b16 %v3056
        %v3470 = vunpack.c.h.b16 %v3056
        %v3471 = vunpack.c.l.b16 %v3057
        %v3472 = vunpack.c.h.b16 %v3057
        %v3473 = vunpack.c.l.b16 %v3058
        %v3474 = vunpack.c.h.b16 %v3058
        %v3475 = vunpack.c.l.b16 %v3059
        %v3476 = vunpack.c.h.b16 %v3059
        %v3477 = vunpack.c.l.b16 %v3060
        %v3478 = vunpack.c.h.b16 %v3060
        %v3479 = vunpack.c.l.b16 %v3061
        %v3480 = vunpack.c.h.b16 %v3061
        %v3481 = vunpack.c.l.b16 %v3062
        %v3482 = vunpack.c.h.b16 %v3062
        %v3483 = vunpack.c.l.b16 %v3063
        %v3484 = vunpack.c.h.b16 %v3063
        %v3485 = vunpack.c.l.b16 %v3064
        %v3486 = vunpack.c.h.b16 %v3064
        %v3487 = vunpack.c.l.b16 %v3065
        %v3488 = vunpack.c.h.b16 %v3065
        %v3489 = vunpack.c.l.b16 %v3066
        %v3490 = vunpack.c.h.b16 %v3066
        %v3491 = vunpack.c.l.b16 %v3067
        %v3492 = vunpack.c.h.b16 %v3067
        %v3493 = vunpack.c.l.b16 %v3068
        %v3494 = vunpack.c.h.b16 %v3068
        %v3495 = vunpack.c.l.b16 %v3069
        %v3496 = vunpack.c.h.b16 %v3069
        %v3497 = vunpack.c.l.b16 %v3070
        %v3498 = vunpack.c.h.b16 %v3070
        %v3499 = vunpack.c.l.b16 %v3071
        %v3500 = vunpack.c.h.b16 %v3071
        %v3501 = vunpack.c.l.b16 %v3072
        %v3502 = vunpack.c.h.b16 %v3072
        %v3503 = vunpack.c.l.b16 %v3073
        %v3504 = vunpack.c.h.b16 %v3073
        %v3505 = vunpack.c.l.b16 %v3074
        %v3506 = vunpack.c.h.b16 %v3074
        %v3507 = vunpack.c.l.b16 %v3075
        %v3508 = vunpack.c.h.b16 %v3075
        %v3509 = vunpack.c.l.b16 %v3076
        %v3510 = vunpack.c.h.b16 %v3076
        %v3511 = vunpack.c.l.b16 %v3077
        %v3512 = vunpack.c.h.b16 %v3077
        %v3513 = vunpack.c.l.b16 %v3078
        %v3514 = vunpack.c.h.b16 %v3078
        %v3515 = vunpack.c.l.b16 %v3079
        %v3516 = vunpack.c.h.b16 %v3079
        %v3517 = vunpack.c.l.b16 %v3080
        %v3518 = vunpack.c.h.b16 %v3080
        %v3519 = vunpack.c.l.b16 %v3081
        %v3520 = vunpack.c.h.b16 %v3081
        %v3521 = vunpack.c.l.b16 %v3082
        %v3522 = vunpack.c.h.b16 %v3082
        %v3523 = vunpack.c.l.b16 %v3083
        %v3524 = vunpack.c.h.b16 %v3083
        %v3525 = vunpack.c.l.b16 %v3084
        %v3526 = vunpack.c.h.b16 %v3084
        %v3527 = vunpack.c.l.b16 %v3085
        %v3528 = vunpack.c.h.b16 %v3085
        %v3529 = vunpack.c.l.b16 %v3086
        %v3530 = vunpack.c.h.b16 %v3086
        %v3531 = vunpack.c.l.b16 %v3087
        %v3532 = vunpack.c.h.b16 %v3087
        %v3533 = vunpack.c.l.b16 %v3088
        %v3534 = vunpack.c.h.b16 %v3088
        %v3535 = vunpack.c.l.b16 %v3089
        %v3536 = vunpack.c.h.b16 %v3089
        %v3537 = vunpack.c.l.b16 %v3090
        %v3538 = vunpack.c.h.b16 %v3090
        %v3539 = vunpack.c.l.b16 %v3091
        %v3540 = vunpack.c.h.b16 %v3091
        %v3541 = vunpack.c.l.b16 %v3092
        %v3542 = vunpack.c.h.b16 %v3092
        %v3543 = vunpack.c.l.b16 %v3093
        %v3544 = vunpack.c.h.b16 %v3093
        %v3545 = vunpack.c.l.b16 %v3094
        %v3546 = vunpack.c.h.b16 %v3094
        %v3547 = vunpack.c.l.b16 %v3095
        %v3548 = vunpack.c.h.b16 %v3095
        %v3549 = vunpack.c.l.b16 %v3096
        %v3550 = vunpack.c.h.b16 %v3096
        %v3551 = vunpack.c.l.b16 %v3097
        %v3552 = vunpack.c.h.b16 %v3097
        %v3553 = vunpack.c.l.b16 %v3098
        %v3554 = vunpack.c.h.b16 %v3098
        %v3555 = vunpack.c.l.b16 %v3099
        %v3556 = vunpack.c.h.b16 %v3099
        %v3557 = vunpack.c.l.b16 %v3100
        %v3558 = vunpack.c.h.b16 %v3100
        %v3559 = vunpack.c.l.b16 %v3101
        %v3560 = vunpack.c.h.b16 %v3101
        %v3561 = vunpack.c.l.b16 %v3102
        %v3562 = vunpack.c.h.b16 %v3102
        %v3563 = vunpack.c.l.b16 %v3103
        %v3564 = vunpack.c.h.b16 %v3103
        %v3565 = vunpack.c.l.b16 %v3104
        %v3566 = vunpack.c.h.b16 %v3104
        %v3567 = vunpack.c.l.b16 %v3105
        %v3568 = vunpack.c.h.b16 %v3105
        %v3569 = vunpack.c.l.b16 %v3106
        %v3570 = vunpack.c.h.b16 %v3106
        %v3571 = vunpack.c.l.b16 %v3107
        %v3572 = vunpack.c.h.b16 %v3107
        %v3573 = vunpack.c.l.b16 %v3108
        %v3574 = vunpack.c.h.b16 %v3108
        %v3575 = vunpack.c.l.b16 %v3109
        %v3576 = vunpack.c.h.b16 %v3109
        %v3577 = vunpack.c.l.b16 %v3110
        %v3578 = vunpack.c.h.b16 %v3110
        %v3579 = vunpack.c.l.b16 %v3111
        %v3580 = vunpack.c.h.b16 %v3111
        %v3581 = vunpack.c.l.b16 %v3112
        %v3582 = vunpack.c.h.b16 %v3112
        %v3583 = vunpack.c.l.b16 %v3113
        %v3584 = vunpack.c.h.b16 %v3113
        %v3585 = vunpack.c.l.b16 %v3114
        %v3586 = vunpack.c.h.b16 %v3114
        %v3587 = vunpack.c.l.b16 %v3115
        %v3588 = vunpack.c.h.b16 %v3115
        %v3589 = vunpack.c.l.b16 %v3116
        %v3590 = vunpack.c.h.b16 %v3116
        %v3591 = vunpack.c.l.b16 %v3117
        %v3592 = vunpack.c.h.b16 %v3117
        %v3593 = vpack.c.b16 %v3371, %v3369
        %v3594 = vpack.c.b16 %v3372, %v3370
        %v3595 = vpack.c.b16 %v3375, %v3373
        %v3596 = vpack.c.b16 %v3376, %v3374
        %v3597 = vpack.c.b16 %v3379, %v3377
        %v3598 = vpack.c.b16 %v3380, %v3378
        %v3599 = vpack.c.b16 %v3383, %v3381
        %v3600 = vpack.c.b16 %v3384, %v3382
        %v3601 = vpack.c.b16 %v3387, %v3385
        %v3602 = vpack.c.b16 %v3388, %v3386
        %v3603 = vpack.c.b16 %v3391, %v3389
        %v3604 = vpack.c.b16 %v3392, %v3390
        %v3605 = vpack.c.b16 %v3395, %v3393
        %v3606 = vpack.c.b16 %v3396, %v3394
        %v3607 = vpack.c.b16 %v3399, %v3397
        %v3608 = vpack.c.b16 %v3400, %v3398
        %v3609 = vpack.c.b16 %v3403, %v3401
        %v3610 = vpack.c.b16 %v3404, %v3402
        %v3611 = vpack.c.b16 %v3407, %v3405
        %v3612 = vpack.c.b16 %v3408, %v3406
        %v3613 = vpack.c.b16 %v3411, %v3409
        %v3614 = vpack.c.b16 %v3412, %v3410
        %v3615 = vpack.c.b16 %v3415, %v3413
        %v3616 = vpack.c.b16 %v3416, %v3414
        %v3617 = vpack.c.b16 %v3419, %v3417
        %v3618 = vpack.c.b16 %v3420, %v3418
        %v3619 = vpack.c.b16 %v3423, %v3421
        %v3620 = vpack.c.b16 %v3424, %v3422
        %v3621 = vpack.c.b16 %v3427, %v3425
        %v3622 = vpack.c.b16 %v3428, %v3426
        %v3623 = vpack.c.b16 %v3431, %v3429
        %v3624 = vpack.c.b16 %v3432, %v3430
        %v3625 = vpack.c.b16 %v3435, %v3433
        %v3626 = vpack.c.b16 %v3436, %v3434
        %v3627 = vpack.c.b16 %v3439, %v3437
        %v3628 = vpack.c.b16 %v3440, %v3438
        %v3629 = vpack.c.b16 %v3443, %v3441
        %v3630 = vpack.c.b16 %v3444, %v3442
        %v3631 = vpack.c.b16 %v3447, %v3445
        %v3632 = vpack.c.b16 %v3448, %v3446
        %v3633 = vpack.c.b16 %v3451, %v3449
        %v3634 = vpack.c.b16 %v3452, %v3450
        %v3635 = vpack.c.b16 %v3455, %v3453
        %v3636 = vpack.c.b16 %v3456, %v3454
        %v3637 = vpack.c.b16 %v3459, %v3457
        %v3638 = vpack.c.b16 %v3460, %v3458
        %v3639 = vpack.c.b16 %v3463, %v3461
        %v3640 = vpack.c.b16 %v3464, %v3462
        %v3641 = vpack.c.b16 %v3467, %v3465
        %v3642 = vpack.c.b16 %v3468, %v3466
        %v3643 = vpack.c.b16 %v3471, %v3469
        %v3644 = vpack.c.b16 %v3472, %v3470
        %v3645 = vpack.c.b16 %v3475, %v3473
        %v3646 = vpack.c.b16 %v3476, %v3474
        %v3647 = vpack.c.b16 %v3479, %v3477
        %v3648 = vpack.c.b16 %v3480, %v3478
        %v3649 = vpack.c.b16 %v3483, %v3481
        %v3650 = vpack.c.b16 %v3484, %v3482
        %v3651 = vpack.c.b16 %v3487, %v3485
        %v3652 = vpack.c.b16 %v3488, %v3486
        %v3653 = vpack.c.b16 %v3491, %v3489
        %v3654 = vpack.c.b16 %v3492, %v3490
        %v3655 = vpack.c.b16 %v3495, %v3493
        %v3656 = vpack.c.b16 %v3496, %v3494
        %v3657 = vpack.c.b16 %v3499, %v3497
        %v3658 = vpack.c.b16 %v3500, %v3498
        %v3659 = vpack.c.b16 %v3503, %v3501
        %v3660 = vpack.c.b16 %v3504, %v3502
        %v3661 = vpack.c.b16 %v3507, %v3505
        %v3662 = vpack.c.b16 %v3508, %v3506
        %v3663 = vpack.c.b16 %v3511, %v3509
        %v3664 = vpack.c.b16 %v3512, %v3510
        %v3665 = vpack.c.b16 %v3515, %v3513
        %v3666 = vpack.c.b16 %v3516, %v3514
        %v3667 = vpack.c.b16 %v3519, %v3517
        %v3668 = vpack.c.b16 %v3520, %v3518
        %v3669 = vpack.c.b16 %v3523, %v3521
        %v3670 = vpack.c.b16 %v3524, %v3522
        %v3671 = vpack.c.b16 %v3527, %v3525
        %v3672 = vpack.c.b16 %v3528, %v3526
        %v3673 = vpack.c.b16 %v3531, %v3529
        %v3674 = vpack.c.b16 %v3532, %v3530
        %v3675 = vpack.c.b16 %v3535, %v3533
        %v3676 = vpack.c.b16 %v3536, %v3534
        %v3677 = vpack.c.b16 %v3539, %v3537
        %v3678 = vpack.c.b16 %v3540, %v3538
        %v3679 = vpack.c.b16 %v3543, %v3541
        %v3680 = vpack.c.b16 %v3544, %v3542
        %v3681 = vpack.c.b16 %v3547, %v3545
        %v3682 = vpack.c.b16 %v3548, %v3546
        %v3683 = vpack.c.b16 %v3551, %v3549
        %v3684 = vpack.c.b16 %v3552, %v3550
        %v3685 = vpack.c.b16 %v3555, %v3553
        %v3686 = vpack.c.b16 %v3556, %v3554
        %v3687 = vpack.c.b16 %v3559, %v3557
        %v3688 = vpack.c.b16 %v3560, %v3558
        %v3689 = vpack.c.b16 %v3563, %v3561
        %v3690 = vpack.c.b16 %v3564, %v3562
        %v3691 = vpack.c.b16 %v3567, %v3565
        %v3692 = vpack.c.b16 %v3568, %v3566
        %v3693 = vpack.c.b16 %v3571, %v3569
        %v3694 = vpack.c.b16 %v3572, %v3570
        %v3695 = vpack.c.b16 %v3575, %v3573
        %v3696 = vpack.c.b16 %v3576, %v3574
        %v3697 = vpack.c.b16 %v3579, %v3577
        %v3698 = vpack.c.b16 %v3580, %v3578
        %v3699 = vpack.c.b16 %v3583, %v3581
        %v3700 = vpack.c.b16 %v3584, %v3582
        %v3701 = vpack.c.b16 %v3587, %v3585
        %v3702 = vpack.c.b16 %v3588, %v3586
        %v3703 = vpack.c.b16 %v3591, %v3589
        %v3704 = vpack.c.b16 %v3592, %v3590
        %3817 = vmatprep.subr.bf16.mxu0 %v3608
        %3818 = vmatpush1.bf16.msra.mxu0 %v3607
        %3819 = vmatprep.subr.bf16.mxu0 %v3606
        %3820 = vmatpush1.bf16.msra.mxu0 %v3605
        %3821 = vmatprep.subr.bf16.mxu0 %v3604
        %3822 = vmatpush1.bf16.msra.mxu0 %v3603
        %3823 = vmatprep.subr.bf16.mxu0 %v3602
        %3824 = vmatpush1.bf16.msra.mxu0 %v3601
        %3825 = vmatprep.subr.bf16.mxu0 %v3600
        %3826 = vmatpush1.bf16.msra.mxu0 %v3599
        %3827 = vmatprep.subr.bf16.mxu0 %v3598
        %3828 = vmatpush1.bf16.msra.mxu0 %v3597
        %3829 = vmatprep.subr.bf16.mxu0 %v3596
        %3830 = vmatpush1.bf16.msra.mxu0 %v3595
        %3831 = vmatprep.subr.bf16.mxu0 %v3594
        %3832 = vmatpush1.bf16.msra.mxu0 %v3593
        %3833 = vmatprep.subr.bf16.mxu0 %v3624
        %3834 = vmatpush2.bf16.msra.mxu0 %v3623
        %3835 = vmatprep.subr.bf16.mxu0 %v3622
        %3836 = vmatpush2.bf16.msra.mxu0 %v3621
        %3837 = vmatprep.subr.bf16.mxu0 %v3620
        %3838 = vmatpush2.bf16.msra.mxu0 %v3619
        %3839 = vmatprep.subr.bf16.mxu0 %v3618
        %3840 = vmatpush2.bf16.msra.mxu0 %v3617
        %3841 = vmatprep.subr.bf16.mxu0 %v3616
        %3842 = vmatpush2.bf16.msra.mxu0 %v3615
        %3843 = vmatprep.subr.bf16.mxu0 %v3614
        %3844 = vmatpush2.bf16.msra.mxu0 %v3613
        %3845 = vmatprep.subr.bf16.mxu0 %v3612
        %3846 = vmatpush2.bf16.msra.mxu0 %v3611
        %3847 = vmatprep.subr.bf16.mxu0 %v3610
        %3848 = vmatpush2.bf16.msra.mxu0 %v3609
        %3849 = vmatprep.mubr.bf16.mxu0 %v3164
        %3850 = vmatmul.mubr.bf16.gmra.mxu0 %v3147
        %v3851 = vpop.f32.mrf.mxu0
        %v3852 = vadd.f32 %v3123, %v3851
        %v3853 = vpop.f32.mrf.mxu0
        %v3854 = vadd.f32 %v3127, %v3853
        %v3855 = vpop.f32.mrf.mxu0
        %v3856 = vadd.f32 %v3123, %v3855
        %v3857 = vpop.f32.mrf.mxu0
        %v3858 = vadd.f32 %v3127, %v3857
        %3859 = vdwg.mxu0
        %3860 = vmatprep.subr.bf16.mxu0 %v3640
        %3861 = vmatpush1.bf16.msra.mxu0 %v3639
        %3862 = vmatprep.subr.bf16.mxu0 %v3638
        %3863 = vmatpush1.bf16.msra.mxu0 %v3637
        %3864 = vmatprep.subr.bf16.mxu0 %v3636
        %3865 = vmatpush1.bf16.msra.mxu0 %v3635
        %3866 = vmatprep.subr.bf16.mxu0 %v3634
        %3867 = vmatpush1.bf16.msra.mxu0 %v3633
        %3868 = vmatprep.subr.bf16.mxu0 %v3632
        %3869 = vmatpush1.bf16.msra.mxu0 %v3631
        %3870 = vmatprep.subr.bf16.mxu0 %v3630
        %3871 = vmatpush1.bf16.msra.mxu0 %v3629
        %3872 = vmatprep.subr.bf16.mxu0 %v3628
        %3873 = vmatpush1.bf16.msra.mxu0 %v3627
        %3874 = vmatprep.subr.bf16.mxu0 %v3626
        %3875 = vmatpush1.bf16.msra.mxu0 %v3625
        %3876 = vmatprep.subr.bf16.mxu0 %v3656
        %3877 = vmatpush2.bf16.msra.mxu0 %v3655
        %3878 = vmatprep.subr.bf16.mxu0 %v3654
        %3879 = vmatpush2.bf16.msra.mxu0 %v3653
        %3880 = vmatprep.subr.bf16.mxu0 %v3652
        %3881 = vmatpush2.bf16.msra.mxu0 %v3651
        %3882 = vmatprep.subr.bf16.mxu0 %v3650
        %3883 = vmatpush2.bf16.msra.mxu0 %v3649
        %3884 = vmatprep.subr.bf16.mxu0 %v3648
        %3885 = vmatpush2.bf16.msra.mxu0 %v3647
        %3886 = vmatprep.subr.bf16.mxu0 %v3646
        %3887 = vmatpush2.bf16.msra.mxu0 %v3645
        %3888 = vmatprep.subr.bf16.mxu0 %v3644
        %3889 = vmatpush2.bf16.msra.mxu0 %v3643
        %3890 = vmatprep.subr.bf16.mxu0 %v3642
        %3891 = vmatpush2.bf16.msra.mxu0 %v3641
        %3892 = vmatprep.mubr.bf16.mxu0 %v3198
        %3893 = vmatmul.mubr.bf16.gmra.mxu0 %v3181
        %v3894 = vpop.f32.mrf.mxu0
        %v3895 = vadd.f32 %v3852, %v3894
        %v3896 = vpop.f32.mrf.mxu0
        %v3897 = vadd.f32 %v3854, %v3896
        %v3898 = vpop.f32.mrf.mxu0
        %v3899 = vadd.f32 %v3856, %v3898
        %v3900 = vpop.f32.mrf.mxu0
        %v3901 = vadd.f32 %v3858, %v3900
        %3902 = vdwg.mxu0
        %3903 = vmatprep.subr.bf16.mxu0 %v3672
        %3904 = vmatpush1.bf16.msra.mxu0 %v3671
        %3905 = vmatprep.subr.bf16.mxu0 %v3670
        %3906 = vmatpush1.bf16.msra.mxu0 %v3669
        %3907 = vmatprep.subr.bf16.mxu0 %v3668
        %3908 = vmatpush1.bf16.msra.mxu0 %v3667
        %3909 = vmatprep.subr.bf16.mxu0 %v3666
        %3910 = vmatpush1.bf16.msra.mxu0 %v3665
        %3911 = vmatprep.subr.bf16.mxu0 %v3664
        %3912 = vmatpush1.bf16.msra.mxu0 %v3663
        %3913 = vmatprep.subr.bf16.mxu0 %v3662
        %3914 = vmatpush1.bf16.msra.mxu0 %v3661
        %3915 = vmatprep.subr.bf16.mxu0 %v3660
        %3916 = vmatpush1.bf16.msra.mxu0 %v3659
        %3917 = vmatprep.subr.bf16.mxu0 %v3658
        %3918 = vmatpush1.bf16.msra.mxu0 %v3657
        %3919 = vmatprep.subr.bf16.mxu0 %v3688
        %3920 = vmatpush2.bf16.msra.mxu0 %v3687
        %3921 = vmatprep.subr.bf16.mxu0 %v3686
        %3922 = vmatpush2.bf16.msra.mxu0 %v3685
        %3923 = vmatprep.subr.bf16.mxu0 %v3684
        %3924 = vmatpush2.bf16.msra.mxu0 %v3683
        %3925 = vmatprep.subr.bf16.mxu0 %v3682
        %3926 = vmatpush2.bf16.msra.mxu0 %v3681
        %3927 = vmatprep.subr.bf16.mxu0 %v3680
        %3928 = vmatpush2.bf16.msra.mxu0 %v3679
        %3929 = vmatprep.subr.bf16.mxu0 %v3678
        %3930 = vmatpush2.bf16.msra.mxu0 %v3677
        %3931 = vmatprep.subr.bf16.mxu0 %v3676
        %3932 = vmatpush2.bf16.msra.mxu0 %v3675
        %3933 = vmatprep.subr.bf16.mxu0 %v3674
        %3934 = vmatpush2.bf16.msra.mxu0 %v3673
        %3935 = vmatprep.mubr.bf16.mxu0 %v3232
        %3936 = vmatmul.mubr.bf16.gmra.mxu0 %v3215
        %v3937 = vpop.f32.mrf.mxu0
        %v3938 = vadd.f32 %v3895, %v3937
        %v3939 = vpop.f32.mrf.mxu0
        %v3940 = vadd.f32 %v3897, %v3939
        %v3941 = vpop.f32.mrf.mxu0
        %v3942 = vadd.f32 %v3899, %v3941
        %v3943 = vpop.f32.mrf.mxu0
        %v3944 = vadd.f32 %v3901, %v3943
        %3945 = vdwg.mxu0
        %3946 = vmatprep.subr.bf16.mxu0 %v3704
        %3947 = vmatpush1.bf16.msra.mxu0 %v3703
        %3948 = vmatprep.subr.bf16.mxu0 %v3702
        %3949 = vmatpush1.bf16.msra.mxu0 %v3701
        %3950 = vmatprep.subr.bf16.mxu0 %v3700
        %3951 = vmatpush1.bf16.msra.mxu0 %v3699
        %3952 = vmatprep.subr.bf16.mxu0 %v3698
        %3953 = vmatpush1.bf16.msra.mxu0 %v3697
        %3954 = vmatprep.subr.bf16.mxu0 %v3696
        %3955 = vmatpush1.bf16.msra.mxu0 %v3695
        %3956 = vmatprep.subr.bf16.mxu0 %v3694
        %3957 = vmatpush1.bf16.msra.mxu0 %v3693
        %3958 = vmatprep.subr.bf16.mxu0 %v3692
        %3959 = vmatpush1.bf16.msra.mxu0 %v3691
        %3960 = vmatprep.subr.bf16.mxu0 %v3690
        %3961 = vmatpush1.bf16.msra.mxu0 %v3689
        %3962 = vmatprep.subr.bf16.mxu0 0
        %3963 = vmatpush2.bf16.msra.mxu0 0
        %3964 = vmatprep.subr.bf16.mxu0 0
        %3965 = vmatpush2.bf16.msra.mxu0 0
        %3966 = vmatprep.subr.bf16.mxu0 0
        %3967 = vmatpush2.bf16.msra.mxu0 0
        %3968 = vmatprep.subr.bf16.mxu0 0
        %3969 = vmatpush2.bf16.msra.mxu0 0
        %3970 = vmatprep.subr.bf16.mxu0 0
        %3971 = vmatpush2.bf16.msra.mxu0 0
        %3972 = vmatprep.subr.bf16.mxu0 0
        %3973 = vmatpush2.bf16.msra.mxu0 0
        %3974 = vmatprep.subr.bf16.mxu0 0
        %3975 = vmatpush2.bf16.msra.mxu0 0
        %3976 = vmatprep.subr.bf16.mxu0 0
        %3977 = vmatpush2.bf16.msra.mxu0 0
        %3978 = vmatprep.mubr.bf16.mxu0 0
        %3979 = vmatmul.mubr.bf16.gmra.mxu0 %v3249
        %v3980 = vpop.f32.mrf.mxu0
        %v3981 = vadd.f32 %v3938, %v3980
        %v3982 = vpop.f32.mrf.mxu0
        %v3983 = vadd.f32 %v3940, %v3982
        %v3984 = vpop.f32.mrf.mxu0
        %v3985 = vadd.f32 %v3942, %v3984
        %v3986 = vpop.f32.mrf.mxu0
        %v3987 = vadd.f32 %v3944, %v3986
        %3988 = vdwg.mxu0
        %v3989 = vmax.f32 %v3981, 0.0
        %v3990 = vmax.f32 %v3983, 0.0
        %v3991 = vmax.f32 %v3985, 0.0
        %v3992 = vmax.f32 %v3987, 0.0
        %3993 = vst [vmem:[#allocation8] sm:$0xff] 0.0
        %3994 = vst [vmem:[#allocation8 + $0x8] sm:$0xff] 0.0
        %3995 = vst [vmem:[#allocation8 + $0x30] sm:$0xff] 0.0
        %3996 = vst [vmem:[#allocation8 + $0x38] sm:$0xff] 0.0
        %3997 = vst [vmem:[#allocation8 + $0x10] sm:$0xff] %v3989
        %3998 = vst [vmem:[#allocation8 + $0x18] sm:$0xff] %v3990
        %3999 = vst [vmem:[#allocation8 + $0x20] sm:$0xff] %v3991
        %4000 = vst [vmem:[#allocation8 + $0x28] sm:$0xff] %v3992
        %v4001 = vld [vmem:[#allocation8] sm:$0x80]
        %v4002 = vld [vmem:[#allocation8 + $0x8] sm:$0x80]
        %v4003 = vld [vmem:[#allocation8 + $0x10] sm:$0xff]
        %v4004 = vld [vmem:[#allocation8 + $0x18] sm:$0xff]
        %v4005 = vld [vmem:[#allocation8 + $0x20] sm:$0x7f]
        %v4006 = vld [vmem:[#allocation8 + $0x28] sm:$0x7f]
        %v4007 = vld [vmem:[#allocation8 + $0x20] sm:$0xff]
        %v4008 = vld [vmem:[#allocation8 + $0x28] sm:$0xff]
        %v4009 = vld [vmem:[#allocation8 + $0x10] sm:$0xfe]
        %v4010 = vld [vmem:[#allocation8 + $0x18] sm:$0xfe]
        %v4011 = vld [vmem:[#allocation8 + $0x20] sm:$0xff]
        %v4012 = vld [vmem:[#allocation8 + $0x28] sm:$0xff]
        %v4013 = vld [vmem:[#allocation8 + $0x30] sm:$0x1]
        %v4014 = vld [vmem:[#allocation8 + $0x38] sm:$0x1]
        %v4019 = vrot.slane %v4003, 1
        %v4020 = vrot.slane %v4004, 1
        %v4021 = vrot.slane %v4007, 1
        %v4022 = vsel %vm2948, %v4019, %v4021
        %v4023 = vrot.slane %v4008, 1
        %v4024 = vsel %vm2948, %v4020, %v4023
        %v4037 = vrot.slane %v4009, 2
        %v4038 = vrot.slane %v4010, 2
        %v4039 = vrot.slane %v4011, 2
        %v4040 = vsel %vm2967, %v4037, %v4039
        %v4041 = vrot.slane %v4012, 2
        %v4042 = vsel %vm2967, %v4038, %v4041
        %v4043 = vrot.slane %v4013, 2
        %v4044 = vsel %vm2967, %v4039, %v4043
        %v4045 = vrot.slane %v4014, 2
        %v4046 = vsel %vm2967, %v4041, %v4045
        %v4053 = vpack.c.bf16 %v4003, %v4001
        %v4054 = vpack.c.bf16 %v4004, %v4002
        %v4055 = vpack.c.bf16 %v4022, %v4019
        %v4056 = vpack.c.bf16 %v4024, %v4020
        %v4057 = vpack.c.bf16 %v4040, %v4037
        %v4058 = vpack.c.bf16 %v4042, %v4038
        %v4059 = vpack.c.bf16 %v4005, %v4005
        %v4060 = vpack.c.bf16 %v4006, %v4006
        %v4061 = vpack.c.bf16 %v4021, %v4021
        %v4062 = vpack.c.bf16 %v4023, %v4023
        %v4063 = vpack.c.bf16 %v4044, %v4044
        %v4064 = vpack.c.bf16 %v4046, %v4046
        %v4065 = vld [vmem:[#allocation27] sm:$0xff]
        %v4066 = vld [vmem:[#allocation27 + $0x8] sm:$0xff]
        %v4067 = vld [vmem:[#allocation27 + $0x10] sm:$0xff]
        %v4068 = vld [vmem:[#allocation27 + $0x18] sm:$0xff]
        %v4069 = vld [vmem:[#allocation27 + $0x20] sm:$0xff]
        %v4070 = vld [vmem:[#allocation27 + $0x28] sm:$0xff]
        %v4071 = vld [vmem:[#allocation27 + $0x30] sm:$0xff]
        %v4072 = vld [vmem:[#allocation27 + $0x38] sm:$0xff]
        %v4073 = vld [vmem:[#allocation27 + $0x40] sm:$0xff]
        %v4074 = vld [vmem:[#allocation27 + $0x48] sm:$0xff]
        %v4075 = vld [vmem:[#allocation27 + $0x50] sm:$0xff]
        %v4076 = vld [vmem:[#allocation27 + $0x58] sm:$0xff]
        %v4077 = vld [vmem:[#allocation27 + $0x60] sm:$0xff]
        %v4078 = vld [vmem:[#allocation27 + $0x68] sm:$0xff]
        %v4079 = vld [vmem:[#allocation27 + $0x70] sm:$0xff]
        %v4080 = vld [vmem:[#allocation27 + $0x78] sm:$0xff]
        %v4081 = vld [vmem:[#allocation27 + $0x80] sm:$0xff]
        %v4082 = vld [vmem:[#allocation27 + $0x88] sm:$0xff]
        %v4083 = vld [vmem:[#allocation27 + $0x90] sm:$0xff]
        %v4084 = vld [vmem:[#allocation27 + $0x98] sm:$0xff]
        %v4085 = vld [vmem:[#allocation27 + $0xa0] sm:$0xff]
        %v4086 = vld [vmem:[#allocation27 + $0xa8] sm:$0xff]
        %v4087 = vld [vmem:[#allocation27 + $0xb0] sm:$0xff]
        %v4088 = vld [vmem:[#allocation27 + $0xb8] sm:$0xff]
        %v4089 = vld [vmem:[#allocation27 + $0xc0] sm:$0xff]
        %v4090 = vld [vmem:[#allocation27 + $0xc8] sm:$0xff]
        %v4091 = vld [vmem:[#allocation27 + $0xd0] sm:$0xff]
        %v4092 = vld [vmem:[#allocation27 + $0xd8] sm:$0xff]
        %v4093 = vld [vmem:[#allocation27 + $0xe0] sm:$0xff]
        %v4094 = vld [vmem:[#allocation27 + $0xe8] sm:$0xff]
        %v4095 = vld [vmem:[#allocation27 + $0xf0] sm:$0xff]
        %v4096 = vld [vmem:[#allocation27 + $0xf8] sm:$0xff]
        %v4097 = vld [vmem:[#allocation27 + $0x100] sm:$0xff]
        %v4098 = vld [vmem:[#allocation27 + $0x108] sm:$0xff]
        %v4099 = vld [vmem:[#allocation27 + $0x110] sm:$0xff]
        %v4100 = vld [vmem:[#allocation27 + $0x118] sm:$0xff]
        %v4101 = vld [vmem:[#allocation27 + $0x120] sm:$0xff]
        %v4102 = vld [vmem:[#allocation27 + $0x128] sm:$0xff]
        %v4103 = vld [vmem:[#allocation27 + $0x130] sm:$0xff]
        %v4104 = vld [vmem:[#allocation27 + $0x138] sm:$0xff]
        %v4105 = vld [vmem:[#allocation27 + $0x140] sm:$0xff]
        %v4106 = vld [vmem:[#allocation27 + $0x148] sm:$0xff]
        %v4107 = vld [vmem:[#allocation27 + $0x150] sm:$0xff]
        %v4108 = vld [vmem:[#allocation27 + $0x158] sm:$0xff]
        %v4109 = vld [vmem:[#allocation27 + $0x160] sm:$0xff]
        %v4110 = vld [vmem:[#allocation27 + $0x168] sm:$0xff]
        %v4111 = vld [vmem:[#allocation27 + $0x170] sm:$0xff]
        %v4112 = vld [vmem:[#allocation27 + $0x178] sm:$0xff]
        %v4113 = vld [vmem:[#allocation27 + $0x180] sm:$0xff]
        %v4114 = vld [vmem:[#allocation27 + $0x188] sm:$0xff]
        %v4115 = vld [vmem:[#allocation27 + $0x190] sm:$0xff]
        %v4116 = vld [vmem:[#allocation27 + $0x198] sm:$0xff]
        %v4117 = vld [vmem:[#allocation27 + $0x1a0] sm:$0xff]
        %v4118 = vld [vmem:[#allocation27 + $0x1a8] sm:$0xff]
        %v4119 = vld [vmem:[#allocation27 + $0x1b0] sm:$0xff]
        %v4120 = vld [vmem:[#allocation27 + $0x1b8] sm:$0xff]
        %v4121 = vld [vmem:[#allocation27 + $0x1c0] sm:$0xff]
        %v4122 = vld [vmem:[#allocation27 + $0x1c8] sm:$0xff]
        %v4123 = vld [vmem:[#allocation27 + $0x1d0] sm:$0xff]
        %v4124 = vld [vmem:[#allocation27 + $0x1d8] sm:$0xff]
        %v4125 = vld [vmem:[#allocation27 + $0x1e0] sm:$0xff]
        %v4126 = vld [vmem:[#allocation27 + $0x1e8] sm:$0xff]
        %v4127 = vld [vmem:[#allocation27 + $0x1f0] sm:$0xff]
        %v4128 = vld [vmem:[#allocation27 + $0x1f8] sm:$0xff]
        %v4129 = vld [vmem:[#allocation27 + $0x200] sm:$0xff]
        %v4130 = vld [vmem:[#allocation27 + $0x208] sm:$0xff]
        %v4131 = vld [vmem:[#allocation27 + $0x210] sm:$0xff]
        %v4132 = vld [vmem:[#allocation27 + $0x218] sm:$0xff]
        %v4133 = vld [vmem:[#allocation27 + $0x220] sm:$0xff]
        %v4134 = vld [vmem:[#allocation27 + $0x228] sm:$0xff]
        %v4135 = vld [vmem:[#allocation27 + $0x230] sm:$0xff]
        %v4136 = vld [vmem:[#allocation27 + $0x238] sm:$0xff]
        %v4137 = vld [vmem:[#allocation27 + $0x240] sm:$0xff]
        %v4138 = vld [vmem:[#allocation27 + $0x248] sm:$0xff]
        %v4139 = vld [vmem:[#allocation27 + $0x250] sm:$0xff]
        %v4140 = vld [vmem:[#allocation27 + $0x258] sm:$0xff]
        %v4141 = vld [vmem:[#allocation27 + $0x260] sm:$0xff]
        %v4142 = vld [vmem:[#allocation27 + $0x268] sm:$0xff]
        %v4143 = vld [vmem:[#allocation27 + $0x270] sm:$0xff]
        %v4144 = vld [vmem:[#allocation27 + $0x278] sm:$0xff]
        %v4145 = vld [vmem:[#allocation27 + $0x280] sm:$0xff]
        %v4146 = vld [vmem:[#allocation27 + $0x288] sm:$0xff]
        %v4147 = vld [vmem:[#allocation27 + $0x290] sm:$0xff]
        %v4148 = vld [vmem:[#allocation27 + $0x298] sm:$0xff]
        %v4149 = vld [vmem:[#allocation27 + $0x2a0] sm:$0xff]
        %v4150 = vld [vmem:[#allocation27 + $0x2a8] sm:$0xff]
        %v4151 = vld [vmem:[#allocation27 + $0x2b0] sm:$0xff]
        %v4152 = vld [vmem:[#allocation27 + $0x2b8] sm:$0xff]
        %v4153 = vld [vmem:[#allocation27 + $0x2c0] sm:$0xff]
        %v4154 = vld [vmem:[#allocation27 + $0x2c8] sm:$0xff]
        %v4155 = vld [vmem:[#allocation27 + $0x2d0] sm:$0xff]
        %v4156 = vld [vmem:[#allocation27 + $0x2d8] sm:$0xff]
        %v4157 = vld [vmem:[#allocation27 + $0x2e0] sm:$0xff]
        %v4158 = vld [vmem:[#allocation27 + $0x2e8] sm:$0xff]
        %v4159 = vld [vmem:[#allocation27 + $0x2f0] sm:$0xff]
        %v4160 = vld [vmem:[#allocation27 + $0x2f8] sm:$0xff]
        %v4161 = vld [vmem:[#allocation27 + $0x300] sm:$0xff]
        %v4162 = vld [vmem:[#allocation27 + $0x308] sm:$0xff]
        %v4163 = vld [vmem:[#allocation27 + $0x310] sm:$0xff]
        %v4164 = vld [vmem:[#allocation27 + $0x318] sm:$0xff]
        %v4165 = vld [vmem:[#allocation27 + $0x320] sm:$0xff]
        %v4166 = vld [vmem:[#allocation27 + $0x328] sm:$0xff]
        %v4167 = vld [vmem:[#allocation27 + $0x330] sm:$0xff]
        %v4168 = vld [vmem:[#allocation27 + $0x338] sm:$0xff]
        %v4169 = vld [vmem:[#allocation27 + $0x340] sm:$0xff]
        %v4170 = vld [vmem:[#allocation27 + $0x348] sm:$0xff]
        %v4171 = vld [vmem:[#allocation27 + $0x350] sm:$0xff]
        %v4172 = vld [vmem:[#allocation27 + $0x358] sm:$0xff]
        %v4173 = vld [vmem:[#allocation27 + $0x360] sm:$0xff]
        %v4174 = vld [vmem:[#allocation27 + $0x368] sm:$0xff]
        %v4175 = vld [vmem:[#allocation27 + $0x370] sm:$0xff]
        %v4176 = vld [vmem:[#allocation27 + $0x378] sm:$0xff]
        %v4177 = vld [vmem:[#allocation27 + $0x380] sm:$0xff]
        %v4178 = vld [vmem:[#allocation27 + $0x388] sm:$0xff]
        %v4179 = vld [vmem:[#allocation27 + $0x390] sm:$0xff]
        %v4180 = vld [vmem:[#allocation27 + $0x398] sm:$0xff]
        %v4181 = vld [vmem:[#allocation27 + $0x3a0] sm:$0xff]
        %v4182 = vld [vmem:[#allocation27 + $0x3a8] sm:$0xff]
        %v4183 = vld [vmem:[#allocation27 + $0x3b0] sm:$0xff]
        %v4184 = vld [vmem:[#allocation27 + $0x3b8] sm:$0xff]
        %v4185 = vld [vmem:[#allocation27 + $0x3c0] sm:$0xff]
        %v4186 = vld [vmem:[#allocation27 + $0x3c8] sm:$0xff]
        %v4187 = vld [vmem:[#allocation27 + $0x3d0] sm:$0xff]
        %v4188 = vld [vmem:[#allocation27 + $0x3d8] sm:$0xff]
        %v4189 = vld [vmem:[#allocation27 + $0x3e0] sm:$0xff]
        %v4190 = vld [vmem:[#allocation27 + $0x3e8] sm:$0xff]
        %v4191 = vld [vmem:[#allocation27 + $0x3f0] sm:$0xff]
        %v4192 = vld [vmem:[#allocation27 + $0x3f8] sm:$0xff]
        %v4193 = vld [vmem:[#allocation27 + $0x400] sm:$0xff]
        %v4194 = vld [vmem:[#allocation27 + $0x408] sm:$0xff]
        %v4195 = vld [vmem:[#allocation27 + $0x410] sm:$0xff]
        %v4196 = vld [vmem:[#allocation27 + $0x418] sm:$0xff]
        %v4197 = vld [vmem:[#allocation27 + $0x420] sm:$0xff]
        %v4198 = vld [vmem:[#allocation27 + $0x428] sm:$0xff]
        %v4199 = vld [vmem:[#allocation27 + $0x430] sm:$0xff]
        %v4200 = vld [vmem:[#allocation27 + $0x438] sm:$0xff]
        %v4201 = vld [vmem:[#allocation27 + $0x440] sm:$0xff]
        %v4202 = vld [vmem:[#allocation27 + $0x448] sm:$0xff]
        %v4203 = vld [vmem:[#allocation27 + $0x450] sm:$0xff]
        %v4204 = vld [vmem:[#allocation27 + $0x458] sm:$0xff]
        %v4205 = vld [vmem:[#allocation27 + $0x460] sm:$0xff]
        %v4206 = vld [vmem:[#allocation27 + $0x468] sm:$0xff]
        %v4207 = vld [vmem:[#allocation27 + $0x470] sm:$0xff]
        %v4208 = vld [vmem:[#allocation27 + $0x478] sm:$0xff]
        %v4209 = vld [vmem:[#allocation27 + $0x480] sm:$0xff]
        %v4210 = vld [vmem:[#allocation27 + $0x488] sm:$0xff]
        %v4211 = vld [vmem:[#allocation27 + $0x490] sm:$0xff]
        %v4212 = vld [vmem:[#allocation27 + $0x498] sm:$0xff]
        %v4213 = vld [vmem:[#allocation27 + $0x4a0] sm:$0xff]
        %v4214 = vld [vmem:[#allocation27 + $0x4a8] sm:$0xff]
        %v4215 = vld [vmem:[#allocation27 + $0x4b0] sm:$0xff]
        %v4216 = vld [vmem:[#allocation27 + $0x4b8] sm:$0xff]
        %v4217 = vld [vmem:[#allocation27 + $0x4c0] sm:$0xff]
        %v4218 = vld [vmem:[#allocation27 + $0x4c8] sm:$0xff]
        %v4219 = vld [vmem:[#allocation27 + $0x4d0] sm:$0xff]
        %v4220 = vld [vmem:[#allocation27 + $0x4d8] sm:$0xff]
        %v4221 = vld [vmem:[#allocation27 + $0x4e0] sm:$0xff]
        %v4222 = vld [vmem:[#allocation27 + $0x4e8] sm:$0xff]
        %v4223 = vld [vmem:[#allocation27 + $0x4f0] sm:$0xff]
        %v4224 = vld [vmem:[#allocation27 + $0x4f8] sm:$0xff]
        %v4225 = vld [vmem:[#allocation27 + $0x500] sm:$0xff]
        %v4226 = vld [vmem:[#allocation27 + $0x508] sm:$0xff]
        %v4227 = vld [vmem:[#allocation27 + $0x510] sm:$0xff]
        %v4228 = vld [vmem:[#allocation27 + $0x518] sm:$0xff]
        %v4229 = vld [vmem:[#allocation27 + $0x520] sm:$0xff]
        %v4230 = vld [vmem:[#allocation27 + $0x528] sm:$0xff]
        %v4231 = vld [vmem:[#allocation27 + $0x530] sm:$0xff]
        %v4232 = vld [vmem:[#allocation27 + $0x538] sm:$0xff]
        %v4233 = vld [vmem:[#allocation27 + $0x540] sm:$0xff]
        %v4234 = vld [vmem:[#allocation27 + $0x548] sm:$0xff]
        %v4235 = vld [vmem:[#allocation27 + $0x550] sm:$0xff]
        %v4236 = vld [vmem:[#allocation27 + $0x558] sm:$0xff]
        %v4237 = vld [vmem:[#allocation27 + $0x560] sm:$0xff]
        %v4238 = vld [vmem:[#allocation27 + $0x568] sm:$0xff]
        %v4239 = vld [vmem:[#allocation27 + $0x570] sm:$0xff]
        %v4240 = vld [vmem:[#allocation27 + $0x578] sm:$0xff]
        %v4241 = vld [vmem:[#allocation27 + $0x580] sm:$0xff]
        %v4242 = vld [vmem:[#allocation27 + $0x588] sm:$0xff]
        %v4243 = vld [vmem:[#allocation27 + $0x590] sm:$0xff]
        %v4244 = vld [vmem:[#allocation27 + $0x598] sm:$0xff]
        %v4245 = vld [vmem:[#allocation27 + $0x5a0] sm:$0xff]
        %v4246 = vld [vmem:[#allocation27 + $0x5a8] sm:$0xff]
        %v4247 = vld [vmem:[#allocation27 + $0x5b0] sm:$0xff]
        %v4248 = vld [vmem:[#allocation27 + $0x5b8] sm:$0xff]
        %v4249 = vld [vmem:[#allocation27 + $0x5c0] sm:$0xff]
        %v4250 = vld [vmem:[#allocation27 + $0x5c8] sm:$0xff]
        %v4251 = vld [vmem:[#allocation27 + $0x5d0] sm:$0xff]
        %v4252 = vld [vmem:[#allocation27 + $0x5d8] sm:$0xff]
        %v4253 = vld [vmem:[#allocation27 + $0x5e0] sm:$0xff]
        %v4254 = vld [vmem:[#allocation27 + $0x5e8] sm:$0xff]
        %v4255 = vld [vmem:[#allocation27 + $0x5f0] sm:$0xff]
        %v4256 = vld [vmem:[#allocation27 + $0x5f8] sm:$0xff]
        %v4257 = vld [vmem:[%s18] sm:$0xf]
        %v4259 = vlaneseq
        %v4260 = vshrl.u32 %v4259, 7
        %v4261 = vsub.s32 0, %v4260
        %v4262 = vrot.slane %v4257, %v4261
        %v4263 = vlaneseq
        %v4264 = vshrl.u32 %v4263, 7
        %v4265 = vsub.s32 1, %v4264
        %v4266 = vrot.slane %v4257, %v4265
        %v4267 = vlaneseq
        %v4268 = vshrl.u32 %v4267, 7
        %v4269 = vsub.s32 2, %v4268
        %v4270 = vrot.slane %v4257, %v4269
        %v4271 = vlaneseq
        %v4272 = vshrl.u32 %v4271, 7
        %v4273 = vsub.s32 3, %v4272
        %v4274 = vrot.slane %v4257, %v4273
        %v4280 = vshrl.u32 %v4053, 16
        %v4282 = vrot.slane %v4280, 3
        %v4283 = vshll.u32 %v4053, 16
        %v4285 = vrot.slane %v4283, 4
        %v4286 = vor.u32 %v4282, %v4285
        %v4288 = vshrl.u32 %v4059, 16
        %v4290 = vrot.slane %v4288, 3
        %v4291 = vshll.u32 %v4059, 16
        %v4293 = vrot.slane %v4291, 4
        %v4294 = vor.u32 %v4290, %v4293
        %v4295 = vsel %vm3130, %v4286, %v4294
        %v4297 = vshrl.u32 %v4054, 16
        %v4299 = vrot.slane %v4297, 3
        %v4300 = vshll.u32 %v4054, 16
        %v4302 = vrot.slane %v4300, 4
        %v4303 = vor.u32 %v4299, %v4302
        %v4305 = vshrl.u32 %v4060, 16
        %v4307 = vrot.slane %v4305, 3
        %v4308 = vshll.u32 %v4060, 16
        %v4310 = vrot.slane %v4308, 4
        %v4311 = vor.u32 %v4307, %v4310
        %v4312 = vsel %vm3130, %v4303, %v4311
        %v4314 = vshrl.u32 %v4055, 16
        %v4316 = vrot.slane %v4314, 3
        %v4317 = vshll.u32 %v4055, 16
        %v4319 = vrot.slane %v4317, 4
        %v4320 = vor.u32 %v4316, %v4319
        %v4322 = vshrl.u32 %v4061, 16
        %v4324 = vrot.slane %v4322, 3
        %v4325 = vshll.u32 %v4061, 16
        %v4327 = vrot.slane %v4325, 4
        %v4328 = vor.u32 %v4324, %v4327
        %v4329 = vsel %vm3130, %v4320, %v4328
        %v4331 = vshrl.u32 %v4056, 16
        %v4333 = vrot.slane %v4331, 3
        %v4334 = vshll.u32 %v4056, 16
        %v4336 = vrot.slane %v4334, 4
        %v4337 = vor.u32 %v4333, %v4336
        %v4339 = vshrl.u32 %v4062, 16
        %v4341 = vrot.slane %v4339, 3
        %v4342 = vshll.u32 %v4062, 16
        %v4344 = vrot.slane %v4342, 4
        %v4345 = vor.u32 %v4341, %v4344
        %v4346 = vsel %vm3130, %v4337, %v4345
        %v4348 = vshrl.u32 %v4057, 16
        %v4350 = vrot.slane %v4348, 3
        %v4351 = vshll.u32 %v4057, 16
        %v4353 = vrot.slane %v4351, 4
        %v4354 = vor.u32 %v4350, %v4353
        %v4356 = vshrl.u32 %v4063, 16
        %v4358 = vrot.slane %v4356, 3
        %v4359 = vshll.u32 %v4063, 16
        %v4361 = vrot.slane %v4359, 4
        %v4362 = vor.u32 %v4358, %v4361
        %v4363 = vsel %vm3130, %v4354, %v4362
        %v4365 = vshrl.u32 %v4058, 16
        %v4367 = vrot.slane %v4365, 3
        %v4368 = vshll.u32 %v4058, 16
        %v4370 = vrot.slane %v4368, 4
        %v4371 = vor.u32 %v4367, %v4370
        %v4373 = vshrl.u32 %v4064, 16
        %v4375 = vrot.slane %v4373, 3
        %v4376 = vshll.u32 %v4064, 16
        %v4378 = vrot.slane %v4376, 4
        %v4379 = vor.u32 %v4375, %v4378
        %v4380 = vsel %vm3130, %v4371, %v4379
        %v4579 = vunpack.c.l.b16 %v4065
        %v4580 = vunpack.c.h.b16 %v4065
        %v4581 = vunpack.c.l.b16 %v4066
        %v4582 = vunpack.c.h.b16 %v4066
        %v4583 = vunpack.c.l.b16 %v4067
        %v4584 = vunpack.c.h.b16 %v4067
        %v4585 = vunpack.c.l.b16 %v4068
        %v4586 = vunpack.c.h.b16 %v4068
        %v4587 = vunpack.c.l.b16 %v4069
        %v4588 = vunpack.c.h.b16 %v4069
        %v4589 = vunpack.c.l.b16 %v4070
        %v4590 = vunpack.c.h.b16 %v4070
        %v4591 = vunpack.c.l.b16 %v4071
        %v4592 = vunpack.c.h.b16 %v4071
        %v4593 = vunpack.c.l.b16 %v4072
        %v4594 = vunpack.c.h.b16 %v4072
        %v4595 = vunpack.c.l.b16 %v4073
        %v4596 = vunpack.c.h.b16 %v4073
        %v4597 = vunpack.c.l.b16 %v4074
        %v4598 = vunpack.c.h.b16 %v4074
        %v4599 = vunpack.c.l.b16 %v4075
        %v4600 = vunpack.c.h.b16 %v4075
        %v4601 = vunpack.c.l.b16 %v4076
        %v4602 = vunpack.c.h.b16 %v4076
        %v4603 = vunpack.c.l.b16 %v4077
        %v4604 = vunpack.c.h.b16 %v4077
        %v4605 = vunpack.c.l.b16 %v4078
        %v4606 = vunpack.c.h.b16 %v4078
        %v4607 = vunpack.c.l.b16 %v4079
        %v4608 = vunpack.c.h.b16 %v4079
        %v4609 = vunpack.c.l.b16 %v4080
        %v4610 = vunpack.c.h.b16 %v4080
        %v4611 = vunpack.c.l.b16 %v4081
        %v4612 = vunpack.c.h.b16 %v4081
        %v4613 = vunpack.c.l.b16 %v4082
        %v4614 = vunpack.c.h.b16 %v4082
        %v4615 = vunpack.c.l.b16 %v4083
        %v4616 = vunpack.c.h.b16 %v4083
        %v4617 = vunpack.c.l.b16 %v4084
        %v4618 = vunpack.c.h.b16 %v4084
        %v4619 = vunpack.c.l.b16 %v4085
        %v4620 = vunpack.c.h.b16 %v4085
        %v4621 = vunpack.c.l.b16 %v4086
        %v4622 = vunpack.c.h.b16 %v4086
        %v4623 = vunpack.c.l.b16 %v4087
        %v4624 = vunpack.c.h.b16 %v4087
        %v4625 = vunpack.c.l.b16 %v4088
        %v4626 = vunpack.c.h.b16 %v4088
        %v4627 = vunpack.c.l.b16 %v4089
        %v4628 = vunpack.c.h.b16 %v4089
        %v4629 = vunpack.c.l.b16 %v4090
        %v4630 = vunpack.c.h.b16 %v4090
        %v4631 = vunpack.c.l.b16 %v4091
        %v4632 = vunpack.c.h.b16 %v4091
        %v4633 = vunpack.c.l.b16 %v4092
        %v4634 = vunpack.c.h.b16 %v4092
        %v4635 = vunpack.c.l.b16 %v4093
        %v4636 = vunpack.c.h.b16 %v4093
        %v4637 = vunpack.c.l.b16 %v4094
        %v4638 = vunpack.c.h.b16 %v4094
        %v4639 = vunpack.c.l.b16 %v4095
        %v4640 = vunpack.c.h.b16 %v4095
        %v4641 = vunpack.c.l.b16 %v4096
        %v4642 = vunpack.c.h.b16 %v4096
        %v4643 = vunpack.c.l.b16 %v4097
        %v4644 = vunpack.c.h.b16 %v4097
        %v4645 = vunpack.c.l.b16 %v4098
        %v4646 = vunpack.c.h.b16 %v4098
        %v4647 = vunpack.c.l.b16 %v4099
        %v4648 = vunpack.c.h.b16 %v4099
        %v4649 = vunpack.c.l.b16 %v4100
        %v4650 = vunpack.c.h.b16 %v4100
        %v4651 = vunpack.c.l.b16 %v4101
        %v4652 = vunpack.c.h.b16 %v4101
        %v4653 = vunpack.c.l.b16 %v4102
        %v4654 = vunpack.c.h.b16 %v4102
        %v4655 = vunpack.c.l.b16 %v4103
        %v4656 = vunpack.c.h.b16 %v4103
        %v4657 = vunpack.c.l.b16 %v4104
        %v4658 = vunpack.c.h.b16 %v4104
        %v4659 = vunpack.c.l.b16 %v4105
        %v4660 = vunpack.c.h.b16 %v4105
        %v4661 = vunpack.c.l.b16 %v4106
        %v4662 = vunpack.c.h.b16 %v4106
        %v4663 = vunpack.c.l.b16 %v4107
        %v4664 = vunpack.c.h.b16 %v4107
        %v4665 = vunpack.c.l.b16 %v4108
        %v4666 = vunpack.c.h.b16 %v4108
        %v4667 = vunpack.c.l.b16 %v4109
        %v4668 = vunpack.c.h.b16 %v4109
        %v4669 = vunpack.c.l.b16 %v4110
        %v4670 = vunpack.c.h.b16 %v4110
        %v4671 = vunpack.c.l.b16 %v4111
        %v4672 = vunpack.c.h.b16 %v4111
        %v4673 = vunpack.c.l.b16 %v4112
        %v4674 = vunpack.c.h.b16 %v4112
        %v4675 = vunpack.c.l.b16 %v4113
        %v4676 = vunpack.c.h.b16 %v4113
        %v4677 = vunpack.c.l.b16 %v4114
        %v4678 = vunpack.c.h.b16 %v4114
        %v4679 = vunpack.c.l.b16 %v4115
        %v4680 = vunpack.c.h.b16 %v4115
        %v4681 = vunpack.c.l.b16 %v4116
        %v4682 = vunpack.c.h.b16 %v4116
        %v4683 = vunpack.c.l.b16 %v4117
        %v4684 = vunpack.c.h.b16 %v4117
        %v4685 = vunpack.c.l.b16 %v4118
        %v4686 = vunpack.c.h.b16 %v4118
        %v4687 = vunpack.c.l.b16 %v4119
        %v4688 = vunpack.c.h.b16 %v4119
        %v4689 = vunpack.c.l.b16 %v4120
        %v4690 = vunpack.c.h.b16 %v4120
        %v4691 = vunpack.c.l.b16 %v4121
        %v4692 = vunpack.c.h.b16 %v4121
        %v4693 = vunpack.c.l.b16 %v4122
        %v4694 = vunpack.c.h.b16 %v4122
        %v4695 = vunpack.c.l.b16 %v4123
        %v4696 = vunpack.c.h.b16 %v4123
        %v4697 = vunpack.c.l.b16 %v4124
        %v4698 = vunpack.c.h.b16 %v4124
        %v4699 = vunpack.c.l.b16 %v4125
        %v4700 = vunpack.c.h.b16 %v4125
        %v4701 = vunpack.c.l.b16 %v4126
        %v4702 = vunpack.c.h.b16 %v4126
        %v4703 = vunpack.c.l.b16 %v4127
        %v4704 = vunpack.c.h.b16 %v4127
        %v4705 = vunpack.c.l.b16 %v4128
        %v4706 = vunpack.c.h.b16 %v4128
        %v4707 = vunpack.c.l.b16 %v4129
        %v4708 = vunpack.c.h.b16 %v4129
        %v4709 = vunpack.c.l.b16 %v4130
        %v4710 = vunpack.c.h.b16 %v4130
        %v4711 = vunpack.c.l.b16 %v4131
        %v4712 = vunpack.c.h.b16 %v4131
        %v4713 = vunpack.c.l.b16 %v4132
        %v4714 = vunpack.c.h.b16 %v4132
        %v4715 = vunpack.c.l.b16 %v4133
        %v4716 = vunpack.c.h.b16 %v4133
        %v4717 = vunpack.c.l.b16 %v4134
        %v4718 = vunpack.c.h.b16 %v4134
        %v4719 = vunpack.c.l.b16 %v4135
        %v4720 = vunpack.c.h.b16 %v4135
        %v4721 = vunpack.c.l.b16 %v4136
        %v4722 = vunpack.c.h.b16 %v4136
        %v4723 = vunpack.c.l.b16 %v4137
        %v4724 = vunpack.c.h.b16 %v4137
        %v4725 = vunpack.c.l.b16 %v4138
        %v4726 = vunpack.c.h.b16 %v4138
        %v4727 = vunpack.c.l.b16 %v4139
        %v4728 = vunpack.c.h.b16 %v4139
        %v4729 = vunpack.c.l.b16 %v4140
        %v4730 = vunpack.c.h.b16 %v4140
        %v4731 = vunpack.c.l.b16 %v4141
        %v4732 = vunpack.c.h.b16 %v4141
        %v4733 = vunpack.c.l.b16 %v4142
        %v4734 = vunpack.c.h.b16 %v4142
        %v4735 = vunpack.c.l.b16 %v4143
        %v4736 = vunpack.c.h.b16 %v4143
        %v4737 = vunpack.c.l.b16 %v4144
        %v4738 = vunpack.c.h.b16 %v4144
        %v4739 = vunpack.c.l.b16 %v4145
        %v4740 = vunpack.c.h.b16 %v4145
        %v4741 = vunpack.c.l.b16 %v4146
        %v4742 = vunpack.c.h.b16 %v4146
        %v4743 = vunpack.c.l.b16 %v4147
        %v4744 = vunpack.c.h.b16 %v4147
        %v4745 = vunpack.c.l.b16 %v4148
        %v4746 = vunpack.c.h.b16 %v4148
        %v4747 = vunpack.c.l.b16 %v4149
        %v4748 = vunpack.c.h.b16 %v4149
        %v4749 = vunpack.c.l.b16 %v4150
        %v4750 = vunpack.c.h.b16 %v4150
        %v4751 = vunpack.c.l.b16 %v4151
        %v4752 = vunpack.c.h.b16 %v4151
        %v4753 = vunpack.c.l.b16 %v4152
        %v4754 = vunpack.c.h.b16 %v4152
        %v4755 = vunpack.c.l.b16 %v4153
        %v4756 = vunpack.c.h.b16 %v4153
        %v4757 = vunpack.c.l.b16 %v4154
        %v4758 = vunpack.c.h.b16 %v4154
        %v4759 = vunpack.c.l.b16 %v4155
        %v4760 = vunpack.c.h.b16 %v4155
        %v4761 = vunpack.c.l.b16 %v4156
        %v4762 = vunpack.c.h.b16 %v4156
        %v4763 = vunpack.c.l.b16 %v4157
        %v4764 = vunpack.c.h.b16 %v4157
        %v4765 = vunpack.c.l.b16 %v4158
        %v4766 = vunpack.c.h.b16 %v4158
        %v4767 = vunpack.c.l.b16 %v4159
        %v4768 = vunpack.c.h.b16 %v4159
        %v4769 = vunpack.c.l.b16 %v4160
        %v4770 = vunpack.c.h.b16 %v4160
        %v4771 = vunpack.c.l.b16 %v4161
        %v4772 = vunpack.c.h.b16 %v4161
        %v4773 = vunpack.c.l.b16 %v4162
        %v4774 = vunpack.c.h.b16 %v4162
        %v4775 = vunpack.c.l.b16 %v4163
        %v4776 = vunpack.c.h.b16 %v4163
        %v4777 = vunpack.c.l.b16 %v4164
        %v4778 = vunpack.c.h.b16 %v4164
        %v4779 = vunpack.c.l.b16 %v4165
        %v4780 = vunpack.c.h.b16 %v4165
        %v4781 = vunpack.c.l.b16 %v4166
        %v4782 = vunpack.c.h.b16 %v4166
        %v4783 = vunpack.c.l.b16 %v4167
        %v4784 = vunpack.c.h.b16 %v4167
        %v4785 = vunpack.c.l.b16 %v4168
        %v4786 = vunpack.c.h.b16 %v4168
        %v4787 = vunpack.c.l.b16 %v4169
        %v4788 = vunpack.c.h.b16 %v4169
        %v4789 = vunpack.c.l.b16 %v4170
        %v4790 = vunpack.c.h.b16 %v4170
        %v4791 = vunpack.c.l.b16 %v4171
        %v4792 = vunpack.c.h.b16 %v4171
        %v4793 = vunpack.c.l.b16 %v4172
        %v4794 = vunpack.c.h.b16 %v4172
        %v4795 = vunpack.c.l.b16 %v4173
        %v4796 = vunpack.c.h.b16 %v4173
        %v4797 = vunpack.c.l.b16 %v4174
        %v4798 = vunpack.c.h.b16 %v4174
        %v4799 = vunpack.c.l.b16 %v4175
        %v4800 = vunpack.c.h.b16 %v4175
        %v4801 = vunpack.c.l.b16 %v4176
        %v4802 = vunpack.c.h.b16 %v4176
        %v4803 = vunpack.c.l.b16 %v4177
        %v4804 = vunpack.c.h.b16 %v4177
        %v4805 = vunpack.c.l.b16 %v4178
        %v4806 = vunpack.c.h.b16 %v4178
        %v4807 = vunpack.c.l.b16 %v4179
        %v4808 = vunpack.c.h.b16 %v4179
        %v4809 = vunpack.c.l.b16 %v4180
        %v4810 = vunpack.c.h.b16 %v4180
        %v4811 = vunpack.c.l.b16 %v4181
        %v4812 = vunpack.c.h.b16 %v4181
        %v4813 = vunpack.c.l.b16 %v4182
        %v4814 = vunpack.c.h.b16 %v4182
        %v4815 = vunpack.c.l.b16 %v4183
        %v4816 = vunpack.c.h.b16 %v4183
        %v4817 = vunpack.c.l.b16 %v4184
        %v4818 = vunpack.c.h.b16 %v4184
        %v4819 = vunpack.c.l.b16 %v4185
        %v4820 = vunpack.c.h.b16 %v4185
        %v4821 = vunpack.c.l.b16 %v4186
        %v4822 = vunpack.c.h.b16 %v4186
        %v4823 = vunpack.c.l.b16 %v4187
        %v4824 = vunpack.c.h.b16 %v4187
        %v4825 = vunpack.c.l.b16 %v4188
        %v4826 = vunpack.c.h.b16 %v4188
        %v4827 = vunpack.c.l.b16 %v4189
        %v4828 = vunpack.c.h.b16 %v4189
        %v4829 = vunpack.c.l.b16 %v4190
        %v4830 = vunpack.c.h.b16 %v4190
        %v4831 = vunpack.c.l.b16 %v4191
        %v4832 = vunpack.c.h.b16 %v4191
        %v4833 = vunpack.c.l.b16 %v4192
        %v4834 = vunpack.c.h.b16 %v4192
        %v4835 = vunpack.c.l.b16 %v4193
        %v4836 = vunpack.c.h.b16 %v4193
        %v4837 = vunpack.c.l.b16 %v4194
        %v4838 = vunpack.c.h.b16 %v4194
        %v4839 = vunpack.c.l.b16 %v4195
        %v4840 = vunpack.c.h.b16 %v4195
        %v4841 = vunpack.c.l.b16 %v4196
        %v4842 = vunpack.c.h.b16 %v4196
        %v4843 = vunpack.c.l.b16 %v4197
        %v4844 = vunpack.c.h.b16 %v4197
        %v4845 = vunpack.c.l.b16 %v4198
        %v4846 = vunpack.c.h.b16 %v4198
        %v4847 = vunpack.c.l.b16 %v4199
        %v4848 = vunpack.c.h.b16 %v4199
        %v4849 = vunpack.c.l.b16 %v4200
        %v4850 = vunpack.c.h.b16 %v4200
        %v4851 = vunpack.c.l.b16 %v4201
        %v4852 = vunpack.c.h.b16 %v4201
        %v4853 = vunpack.c.l.b16 %v4202
        %v4854 = vunpack.c.h.b16 %v4202
        %v4855 = vunpack.c.l.b16 %v4203
        %v4856 = vunpack.c.h.b16 %v4203
        %v4857 = vunpack.c.l.b16 %v4204
        %v4858 = vunpack.c.h.b16 %v4204
        %v4859 = vunpack.c.l.b16 %v4205
        %v4860 = vunpack.c.h.b16 %v4205
        %v4861 = vunpack.c.l.b16 %v4206
        %v4862 = vunpack.c.h.b16 %v4206
        %v4863 = vunpack.c.l.b16 %v4207
        %v4864 = vunpack.c.h.b16 %v4207
        %v4865 = vunpack.c.l.b16 %v4208
        %v4866 = vunpack.c.h.b16 %v4208
        %v4867 = vunpack.c.l.b16 %v4209
        %v4868 = vunpack.c.h.b16 %v4209
        %v4869 = vunpack.c.l.b16 %v4210
        %v4870 = vunpack.c.h.b16 %v4210
        %v4871 = vunpack.c.l.b16 %v4211
        %v4872 = vunpack.c.h.b16 %v4211
        %v4873 = vunpack.c.l.b16 %v4212
        %v4874 = vunpack.c.h.b16 %v4212
        %v4875 = vunpack.c.l.b16 %v4213
        %v4876 = vunpack.c.h.b16 %v4213
        %v4877 = vunpack.c.l.b16 %v4214
        %v4878 = vunpack.c.h.b16 %v4214
        %v4879 = vunpack.c.l.b16 %v4215
        %v4880 = vunpack.c.h.b16 %v4215
        %v4881 = vunpack.c.l.b16 %v4216
        %v4882 = vunpack.c.h.b16 %v4216
        %v4883 = vunpack.c.l.b16 %v4217
        %v4884 = vunpack.c.h.b16 %v4217
        %v4885 = vunpack.c.l.b16 %v4218
        %v4886 = vunpack.c.h.b16 %v4218
        %v4887 = vunpack.c.l.b16 %v4219
        %v4888 = vunpack.c.h.b16 %v4219
        %v4889 = vunpack.c.l.b16 %v4220
        %v4890 = vunpack.c.h.b16 %v4220
        %v4891 = vunpack.c.l.b16 %v4221
        %v4892 = vunpack.c.h.b16 %v4221
        %v4893 = vunpack.c.l.b16 %v4222
        %v4894 = vunpack.c.h.b16 %v4222
        %v4895 = vunpack.c.l.b16 %v4223
        %v4896 = vunpack.c.h.b16 %v4223
        %v4897 = vunpack.c.l.b16 %v4224
        %v4898 = vunpack.c.h.b16 %v4224
        %v4899 = vunpack.c.l.b16 %v4225
        %v4900 = vunpack.c.h.b16 %v4225
        %v4901 = vunpack.c.l.b16 %v4226
        %v4902 = vunpack.c.h.b16 %v4226
        %v4903 = vunpack.c.l.b16 %v4227
        %v4904 = vunpack.c.h.b16 %v4227
        %v4905 = vunpack.c.l.b16 %v4228
        %v4906 = vunpack.c.h.b16 %v4228
        %v4907 = vunpack.c.l.b16 %v4229
        %v4908 = vunpack.c.h.b16 %v4229
        %v4909 = vunpack.c.l.b16 %v4230
        %v4910 = vunpack.c.h.b16 %v4230
        %v4911 = vunpack.c.l.b16 %v4231
        %v4912 = vunpack.c.h.b16 %v4231
        %v4913 = vunpack.c.l.b16 %v4232
        %v4914 = vunpack.c.h.b16 %v4232
        %v4915 = vunpack.c.l.b16 %v4233
        %v4916 = vunpack.c.h.b16 %v4233
        %v4917 = vunpack.c.l.b16 %v4234
        %v4918 = vunpack.c.h.b16 %v4234
        %v4919 = vunpack.c.l.b16 %v4235
        %v4920 = vunpack.c.h.b16 %v4235
        %v4921 = vunpack.c.l.b16 %v4236
        %v4922 = vunpack.c.h.b16 %v4236
        %v4923 = vunpack.c.l.b16 %v4237
        %v4924 = vunpack.c.h.b16 %v4237
        %v4925 = vunpack.c.l.b16 %v4238
        %v4926 = vunpack.c.h.b16 %v4238
        %v4927 = vunpack.c.l.b16 %v4239
        %v4928 = vunpack.c.h.b16 %v4239
        %v4929 = vunpack.c.l.b16 %v4240
        %v4930 = vunpack.c.h.b16 %v4240
        %v4931 = vunpack.c.l.b16 %v4241
        %v4932 = vunpack.c.h.b16 %v4241
        %v4933 = vunpack.c.l.b16 %v4242
        %v4934 = vunpack.c.h.b16 %v4242
        %v4935 = vunpack.c.l.b16 %v4243
        %v4936 = vunpack.c.h.b16 %v4243
        %v4937 = vunpack.c.l.b16 %v4244
        %v4938 = vunpack.c.h.b16 %v4244
        %v4939 = vunpack.c.l.b16 %v4245
        %v4940 = vunpack.c.h.b16 %v4245
        %v4941 = vunpack.c.l.b16 %v4246
        %v4942 = vunpack.c.h.b16 %v4246
        %v4943 = vunpack.c.l.b16 %v4247
        %v4944 = vunpack.c.h.b16 %v4247
        %v4945 = vunpack.c.l.b16 %v4248
        %v4946 = vunpack.c.h.b16 %v4248
        %v4947 = vunpack.c.l.b16 %v4249
        %v4948 = vunpack.c.h.b16 %v4249
        %v4949 = vunpack.c.l.b16 %v4250
        %v4950 = vunpack.c.h.b16 %v4250
        %v4951 = vunpack.c.l.b16 %v4251
        %v4952 = vunpack.c.h.b16 %v4251
        %v4953 = vunpack.c.l.b16 %v4252
        %v4954 = vunpack.c.h.b16 %v4252
        %v4955 = vunpack.c.l.b16 %v4253
        %v4956 = vunpack.c.h.b16 %v4253
        %v4957 = vunpack.c.l.b16 %v4254
        %v4958 = vunpack.c.h.b16 %v4254
        %v4959 = vunpack.c.l.b16 %v4255
        %v4960 = vunpack.c.h.b16 %v4255
        %v4961 = vunpack.c.l.b16 %v4256
        %v4962 = vunpack.c.h.b16 %v4256
        %v4963 = vpack.c.b16 %v4583, %v4579
        %v4964 = vpack.c.b16 %v4584, %v4580
        %v4965 = vpack.c.b16 %v4585, %v4581
        %v4966 = vpack.c.b16 %v4586, %v4582
        %v4967 = vpack.c.b16 %v4591, %v4587
        %v4968 = vpack.c.b16 %v4592, %v4588
        %v4969 = vpack.c.b16 %v4593, %v4589
        %v4970 = vpack.c.b16 %v4594, %v4590
        %v4971 = vpack.c.b16 %v4599, %v4595
        %v4972 = vpack.c.b16 %v4600, %v4596
        %v4973 = vpack.c.b16 %v4601, %v4597
        %v4974 = vpack.c.b16 %v4602, %v4598
        %v4975 = vpack.c.b16 %v4607, %v4603
        %v4976 = vpack.c.b16 %v4608, %v4604
        %v4977 = vpack.c.b16 %v4609, %v4605
        %v4978 = vpack.c.b16 %v4610, %v4606
        %v4979 = vpack.c.b16 %v4615, %v4611
        %v4980 = vpack.c.b16 %v4616, %v4612
        %v4981 = vpack.c.b16 %v4617, %v4613
        %v4982 = vpack.c.b16 %v4618, %v4614
        %v4983 = vpack.c.b16 %v4623, %v4619
        %v4984 = vpack.c.b16 %v4624, %v4620
        %v4985 = vpack.c.b16 %v4625, %v4621
        %v4986 = vpack.c.b16 %v4626, %v4622
        %v4987 = vpack.c.b16 %v4631, %v4627
        %v4988 = vpack.c.b16 %v4632, %v4628
        %v4989 = vpack.c.b16 %v4633, %v4629
        %v4990 = vpack.c.b16 %v4634, %v4630
        %v4991 = vpack.c.b16 %v4639, %v4635
        %v4992 = vpack.c.b16 %v4640, %v4636
        %v4993 = vpack.c.b16 %v4641, %v4637
        %v4994 = vpack.c.b16 %v4642, %v4638
        %v4995 = vpack.c.b16 %v4647, %v4643
        %v4996 = vpack.c.b16 %v4648, %v4644
        %v4997 = vpack.c.b16 %v4649, %v4645
        %v4998 = vpack.c.b16 %v4650, %v4646
        %v4999 = vpack.c.b16 %v4655, %v4651
        %v5000 = vpack.c.b16 %v4656, %v4652
        %v5001 = vpack.c.b16 %v4657, %v4653
        %v5002 = vpack.c.b16 %v4658, %v4654
        %v5003 = vpack.c.b16 %v4663, %v4659
        %v5004 = vpack.c.b16 %v4664, %v4660
        %v5005 = vpack.c.b16 %v4665, %v4661
        %v5006 = vpack.c.b16 %v4666, %v4662
        %v5007 = vpack.c.b16 %v4671, %v4667
        %v5008 = vpack.c.b16 %v4672, %v4668
        %v5009 = vpack.c.b16 %v4673, %v4669
        %v5010 = vpack.c.b16 %v4674, %v4670
        %v5011 = vpack.c.b16 %v4679, %v4675
        %v5012 = vpack.c.b16 %v4680, %v4676
        %v5013 = vpack.c.b16 %v4681, %v4677
        %v5014 = vpack.c.b16 %v4682, %v4678
        %v5015 = vpack.c.b16 %v4687, %v4683
        %v5016 = vpack.c.b16 %v4688, %v4684
        %v5017 = vpack.c.b16 %v4689, %v4685
        %v5018 = vpack.c.b16 %v4690, %v4686
        %v5019 = vpack.c.b16 %v4695, %v4691
        %v5020 = vpack.c.b16 %v4696, %v4692
        %v5021 = vpack.c.b16 %v4697, %v4693
        %v5022 = vpack.c.b16 %v4698, %v4694
        %v5023 = vpack.c.b16 %v4703, %v4699
        %v5024 = vpack.c.b16 %v4704, %v4700
        %v5025 = vpack.c.b16 %v4705, %v4701
        %v5026 = vpack.c.b16 %v4706, %v4702
        %v5027 = vpack.c.b16 %v4711, %v4707
        %v5028 = vpack.c.b16 %v4712, %v4708
        %v5029 = vpack.c.b16 %v4713, %v4709
        %v5030 = vpack.c.b16 %v4714, %v4710
        %v5031 = vpack.c.b16 %v4719, %v4715
        %v5032 = vpack.c.b16 %v4720, %v4716
        %v5033 = vpack.c.b16 %v4721, %v4717
        %v5034 = vpack.c.b16 %v4722, %v4718
        %v5035 = vpack.c.b16 %v4727, %v4723
        %v5036 = vpack.c.b16 %v4728, %v4724
        %v5037 = vpack.c.b16 %v4729, %v4725
        %v5038 = vpack.c.b16 %v4730, %v4726
        %v5039 = vpack.c.b16 %v4735, %v4731
        %v5040 = vpack.c.b16 %v4736, %v4732
        %v5041 = vpack.c.b16 %v4737, %v4733
        %v5042 = vpack.c.b16 %v4738, %v4734
        %v5043 = vpack.c.b16 %v4743, %v4739
        %v5044 = vpack.c.b16 %v4744, %v4740
        %v5045 = vpack.c.b16 %v4745, %v4741
        %v5046 = vpack.c.b16 %v4746, %v4742
        %v5047 = vpack.c.b16 %v4751, %v4747
        %v5048 = vpack.c.b16 %v4752, %v4748
        %v5049 = vpack.c.b16 %v4753, %v4749
        %v5050 = vpack.c.b16 %v4754, %v4750
        %v5051 = vpack.c.b16 %v4759, %v4755
        %v5052 = vpack.c.b16 %v4760, %v4756
        %v5053 = vpack.c.b16 %v4761, %v4757
        %v5054 = vpack.c.b16 %v4762, %v4758
        %v5055 = vpack.c.b16 %v4767, %v4763
        %v5056 = vpack.c.b16 %v4768, %v4764
        %v5057 = vpack.c.b16 %v4769, %v4765
        %v5058 = vpack.c.b16 %v4770, %v4766
        %v5059 = vpack.c.b16 %v4775, %v4771
        %v5060 = vpack.c.b16 %v4776, %v4772
        %v5061 = vpack.c.b16 %v4777, %v4773
        %v5062 = vpack.c.b16 %v4778, %v4774
        %v5063 = vpack.c.b16 %v4783, %v4779
        %v5064 = vpack.c.b16 %v4784, %v4780
        %v5065 = vpack.c.b16 %v4785, %v4781
        %v5066 = vpack.c.b16 %v4786, %v4782
        %v5067 = vpack.c.b16 %v4791, %v4787
        %v5068 = vpack.c.b16 %v4792, %v4788
        %v5069 = vpack.c.b16 %v4793, %v4789
        %v5070 = vpack.c.b16 %v4794, %v4790
        %v5071 = vpack.c.b16 %v4799, %v4795
        %v5072 = vpack.c.b16 %v4800, %v4796
        %v5073 = vpack.c.b16 %v4801, %v4797
        %v5074 = vpack.c.b16 %v4802, %v4798
        %v5075 = vpack.c.b16 %v4807, %v4803
        %v5076 = vpack.c.b16 %v4808, %v4804
        %v5077 = vpack.c.b16 %v4809, %v4805
        %v5078 = vpack.c.b16 %v4810, %v4806
        %v5079 = vpack.c.b16 %v4815, %v4811
        %v5080 = vpack.c.b16 %v4816, %v4812
        %v5081 = vpack.c.b16 %v4817, %v4813
        %v5082 = vpack.c.b16 %v4818, %v4814
        %v5083 = vpack.c.b16 %v4823, %v4819
        %v5084 = vpack.c.b16 %v4824, %v4820
        %v5085 = vpack.c.b16 %v4825, %v4821
        %v5086 = vpack.c.b16 %v4826, %v4822
        %v5087 = vpack.c.b16 %v4831, %v4827
        %v5088 = vpack.c.b16 %v4832, %v4828
        %v5089 = vpack.c.b16 %v4833, %v4829
        %v5090 = vpack.c.b16 %v4834, %v4830
        %v5091 = vpack.c.b16 %v4839, %v4835
        %v5092 = vpack.c.b16 %v4840, %v4836
        %v5093 = vpack.c.b16 %v4841, %v4837
        %v5094 = vpack.c.b16 %v4842, %v4838
        %v5095 = vpack.c.b16 %v4847, %v4843
        %v5096 = vpack.c.b16 %v4848, %v4844
        %v5097 = vpack.c.b16 %v4849, %v4845
        %v5098 = vpack.c.b16 %v4850, %v4846
        %v5099 = vpack.c.b16 %v4855, %v4851
        %v5100 = vpack.c.b16 %v4856, %v4852
        %v5101 = vpack.c.b16 %v4857, %v4853
        %v5102 = vpack.c.b16 %v4858, %v4854
        %v5103 = vpack.c.b16 %v4863, %v4859
        %v5104 = vpack.c.b16 %v4864, %v4860
        %v5105 = vpack.c.b16 %v4865, %v4861
        %v5106 = vpack.c.b16 %v4866, %v4862
        %v5107 = vpack.c.b16 %v4871, %v4867
        %v5108 = vpack.c.b16 %v4872, %v4868
        %v5109 = vpack.c.b16 %v4873, %v4869
        %v5110 = vpack.c.b16 %v4874, %v4870
        %v5111 = vpack.c.b16 %v4879, %v4875
        %v5112 = vpack.c.b16 %v4880, %v4876
        %v5113 = vpack.c.b16 %v4881, %v4877
        %v5114 = vpack.c.b16 %v4882, %v4878
        %v5115 = vpack.c.b16 %v4887, %v4883
        %v5116 = vpack.c.b16 %v4888, %v4884
        %v5117 = vpack.c.b16 %v4889, %v4885
        %v5118 = vpack.c.b16 %v4890, %v4886
        %v5119 = vpack.c.b16 %v4895, %v4891
        %v5120 = vpack.c.b16 %v4896, %v4892
        %v5121 = vpack.c.b16 %v4897, %v4893
        %v5122 = vpack.c.b16 %v4898, %v4894
        %v5123 = vpack.c.b16 %v4903, %v4899
        %v5124 = vpack.c.b16 %v4904, %v4900
        %v5125 = vpack.c.b16 %v4905, %v4901
        %v5126 = vpack.c.b16 %v4906, %v4902
        %v5127 = vpack.c.b16 %v4911, %v4907
        %v5128 = vpack.c.b16 %v4912, %v4908
        %v5129 = vpack.c.b16 %v4913, %v4909
        %v5130 = vpack.c.b16 %v4914, %v4910
        %v5131 = vpack.c.b16 %v4919, %v4915
        %v5132 = vpack.c.b16 %v4920, %v4916
        %v5133 = vpack.c.b16 %v4921, %v4917
        %v5134 = vpack.c.b16 %v4922, %v4918
        %v5135 = vpack.c.b16 %v4927, %v4923
        %v5136 = vpack.c.b16 %v4928, %v4924
        %v5137 = vpack.c.b16 %v4929, %v4925
        %v5138 = vpack.c.b16 %v4930, %v4926
        %v5139 = vpack.c.b16 %v4935, %v4931
        %v5140 = vpack.c.b16 %v4936, %v4932
        %v5141 = vpack.c.b16 %v4937, %v4933
        %v5142 = vpack.c.b16 %v4938, %v4934
        %v5143 = vpack.c.b16 %v4943, %v4939
        %v5144 = vpack.c.b16 %v4944, %v4940
        %v5145 = vpack.c.b16 %v4945, %v4941
        %v5146 = vpack.c.b16 %v4946, %v4942
        %v5147 = vpack.c.b16 %v4951, %v4947
        %v5148 = vpack.c.b16 %v4952, %v4948
        %v5149 = vpack.c.b16 %v4953, %v4949
        %v5150 = vpack.c.b16 %v4954, %v4950
        %v5151 = vpack.c.b16 %v4959, %v4955
        %v5152 = vpack.c.b16 %v4960, %v4956
        %v5153 = vpack.c.b16 %v4961, %v4957
        %v5154 = vpack.c.b16 %v4962, %v4958
        %5347 = vmatprep.subr.bf16.mxu0 %v4992
        %5348 = vmatpush1.bf16.msra.mxu0 %v4991
        %5349 = vmatprep.subr.bf16.mxu0 %v4988
        %5350 = vmatpush1.bf16.msra.mxu0 %v4987
        %5351 = vmatprep.subr.bf16.mxu0 %v4984
        %5352 = vmatpush1.bf16.msra.mxu0 %v4983
        %5353 = vmatprep.subr.bf16.mxu0 %v4980
        %5354 = vmatpush1.bf16.msra.mxu0 %v4979
        %5355 = vmatprep.subr.bf16.mxu0 %v4976
        %5356 = vmatpush1.bf16.msra.mxu0 %v4975
        %5357 = vmatprep.subr.bf16.mxu0 %v4972
        %5358 = vmatpush1.bf16.msra.mxu0 %v4971
        %5359 = vmatprep.subr.bf16.mxu0 %v4968
        %5360 = vmatpush1.bf16.msra.mxu0 %v4967
        %5361 = vmatprep.subr.bf16.mxu0 %v4964
        %5362 = vmatpush1.bf16.msra.mxu0 %v4963
        %5363 = vmatprep.subr.bf16.mxu0 %v5024
        %5364 = vmatpush2.bf16.msra.mxu0 %v5023
        %5365 = vmatprep.subr.bf16.mxu0 %v5020
        %5366 = vmatpush2.bf16.msra.mxu0 %v5019
        %5367 = vmatprep.subr.bf16.mxu0 %v5016
        %5368 = vmatpush2.bf16.msra.mxu0 %v5015
        %5369 = vmatprep.subr.bf16.mxu0 %v5012
        %5370 = vmatpush2.bf16.msra.mxu0 %v5011
        %5371 = vmatprep.subr.bf16.mxu0 %v5008
        %5372 = vmatpush2.bf16.msra.mxu0 %v5007
        %5373 = vmatprep.subr.bf16.mxu0 %v5004
        %5374 = vmatpush2.bf16.msra.mxu0 %v5003
        %5375 = vmatprep.subr.bf16.mxu0 %v5000
        %5376 = vmatpush2.bf16.msra.mxu0 %v4999
        %5377 = vmatprep.subr.bf16.mxu0 %v4996
        %5378 = vmatpush2.bf16.msra.mxu0 %v4995
        %5379 = vmatprep.mubr.bf16.mxu0 %v4312
        %5380 = vmatmul.mubr.bf16.gmra.mxu0 %v4295
        %v5381 = vpop.f32.mrf.mxu0
        %v5382 = vadd.f32 %v4262, %v5381
        %v5383 = vpop.f32.mrf.mxu0
        %v5384 = vadd.f32 %v4266, %v5383
        %v5385 = vpop.f32.mrf.mxu0
        %v5386 = vadd.f32 %v4262, %v5385
        %v5387 = vpop.f32.mrf.mxu0
        %v5388 = vadd.f32 %v4266, %v5387
        %5389 = vdwg.mxu0
        %5390 = vmatprep.subr.bf16.mxu0 %v5056
        %5391 = vmatpush1.bf16.msra.mxu0 %v5055
        %5392 = vmatprep.subr.bf16.mxu0 %v5052
        %5393 = vmatpush1.bf16.msra.mxu0 %v5051
        %5394 = vmatprep.subr.bf16.mxu0 %v5048
        %5395 = vmatpush1.bf16.msra.mxu0 %v5047
        %5396 = vmatprep.subr.bf16.mxu0 %v5044
        %5397 = vmatpush1.bf16.msra.mxu0 %v5043
        %5398 = vmatprep.subr.bf16.mxu0 %v5040
        %5399 = vmatpush1.bf16.msra.mxu0 %v5039
        %5400 = vmatprep.subr.bf16.mxu0 %v5036
        %5401 = vmatpush1.bf16.msra.mxu0 %v5035
        %5402 = vmatprep.subr.bf16.mxu0 %v5032
        %5403 = vmatpush1.bf16.msra.mxu0 %v5031
        %5404 = vmatprep.subr.bf16.mxu0 %v5028
        %5405 = vmatpush1.bf16.msra.mxu0 %v5027
        %5406 = vmatprep.subr.bf16.mxu0 %v5088
        %5407 = vmatpush2.bf16.msra.mxu0 %v5087
        %5408 = vmatprep.subr.bf16.mxu0 %v5084
        %5409 = vmatpush2.bf16.msra.mxu0 %v5083
        %5410 = vmatprep.subr.bf16.mxu0 %v5080
        %5411 = vmatpush2.bf16.msra.mxu0 %v5079
        %5412 = vmatprep.subr.bf16.mxu0 %v5076
        %5413 = vmatpush2.bf16.msra.mxu0 %v5075
        %5414 = vmatprep.subr.bf16.mxu0 %v5072
        %5415 = vmatpush2.bf16.msra.mxu0 %v5071
        %5416 = vmatprep.subr.bf16.mxu0 %v5068
        %5417 = vmatpush2.bf16.msra.mxu0 %v5067
        %5418 = vmatprep.subr.bf16.mxu0 %v5064
        %5419 = vmatpush2.bf16.msra.mxu0 %v5063
        %5420 = vmatprep.subr.bf16.mxu0 %v5060
        %5421 = vmatpush2.bf16.msra.mxu0 %v5059
        %5422 = vmatprep.mubr.bf16.mxu0 %v4346
        %5423 = vmatmul.mubr.bf16.gmra.mxu0 %v4329
        %v5424 = vpop.f32.mrf.mxu0
        %v5425 = vadd.f32 %v5382, %v5424
        %v5426 = vpop.f32.mrf.mxu0
        %v5427 = vadd.f32 %v5384, %v5426
        %v5428 = vpop.f32.mrf.mxu0
        %v5429 = vadd.f32 %v5386, %v5428
        %v5430 = vpop.f32.mrf.mxu0
        %v5431 = vadd.f32 %v5388, %v5430
        %5432 = vdwg.mxu0
        %5433 = vmatprep.subr.bf16.mxu0 %v5120
        %5434 = vmatpush1.bf16.msra.mxu0 %v5119
        %5435 = vmatprep.subr.bf16.mxu0 %v5116
        %5436 = vmatpush1.bf16.msra.mxu0 %v5115
        %5437 = vmatprep.subr.bf16.mxu0 %v5112
        %5438 = vmatpush1.bf16.msra.mxu0 %v5111
        %5439 = vmatprep.subr.bf16.mxu0 %v5108
        %5440 = vmatpush1.bf16.msra.mxu0 %v5107
        %5441 = vmatprep.subr.bf16.mxu0 %v5104
        %5442 = vmatpush1.bf16.msra.mxu0 %v5103
        %5443 = vmatprep.subr.bf16.mxu0 %v5100
        %5444 = vmatpush1.bf16.msra.mxu0 %v5099
        %5445 = vmatprep.subr.bf16.mxu0 %v5096
        %5446 = vmatpush1.bf16.msra.mxu0 %v5095
        %5447 = vmatprep.subr.bf16.mxu0 %v5092
        %5448 = vmatpush1.bf16.msra.mxu0 %v5091
        %5449 = vmatprep.subr.bf16.mxu0 %v5152
        %5450 = vmatpush2.bf16.msra.mxu0 %v5151
        %5451 = vmatprep.subr.bf16.mxu0 %v5148
        %5452 = vmatpush2.bf16.msra.mxu0 %v5147
        %5453 = vmatprep.subr.bf16.mxu0 %v5144
        %5454 = vmatpush2.bf16.msra.mxu0 %v5143
        %5455 = vmatprep.subr.bf16.mxu0 %v5140
        %5456 = vmatpush2.bf16.msra.mxu0 %v5139
        %5457 = vmatprep.subr.bf16.mxu0 %v5136
        %5458 = vmatpush2.bf16.msra.mxu0 %v5135
        %5459 = vmatprep.subr.bf16.mxu0 %v5132
        %5460 = vmatpush2.bf16.msra.mxu0 %v5131
        %5461 = vmatprep.subr.bf16.mxu0 %v5128
        %5462 = vmatpush2.bf16.msra.mxu0 %v5127
        %5463 = vmatprep.subr.bf16.mxu0 %v5124
        %5464 = vmatpush2.bf16.msra.mxu0 %v5123
        %5465 = vmatprep.mubr.bf16.mxu0 %v4380
        %5466 = vmatmul.mubr.bf16.gmra.mxu0 %v4363
        %v5467 = vpop.f32.mrf.mxu0
        %v5468 = vadd.f32 %v5425, %v5467
        %v5469 = vpop.f32.mrf.mxu0
        %v5470 = vadd.f32 %v5427, %v5469
        %v5471 = vpop.f32.mrf.mxu0
        %v5472 = vadd.f32 %v5429, %v5471
        %v5473 = vpop.f32.mrf.mxu0
        %v5474 = vadd.f32 %v5431, %v5473
        %5475 = vdwg.mxu0
        %5476 = vmatprep.subr.bf16.mxu0 %v4994
        %5477 = vmatpush1.bf16.msra.mxu0 %v4993
        %5478 = vmatprep.subr.bf16.mxu0 %v4990
        %5479 = vmatpush1.bf16.msra.mxu0 %v4989
        %5480 = vmatprep.subr.bf16.mxu0 %v4986
        %5481 = vmatpush1.bf16.msra.mxu0 %v4985
        %5482 = vmatprep.subr.bf16.mxu0 %v4982
        %5483 = vmatpush1.bf16.msra.mxu0 %v4981
        %5484 = vmatprep.subr.bf16.mxu0 %v4978
        %5485 = vmatpush1.bf16.msra.mxu0 %v4977
        %5486 = vmatprep.subr.bf16.mxu0 %v4974
        %5487 = vmatpush1.bf16.msra.mxu0 %v4973
        %5488 = vmatprep.subr.bf16.mxu0 %v4970
        %5489 = vmatpush1.bf16.msra.mxu0 %v4969
        %5490 = vmatprep.subr.bf16.mxu0 %v4966
        %5491 = vmatpush1.bf16.msra.mxu0 %v4965
        %5492 = vmatprep.subr.bf16.mxu0 %v5026
        %5493 = vmatpush2.bf16.msra.mxu0 %v5025
        %5494 = vmatprep.subr.bf16.mxu0 %v5022
        %5495 = vmatpush2.bf16.msra.mxu0 %v5021
        %5496 = vmatprep.subr.bf16.mxu0 %v5018
        %5497 = vmatpush2.bf16.msra.mxu0 %v5017
        %5498 = vmatprep.subr.bf16.mxu0 %v5014
        %5499 = vmatpush2.bf16.msra.mxu0 %v5013
        %5500 = vmatprep.subr.bf16.mxu0 %v5010
        %5501 = vmatpush2.bf16.msra.mxu0 %v5009
        %5502 = vmatprep.subr.bf16.mxu0 %v5006
        %5503 = vmatpush2.bf16.msra.mxu0 %v5005
        %5504 = vmatprep.subr.bf16.mxu0 %v5002
        %5505 = vmatpush2.bf16.msra.mxu0 %v5001
        %5506 = vmatprep.subr.bf16.mxu0 %v4998
        %5507 = vmatpush2.bf16.msra.mxu0 %v4997
        %5508 = vmatprep.mubr.bf16.mxu0 %v4312
        %5509 = vmatmul.mubr.bf16.gmra.mxu0 %v4295
        %v5510 = vpop.f32.mrf.mxu0
        %v5511 = vadd.f32 %v4270, %v5510
        %v5512 = vpop.f32.mrf.mxu0
        %v5513 = vadd.f32 %v4274, %v5512
        %v5514 = vpop.f32.mrf.mxu0
        %v5515 = vadd.f32 %v4270, %v5514
        %v5516 = vpop.f32.mrf.mxu0
        %v5517 = vadd.f32 %v4274, %v5516
        %5518 = vdwg.mxu0
        %5519 = vmatprep.subr.bf16.mxu0 %v5058
        %5520 = vmatpush1.bf16.msra.mxu0 %v5057
        %5521 = vmatprep.subr.bf16.mxu0 %v5054
        %5522 = vmatpush1.bf16.msra.mxu0 %v5053
        %5523 = vmatprep.subr.bf16.mxu0 %v5050
        %5524 = vmatpush1.bf16.msra.mxu0 %v5049
        %5525 = vmatprep.subr.bf16.mxu0 %v5046
        %5526 = vmatpush1.bf16.msra.mxu0 %v5045
        %5527 = vmatprep.subr.bf16.mxu0 %v5042
        %5528 = vmatpush1.bf16.msra.mxu0 %v5041
        %5529 = vmatprep.subr.bf16.mxu0 %v5038
        %5530 = vmatpush1.bf16.msra.mxu0 %v5037
        %5531 = vmatprep.subr.bf16.mxu0 %v5034
        %5532 = vmatpush1.bf16.msra.mxu0 %v5033
        %5533 = vmatprep.subr.bf16.mxu0 %v5030
        %5534 = vmatpush1.bf16.msra.mxu0 %v5029
        %5535 = vmatprep.subr.bf16.mxu0 %v5090
        %5536 = vmatpush2.bf16.msra.mxu0 %v5089
        %5537 = vmatprep.subr.bf16.mxu0 %v5086
        %5538 = vmatpush2.bf16.msra.mxu0 %v5085
        %5539 = vmatprep.subr.bf16.mxu0 %v5082
        %5540 = vmatpush2.bf16.msra.mxu0 %v5081
        %5541 = vmatprep.subr.bf16.mxu0 %v5078
        %5542 = vmatpush2.bf16.msra.mxu0 %v5077
        %5543 = vmatprep.subr.bf16.mxu0 %v5074
        %5544 = vmatpush2.bf16.msra.mxu0 %v5073
        %5545 = vmatprep.subr.bf16.mxu0 %v5070
        %5546 = vmatpush2.bf16.msra.mxu0 %v5069
        %5547 = vmatprep.subr.bf16.mxu0 %v5066
        %5548 = vmatpush2.bf16.msra.mxu0 %v5065
        %5549 = vmatprep.subr.bf16.mxu0 %v5062
        %5550 = vmatpush2.bf16.msra.mxu0 %v5061
        %5551 = vmatprep.mubr.bf16.mxu0 %v4346
        %5552 = vmatmul.mubr.bf16.gmra.mxu0 %v4329
        %v5553 = vpop.f32.mrf.mxu0
        %v5554 = vadd.f32 %v5511, %v5553
        %v5555 = vpop.f32.mrf.mxu0
        %v5556 = vadd.f32 %v5513, %v5555
        %v5557 = vpop.f32.mrf.mxu0
        %v5558 = vadd.f32 %v5515, %v5557
        %v5559 = vpop.f32.mrf.mxu0
        %v5560 = vadd.f32 %v5517, %v5559
        %5561 = vdwg.mxu0
        %5562 = vmatprep.subr.bf16.mxu0 %v5122
        %5563 = vmatpush1.bf16.msra.mxu0 %v5121
        %5564 = vmatprep.subr.bf16.mxu0 %v5118
        %5565 = vmatpush1.bf16.msra.mxu0 %v5117
        %5566 = vmatprep.subr.bf16.mxu0 %v5114
        %5567 = vmatpush1.bf16.msra.mxu0 %v5113
        %5568 = vmatprep.subr.bf16.mxu0 %v5110
        %5569 = vmatpush1.bf16.msra.mxu0 %v5109
        %5570 = vmatprep.subr.bf16.mxu0 %v5106
        %5571 = vmatpush1.bf16.msra.mxu0 %v5105
        %5572 = vmatprep.subr.bf16.mxu0 %v5102
        %5573 = vmatpush1.bf16.msra.mxu0 %v5101
        %5574 = vmatprep.subr.bf16.mxu0 %v5098
        %5575 = vmatpush1.bf16.msra.mxu0 %v5097
        %5576 = vmatprep.subr.bf16.mxu0 %v5094
        %5577 = vmatpush1.bf16.msra.mxu0 %v5093
        %5578 = vmatprep.subr.bf16.mxu0 %v5154
        %5579 = vmatpush2.bf16.msra.mxu0 %v5153
        %5580 = vmatprep.subr.bf16.mxu0 %v5150
        %5581 = vmatpush2.bf16.msra.mxu0 %v5149
        %5582 = vmatprep.subr.bf16.mxu0 %v5146
        %5583 = vmatpush2.bf16.msra.mxu0 %v5145
        %5584 = vmatprep.subr.bf16.mxu0 %v5142
        %5585 = vmatpush2.bf16.msra.mxu0 %v5141
        %5586 = vmatprep.subr.bf16.mxu0 %v5138
        %5587 = vmatpush2.bf16.msra.mxu0 %v5137
        %5588 = vmatprep.subr.bf16.mxu0 %v5134
        %5589 = vmatpush2.bf16.msra.mxu0 %v5133
        %5590 = vmatprep.subr.bf16.mxu0 %v5130
        %5591 = vmatpush2.bf16.msra.mxu0 %v5129
        %5592 = vmatprep.subr.bf16.mxu0 %v5126
        %5593 = vmatpush2.bf16.msra.mxu0 %v5125
        %5594 = vmatprep.mubr.bf16.mxu0 %v4380
        %5595 = vmatmul.mubr.bf16.gmra.mxu0 %v4363
        %v5596 = vpop.f32.mrf.mxu0
        %v5597 = vadd.f32 %v5554, %v5596
        %v5598 = vpop.f32.mrf.mxu0
        %v5599 = vadd.f32 %v5556, %v5598
        %v5600 = vpop.f32.mrf.mxu0
        %v5601 = vadd.f32 %v5558, %v5600
        %v5602 = vpop.f32.mrf.mxu0
        %v5603 = vadd.f32 %v5560, %v5602
        %5604 = vdwg.mxu0
        %v5605 = vmax.f32 %v5468, 0.0
        %v5606 = vmax.f32 %v5470, 0.0
        %v5607 = vmax.f32 %v5597, 0.0
        %v5608 = vmax.f32 %v5599, 0.0
        %v5609 = vmax.f32 %v5472, 0.0
        %v5610 = vmax.f32 %v5474, 0.0
        %v5611 = vmax.f32 %v5601, 0.0
        %v5612 = vmax.f32 %v5603, 0.0
        %v5613 = vld [vmem:[#allocation30] sm:$0xf]
        %v5614 = vpack.c.bf16 %v5609, %v5605
        %v5615 = vpack.c.bf16 %v5610, %v5606
        %v5616 = vpack.c.bf16 %v5611, %v5607
        %v5617 = vpack.c.bf16 %v5612, %v5608
        %vm5618 = vcmask 130048
        %v5620 = vsel %vm5618, %v5613, 0
        %5622 = vmatprep.subr.bf16.mxu0 0
        %5623 = vmatpush1.bf16.msra.mxu0 0
        %5624 = vmatprep.subr.bf16.mxu0 0
        %5625 = vmatpush1.bf16.msra.mxu0 0
        %5626 = vmatprep.subr.bf16.mxu0 0
        %5627 = vmatpush1.bf16.msra.mxu0 0
        %5628 = vmatprep.subr.bf16.mxu0 0
        %5629 = vmatpush1.bf16.msra.mxu0 0
        %5630 = vmatprep.subr.bf16.mxu0 0
        %5631 = vmatpush1.bf16.msra.mxu0 0
        %5632 = vmatprep.subr.bf16.mxu0 0
        %5633 = vmatpush1.bf16.msra.mxu0 0
        %5634 = vmatprep.subr.bf16.mxu0 0
        %5635 = vmatpush1.bf16.msra.mxu0 0
        %5636 = vmatprep.subr.bf16.mxu0 %v5615
        %5637 = vmatpush1.bf16.msra.mxu0 %v5614
        %5638 = vmatprep.subr.bf16.mxu0 0
        %5639 = vmatpush2.bf16.msra.mxu0 0
        %5640 = vmatprep.subr.bf16.mxu0 0
        %5641 = vmatpush2.bf16.msra.mxu0 0
        %5642 = vmatprep.subr.bf16.mxu0 0
        %5643 = vmatpush2.bf16.msra.mxu0 0
        %5644 = vmatprep.subr.bf16.mxu0 0
        %5645 = vmatpush2.bf16.msra.mxu0 0
        %5646 = vmatprep.subr.bf16.mxu0 0
        %5647 = vmatpush2.bf16.msra.mxu0 0
        %5648 = vmatprep.subr.bf16.mxu0 0
        %5649 = vmatpush2.bf16.msra.mxu0 0
        %5650 = vmatprep.subr.bf16.mxu0 0
        %5651 = vmatpush2.bf16.msra.mxu0 0
        %5652 = vmatprep.subr.bf16.mxu0 0
        %5653 = vmatpush2.bf16.msra.mxu0 0
        %5654 = vmatprep.mubr.bf16.mxu0 0
        %5655 = vmatmul.mubr.bf16.gmra.mxu0 %v5620
        %v5656 = vpop.f32.mrf.mxu0
        %v5657 = vadd.f32 0.0, %v5656
        %v5658 = vpop.f32.mrf.mxu0
        %v5659 = vadd.f32 0.0, %v5658
        %v5660 = vpop.f32.mrf.mxu0
        %v5661 = vpop.f32.mrf.mxu0
        %5662 = vdwg.mxu0
        %5663 = vmatprep.subr.bf16.mxu0 0
        %5664 = vmatpush1.bf16.msra.mxu0 0
        %5665 = vmatprep.subr.bf16.mxu0 0
        %5666 = vmatpush1.bf16.msra.mxu0 0
        %5667 = vmatprep.subr.bf16.mxu0 0
        %5668 = vmatpush1.bf16.msra.mxu0 0
        %5669 = vmatprep.subr.bf16.mxu0 0
        %5670 = vmatpush1.bf16.msra.mxu0 0
        %5671 = vmatprep.subr.bf16.mxu0 0
        %5672 = vmatpush1.bf16.msra.mxu0 0
        %5673 = vmatprep.subr.bf16.mxu0 0
        %5674 = vmatpush1.bf16.msra.mxu0 0
        %5675 = vmatprep.subr.bf16.mxu0 0
        %5676 = vmatpush1.bf16.msra.mxu0 0
        %5677 = vmatprep.subr.bf16.mxu0 %v5617
        %5678 = vmatpush1.bf16.msra.mxu0 %v5616
        %5679 = vmatprep.subr.bf16.mxu0 0
        %5680 = vmatpush2.bf16.msra.mxu0 0
        %5681 = vmatprep.subr.bf16.mxu0 0
        %5682 = vmatpush2.bf16.msra.mxu0 0
        %5683 = vmatprep.subr.bf16.mxu0 0
        %5684 = vmatpush2.bf16.msra.mxu0 0
        %5685 = vmatprep.subr.bf16.mxu0 0
        %5686 = vmatpush2.bf16.msra.mxu0 0
        %5687 = vmatprep.subr.bf16.mxu0 0
        %5688 = vmatpush2.bf16.msra.mxu0 0
        %5689 = vmatprep.subr.bf16.mxu0 0
        %5690 = vmatpush2.bf16.msra.mxu0 0
        %5691 = vmatprep.subr.bf16.mxu0 0
        %5692 = vmatpush2.bf16.msra.mxu0 0
        %5693 = vmatprep.subr.bf16.mxu0 0
        %5694 = vmatpush2.bf16.msra.mxu0 0
        %5695 = vmatprep.mubr.bf16.mxu0 0
        %5696 = vmatmul.mubr.bf16.gmra.mxu0 %v5620
        %v5697 = vpop.f32.mrf.mxu0
        %v5698 = vadd.f32 0.0, %v5697
        %v5699 = vpop.f32.mrf.mxu0
        %v5700 = vadd.f32 0.0, %v5699
        %v5701 = vpop.f32.mrf.mxu0
        %v5702 = vpop.f32.mrf.mxu0
        %5703 = vdwg.mxu0
        %v5704 = vpack.c.bf16 %v3991, %v3989
        %v5705 = vpack.c.bf16 %v3992, %v3990
        %5706 = vmatprep.subr.bf16.mxu0 0
        %5707 = vmatpush1.bf16.msra.mxu0 0
        %5708 = vmatprep.subr.bf16.mxu0 0
        %5709 = vmatpush1.bf16.msra.mxu0 0
        %5710 = vmatprep.subr.bf16.mxu0 0
        %5711 = vmatpush1.bf16.msra.mxu0 0
        %5712 = vmatprep.subr.bf16.mxu0 0
        %5713 = vmatpush1.bf16.msra.mxu0 0
        %5714 = vmatprep.subr.bf16.mxu0 0
        %5715 = vmatpush1.bf16.msra.mxu0 0
        %5716 = vmatprep.subr.bf16.mxu0 0
        %5717 = vmatpush1.bf16.msra.mxu0 0
        %5718 = vmatprep.subr.bf16.mxu0 0
        %5719 = vmatpush1.bf16.msra.mxu0 0
        %5720 = vmatprep.subr.bf16.mxu0 %v5705
        %5721 = vmatpush1.bf16.msra.mxu0 %v5704
        %5722 = vmatprep.subr.bf16.mxu0 0
        %5723 = vmatpush2.bf16.msra.mxu0 0
        %5724 = vmatprep.subr.bf16.mxu0 0
        %5725 = vmatpush2.bf16.msra.mxu0 0
        %5726 = vmatprep.subr.bf16.mxu0 0
        %5727 = vmatpush2.bf16.msra.mxu0 0
        %5728 = vmatprep.subr.bf16.mxu0 0
        %5729 = vmatpush2.bf16.msra.mxu0 0
        %5730 = vmatprep.subr.bf16.mxu0 0
        %5731 = vmatpush2.bf16.msra.mxu0 0
        %5732 = vmatprep.subr.bf16.mxu0 0
        %5733 = vmatpush2.bf16.msra.mxu0 0
        %5734 = vmatprep.subr.bf16.mxu0 0
        %5735 = vmatpush2.bf16.msra.mxu0 0
        %5736 = vmatprep.subr.bf16.mxu0 0
        %5737 = vmatpush2.bf16.msra.mxu0 0
        %5738 = vmatprep.mubr.bf16.mxu0 0
        %5739 = vmatmul.mubr.bf16.gmra.mxu0 %v5620
        %v5740 = vpop.f32.mrf.mxu0
        %v5741 = vadd.f32 0.0, %v5740
        %v5742 = vpop.f32.mrf.mxu0
        %v5743 = vadd.f32 0.0, %v5742
        %v5744 = vpop.f32.mrf.mxu0
        %v5745 = vpop.f32.mrf.mxu0
        %5746 = vdwg.mxu0
        %5747 = vst [vmem:[#allocation9] sm:$0xff] 0.0
        %5748 = vst [vmem:[#allocation9 + $0x8] sm:$0xff] 0.0
        %5749 = vst [vmem:[#allocation9 + $0x10] sm:$0xff] 0.0
        %5750 = vst [vmem:[#allocation9 + $0x18] sm:$0xff] 0.0
        %5751 = vst [vmem:[#allocation9 + $0x40] sm:$0xff] 0.0
        %5752 = vst [vmem:[#allocation9 + $0x48] sm:$0xff] 0.0
        %5753 = vst [vmem:[#allocation9 + $0x50] sm:$0xff] 0.0
        %5754 = vst [vmem:[#allocation9 + $0x58] sm:$0xff] 0.0
        %5755 = vst [vmem:[#allocation9 + $0x20] sm:$0xff] %v5657
        %5756 = vst [vmem:[#allocation9 + $0x28] sm:$0xff] %v5659
        %5757 = vst [vmem:[#allocation9 + $0x30] sm:$0xff] %v5698
        %5758 = vst [vmem:[#allocation9 + $0x38] sm:$0xff] %v5700
        %v5759 = vld [vmem:[#allocation9] sm:$0x80]
        %v5760 = vld [vmem:[#allocation9 + $0x8] sm:$0x80]
        %v5761 = vld [vmem:[#allocation9 + $0x10] sm:$0x80]
        %v5762 = vld [vmem:[#allocation9 + $0x18] sm:$0x80]
        %v5763 = vld [vmem:[#allocation9 + $0x20] sm:$0x7f]
        %v5764 = vld [vmem:[#allocation9 + $0x28] sm:$0x7f]
        %v5765 = vld [vmem:[#allocation9 + $0x30] sm:$0x7f]
        %v5766 = vld [vmem:[#allocation9 + $0x38] sm:$0x7f]
        %v5767 = vld [vmem:[#allocation9 + $0x20] sm:$0xff]
        %v5768 = vld [vmem:[#allocation9 + $0x28] sm:$0xff]
        %v5769 = vld [vmem:[#allocation9 + $0x30] sm:$0xff]
        %v5770 = vld [vmem:[#allocation9 + $0x38] sm:$0xff]
        %v5771 = vld [vmem:[#allocation9 + $0x20] sm:$0xfe]
        %v5772 = vld [vmem:[#allocation9 + $0x28] sm:$0xfe]
        %v5773 = vld [vmem:[#allocation9 + $0x30] sm:$0xfe]
        %v5774 = vld [vmem:[#allocation9 + $0x38] sm:$0xfe]
        %v5775 = vld [vmem:[#allocation9 + $0x40] sm:$0x1]
        %v5776 = vld [vmem:[#allocation9 + $0x48] sm:$0x1]
        %v5777 = vld [vmem:[#allocation9 + $0x50] sm:$0x1]
        %v5778 = vld [vmem:[#allocation9 + $0x58] sm:$0x1]
        %v5783 = vrot.slane %v5767, 1
        %v5784 = vrot.slane %v5768, 1
        %v5785 = vrot.slane %v5769, 1
        %v5786 = vrot.slane %v5770, 1
        %v5799 = vrot.slane %v5771, 2
        %v5800 = vrot.slane %v5772, 2
        %v5801 = vrot.slane %v5773, 2
        %v5802 = vrot.slane %v5774, 2
        %v5803 = vrot.slane %v5775, 2
        %v5804 = vsel %vm2967, %v5799, %v5803
        %v5805 = vrot.slane %v5776, 2
        %v5806 = vsel %vm2967, %v5800, %v5805
        %v5807 = vrot.slane %v5777, 2
        %v5808 = vsel %vm2967, %v5801, %v5807
        %v5809 = vrot.slane %v5778, 2
        %v5810 = vsel %vm2967, %v5802, %v5809
        %v5821 = vrot.slane %v5741, 1
        %v5822 = vrot.slane %v5743, 1
        %v5825 = vpack.c.bf16 %v5763, %v5759
        %v5826 = vpack.c.bf16 %v5764, %v5760
        %v5827 = vpack.c.bf16 %v5765, %v5761
        %v5828 = vpack.c.bf16 %v5766, %v5762
        %v5829 = vpack.c.bf16 %v5783, %v5783
        %v5830 = vpack.c.bf16 %v5784, %v5784
        %v5831 = vpack.c.bf16 %v5785, %v5785
        %v5832 = vpack.c.bf16 %v5786, %v5786
        %v5833 = vpack.c.bf16 %v5804, %v5799
        %v5834 = vpack.c.bf16 %v5806, %v5800
        %v5835 = vpack.c.bf16 %v5808, %v5801
        %v5836 = vpack.c.bf16 %v5810, %v5802
        %v5837 = vpack.c.bf16 %v5821, %v5821
        %v5838 = vpack.c.bf16 %v5822, %v5822
        %v5839 = vld [vmem:[#allocation28] sm:$0xff]
        %v5840 = vld [vmem:[#allocation28 + $0x8] sm:$0xff]
        %v5841 = vld [vmem:[#allocation28 + $0x10] sm:$0xff]
        %v5842 = vld [vmem:[#allocation28 + $0x18] sm:$0xff]
        %v5843 = vld [vmem:[#allocation28 + $0x20] sm:$0xff]
        %v5844 = vld [vmem:[#allocation28 + $0x28] sm:$0xff]
        %v5845 = vld [vmem:[#allocation28 + $0x30] sm:$0xff]
        %v5846 = vld [vmem:[#allocation28 + $0x38] sm:$0xff]
        %v5847 = vld [vmem:[#allocation28 + $0x40] sm:$0xff]
        %v5848 = vld [vmem:[#allocation28 + $0x48] sm:$0xff]
        %v5849 = vld [vmem:[#allocation28 + $0x50] sm:$0xff]
        %v5850 = vld [vmem:[#allocation28 + $0x58] sm:$0xff]
        %v5851 = vld [vmem:[#allocation28 + $0x60] sm:$0xff]
        %v5852 = vld [vmem:[#allocation28 + $0x68] sm:$0xff]
        %v5853 = vld [vmem:[#allocation28 + $0x70] sm:$0xff]
        %v5854 = vld [vmem:[#allocation28 + $0x78] sm:$0xff]
        %v5855 = vld [vmem:[#allocation28 + $0x80] sm:$0xff]
        %v5856 = vld [vmem:[#allocation28 + $0x88] sm:$0xff]
        %v5857 = vld [vmem:[#allocation28 + $0x90] sm:$0xff]
        %v5858 = vld [vmem:[#allocation28 + $0x98] sm:$0xff]
        %v5859 = vld [vmem:[#allocation28 + $0xa0] sm:$0xff]
        %v5860 = vld [vmem:[#allocation28 + $0xa8] sm:$0xff]
        %v5861 = vld [vmem:[#allocation28 + $0xb0] sm:$0xff]
        %v5862 = vld [vmem:[#allocation28 + $0xb8] sm:$0xff]
        %v5863 = vld [vmem:[#allocation28 + $0xc0] sm:$0xff]
        %v5864 = vld [vmem:[#allocation28 + $0xc8] sm:$0xff]
        %v5865 = vld [vmem:[#allocation28 + $0xd0] sm:$0xff]
        %v5866 = vld [vmem:[#allocation28 + $0xd8] sm:$0xff]
        %v5867 = vld [vmem:[#allocation28 + $0xe0] sm:$0xff]
        %v5868 = vld [vmem:[#allocation28 + $0xe8] sm:$0xff]
        %v5869 = vld [vmem:[#allocation28 + $0xf0] sm:$0xff]
        %v5870 = vld [vmem:[#allocation28 + $0xf8] sm:$0xff]
        %v5871 = vld [vmem:[#allocation28 + $0x100] sm:$0xff]
        %v5872 = vld [vmem:[#allocation28 + $0x108] sm:$0xff]
        %v5873 = vld [vmem:[#allocation28 + $0x110] sm:$0xff]
        %v5874 = vld [vmem:[#allocation28 + $0x118] sm:$0xff]
        %v5875 = vld [vmem:[#allocation28 + $0x120] sm:$0xff]
        %v5876 = vld [vmem:[#allocation28 + $0x128] sm:$0xff]
        %v5877 = vld [vmem:[#allocation28 + $0x130] sm:$0xff]
        %v5878 = vld [vmem:[#allocation28 + $0x138] sm:$0xff]
        %v5879 = vld [vmem:[#allocation28 + $0x140] sm:$0xff]
        %v5880 = vld [vmem:[#allocation28 + $0x148] sm:$0xff]
        %v5881 = vld [vmem:[#allocation28 + $0x150] sm:$0xff]
        %v5882 = vld [vmem:[#allocation28 + $0x158] sm:$0xff]
        %v5883 = vld [vmem:[#allocation28 + $0x160] sm:$0xff]
        %v5884 = vld [vmem:[#allocation28 + $0x168] sm:$0xff]
        %v5885 = vld [vmem:[#allocation28 + $0x170] sm:$0xff]
        %v5886 = vld [vmem:[#allocation28 + $0x178] sm:$0xff]
        %v5887 = vld [vmem:[#allocation28 + $0x180] sm:$0xff]
        %v5888 = vld [vmem:[#allocation28 + $0x188] sm:$0xff]
        %v5889 = vld [vmem:[#allocation28 + $0x190] sm:$0xff]
        %v5890 = vld [vmem:[#allocation28 + $0x198] sm:$0xff]
        %v5891 = vld [vmem:[#allocation28 + $0x1a0] sm:$0xff]
        %v5892 = vld [vmem:[#allocation28 + $0x1a8] sm:$0xff]
        %v5893 = vld [vmem:[#allocation28 + $0x1b0] sm:$0xff]
        %v5894 = vld [vmem:[#allocation28 + $0x1b8] sm:$0xff]
        %v5895 = vld [vmem:[#allocation28 + $0x1c0] sm:$0xff]
        %v5896 = vld [vmem:[#allocation28 + $0x1c8] sm:$0xff]
        %v5897 = vld [vmem:[#allocation28 + $0x1d0] sm:$0xff]
        %v5898 = vld [vmem:[#allocation28 + $0x1d8] sm:$0xff]
        %v5899 = vld [vmem:[#allocation28 + $0x1e0] sm:$0xff]
        %v5900 = vld [vmem:[#allocation28 + $0x1e8] sm:$0xff]
        %v5901 = vld [vmem:[#allocation28 + $0x1f0] sm:$0xff]
        %v5902 = vld [vmem:[#allocation28 + $0x1f8] sm:$0xff]
        %v5903 = vld [vmem:[#allocation28 + $0x200] sm:$0xff]
        %v5904 = vld [vmem:[#allocation28 + $0x208] sm:$0xff]
        %v5905 = vld [vmem:[#allocation28 + $0x210] sm:$0xff]
        %v5906 = vld [vmem:[#allocation28 + $0x218] sm:$0xff]
        %v5907 = vld [vmem:[#allocation28 + $0x220] sm:$0xff]
        %v5908 = vld [vmem:[#allocation28 + $0x228] sm:$0xff]
        %v5909 = vld [vmem:[#allocation28 + $0x230] sm:$0xff]
        %v5910 = vld [vmem:[#allocation28 + $0x238] sm:$0xff]
        %v5911 = vld [vmem:[#allocation28 + $0x240] sm:$0xff]
        %v5912 = vld [vmem:[#allocation28 + $0x248] sm:$0xff]
        %v5913 = vld [vmem:[#allocation28 + $0x250] sm:$0xff]
        %v5914 = vld [vmem:[#allocation28 + $0x258] sm:$0xff]
        %v5915 = vld [vmem:[#allocation28 + $0x260] sm:$0xff]
        %v5916 = vld [vmem:[#allocation28 + $0x268] sm:$0xff]
        %v5917 = vld [vmem:[#allocation28 + $0x270] sm:$0xff]
        %v5918 = vld [vmem:[#allocation28 + $0x278] sm:$0xff]
        %v5919 = vld [vmem:[#allocation28 + $0x280] sm:$0xff]
        %v5920 = vld [vmem:[#allocation28 + $0x288] sm:$0xff]
        %v5921 = vld [vmem:[#allocation28 + $0x290] sm:$0xff]
        %v5922 = vld [vmem:[#allocation28 + $0x298] sm:$0xff]
        %v5923 = vld [vmem:[#allocation28 + $0x2a0] sm:$0xff]
        %v5924 = vld [vmem:[#allocation28 + $0x2a8] sm:$0xff]
        %v5925 = vld [vmem:[#allocation28 + $0x2b0] sm:$0xff]
        %v5926 = vld [vmem:[#allocation28 + $0x2b8] sm:$0xff]
        %v5927 = vld [vmem:[#allocation28 + $0x2c0] sm:$0xff]
        %v5928 = vld [vmem:[#allocation28 + $0x2c8] sm:$0xff]
        %v5929 = vld [vmem:[#allocation28 + $0x2d0] sm:$0xff]
        %v5930 = vld [vmem:[#allocation28 + $0x2d8] sm:$0xff]
        %v5931 = vld [vmem:[#allocation28 + $0x2e0] sm:$0xff]
        %v5932 = vld [vmem:[#allocation28 + $0x2e8] sm:$0xff]
        %v5933 = vld [vmem:[#allocation28 + $0x2f0] sm:$0xff]
        %v5934 = vld [vmem:[#allocation28 + $0x2f8] sm:$0xff]
        %v5935 = vld [vmem:[#allocation28 + $0x300] sm:$0xff]
        %v5936 = vld [vmem:[#allocation28 + $0x308] sm:$0xff]
        %v5937 = vld [vmem:[#allocation28 + $0x310] sm:$0xff]
        %v5938 = vld [vmem:[#allocation28 + $0x318] sm:$0xff]
        %v5939 = vld [vmem:[#allocation28 + $0x320] sm:$0xff]
        %v5940 = vld [vmem:[#allocation28 + $0x328] sm:$0xff]
        %v5941 = vld [vmem:[#allocation28 + $0x330] sm:$0xff]
        %v5942 = vld [vmem:[#allocation28 + $0x338] sm:$0xff]
        %v5943 = vld [vmem:[#allocation28 + $0x340] sm:$0xff]
        %v5944 = vld [vmem:[#allocation28 + $0x348] sm:$0xff]
        %v5945 = vld [vmem:[#allocation28 + $0x350] sm:$0xff]
        %v5946 = vld [vmem:[#allocation28 + $0x358] sm:$0xff]
        %v5947 = vld [vmem:[#allocation28 + $0x360] sm:$0xff]
        %v5948 = vld [vmem:[#allocation28 + $0x368] sm:$0xff]
        %v5949 = vld [vmem:[#allocation28 + $0x370] sm:$0xff]
        %v5950 = vld [vmem:[#allocation28 + $0x378] sm:$0xff]
        %v5951 = vld [vmem:[#allocation28 + $0x380] sm:$0xff]
        %v5952 = vld [vmem:[#allocation28 + $0x388] sm:$0xff]
        %v5953 = vld [vmem:[#allocation28 + $0x390] sm:$0xff]
        %v5954 = vld [vmem:[#allocation28 + $0x398] sm:$0xff]
        %v5955 = vld [vmem:[#allocation28 + $0x3a0] sm:$0xff]
        %v5956 = vld [vmem:[#allocation28 + $0x3a8] sm:$0xff]
        %v5957 = vld [vmem:[#allocation28 + $0x3b0] sm:$0xff]
        %v5958 = vld [vmem:[#allocation28 + $0x3b8] sm:$0xff]
        %v5959 = vld [vmem:[#allocation28 + $0x3c0] sm:$0xff]
        %v5960 = vld [vmem:[#allocation28 + $0x3c8] sm:$0xff]
        %v5961 = vld [vmem:[#allocation28 + $0x3d0] sm:$0xff]
        %v5962 = vld [vmem:[#allocation28 + $0x3d8] sm:$0xff]
        %v5963 = vld [vmem:[#allocation28 + $0x3e0] sm:$0xff]
        %v5964 = vld [vmem:[#allocation28 + $0x3e8] sm:$0xff]
        %v5965 = vld [vmem:[#allocation28 + $0x3f0] sm:$0xff]
        %v5966 = vld [vmem:[#allocation28 + $0x3f8] sm:$0xff]
        %v5967 = vld [vmem:[#allocation28 + $0x400] sm:$0xff]
        %v5968 = vld [vmem:[#allocation28 + $0x408] sm:$0xff]
        %v5969 = vld [vmem:[#allocation28 + $0x410] sm:$0xff]
        %v5970 = vld [vmem:[#allocation28 + $0x418] sm:$0xff]
        %v5971 = vld [vmem:[#allocation28 + $0x420] sm:$0xff]
        %v5972 = vld [vmem:[#allocation28 + $0x428] sm:$0xff]
        %v5973 = vld [vmem:[#allocation28 + $0x430] sm:$0xff]
        %v5974 = vld [vmem:[#allocation28 + $0x438] sm:$0xff]
        %v5975 = vld [vmem:[#allocation28 + $0x440] sm:$0xff]
        %v5976 = vld [vmem:[#allocation28 + $0x448] sm:$0xff]
        %v5977 = vld [vmem:[#allocation28 + $0x450] sm:$0xff]
        %v5978 = vld [vmem:[#allocation28 + $0x458] sm:$0xff]
        %v5979 = vld [vmem:[#allocation28 + $0x460] sm:$0xff]
        %v5980 = vld [vmem:[#allocation28 + $0x468] sm:$0xff]
        %v5981 = vld [vmem:[#allocation28 + $0x470] sm:$0xff]
        %v5982 = vld [vmem:[#allocation28 + $0x478] sm:$0xff]
        %v5983 = vld [vmem:[#allocation28 + $0x480] sm:$0xff]
        %v5984 = vld [vmem:[#allocation28 + $0x488] sm:$0xff]
        %v5985 = vld [vmem:[#allocation28 + $0x490] sm:$0xff]
        %v5986 = vld [vmem:[#allocation28 + $0x498] sm:$0xff]
        %v5987 = vld [vmem:[#allocation28 + $0x4a0] sm:$0xff]
        %v5988 = vld [vmem:[#allocation28 + $0x4a8] sm:$0xff]
        %v5989 = vld [vmem:[#allocation28 + $0x4b0] sm:$0xff]
        %v5990 = vld [vmem:[#allocation28 + $0x4b8] sm:$0xff]
        %v5991 = vld [vmem:[#allocation28 + $0x4c0] sm:$0xff]
        %v5992 = vld [vmem:[#allocation28 + $0x4c8] sm:$0xff]
        %v5993 = vld [vmem:[#allocation28 + $0x4d0] sm:$0xff]
        %v5994 = vld [vmem:[#allocation28 + $0x4d8] sm:$0xff]
        %v5995 = vld [vmem:[#allocation28 + $0x4e0] sm:$0xff]
        %v5996 = vld [vmem:[#allocation28 + $0x4e8] sm:$0xff]
        %v5997 = vld [vmem:[#allocation28 + $0x4f0] sm:$0xff]
        %v5998 = vld [vmem:[#allocation28 + $0x4f8] sm:$0xff]
        %v5999 = vld [vmem:[#allocation28 + $0x500] sm:$0xff]
        %v6000 = vld [vmem:[#allocation28 + $0x508] sm:$0xff]
        %v6001 = vld [vmem:[#allocation28 + $0x510] sm:$0xff]
        %v6002 = vld [vmem:[#allocation28 + $0x518] sm:$0xff]
        %v6003 = vld [vmem:[#allocation28 + $0x520] sm:$0xff]
        %v6004 = vld [vmem:[#allocation28 + $0x528] sm:$0xff]
        %v6005 = vld [vmem:[#allocation28 + $0x530] sm:$0xff]
        %v6006 = vld [vmem:[#allocation28 + $0x538] sm:$0xff]
        %v6007 = vld [vmem:[#allocation28 + $0x540] sm:$0xff]
        %v6008 = vld [vmem:[#allocation28 + $0x548] sm:$0xff]
        %v6009 = vld [vmem:[#allocation28 + $0x550] sm:$0xff]
        %v6010 = vld [vmem:[#allocation28 + $0x558] sm:$0xff]
        %v6011 = vld [vmem:[#allocation28 + $0x560] sm:$0xff]
        %v6012 = vld [vmem:[#allocation28 + $0x568] sm:$0xff]
        %v6013 = vld [vmem:[#allocation28 + $0x570] sm:$0xff]
        %v6014 = vld [vmem:[#allocation28 + $0x578] sm:$0xff]
        %v6015 = vld [vmem:[#allocation28 + $0x580] sm:$0xff]
        %v6016 = vld [vmem:[#allocation28 + $0x588] sm:$0xff]
        %v6017 = vld [vmem:[#allocation28 + $0x590] sm:$0xff]
        %v6018 = vld [vmem:[#allocation28 + $0x598] sm:$0xff]
        %v6019 = vld [vmem:[#allocation28 + $0x5a0] sm:$0xff]
        %v6020 = vld [vmem:[#allocation28 + $0x5a8] sm:$0xff]
        %v6021 = vld [vmem:[#allocation28 + $0x5b0] sm:$0xff]
        %v6022 = vld [vmem:[#allocation28 + $0x5b8] sm:$0xff]
        %v6023 = vld [vmem:[#allocation28 + $0x5c0] sm:$0xff]
        %v6024 = vld [vmem:[#allocation28 + $0x5c8] sm:$0xff]
        %v6025 = vld [vmem:[#allocation28 + $0x5d0] sm:$0xff]
        %v6026 = vld [vmem:[#allocation28 + $0x5d8] sm:$0xff]
        %v6027 = vld [vmem:[#allocation28 + $0x5e0] sm:$0xff]
        %v6028 = vld [vmem:[#allocation28 + $0x5e8] sm:$0xff]
        %v6029 = vld [vmem:[#allocation28 + $0x5f0] sm:$0xff]
        %v6030 = vld [vmem:[#allocation28 + $0x5f8] sm:$0xff]
        %v6031 = vld [vmem:[#allocation28 + $0x600] sm:$0xff]
        %v6032 = vld [vmem:[#allocation28 + $0x608] sm:$0xff]
        %v6033 = vld [vmem:[#allocation28 + $0x610] sm:$0xff]
        %v6034 = vld [vmem:[#allocation28 + $0x618] sm:$0xff]
        %v6035 = vld [vmem:[#allocation28 + $0x620] sm:$0xff]
        %v6036 = vld [vmem:[#allocation28 + $0x628] sm:$0xff]
        %v6037 = vld [vmem:[#allocation28 + $0x630] sm:$0xff]
        %v6038 = vld [vmem:[#allocation28 + $0x638] sm:$0xff]
        %v6039 = vld [vmem:[#allocation28 + $0x640] sm:$0xff]
        %v6040 = vld [vmem:[#allocation28 + $0x648] sm:$0xff]
        %v6041 = vld [vmem:[#allocation28 + $0x650] sm:$0xff]
        %v6042 = vld [vmem:[#allocation28 + $0x658] sm:$0xff]
        %v6043 = vld [vmem:[#allocation28 + $0x660] sm:$0xff]
        %v6044 = vld [vmem:[#allocation28 + $0x668] sm:$0xff]
        %v6045 = vld [vmem:[#allocation28 + $0x670] sm:$0xff]
        %v6046 = vld [vmem:[#allocation28 + $0x678] sm:$0xff]
        %v6047 = vld [vmem:[#allocation28 + $0x680] sm:$0xff]
        %v6048 = vld [vmem:[#allocation28 + $0x688] sm:$0xff]
        %v6049 = vld [vmem:[#allocation28 + $0x690] sm:$0xff]
        %v6050 = vld [vmem:[#allocation28 + $0x698] sm:$0xff]
        %v6051 = vld [vmem:[#allocation28 + $0x6a0] sm:$0xff]
        %v6052 = vld [vmem:[#allocation28 + $0x6a8] sm:$0xff]
        %v6053 = vld [vmem:[#allocation28 + $0x6b0] sm:$0xff]
        %v6054 = vld [vmem:[#allocation28 + $0x6b8] sm:$0xff]
        %v6055 = vld [vmem:[#allocation28 + $0x6c0] sm:$0xff]
        %v6056 = vld [vmem:[#allocation28 + $0x6c8] sm:$0xff]
        %v6057 = vld [vmem:[#allocation28 + $0x6d0] sm:$0xff]
        %v6058 = vld [vmem:[#allocation28 + $0x6d8] sm:$0xff]
        %v6059 = vld [vmem:[#allocation28 + $0x6e0] sm:$0xff]
        %v6060 = vld [vmem:[#allocation28 + $0x6e8] sm:$0xff]
        %v6061 = vld [vmem:[#allocation28 + $0x6f0] sm:$0xff]
        %v6062 = vld [vmem:[#allocation28 + $0x6f8] sm:$0xff]
        %v6063 = vld [vmem:[#allocation28 + $0x700] sm:$0xff]
        %v6064 = vld [vmem:[#allocation28 + $0x708] sm:$0xff]
        %v6065 = vld [vmem:[#allocation28 + $0x710] sm:$0xff]
        %v6066 = vld [vmem:[#allocation28 + $0x718] sm:$0xff]
        %v6067 = vld [vmem:[#allocation28 + $0x720] sm:$0xff]
        %v6068 = vld [vmem:[#allocation28 + $0x728] sm:$0xff]
        %v6069 = vld [vmem:[#allocation28 + $0x730] sm:$0xff]
        %v6070 = vld [vmem:[#allocation28 + $0x738] sm:$0xff]
        %v6071 = vld [vmem:[#allocation28 + $0x740] sm:$0xff]
        %v6072 = vld [vmem:[#allocation28 + $0x748] sm:$0xff]
        %v6073 = vld [vmem:[#allocation28 + $0x750] sm:$0xff]
        %v6074 = vld [vmem:[#allocation28 + $0x758] sm:$0xff]
        %v6075 = vld [vmem:[#allocation28 + $0x760] sm:$0xff]
        %v6076 = vld [vmem:[#allocation28 + $0x768] sm:$0xff]
        %v6077 = vld [vmem:[#allocation28 + $0x770] sm:$0xff]
        %v6078 = vld [vmem:[#allocation28 + $0x778] sm:$0xff]
        %v6079 = vld [vmem:[#allocation28 + $0x780] sm:$0xff]
        %v6080 = vld [vmem:[#allocation28 + $0x788] sm:$0xff]
        %v6081 = vld [vmem:[#allocation28 + $0x790] sm:$0xff]
        %v6082 = vld [vmem:[#allocation28 + $0x798] sm:$0xff]
        %v6083 = vld [vmem:[#allocation28 + $0x7a0] sm:$0xff]
        %v6084 = vld [vmem:[#allocation28 + $0x7a8] sm:$0xff]
        %v6085 = vld [vmem:[#allocation28 + $0x7b0] sm:$0xff]
        %v6086 = vld [vmem:[#allocation28 + $0x7b8] sm:$0xff]
        %v6087 = vld [vmem:[#allocation28 + $0x7c0] sm:$0xff]
        %v6088 = vld [vmem:[#allocation28 + $0x7c8] sm:$0xff]
        %v6089 = vld [vmem:[#allocation28 + $0x7d0] sm:$0xff]
        %v6090 = vld [vmem:[#allocation28 + $0x7d8] sm:$0xff]
        %v6091 = vld [vmem:[#allocation28 + $0x7e0] sm:$0xff]
        %v6092 = vld [vmem:[#allocation28 + $0x7e8] sm:$0xff]
        %v6093 = vld [vmem:[#allocation28 + $0x7f0] sm:$0xff]
        %v6094 = vld [vmem:[#allocation28 + $0x7f8] sm:$0xff]
        %v6095 = vld [vmem:[#allocation28 + $0x800] sm:$0xff]
        %v6096 = vld [vmem:[#allocation28 + $0x808] sm:$0xff]
        %v6097 = vld [vmem:[#allocation28 + $0x810] sm:$0xff]
        %v6098 = vld [vmem:[#allocation28 + $0x818] sm:$0xff]
        %v6099 = vld [vmem:[#allocation28 + $0x820] sm:$0xff]
        %v6100 = vld [vmem:[#allocation28 + $0x828] sm:$0xff]
        %v6101 = vld [vmem:[#allocation28 + $0x830] sm:$0xff]
        %v6102 = vld [vmem:[#allocation28 + $0x838] sm:$0xff]
        %v6103 = vld [vmem:[#allocation28 + $0x840] sm:$0xff]
        %v6104 = vld [vmem:[#allocation28 + $0x848] sm:$0xff]
        %v6105 = vld [vmem:[#allocation28 + $0x850] sm:$0xff]
        %v6106 = vld [vmem:[#allocation28 + $0x858] sm:$0xff]
        %v6107 = vld [vmem:[#allocation28 + $0x860] sm:$0xff]
        %v6108 = vld [vmem:[#allocation28 + $0x868] sm:$0xff]
        %v6109 = vld [vmem:[#allocation28 + $0x870] sm:$0xff]
        %v6110 = vld [vmem:[#allocation28 + $0x878] sm:$0xff]
        %v6111 = vld [vmem:[#allocation28 + $0x880] sm:$0xff]
        %v6112 = vld [vmem:[#allocation28 + $0x888] sm:$0xff]
        %v6113 = vld [vmem:[#allocation28 + $0x890] sm:$0xff]
        %v6114 = vld [vmem:[#allocation28 + $0x898] sm:$0xff]
        %v6115 = vld [vmem:[#allocation28 + $0x8a0] sm:$0xff]
        %v6116 = vld [vmem:[#allocation28 + $0x8a8] sm:$0xff]
        %v6117 = vld [vmem:[#allocation28 + $0x8b0] sm:$0xff]
        %v6118 = vld [vmem:[#allocation28 + $0x8b8] sm:$0xff]
        %v6119 = vld [vmem:[#allocation28 + $0x8c0] sm:$0xff]
        %v6120 = vld [vmem:[#allocation28 + $0x8c8] sm:$0xff]
        %v6121 = vld [vmem:[#allocation28 + $0x8d0] sm:$0xff]
        %v6122 = vld [vmem:[#allocation28 + $0x8d8] sm:$0xff]
        %v6123 = vld [vmem:[#allocation28 + $0x8e0] sm:$0xff]
        %v6124 = vld [vmem:[#allocation28 + $0x8e8] sm:$0xff]
        %v6125 = vld [vmem:[#allocation28 + $0x8f0] sm:$0xff]
        %v6126 = vld [vmem:[#allocation28 + $0x8f8] sm:$0xff]
        %v6127 = vld [vmem:[#allocation28 + $0x900] sm:$0xff]
        %v6128 = vld [vmem:[#allocation28 + $0x908] sm:$0xff]
        %v6129 = vld [vmem:[#allocation28 + $0x910] sm:$0xff]
        %v6130 = vld [vmem:[#allocation28 + $0x918] sm:$0xff]
        %v6131 = vld [vmem:[#allocation28 + $0x920] sm:$0xff]
        %v6132 = vld [vmem:[#allocation28 + $0x928] sm:$0xff]
        %v6133 = vld [vmem:[#allocation28 + $0x930] sm:$0xff]
        %v6134 = vld [vmem:[#allocation28 + $0x938] sm:$0xff]
        %v6135 = vld [vmem:[#allocation28 + $0x940] sm:$0xff]
        %v6136 = vld [vmem:[#allocation28 + $0x948] sm:$0xff]
        %v6137 = vld [vmem:[#allocation28 + $0x950] sm:$0xff]
        %v6138 = vld [vmem:[#allocation28 + $0x958] sm:$0xff]
        %v6139 = vld [vmem:[#allocation28 + $0x960] sm:$0xff]
        %v6140 = vld [vmem:[#allocation28 + $0x968] sm:$0xff]
        %v6141 = vld [vmem:[#allocation28 + $0x970] sm:$0xff]
        %v6142 = vld [vmem:[#allocation28 + $0x978] sm:$0xff]
        %v6143 = vld [vmem:[#allocation28 + $0x980] sm:$0xff]
        %v6144 = vld [vmem:[#allocation28 + $0x988] sm:$0xff]
        %v6145 = vld [vmem:[#allocation28 + $0x990] sm:$0xff]
        %v6146 = vld [vmem:[#allocation28 + $0x998] sm:$0xff]
        %v6147 = vld [vmem:[#allocation28 + $0x9a0] sm:$0xff]
        %v6148 = vld [vmem:[#allocation28 + $0x9a8] sm:$0xff]
        %v6149 = vld [vmem:[#allocation28 + $0x9b0] sm:$0xff]
        %v6150 = vld [vmem:[#allocation28 + $0x9b8] sm:$0xff]
        %v6151 = vld [vmem:[#allocation28 + $0x9c0] sm:$0xff]
        %v6152 = vld [vmem:[#allocation28 + $0x9c8] sm:$0xff]
        %v6153 = vld [vmem:[#allocation28 + $0x9d0] sm:$0xff]
        %v6154 = vld [vmem:[#allocation28 + $0x9d8] sm:$0xff]
        %v6155 = vld [vmem:[#allocation28 + $0x9e0] sm:$0xff]
        %v6156 = vld [vmem:[#allocation28 + $0x9e8] sm:$0xff]
        %v6157 = vld [vmem:[#allocation28 + $0x9f0] sm:$0xff]
        %v6158 = vld [vmem:[#allocation28 + $0x9f8] sm:$0xff]
        %v6159 = vld [vmem:[#allocation28 + $0xa00] sm:$0xff]
        %v6160 = vld [vmem:[#allocation28 + $0xa08] sm:$0xff]
        %v6161 = vld [vmem:[#allocation28 + $0xa10] sm:$0xff]
        %v6162 = vld [vmem:[#allocation28 + $0xa18] sm:$0xff]
        %v6163 = vld [vmem:[#allocation28 + $0xa20] sm:$0xff]
        %v6164 = vld [vmem:[#allocation28 + $0xa28] sm:$0xff]
        %v6165 = vld [vmem:[#allocation28 + $0xa30] sm:$0xff]
        %v6166 = vld [vmem:[#allocation28 + $0xa38] sm:$0xff]
        %v6167 = vld [vmem:[#allocation28 + $0xa40] sm:$0xff]
        %v6168 = vld [vmem:[#allocation28 + $0xa48] sm:$0xff]
        %v6169 = vld [vmem:[#allocation28 + $0xa50] sm:$0xff]
        %v6170 = vld [vmem:[#allocation28 + $0xa58] sm:$0xff]
        %v6171 = vld [vmem:[#allocation28 + $0xa60] sm:$0xff]
        %v6172 = vld [vmem:[#allocation28 + $0xa68] sm:$0xff]
        %v6173 = vld [vmem:[#allocation28 + $0xa70] sm:$0xff]
        %v6174 = vld [vmem:[#allocation28 + $0xa78] sm:$0xff]
        %v6175 = vld [vmem:[#allocation28 + $0xa80] sm:$0xff]
        %v6176 = vld [vmem:[#allocation28 + $0xa88] sm:$0xff]
        %v6177 = vld [vmem:[#allocation28 + $0xa90] sm:$0xff]
        %v6178 = vld [vmem:[#allocation28 + $0xa98] sm:$0xff]
        %v6179 = vld [vmem:[#allocation28 + $0xaa0] sm:$0xff]
        %v6180 = vld [vmem:[#allocation28 + $0xaa8] sm:$0xff]
        %v6181 = vld [vmem:[#allocation28 + $0xab0] sm:$0xff]
        %v6182 = vld [vmem:[#allocation28 + $0xab8] sm:$0xff]
        %v6183 = vld [vmem:[#allocation28 + $0xac0] sm:$0xff]
        %v6184 = vld [vmem:[#allocation28 + $0xac8] sm:$0xff]
        %v6185 = vld [vmem:[#allocation28 + $0xad0] sm:$0xff]
        %v6186 = vld [vmem:[#allocation28 + $0xad8] sm:$0xff]
        %v6187 = vld [vmem:[#allocation28 + $0xae0] sm:$0xff]
        %v6188 = vld [vmem:[#allocation28 + $0xae8] sm:$0xff]
        %v6189 = vld [vmem:[#allocation28 + $0xaf0] sm:$0xff]
        %v6190 = vld [vmem:[#allocation28 + $0xaf8] sm:$0xff]
        %v6191 = vld [vmem:[#allocation28 + $0xb00] sm:$0xff]
        %v6192 = vld [vmem:[#allocation28 + $0xb08] sm:$0xff]
        %v6193 = vld [vmem:[#allocation28 + $0xb10] sm:$0xff]
        %v6194 = vld [vmem:[#allocation28 + $0xb18] sm:$0xff]
        %v6195 = vld [vmem:[#allocation28 + $0xb20] sm:$0xff]
        %v6196 = vld [vmem:[#allocation28 + $0xb28] sm:$0xff]
        %v6197 = vld [vmem:[#allocation28 + $0xb30] sm:$0xff]
        %v6198 = vld [vmem:[#allocation28 + $0xb38] sm:$0xff]
        %v6199 = vld [vmem:[#allocation28 + $0xb40] sm:$0xff]
        %v6200 = vld [vmem:[#allocation28 + $0xb48] sm:$0xff]
        %v6201 = vld [vmem:[#allocation28 + $0xb50] sm:$0xff]
        %v6202 = vld [vmem:[#allocation28 + $0xb58] sm:$0xff]
        %v6203 = vld [vmem:[#allocation28 + $0xb60] sm:$0xff]
        %v6204 = vld [vmem:[#allocation28 + $0xb68] sm:$0xff]
        %v6205 = vld [vmem:[#allocation28 + $0xb70] sm:$0xff]
        %v6206 = vld [vmem:[#allocation28 + $0xb78] sm:$0xff]
        %v6207 = vld [vmem:[#allocation28 + $0xb80] sm:$0xff]
        %v6208 = vld [vmem:[#allocation28 + $0xb88] sm:$0xff]
        %v6209 = vld [vmem:[#allocation28 + $0xb90] sm:$0xff]
        %v6210 = vld [vmem:[#allocation28 + $0xb98] sm:$0xff]
        %v6211 = vld [vmem:[#allocation28 + $0xba0] sm:$0xff]
        %v6212 = vld [vmem:[#allocation28 + $0xba8] sm:$0xff]
        %v6213 = vld [vmem:[#allocation28 + $0xbb0] sm:$0xff]
        %v6214 = vld [vmem:[#allocation28 + $0xbb8] sm:$0xff]
        %v6215 = vld [vmem:[#allocation28 + $0xbc0] sm:$0xff]
        %v6216 = vld [vmem:[#allocation28 + $0xbc8] sm:$0xff]
        %v6217 = vld [vmem:[#allocation28 + $0xbd0] sm:$0xff]
        %v6218 = vld [vmem:[#allocation28 + $0xbd8] sm:$0xff]
        %v6219 = vld [vmem:[#allocation28 + $0xbe0] sm:$0xff]
        %v6220 = vld [vmem:[#allocation28 + $0xbe8] sm:$0xff]
        %v6221 = vld [vmem:[#allocation28 + $0xbf0] sm:$0xff]
        %v6222 = vld [vmem:[#allocation28 + $0xbf8] sm:$0xff]
        %v6223 = vld [vmem:[#allocation28 + $0xc00] sm:$0xff]
        %v6224 = vld [vmem:[#allocation28 + $0xc08] sm:$0xff]
        %v6225 = vld [vmem:[#allocation28 + $0xc10] sm:$0xff]
        %v6226 = vld [vmem:[#allocation28 + $0xc18] sm:$0xff]
        %v6227 = vld [vmem:[#allocation28 + $0xc20] sm:$0xff]
        %v6228 = vld [vmem:[#allocation28 + $0xc28] sm:$0xff]
        %v6229 = vld [vmem:[#allocation28 + $0xc30] sm:$0xff]
        %v6230 = vld [vmem:[#allocation28 + $0xc38] sm:$0xff]
        %v6231 = vld [vmem:[#allocation28 + $0xc40] sm:$0xff]
        %v6232 = vld [vmem:[#allocation28 + $0xc48] sm:$0xff]
        %v6233 = vld [vmem:[#allocation28 + $0xc50] sm:$0xff]
        %v6234 = vld [vmem:[#allocation28 + $0xc58] sm:$0xff]
        %v6235 = vld [vmem:[#allocation28 + $0xc60] sm:$0xff]
        %v6236 = vld [vmem:[#allocation28 + $0xc68] sm:$0xff]
        %v6237 = vld [vmem:[#allocation28 + $0xc70] sm:$0xff]
        %v6238 = vld [vmem:[#allocation28 + $0xc78] sm:$0xff]
        %v6239 = vld [vmem:[#allocation28 + $0xc80] sm:$0xff]
        %v6240 = vld [vmem:[#allocation28 + $0xc88] sm:$0xff]
        %v6241 = vld [vmem:[#allocation28 + $0xc90] sm:$0xff]
        %v6242 = vld [vmem:[#allocation28 + $0xc98] sm:$0xff]
        %v6243 = vld [vmem:[#allocation28 + $0xca0] sm:$0xff]
        %v6244 = vld [vmem:[#allocation28 + $0xca8] sm:$0xff]
        %v6245 = vld [vmem:[#allocation28 + $0xcb0] sm:$0xff]
        %v6246 = vld [vmem:[#allocation28 + $0xcb8] sm:$0xff]
        %v6247 = vld [vmem:[#allocation28 + $0xcc0] sm:$0xff]
        %v6248 = vld [vmem:[#allocation28 + $0xcc8] sm:$0xff]
        %v6249 = vld [vmem:[#allocation28 + $0xcd0] sm:$0xff]
        %v6250 = vld [vmem:[#allocation28 + $0xcd8] sm:$0xff]
        %v6251 = vld [vmem:[#allocation28 + $0xce0] sm:$0xff]
        %v6252 = vld [vmem:[#allocation28 + $0xce8] sm:$0xff]
        %v6253 = vld [vmem:[#allocation28 + $0xcf0] sm:$0xff]
        %v6254 = vld [vmem:[#allocation28 + $0xcf8] sm:$0xff]
        %v6255 = vld [vmem:[#allocation28 + $0xd00] sm:$0xff]
        %v6256 = vld [vmem:[#allocation28 + $0xd08] sm:$0xff]
        %v6257 = vld [vmem:[#allocation28 + $0xd10] sm:$0xff]
        %v6258 = vld [vmem:[#allocation28 + $0xd18] sm:$0xff]
        %v6259 = vld [vmem:[#allocation28 + $0xd20] sm:$0xff]
        %v6260 = vld [vmem:[#allocation28 + $0xd28] sm:$0xff]
        %v6261 = vld [vmem:[#allocation28 + $0xd30] sm:$0xff]
        %v6262 = vld [vmem:[#allocation28 + $0xd38] sm:$0xff]
        %v6263 = vld [vmem:[#allocation28 + $0xd40] sm:$0xff]
        %v6264 = vld [vmem:[#allocation28 + $0xd48] sm:$0xff]
        %v6265 = vld [vmem:[#allocation28 + $0xd50] sm:$0xff]
        %v6266 = vld [vmem:[#allocation28 + $0xd58] sm:$0xff]
        %v6267 = vld [vmem:[#allocation28 + $0xd60] sm:$0xff]
        %v6268 = vld [vmem:[#allocation28 + $0xd68] sm:$0xff]
        %v6269 = vld [vmem:[#allocation28 + $0xd70] sm:$0xff]
        %v6270 = vld [vmem:[#allocation28 + $0xd78] sm:$0xff]
        %v6271 = vld [vmem:[#allocation28 + $0xd80] sm:$0xff]
        %v6272 = vld [vmem:[#allocation28 + $0xd88] sm:$0xff]
        %v6273 = vld [vmem:[#allocation28 + $0xd90] sm:$0xff]
        %v6274 = vld [vmem:[#allocation28 + $0xd98] sm:$0xff]
        %v6275 = vld [vmem:[#allocation28 + $0xda0] sm:$0xff]
        %v6276 = vld [vmem:[#allocation28 + $0xda8] sm:$0xff]
        %v6277 = vld [vmem:[#allocation28 + $0xdb0] sm:$0xff]
        %v6278 = vld [vmem:[#allocation28 + $0xdb8] sm:$0xff]
        %v6279 = vld [vmem:[#allocation28 + $0xdc0] sm:$0xff]
        %v6280 = vld [vmem:[#allocation28 + $0xdc8] sm:$0xff]
        %v6281 = vld [vmem:[#allocation28 + $0xdd0] sm:$0xff]
        %v6282 = vld [vmem:[#allocation28 + $0xdd8] sm:$0xff]
        %v6283 = vld [vmem:[#allocation28 + $0xde0] sm:$0xff]
        %v6284 = vld [vmem:[#allocation28 + $0xde8] sm:$0xff]
        %v6285 = vld [vmem:[#allocation28 + $0xdf0] sm:$0xff]
        %v6286 = vld [vmem:[#allocation28 + $0xdf8] sm:$0xff]
        %v6287 = vld [vmem:[%s20] sm:$0xf]
        %v6289 = vlaneseq
        %v6290 = vshrl.u32 %v6289, 7
        %v6291 = vsub.s32 0, %v6290
        %v6292 = vrot.slane %v6287, %v6291
        %v6293 = vlaneseq
        %v6294 = vshrl.u32 %v6293, 7
        %v6295 = vsub.s32 1, %v6294
        %v6296 = vrot.slane %v6287, %v6295
        %v6297 = vlaneseq
        %v6298 = vshrl.u32 %v6297, 7
        %v6299 = vsub.s32 2, %v6298
        %v6300 = vrot.slane %v6287, %v6299
        %v6301 = vlaneseq
        %v6302 = vshrl.u32 %v6301, 7
        %v6303 = vsub.s32 3, %v6302
        %v6304 = vrot.slane %v6287, %v6303
        %v6310 = vshrl.u32 %v5825, 16
        %v6312 = vrot.slane %v6310, 3
        %v6313 = vshll.u32 %v5825, 16
        %v6315 = vrot.slane %v6313, 4
        %v6316 = vor.u32 %v6312, %v6315
        %v6318 = vshrl.u32 %v5826, 16
        %v6320 = vrot.slane %v6318, 3
        %v6321 = vshll.u32 %v5826, 16
        %v6323 = vrot.slane %v6321, 4
        %v6324 = vor.u32 %v6320, %v6323
        %v6326 = vshrl.u32 %v5827, 16
        %v6328 = vrot.slane %v6326, 3
        %v6329 = vshll.u32 %v5827, 16
        %v6331 = vrot.slane %v6329, 4
        %v6332 = vor.u32 %v6328, %v6331
        %v6334 = vshrl.u32 %v5828, 16
        %v6336 = vrot.slane %v6334, 3
        %v6337 = vshll.u32 %v5828, 16
        %v6339 = vrot.slane %v6337, 4
        %v6340 = vor.u32 %v6336, %v6339
        %v6342 = vshrl.u32 %v5829, 16
        %v6344 = vrot.slane %v6342, 3
        %v6345 = vshll.u32 %v5829, 16
        %v6347 = vrot.slane %v6345, 4
        %v6348 = vor.u32 %v6344, %v6347
        %v6350 = vshrl.u32 %v5830, 16
        %v6352 = vrot.slane %v6350, 3
        %v6353 = vshll.u32 %v5830, 16
        %v6355 = vrot.slane %v6353, 4
        %v6356 = vor.u32 %v6352, %v6355
        %v6358 = vshrl.u32 %v5831, 16
        %v6360 = vrot.slane %v6358, 3
        %v6361 = vshll.u32 %v5831, 16
        %v6363 = vrot.slane %v6361, 4
        %v6364 = vor.u32 %v6360, %v6363
        %v6366 = vshrl.u32 %v5832, 16
        %v6368 = vrot.slane %v6366, 3
        %v6369 = vshll.u32 %v5832, 16
        %v6371 = vrot.slane %v6369, 4
        %v6372 = vor.u32 %v6368, %v6371
        %v6374 = vshrl.u32 %v5833, 16
        %v6376 = vrot.slane %v6374, 3
        %v6377 = vshll.u32 %v5833, 16
        %v6379 = vrot.slane %v6377, 4
        %v6380 = vor.u32 %v6376, %v6379
        %v6382 = vshrl.u32 %v5834, 16
        %v6384 = vrot.slane %v6382, 3
        %v6385 = vshll.u32 %v5834, 16
        %v6387 = vrot.slane %v6385, 4
        %v6388 = vor.u32 %v6384, %v6387
        %v6390 = vshrl.u32 %v5835, 16
        %v6392 = vrot.slane %v6390, 3
        %v6393 = vshll.u32 %v5835, 16
        %v6395 = vrot.slane %v6393, 4
        %v6396 = vor.u32 %v6392, %v6395
        %v6398 = vshrl.u32 %v5836, 16
        %v6400 = vrot.slane %v6398, 3
        %v6401 = vshll.u32 %v5836, 16
        %v6403 = vrot.slane %v6401, 4
        %v6404 = vor.u32 %v6400, %v6403
        %v6406 = vshrl.u32 %v5837, 16
        %v6408 = vrot.slane %v6406, 3
        %v6409 = vshll.u32 %v5837, 16
        %v6411 = vrot.slane %v6409, 4
        %v6412 = vor.u32 %v6408, %v6411
        %v6414 = vshrl.u32 %v5838, 16
        %v6416 = vrot.slane %v6414, 3
        %v6417 = vshll.u32 %v5838, 16
        %v6419 = vrot.slane %v6417, 4
        %v6420 = vor.u32 %v6416, %v6419
        %v6883 = vunpack.c.l.b16 %v5839
        %v6884 = vunpack.c.h.b16 %v5839
        %v6885 = vunpack.c.l.b16 %v5840
        %v6886 = vunpack.c.h.b16 %v5840
        %v6887 = vunpack.c.l.b16 %v5841
        %v6888 = vunpack.c.h.b16 %v5841
        %v6889 = vunpack.c.l.b16 %v5842
        %v6890 = vunpack.c.h.b16 %v5842
        %v6891 = vunpack.c.l.b16 %v5843
        %v6892 = vunpack.c.h.b16 %v5843
        %v6893 = vunpack.c.l.b16 %v5844
        %v6894 = vunpack.c.h.b16 %v5844
        %v6895 = vunpack.c.l.b16 %v5845
        %v6896 = vunpack.c.h.b16 %v5845
        %v6897 = vunpack.c.l.b16 %v5846
        %v6898 = vunpack.c.h.b16 %v5846
        %v6899 = vunpack.c.l.b16 %v5847
        %v6900 = vunpack.c.h.b16 %v5847
        %v6901 = vunpack.c.l.b16 %v5848
        %v6902 = vunpack.c.h.b16 %v5848
        %v6903 = vunpack.c.l.b16 %v5849
        %v6904 = vunpack.c.h.b16 %v5849
        %v6905 = vunpack.c.l.b16 %v5850
        %v6906 = vunpack.c.h.b16 %v5850
        %v6907 = vunpack.c.l.b16 %v5851
        %v6908 = vunpack.c.h.b16 %v5851
        %v6909 = vunpack.c.l.b16 %v5852
        %v6910 = vunpack.c.h.b16 %v5852
        %v6911 = vunpack.c.l.b16 %v5853
        %v6912 = vunpack.c.h.b16 %v5853
        %v6913 = vunpack.c.l.b16 %v5854
        %v6914 = vunpack.c.h.b16 %v5854
        %v6915 = vunpack.c.l.b16 %v5855
        %v6916 = vunpack.c.h.b16 %v5855
        %v6917 = vunpack.c.l.b16 %v5856
        %v6918 = vunpack.c.h.b16 %v5856
        %v6919 = vunpack.c.l.b16 %v5857
        %v6920 = vunpack.c.h.b16 %v5857
        %v6921 = vunpack.c.l.b16 %v5858
        %v6922 = vunpack.c.h.b16 %v5858
        %v6923 = vunpack.c.l.b16 %v5859
        %v6924 = vunpack.c.h.b16 %v5859
        %v6925 = vunpack.c.l.b16 %v5860
        %v6926 = vunpack.c.h.b16 %v5860
        %v6927 = vunpack.c.l.b16 %v5861
        %v6928 = vunpack.c.h.b16 %v5861
        %v6929 = vunpack.c.l.b16 %v5862
        %v6930 = vunpack.c.h.b16 %v5862
        %v6931 = vunpack.c.l.b16 %v5863
        %v6932 = vunpack.c.h.b16 %v5863
        %v6933 = vunpack.c.l.b16 %v5864
        %v6934 = vunpack.c.h.b16 %v5864
        %v6935 = vunpack.c.l.b16 %v5865
        %v6936 = vunpack.c.h.b16 %v5865
        %v6937 = vunpack.c.l.b16 %v5866
        %v6938 = vunpack.c.h.b16 %v5866
        %v6939 = vunpack.c.l.b16 %v5867
        %v6940 = vunpack.c.h.b16 %v5867
        %v6941 = vunpack.c.l.b16 %v5868
        %v6942 = vunpack.c.h.b16 %v5868
        %v6943 = vunpack.c.l.b16 %v5869
        %v6944 = vunpack.c.h.b16 %v5869
        %v6945 = vunpack.c.l.b16 %v5870
        %v6946 = vunpack.c.h.b16 %v5870
        %v6947 = vunpack.c.l.b16 %v5871
        %v6948 = vunpack.c.h.b16 %v5871
        %v6949 = vunpack.c.l.b16 %v5872
        %v6950 = vunpack.c.h.b16 %v5872
        %v6951 = vunpack.c.l.b16 %v5873
        %v6952 = vunpack.c.h.b16 %v5873
        %v6953 = vunpack.c.l.b16 %v5874
        %v6954 = vunpack.c.h.b16 %v5874
        %v6955 = vunpack.c.l.b16 %v5875
        %v6956 = vunpack.c.h.b16 %v5875
        %v6957 = vunpack.c.l.b16 %v5876
        %v6958 = vunpack.c.h.b16 %v5876
        %v6959 = vunpack.c.l.b16 %v5877
        %v6960 = vunpack.c.h.b16 %v5877
        %v6961 = vunpack.c.l.b16 %v5878
        %v6962 = vunpack.c.h.b16 %v5878
        %v6963 = vunpack.c.l.b16 %v5879
        %v6964 = vunpack.c.h.b16 %v5879
        %v6965 = vunpack.c.l.b16 %v5880
        %v6966 = vunpack.c.h.b16 %v5880
        %v6967 = vunpack.c.l.b16 %v5881
        %v6968 = vunpack.c.h.b16 %v5881
        %v6969 = vunpack.c.l.b16 %v5882
        %v6970 = vunpack.c.h.b16 %v5882
        %v6971 = vunpack.c.l.b16 %v5883
        %v6972 = vunpack.c.h.b16 %v5883
        %v6973 = vunpack.c.l.b16 %v5884
        %v6974 = vunpack.c.h.b16 %v5884
        %v6975 = vunpack.c.l.b16 %v5885
        %v6976 = vunpack.c.h.b16 %v5885
        %v6977 = vunpack.c.l.b16 %v5886
        %v6978 = vunpack.c.h.b16 %v5886
        %v6979 = vunpack.c.l.b16 %v5887
        %v6980 = vunpack.c.h.b16 %v5887
        %v6981 = vunpack.c.l.b16 %v5888
        %v6982 = vunpack.c.h.b16 %v5888
        %v6983 = vunpack.c.l.b16 %v5889
        %v6984 = vunpack.c.h.b16 %v5889
        %v6985 = vunpack.c.l.b16 %v5890
        %v6986 = vunpack.c.h.b16 %v5890
        %v6987 = vunpack.c.l.b16 %v5891
        %v6988 = vunpack.c.h.b16 %v5891
        %v6989 = vunpack.c.l.b16 %v5892
        %v6990 = vunpack.c.h.b16 %v5892
        %v6991 = vunpack.c.l.b16 %v5893
        %v6992 = vunpack.c.h.b16 %v5893
        %v6993 = vunpack.c.l.b16 %v5894
        %v6994 = vunpack.c.h.b16 %v5894
        %v6995 = vunpack.c.l.b16 %v5895
        %v6996 = vunpack.c.h.b16 %v5895
        %v6997 = vunpack.c.l.b16 %v5896
        %v6998 = vunpack.c.h.b16 %v5896
        %v6999 = vunpack.c.l.b16 %v5897
        %v7000 = vunpack.c.h.b16 %v5897
        %v7001 = vunpack.c.l.b16 %v5898
        %v7002 = vunpack.c.h.b16 %v5898
        %v7003 = vunpack.c.l.b16 %v5899
        %v7004 = vunpack.c.h.b16 %v5899
        %v7005 = vunpack.c.l.b16 %v5900
        %v7006 = vunpack.c.h.b16 %v5900
        %v7007 = vunpack.c.l.b16 %v5901
        %v7008 = vunpack.c.h.b16 %v5901
        %v7009 = vunpack.c.l.b16 %v5902
        %v7010 = vunpack.c.h.b16 %v5902
        %v7011 = vunpack.c.l.b16 %v5903
        %v7012 = vunpack.c.h.b16 %v5903
        %v7013 = vunpack.c.l.b16 %v5904
        %v7014 = vunpack.c.h.b16 %v5904
        %v7015 = vunpack.c.l.b16 %v5905
        %v7016 = vunpack.c.h.b16 %v5905
        %v7017 = vunpack.c.l.b16 %v5906
        %v7018 = vunpack.c.h.b16 %v5906
        %v7019 = vunpack.c.l.b16 %v5907
        %v7020 = vunpack.c.h.b16 %v5907
        %v7021 = vunpack.c.l.b16 %v5908
        %v7022 = vunpack.c.h.b16 %v5908
        %v7023 = vunpack.c.l.b16 %v5909
        %v7024 = vunpack.c.h.b16 %v5909
        %v7025 = vunpack.c.l.b16 %v5910
        %v7026 = vunpack.c.h.b16 %v5910
        %v7027 = vunpack.c.l.b16 %v5911
        %v7028 = vunpack.c.h.b16 %v5911
        %v7029 = vunpack.c.l.b16 %v5912
        %v7030 = vunpack.c.h.b16 %v5912
        %v7031 = vunpack.c.l.b16 %v5913
        %v7032 = vunpack.c.h.b16 %v5913
        %v7033 = vunpack.c.l.b16 %v5914
        %v7034 = vunpack.c.h.b16 %v5914
        %v7035 = vunpack.c.l.b16 %v5915
        %v7036 = vunpack.c.h.b16 %v5915
        %v7037 = vunpack.c.l.b16 %v5916
        %v7038 = vunpack.c.h.b16 %v5916
        %v7039 = vunpack.c.l.b16 %v5917
        %v7040 = vunpack.c.h.b16 %v5917
        %v7041 = vunpack.c.l.b16 %v5918
        %v7042 = vunpack.c.h.b16 %v5918
        %v7043 = vunpack.c.l.b16 %v5919
        %v7044 = vunpack.c.h.b16 %v5919
        %v7045 = vunpack.c.l.b16 %v5920
        %v7046 = vunpack.c.h.b16 %v5920
        %v7047 = vunpack.c.l.b16 %v5921
        %v7048 = vunpack.c.h.b16 %v5921
        %v7049 = vunpack.c.l.b16 %v5922
        %v7050 = vunpack.c.h.b16 %v5922
        %v7051 = vunpack.c.l.b16 %v5923
        %v7052 = vunpack.c.h.b16 %v5923
        %v7053 = vunpack.c.l.b16 %v5924
        %v7054 = vunpack.c.h.b16 %v5924
        %v7055 = vunpack.c.l.b16 %v5925
        %v7056 = vunpack.c.h.b16 %v5925
        %v7057 = vunpack.c.l.b16 %v5926
        %v7058 = vunpack.c.h.b16 %v5926
        %v7059 = vunpack.c.l.b16 %v5927
        %v7060 = vunpack.c.h.b16 %v5927
        %v7061 = vunpack.c.l.b16 %v5928
        %v7062 = vunpack.c.h.b16 %v5928
        %v7063 = vunpack.c.l.b16 %v5929
        %v7064 = vunpack.c.h.b16 %v5929
        %v7065 = vunpack.c.l.b16 %v5930
        %v7066 = vunpack.c.h.b16 %v5930
        %v7067 = vunpack.c.l.b16 %v5931
        %v7068 = vunpack.c.h.b16 %v5931
        %v7069 = vunpack.c.l.b16 %v5932
        %v7070 = vunpack.c.h.b16 %v5932
        %v7071 = vunpack.c.l.b16 %v5933
        %v7072 = vunpack.c.h.b16 %v5933
        %v7073 = vunpack.c.l.b16 %v5934
        %v7074 = vunpack.c.h.b16 %v5934
        %v7075 = vunpack.c.l.b16 %v5935
        %v7076 = vunpack.c.h.b16 %v5935
        %v7077 = vunpack.c.l.b16 %v5936
        %v7078 = vunpack.c.h.b16 %v5936
        %v7079 = vunpack.c.l.b16 %v5937
        %v7080 = vunpack.c.h.b16 %v5937
        %v7081 = vunpack.c.l.b16 %v5938
        %v7082 = vunpack.c.h.b16 %v5938
        %v7083 = vunpack.c.l.b16 %v5939
        %v7084 = vunpack.c.h.b16 %v5939
        %v7085 = vunpack.c.l.b16 %v5940
        %v7086 = vunpack.c.h.b16 %v5940
        %v7087 = vunpack.c.l.b16 %v5941
        %v7088 = vunpack.c.h.b16 %v5941
        %v7089 = vunpack.c.l.b16 %v5942
        %v7090 = vunpack.c.h.b16 %v5942
        %v7091 = vunpack.c.l.b16 %v5943
        %v7092 = vunpack.c.h.b16 %v5943
        %v7093 = vunpack.c.l.b16 %v5944
        %v7094 = vunpack.c.h.b16 %v5944
        %v7095 = vunpack.c.l.b16 %v5945
        %v7096 = vunpack.c.h.b16 %v5945
        %v7097 = vunpack.c.l.b16 %v5946
        %v7098 = vunpack.c.h.b16 %v5946
        %v7099 = vunpack.c.l.b16 %v5947
        %v7100 = vunpack.c.h.b16 %v5947
        %v7101 = vunpack.c.l.b16 %v5948
        %v7102 = vunpack.c.h.b16 %v5948
        %v7103 = vunpack.c.l.b16 %v5949
        %v7104 = vunpack.c.h.b16 %v5949
        %v7105 = vunpack.c.l.b16 %v5950
        %v7106 = vunpack.c.h.b16 %v5950
        %v7107 = vunpack.c.l.b16 %v5951
        %v7108 = vunpack.c.h.b16 %v5951
        %v7109 = vunpack.c.l.b16 %v5952
        %v7110 = vunpack.c.h.b16 %v5952
        %v7111 = vunpack.c.l.b16 %v5953
        %v7112 = vunpack.c.h.b16 %v5953
        %v7113 = vunpack.c.l.b16 %v5954
        %v7114 = vunpack.c.h.b16 %v5954
        %v7115 = vunpack.c.l.b16 %v5955
        %v7116 = vunpack.c.h.b16 %v5955
        %v7117 = vunpack.c.l.b16 %v5956
        %v7118 = vunpack.c.h.b16 %v5956
        %v7119 = vunpack.c.l.b16 %v5957
        %v7120 = vunpack.c.h.b16 %v5957
        %v7121 = vunpack.c.l.b16 %v5958
        %v7122 = vunpack.c.h.b16 %v5958
        %v7123 = vunpack.c.l.b16 %v5959
        %v7124 = vunpack.c.h.b16 %v5959
        %v7125 = vunpack.c.l.b16 %v5960
        %v7126 = vunpack.c.h.b16 %v5960
        %v7127 = vunpack.c.l.b16 %v5961
        %v7128 = vunpack.c.h.b16 %v5961
        %v7129 = vunpack.c.l.b16 %v5962
        %v7130 = vunpack.c.h.b16 %v5962
        %v7131 = vunpack.c.l.b16 %v5963
        %v7132 = vunpack.c.h.b16 %v5963
        %v7133 = vunpack.c.l.b16 %v5964
        %v7134 = vunpack.c.h.b16 %v5964
        %v7135 = vunpack.c.l.b16 %v5965
        %v7136 = vunpack.c.h.b16 %v5965
        %v7137 = vunpack.c.l.b16 %v5966
        %v7138 = vunpack.c.h.b16 %v5966
        %v7139 = vunpack.c.l.b16 %v5967
        %v7140 = vunpack.c.h.b16 %v5967
        %v7141 = vunpack.c.l.b16 %v5968
        %v7142 = vunpack.c.h.b16 %v5968
        %v7143 = vunpack.c.l.b16 %v5969
        %v7144 = vunpack.c.h.b16 %v5969
        %v7145 = vunpack.c.l.b16 %v5970
        %v7146 = vunpack.c.h.b16 %v5970
        %v7147 = vunpack.c.l.b16 %v5971
        %v7148 = vunpack.c.h.b16 %v5971
        %v7149 = vunpack.c.l.b16 %v5972
        %v7150 = vunpack.c.h.b16 %v5972
        %v7151 = vunpack.c.l.b16 %v5973
        %v7152 = vunpack.c.h.b16 %v5973
        %v7153 = vunpack.c.l.b16 %v5974
        %v7154 = vunpack.c.h.b16 %v5974
        %v7155 = vunpack.c.l.b16 %v5975
        %v7156 = vunpack.c.h.b16 %v5975
        %v7157 = vunpack.c.l.b16 %v5976
        %v7158 = vunpack.c.h.b16 %v5976
        %v7159 = vunpack.c.l.b16 %v5977
        %v7160 = vunpack.c.h.b16 %v5977
        %v7161 = vunpack.c.l.b16 %v5978
        %v7162 = vunpack.c.h.b16 %v5978
        %v7163 = vunpack.c.l.b16 %v5979
        %v7164 = vunpack.c.h.b16 %v5979
        %v7165 = vunpack.c.l.b16 %v5980
        %v7166 = vunpack.c.h.b16 %v5980
        %v7167 = vunpack.c.l.b16 %v5981
        %v7168 = vunpack.c.h.b16 %v5981
        %v7169 = vunpack.c.l.b16 %v5982
        %v7170 = vunpack.c.h.b16 %v5982
        %v7171 = vunpack.c.l.b16 %v5983
        %v7172 = vunpack.c.h.b16 %v5983
        %v7173 = vunpack.c.l.b16 %v5984
        %v7174 = vunpack.c.h.b16 %v5984
        %v7175 = vunpack.c.l.b16 %v5985
        %v7176 = vunpack.c.h.b16 %v5985
        %v7177 = vunpack.c.l.b16 %v5986
        %v7178 = vunpack.c.h.b16 %v5986
        %v7179 = vunpack.c.l.b16 %v5987
        %v7180 = vunpack.c.h.b16 %v5987
        %v7181 = vunpack.c.l.b16 %v5988
        %v7182 = vunpack.c.h.b16 %v5988
        %v7183 = vunpack.c.l.b16 %v5989
        %v7184 = vunpack.c.h.b16 %v5989
        %v7185 = vunpack.c.l.b16 %v5990
        %v7186 = vunpack.c.h.b16 %v5990
        %v7187 = vunpack.c.l.b16 %v5991
        %v7188 = vunpack.c.h.b16 %v5991
        %v7189 = vunpack.c.l.b16 %v5992
        %v7190 = vunpack.c.h.b16 %v5992
        %v7191 = vunpack.c.l.b16 %v5993
        %v7192 = vunpack.c.h.b16 %v5993
        %v7193 = vunpack.c.l.b16 %v5994
        %v7194 = vunpack.c.h.b16 %v5994
        %v7195 = vunpack.c.l.b16 %v5995
        %v7196 = vunpack.c.h.b16 %v5995
        %v7197 = vunpack.c.l.b16 %v5996
        %v7198 = vunpack.c.h.b16 %v5996
        %v7199 = vunpack.c.l.b16 %v5997
        %v7200 = vunpack.c.h.b16 %v5997
        %v7201 = vunpack.c.l.b16 %v5998
        %v7202 = vunpack.c.h.b16 %v5998
        %v7203 = vunpack.c.l.b16 %v5999
        %v7204 = vunpack.c.h.b16 %v5999
        %v7205 = vunpack.c.l.b16 %v6000
        %v7206 = vunpack.c.h.b16 %v6000
        %v7207 = vunpack.c.l.b16 %v6001
        %v7208 = vunpack.c.h.b16 %v6001
        %v7209 = vunpack.c.l.b16 %v6002
        %v7210 = vunpack.c.h.b16 %v6002
        %v7211 = vunpack.c.l.b16 %v6003
        %v7212 = vunpack.c.h.b16 %v6003
        %v7213 = vunpack.c.l.b16 %v6004
        %v7214 = vunpack.c.h.b16 %v6004
        %v7215 = vunpack.c.l.b16 %v6005
        %v7216 = vunpack.c.h.b16 %v6005
        %v7217 = vunpack.c.l.b16 %v6006
        %v7218 = vunpack.c.h.b16 %v6006
        %v7219 = vunpack.c.l.b16 %v6007
        %v7220 = vunpack.c.h.b16 %v6007
        %v7221 = vunpack.c.l.b16 %v6008
        %v7222 = vunpack.c.h.b16 %v6008
        %v7223 = vunpack.c.l.b16 %v6009
        %v7224 = vunpack.c.h.b16 %v6009
        %v7225 = vunpack.c.l.b16 %v6010
        %v7226 = vunpack.c.h.b16 %v6010
        %v7227 = vunpack.c.l.b16 %v6011
        %v7228 = vunpack.c.h.b16 %v6011
        %v7229 = vunpack.c.l.b16 %v6012
        %v7230 = vunpack.c.h.b16 %v6012
        %v7231 = vunpack.c.l.b16 %v6013
        %v7232 = vunpack.c.h.b16 %v6013
        %v7233 = vunpack.c.l.b16 %v6014
        %v7234 = vunpack.c.h.b16 %v6014
        %v7235 = vunpack.c.l.b16 %v6015
        %v7236 = vunpack.c.h.b16 %v6015
        %v7237 = vunpack.c.l.b16 %v6016
        %v7238 = vunpack.c.h.b16 %v6016
        %v7239 = vunpack.c.l.b16 %v6017
        %v7240 = vunpack.c.h.b16 %v6017
        %v7241 = vunpack.c.l.b16 %v6018
        %v7242 = vunpack.c.h.b16 %v6018
        %v7243 = vunpack.c.l.b16 %v6019
        %v7244 = vunpack.c.h.b16 %v6019
        %v7245 = vunpack.c.l.b16 %v6020
        %v7246 = vunpack.c.h.b16 %v6020
        %v7247 = vunpack.c.l.b16 %v6021
        %v7248 = vunpack.c.h.b16 %v6021
        %v7249 = vunpack.c.l.b16 %v6022
        %v7250 = vunpack.c.h.b16 %v6022
        %v7251 = vunpack.c.l.b16 %v6023
        %v7252 = vunpack.c.h.b16 %v6023
        %v7253 = vunpack.c.l.b16 %v6024
        %v7254 = vunpack.c.h.b16 %v6024
        %v7255 = vunpack.c.l.b16 %v6025
        %v7256 = vunpack.c.h.b16 %v6025
        %v7257 = vunpack.c.l.b16 %v6026
        %v7258 = vunpack.c.h.b16 %v6026
        %v7259 = vunpack.c.l.b16 %v6027
        %v7260 = vunpack.c.h.b16 %v6027
        %v7261 = vunpack.c.l.b16 %v6028
        %v7262 = vunpack.c.h.b16 %v6028
        %v7263 = vunpack.c.l.b16 %v6029
        %v7264 = vunpack.c.h.b16 %v6029
        %v7265 = vunpack.c.l.b16 %v6030
        %v7266 = vunpack.c.h.b16 %v6030
        %v7267 = vunpack.c.l.b16 %v6031
        %v7268 = vunpack.c.h.b16 %v6031
        %v7269 = vunpack.c.l.b16 %v6032
        %v7270 = vunpack.c.h.b16 %v6032
        %v7271 = vunpack.c.l.b16 %v6033
        %v7272 = vunpack.c.h.b16 %v6033
        %v7273 = vunpack.c.l.b16 %v6034
        %v7274 = vunpack.c.h.b16 %v6034
        %v7275 = vunpack.c.l.b16 %v6035
        %v7276 = vunpack.c.h.b16 %v6035
        %v7277 = vunpack.c.l.b16 %v6036
        %v7278 = vunpack.c.h.b16 %v6036
        %v7279 = vunpack.c.l.b16 %v6037
        %v7280 = vunpack.c.h.b16 %v6037
        %v7281 = vunpack.c.l.b16 %v6038
        %v7282 = vunpack.c.h.b16 %v6038
        %v7283 = vunpack.c.l.b16 %v6039
        %v7284 = vunpack.c.h.b16 %v6039
        %v7285 = vunpack.c.l.b16 %v6040
        %v7286 = vunpack.c.h.b16 %v6040
        %v7287 = vunpack.c.l.b16 %v6041
        %v7288 = vunpack.c.h.b16 %v6041
        %v7289 = vunpack.c.l.b16 %v6042
        %v7290 = vunpack.c.h.b16 %v6042
        %v7291 = vunpack.c.l.b16 %v6043
        %v7292 = vunpack.c.h.b16 %v6043
        %v7293 = vunpack.c.l.b16 %v6044
        %v7294 = vunpack.c.h.b16 %v6044
        %v7295 = vunpack.c.l.b16 %v6045
        %v7296 = vunpack.c.h.b16 %v6045
        %v7297 = vunpack.c.l.b16 %v6046
        %v7298 = vunpack.c.h.b16 %v6046
        %v7299 = vunpack.c.l.b16 %v6047
        %v7300 = vunpack.c.h.b16 %v6047
        %v7301 = vunpack.c.l.b16 %v6048
        %v7302 = vunpack.c.h.b16 %v6048
        %v7303 = vunpack.c.l.b16 %v6049
        %v7304 = vunpack.c.h.b16 %v6049
        %v7305 = vunpack.c.l.b16 %v6050
        %v7306 = vunpack.c.h.b16 %v6050
        %v7307 = vunpack.c.l.b16 %v6051
        %v7308 = vunpack.c.h.b16 %v6051
        %v7309 = vunpack.c.l.b16 %v6052
        %v7310 = vunpack.c.h.b16 %v6052
        %v7311 = vunpack.c.l.b16 %v6053
        %v7312 = vunpack.c.h.b16 %v6053
        %v7313 = vunpack.c.l.b16 %v6054
        %v7314 = vunpack.c.h.b16 %v6054
        %v7315 = vunpack.c.l.b16 %v6055
        %v7316 = vunpack.c.h.b16 %v6055
        %v7317 = vunpack.c.l.b16 %v6056
        %v7318 = vunpack.c.h.b16 %v6056
        %v7319 = vunpack.c.l.b16 %v6057
        %v7320 = vunpack.c.h.b16 %v6057
        %v7321 = vunpack.c.l.b16 %v6058
        %v7322 = vunpack.c.h.b16 %v6058
        %v7323 = vunpack.c.l.b16 %v6059
        %v7324 = vunpack.c.h.b16 %v6059
        %v7325 = vunpack.c.l.b16 %v6060
        %v7326 = vunpack.c.h.b16 %v6060
        %v7327 = vunpack.c.l.b16 %v6061
        %v7328 = vunpack.c.h.b16 %v6061
        %v7329 = vunpack.c.l.b16 %v6062
        %v7330 = vunpack.c.h.b16 %v6062
        %v7331 = vunpack.c.l.b16 %v6063
        %v7332 = vunpack.c.h.b16 %v6063
        %v7333 = vunpack.c.l.b16 %v6064
        %v7334 = vunpack.c.h.b16 %v6064
        %v7335 = vunpack.c.l.b16 %v6065
        %v7336 = vunpack.c.h.b16 %v6065
        %v7337 = vunpack.c.l.b16 %v6066
        %v7338 = vunpack.c.h.b16 %v6066
        %v7339 = vunpack.c.l.b16 %v6067
        %v7340 = vunpack.c.h.b16 %v6067
        %v7341 = vunpack.c.l.b16 %v6068
        %v7342 = vunpack.c.h.b16 %v6068
        %v7343 = vunpack.c.l.b16 %v6069
        %v7344 = vunpack.c.h.b16 %v6069
        %v7345 = vunpack.c.l.b16 %v6070
        %v7346 = vunpack.c.h.b16 %v6070
        %v7347 = vunpack.c.l.b16 %v6071
        %v7348 = vunpack.c.h.b16 %v6071
        %v7349 = vunpack.c.l.b16 %v6072
        %v7350 = vunpack.c.h.b16 %v6072
        %v7351 = vunpack.c.l.b16 %v6073
        %v7352 = vunpack.c.h.b16 %v6073
        %v7353 = vunpack.c.l.b16 %v6074
        %v7354 = vunpack.c.h.b16 %v6074
        %v7355 = vunpack.c.l.b16 %v6075
        %v7356 = vunpack.c.h.b16 %v6075
        %v7357 = vunpack.c.l.b16 %v6076
        %v7358 = vunpack.c.h.b16 %v6076
        %v7359 = vunpack.c.l.b16 %v6077
        %v7360 = vunpack.c.h.b16 %v6077
        %v7361 = vunpack.c.l.b16 %v6078
        %v7362 = vunpack.c.h.b16 %v6078
        %v7363 = vunpack.c.l.b16 %v6079
        %v7364 = vunpack.c.h.b16 %v6079
        %v7365 = vunpack.c.l.b16 %v6080
        %v7366 = vunpack.c.h.b16 %v6080
        %v7367 = vunpack.c.l.b16 %v6081
        %v7368 = vunpack.c.h.b16 %v6081
        %v7369 = vunpack.c.l.b16 %v6082
        %v7370 = vunpack.c.h.b16 %v6082
        %v7371 = vunpack.c.l.b16 %v6083
        %v7372 = vunpack.c.h.b16 %v6083
        %v7373 = vunpack.c.l.b16 %v6084
        %v7374 = vunpack.c.h.b16 %v6084
        %v7375 = vunpack.c.l.b16 %v6085
        %v7376 = vunpack.c.h.b16 %v6085
        %v7377 = vunpack.c.l.b16 %v6086
        %v7378 = vunpack.c.h.b16 %v6086
        %v7379 = vunpack.c.l.b16 %v6087
        %v7380 = vunpack.c.h.b16 %v6087
        %v7381 = vunpack.c.l.b16 %v6088
        %v7382 = vunpack.c.h.b16 %v6088
        %v7383 = vunpack.c.l.b16 %v6089
        %v7384 = vunpack.c.h.b16 %v6089
        %v7385 = vunpack.c.l.b16 %v6090
        %v7386 = vunpack.c.h.b16 %v6090
        %v7387 = vunpack.c.l.b16 %v6091
        %v7388 = vunpack.c.h.b16 %v6091
        %v7389 = vunpack.c.l.b16 %v6092
        %v7390 = vunpack.c.h.b16 %v6092
        %v7391 = vunpack.c.l.b16 %v6093
        %v7392 = vunpack.c.h.b16 %v6093
        %v7393 = vunpack.c.l.b16 %v6094
        %v7394 = vunpack.c.h.b16 %v6094
        %v7395 = vunpack.c.l.b16 %v6095
        %v7396 = vunpack.c.h.b16 %v6095
        %v7397 = vunpack.c.l.b16 %v6096
        %v7398 = vunpack.c.h.b16 %v6096
        %v7399 = vunpack.c.l.b16 %v6097
        %v7400 = vunpack.c.h.b16 %v6097
        %v7401 = vunpack.c.l.b16 %v6098
        %v7402 = vunpack.c.h.b16 %v6098
        %v7403 = vunpack.c.l.b16 %v6099
        %v7404 = vunpack.c.h.b16 %v6099
        %v7405 = vunpack.c.l.b16 %v6100
        %v7406 = vunpack.c.h.b16 %v6100
        %v7407 = vunpack.c.l.b16 %v6101
        %v7408 = vunpack.c.h.b16 %v6101
        %v7409 = vunpack.c.l.b16 %v6102
        %v7410 = vunpack.c.h.b16 %v6102
        %v7411 = vunpack.c.l.b16 %v6103
        %v7412 = vunpack.c.h.b16 %v6103
        %v7413 = vunpack.c.l.b16 %v6104
        %v7414 = vunpack.c.h.b16 %v6104
        %v7415 = vunpack.c.l.b16 %v6105
        %v7416 = vunpack.c.h.b16 %v6105
        %v7417 = vunpack.c.l.b16 %v6106
        %v7418 = vunpack.c.h.b16 %v6106
        %v7419 = vunpack.c.l.b16 %v6107
        %v7420 = vunpack.c.h.b16 %v6107
        %v7421 = vunpack.c.l.b16 %v6108
        %v7422 = vunpack.c.h.b16 %v6108
        %v7423 = vunpack.c.l.b16 %v6109
        %v7424 = vunpack.c.h.b16 %v6109
        %v7425 = vunpack.c.l.b16 %v6110
        %v7426 = vunpack.c.h.b16 %v6110
        %v7427 = vunpack.c.l.b16 %v6111
        %v7428 = vunpack.c.h.b16 %v6111
        %v7429 = vunpack.c.l.b16 %v6112
        %v7430 = vunpack.c.h.b16 %v6112
        %v7431 = vunpack.c.l.b16 %v6113
        %v7432 = vunpack.c.h.b16 %v6113
        %v7433 = vunpack.c.l.b16 %v6114
        %v7434 = vunpack.c.h.b16 %v6114
        %v7435 = vunpack.c.l.b16 %v6115
        %v7436 = vunpack.c.h.b16 %v6115
        %v7437 = vunpack.c.l.b16 %v6116
        %v7438 = vunpack.c.h.b16 %v6116
        %v7439 = vunpack.c.l.b16 %v6117
        %v7440 = vunpack.c.h.b16 %v6117
        %v7441 = vunpack.c.l.b16 %v6118
        %v7442 = vunpack.c.h.b16 %v6118
        %v7443 = vunpack.c.l.b16 %v6119
        %v7444 = vunpack.c.h.b16 %v6119
        %v7445 = vunpack.c.l.b16 %v6120
        %v7446 = vunpack.c.h.b16 %v6120
        %v7447 = vunpack.c.l.b16 %v6121
        %v7448 = vunpack.c.h.b16 %v6121
        %v7449 = vunpack.c.l.b16 %v6122
        %v7450 = vunpack.c.h.b16 %v6122
        %v7451 = vunpack.c.l.b16 %v6123
        %v7452 = vunpack.c.h.b16 %v6123
        %v7453 = vunpack.c.l.b16 %v6124
        %v7454 = vunpack.c.h.b16 %v6124
        %v7455 = vunpack.c.l.b16 %v6125
        %v7456 = vunpack.c.h.b16 %v6125
        %v7457 = vunpack.c.l.b16 %v6126
        %v7458 = vunpack.c.h.b16 %v6126
        %v7459 = vunpack.c.l.b16 %v6127
        %v7460 = vunpack.c.h.b16 %v6127
        %v7461 = vunpack.c.l.b16 %v6128
        %v7462 = vunpack.c.h.b16 %v6128
        %v7463 = vunpack.c.l.b16 %v6129
        %v7464 = vunpack.c.h.b16 %v6129
        %v7465 = vunpack.c.l.b16 %v6130
        %v7466 = vunpack.c.h.b16 %v6130
        %v7467 = vunpack.c.l.b16 %v6131
        %v7468 = vunpack.c.h.b16 %v6131
        %v7469 = vunpack.c.l.b16 %v6132
        %v7470 = vunpack.c.h.b16 %v6132
        %v7471 = vunpack.c.l.b16 %v6133
        %v7472 = vunpack.c.h.b16 %v6133
        %v7473 = vunpack.c.l.b16 %v6134
        %v7474 = vunpack.c.h.b16 %v6134
        %v7475 = vunpack.c.l.b16 %v6135
        %v7476 = vunpack.c.h.b16 %v6135
        %v7477 = vunpack.c.l.b16 %v6136
        %v7478 = vunpack.c.h.b16 %v6136
        %v7479 = vunpack.c.l.b16 %v6137
        %v7480 = vunpack.c.h.b16 %v6137
        %v7481 = vunpack.c.l.b16 %v6138
        %v7482 = vunpack.c.h.b16 %v6138
        %v7483 = vunpack.c.l.b16 %v6139
        %v7484 = vunpack.c.h.b16 %v6139
        %v7485 = vunpack.c.l.b16 %v6140
        %v7486 = vunpack.c.h.b16 %v6140
        %v7487 = vunpack.c.l.b16 %v6141
        %v7488 = vunpack.c.h.b16 %v6141
        %v7489 = vunpack.c.l.b16 %v6142
        %v7490 = vunpack.c.h.b16 %v6142
        %v7491 = vunpack.c.l.b16 %v6143
        %v7492 = vunpack.c.h.b16 %v6143
        %v7493 = vunpack.c.l.b16 %v6144
        %v7494 = vunpack.c.h.b16 %v6144
        %v7495 = vunpack.c.l.b16 %v6145
        %v7496 = vunpack.c.h.b16 %v6145
        %v7497 = vunpack.c.l.b16 %v6146
        %v7498 = vunpack.c.h.b16 %v6146
        %v7499 = vunpack.c.l.b16 %v6147
        %v7500 = vunpack.c.h.b16 %v6147
        %v7501 = vunpack.c.l.b16 %v6148
        %v7502 = vunpack.c.h.b16 %v6148
        %v7503 = vunpack.c.l.b16 %v6149
        %v7504 = vunpack.c.h.b16 %v6149
        %v7505 = vunpack.c.l.b16 %v6150
        %v7506 = vunpack.c.h.b16 %v6150
        %v7507 = vunpack.c.l.b16 %v6151
        %v7508 = vunpack.c.h.b16 %v6151
        %v7509 = vunpack.c.l.b16 %v6152
        %v7510 = vunpack.c.h.b16 %v6152
        %v7511 = vunpack.c.l.b16 %v6153
        %v7512 = vunpack.c.h.b16 %v6153
        %v7513 = vunpack.c.l.b16 %v6154
        %v7514 = vunpack.c.h.b16 %v6154
        %v7515 = vunpack.c.l.b16 %v6155
        %v7516 = vunpack.c.h.b16 %v6155
        %v7517 = vunpack.c.l.b16 %v6156
        %v7518 = vunpack.c.h.b16 %v6156
        %v7519 = vunpack.c.l.b16 %v6157
        %v7520 = vunpack.c.h.b16 %v6157
        %v7521 = vunpack.c.l.b16 %v6158
        %v7522 = vunpack.c.h.b16 %v6158
        %v7523 = vunpack.c.l.b16 %v6159
        %v7524 = vunpack.c.h.b16 %v6159
        %v7525 = vunpack.c.l.b16 %v6160
        %v7526 = vunpack.c.h.b16 %v6160
        %v7527 = vunpack.c.l.b16 %v6161
        %v7528 = vunpack.c.h.b16 %v6161
        %v7529 = vunpack.c.l.b16 %v6162
        %v7530 = vunpack.c.h.b16 %v6162
        %v7531 = vunpack.c.l.b16 %v6163
        %v7532 = vunpack.c.h.b16 %v6163
        %v7533 = vunpack.c.l.b16 %v6164
        %v7534 = vunpack.c.h.b16 %v6164
        %v7535 = vunpack.c.l.b16 %v6165
        %v7536 = vunpack.c.h.b16 %v6165
        %v7537 = vunpack.c.l.b16 %v6166
        %v7538 = vunpack.c.h.b16 %v6166
        %v7539 = vunpack.c.l.b16 %v6167
        %v7540 = vunpack.c.h.b16 %v6167
        %v7541 = vunpack.c.l.b16 %v6168
        %v7542 = vunpack.c.h.b16 %v6168
        %v7543 = vunpack.c.l.b16 %v6169
        %v7544 = vunpack.c.h.b16 %v6169
        %v7545 = vunpack.c.l.b16 %v6170
        %v7546 = vunpack.c.h.b16 %v6170
        %v7547 = vunpack.c.l.b16 %v6171
        %v7548 = vunpack.c.h.b16 %v6171
        %v7549 = vunpack.c.l.b16 %v6172
        %v7550 = vunpack.c.h.b16 %v6172
        %v7551 = vunpack.c.l.b16 %v6173
        %v7552 = vunpack.c.h.b16 %v6173
        %v7553 = vunpack.c.l.b16 %v6174
        %v7554 = vunpack.c.h.b16 %v6174
        %v7555 = vunpack.c.l.b16 %v6175
        %v7556 = vunpack.c.h.b16 %v6175
        %v7557 = vunpack.c.l.b16 %v6176
        %v7558 = vunpack.c.h.b16 %v6176
        %v7559 = vunpack.c.l.b16 %v6177
        %v7560 = vunpack.c.h.b16 %v6177
        %v7561 = vunpack.c.l.b16 %v6178
        %v7562 = vunpack.c.h.b16 %v6178
        %v7563 = vunpack.c.l.b16 %v6179
        %v7564 = vunpack.c.h.b16 %v6179
        %v7565 = vunpack.c.l.b16 %v6180
        %v7566 = vunpack.c.h.b16 %v6180
        %v7567 = vunpack.c.l.b16 %v6181
        %v7568 = vunpack.c.h.b16 %v6181
        %v7569 = vunpack.c.l.b16 %v6182
        %v7570 = vunpack.c.h.b16 %v6182
        %v7571 = vunpack.c.l.b16 %v6183
        %v7572 = vunpack.c.h.b16 %v6183
        %v7573 = vunpack.c.l.b16 %v6184
        %v7574 = vunpack.c.h.b16 %v6184
        %v7575 = vunpack.c.l.b16 %v6185
        %v7576 = vunpack.c.h.b16 %v6185
        %v7577 = vunpack.c.l.b16 %v6186
        %v7578 = vunpack.c.h.b16 %v6186
        %v7579 = vunpack.c.l.b16 %v6187
        %v7580 = vunpack.c.h.b16 %v6187
        %v7581 = vunpack.c.l.b16 %v6188
        %v7582 = vunpack.c.h.b16 %v6188
        %v7583 = vunpack.c.l.b16 %v6189
        %v7584 = vunpack.c.h.b16 %v6189
        %v7585 = vunpack.c.l.b16 %v6190
        %v7586 = vunpack.c.h.b16 %v6190
        %v7587 = vunpack.c.l.b16 %v6191
        %v7588 = vunpack.c.h.b16 %v6191
        %v7589 = vunpack.c.l.b16 %v6192
        %v7590 = vunpack.c.h.b16 %v6192
        %v7591 = vunpack.c.l.b16 %v6193
        %v7592 = vunpack.c.h.b16 %v6193
        %v7593 = vunpack.c.l.b16 %v6194
        %v7594 = vunpack.c.h.b16 %v6194
        %v7595 = vunpack.c.l.b16 %v6195
        %v7596 = vunpack.c.h.b16 %v6195
        %v7597 = vunpack.c.l.b16 %v6196
        %v7598 = vunpack.c.h.b16 %v6196
        %v7599 = vunpack.c.l.b16 %v6197
        %v7600 = vunpack.c.h.b16 %v6197
        %v7601 = vunpack.c.l.b16 %v6198
        %v7602 = vunpack.c.h.b16 %v6198
        %v7603 = vunpack.c.l.b16 %v6199
        %v7604 = vunpack.c.h.b16 %v6199
        %v7605 = vunpack.c.l.b16 %v6200
        %v7606 = vunpack.c.h.b16 %v6200
        %v7607 = vunpack.c.l.b16 %v6201
        %v7608 = vunpack.c.h.b16 %v6201
        %v7609 = vunpack.c.l.b16 %v6202
        %v7610 = vunpack.c.h.b16 %v6202
        %v7611 = vunpack.c.l.b16 %v6203
        %v7612 = vunpack.c.h.b16 %v6203
        %v7613 = vunpack.c.l.b16 %v6204
        %v7614 = vunpack.c.h.b16 %v6204
        %v7615 = vunpack.c.l.b16 %v6205
        %v7616 = vunpack.c.h.b16 %v6205
        %v7617 = vunpack.c.l.b16 %v6206
        %v7618 = vunpack.c.h.b16 %v6206
        %v7619 = vunpack.c.l.b16 %v6207
        %v7620 = vunpack.c.h.b16 %v6207
        %v7621 = vunpack.c.l.b16 %v6208
        %v7622 = vunpack.c.h.b16 %v6208
        %v7623 = vunpack.c.l.b16 %v6209
        %v7624 = vunpack.c.h.b16 %v6209
        %v7625 = vunpack.c.l.b16 %v6210
        %v7626 = vunpack.c.h.b16 %v6210
        %v7627 = vunpack.c.l.b16 %v6211
        %v7628 = vunpack.c.h.b16 %v6211
        %v7629 = vunpack.c.l.b16 %v6212
        %v7630 = vunpack.c.h.b16 %v6212
        %v7631 = vunpack.c.l.b16 %v6213
        %v7632 = vunpack.c.h.b16 %v6213
        %v7633 = vunpack.c.l.b16 %v6214
        %v7634 = vunpack.c.h.b16 %v6214
        %v7635 = vunpack.c.l.b16 %v6215
        %v7636 = vunpack.c.h.b16 %v6215
        %v7637 = vunpack.c.l.b16 %v6216
        %v7638 = vunpack.c.h.b16 %v6216
        %v7639 = vunpack.c.l.b16 %v6217
        %v7640 = vunpack.c.h.b16 %v6217
        %v7641 = vunpack.c.l.b16 %v6218
        %v7642 = vunpack.c.h.b16 %v6218
        %v7643 = vunpack.c.l.b16 %v6219
        %v7644 = vunpack.c.h.b16 %v6219
        %v7645 = vunpack.c.l.b16 %v6220
        %v7646 = vunpack.c.h.b16 %v6220
        %v7647 = vunpack.c.l.b16 %v6221
        %v7648 = vunpack.c.h.b16 %v6221
        %v7649 = vunpack.c.l.b16 %v6222
        %v7650 = vunpack.c.h.b16 %v6222
        %v7651 = vunpack.c.l.b16 %v6223
        %v7652 = vunpack.c.h.b16 %v6223
        %v7653 = vunpack.c.l.b16 %v6224
        %v7654 = vunpack.c.h.b16 %v6224
        %v7655 = vunpack.c.l.b16 %v6225
        %v7656 = vunpack.c.h.b16 %v6225
        %v7657 = vunpack.c.l.b16 %v6226
        %v7658 = vunpack.c.h.b16 %v6226
        %v7659 = vunpack.c.l.b16 %v6227
        %v7660 = vunpack.c.h.b16 %v6227
        %v7661 = vunpack.c.l.b16 %v6228
        %v7662 = vunpack.c.h.b16 %v6228
        %v7663 = vunpack.c.l.b16 %v6229
        %v7664 = vunpack.c.h.b16 %v6229
        %v7665 = vunpack.c.l.b16 %v6230
        %v7666 = vunpack.c.h.b16 %v6230
        %v7667 = vunpack.c.l.b16 %v6231
        %v7668 = vunpack.c.h.b16 %v6231
        %v7669 = vunpack.c.l.b16 %v6232
        %v7670 = vunpack.c.h.b16 %v6232
        %v7671 = vunpack.c.l.b16 %v6233
        %v7672 = vunpack.c.h.b16 %v6233
        %v7673 = vunpack.c.l.b16 %v6234
        %v7674 = vunpack.c.h.b16 %v6234
        %v7675 = vunpack.c.l.b16 %v6235
        %v7676 = vunpack.c.h.b16 %v6235
        %v7677 = vunpack.c.l.b16 %v6236
        %v7678 = vunpack.c.h.b16 %v6236
        %v7679 = vunpack.c.l.b16 %v6237
        %v7680 = vunpack.c.h.b16 %v6237
        %v7681 = vunpack.c.l.b16 %v6238
        %v7682 = vunpack.c.h.b16 %v6238
        %v7683 = vunpack.c.l.b16 %v6239
        %v7684 = vunpack.c.h.b16 %v6239
        %v7685 = vunpack.c.l.b16 %v6240
        %v7686 = vunpack.c.h.b16 %v6240
        %v7687 = vunpack.c.l.b16 %v6241
        %v7688 = vunpack.c.h.b16 %v6241
        %v7689 = vunpack.c.l.b16 %v6242
        %v7690 = vunpack.c.h.b16 %v6242
        %v7691 = vunpack.c.l.b16 %v6243
        %v7692 = vunpack.c.h.b16 %v6243
        %v7693 = vunpack.c.l.b16 %v6244
        %v7694 = vunpack.c.h.b16 %v6244
        %v7695 = vunpack.c.l.b16 %v6245
        %v7696 = vunpack.c.h.b16 %v6245
        %v7697 = vunpack.c.l.b16 %v6246
        %v7698 = vunpack.c.h.b16 %v6246
        %v7699 = vunpack.c.l.b16 %v6247
        %v7700 = vunpack.c.h.b16 %v6247
        %v7701 = vunpack.c.l.b16 %v6248
        %v7702 = vunpack.c.h.b16 %v6248
        %v7703 = vunpack.c.l.b16 %v6249
        %v7704 = vunpack.c.h.b16 %v6249
        %v7705 = vunpack.c.l.b16 %v6250
        %v7706 = vunpack.c.h.b16 %v6250
        %v7707 = vunpack.c.l.b16 %v6251
        %v7708 = vunpack.c.h.b16 %v6251
        %v7709 = vunpack.c.l.b16 %v6252
        %v7710 = vunpack.c.h.b16 %v6252
        %v7711 = vunpack.c.l.b16 %v6253
        %v7712 = vunpack.c.h.b16 %v6253
        %v7713 = vunpack.c.l.b16 %v6254
        %v7714 = vunpack.c.h.b16 %v6254
        %v7715 = vunpack.c.l.b16 %v6255
        %v7716 = vunpack.c.h.b16 %v6255
        %v7717 = vunpack.c.l.b16 %v6256
        %v7718 = vunpack.c.h.b16 %v6256
        %v7719 = vunpack.c.l.b16 %v6257
        %v7720 = vunpack.c.h.b16 %v6257
        %v7721 = vunpack.c.l.b16 %v6258
        %v7722 = vunpack.c.h.b16 %v6258
        %v7723 = vunpack.c.l.b16 %v6259
        %v7724 = vunpack.c.h.b16 %v6259
        %v7725 = vunpack.c.l.b16 %v6260
        %v7726 = vunpack.c.h.b16 %v6260
        %v7727 = vunpack.c.l.b16 %v6261
        %v7728 = vunpack.c.h.b16 %v6261
        %v7729 = vunpack.c.l.b16 %v6262
        %v7730 = vunpack.c.h.b16 %v6262
        %v7731 = vunpack.c.l.b16 %v6263
        %v7732 = vunpack.c.h.b16 %v6263
        %v7733 = vunpack.c.l.b16 %v6264
        %v7734 = vunpack.c.h.b16 %v6264
        %v7735 = vunpack.c.l.b16 %v6265
        %v7736 = vunpack.c.h.b16 %v6265
        %v7737 = vunpack.c.l.b16 %v6266
        %v7738 = vunpack.c.h.b16 %v6266
        %v7739 = vunpack.c.l.b16 %v6267
        %v7740 = vunpack.c.h.b16 %v6267
        %v7741 = vunpack.c.l.b16 %v6268
        %v7742 = vunpack.c.h.b16 %v6268
        %v7743 = vunpack.c.l.b16 %v6269
        %v7744 = vunpack.c.h.b16 %v6269
        %v7745 = vunpack.c.l.b16 %v6270
        %v7746 = vunpack.c.h.b16 %v6270
        %v7747 = vunpack.c.l.b16 %v6271
        %v7748 = vunpack.c.h.b16 %v6271
        %v7749 = vunpack.c.l.b16 %v6272
        %v7750 = vunpack.c.h.b16 %v6272
        %v7751 = vunpack.c.l.b16 %v6273
        %v7752 = vunpack.c.h.b16 %v6273
        %v7753 = vunpack.c.l.b16 %v6274
        %v7754 = vunpack.c.h.b16 %v6274
        %v7755 = vunpack.c.l.b16 %v6275
        %v7756 = vunpack.c.h.b16 %v6275
        %v7757 = vunpack.c.l.b16 %v6276
        %v7758 = vunpack.c.h.b16 %v6276
        %v7759 = vunpack.c.l.b16 %v6277
        %v7760 = vunpack.c.h.b16 %v6277
        %v7761 = vunpack.c.l.b16 %v6278
        %v7762 = vunpack.c.h.b16 %v6278
        %v7763 = vunpack.c.l.b16 %v6279
        %v7764 = vunpack.c.h.b16 %v6279
        %v7765 = vunpack.c.l.b16 %v6280
        %v7766 = vunpack.c.h.b16 %v6280
        %v7767 = vunpack.c.l.b16 %v6281
        %v7768 = vunpack.c.h.b16 %v6281
        %v7769 = vunpack.c.l.b16 %v6282
        %v7770 = vunpack.c.h.b16 %v6282
        %v7771 = vunpack.c.l.b16 %v6283
        %v7772 = vunpack.c.h.b16 %v6283
        %v7773 = vunpack.c.l.b16 %v6284
        %v7774 = vunpack.c.h.b16 %v6284
        %v7775 = vunpack.c.l.b16 %v6285
        %v7776 = vunpack.c.h.b16 %v6285
        %v7777 = vunpack.c.l.b16 %v6286
        %v7778 = vunpack.c.h.b16 %v6286
        %v7779 = vpack.c.b16 %v6887, %v6883
        %v7780 = vpack.c.b16 %v6888, %v6884
        %v7781 = vpack.c.b16 %v6889, %v6885
        %v7782 = vpack.c.b16 %v6890, %v6886
        %v7783 = vpack.c.b16 %v6895, %v6891
        %v7784 = vpack.c.b16 %v6896, %v6892
        %v7785 = vpack.c.b16 %v6897, %v6893
        %v7786 = vpack.c.b16 %v6898, %v6894
        %v7787 = vpack.c.b16 %v6903, %v6899
        %v7788 = vpack.c.b16 %v6904, %v6900
        %v7789 = vpack.c.b16 %v6905, %v6901
        %v7790 = vpack.c.b16 %v6906, %v6902
        %v7791 = vpack.c.b16 %v6911, %v6907
        %v7792 = vpack.c.b16 %v6912, %v6908
        %v7793 = vpack.c.b16 %v6913, %v6909
        %v7794 = vpack.c.b16 %v6914, %v6910
        %v7795 = vpack.c.b16 %v6919, %v6915
        %v7796 = vpack.c.b16 %v6920, %v6916
        %v7797 = vpack.c.b16 %v6921, %v6917
        %v7798 = vpack.c.b16 %v6922, %v6918
        %v7799 = vpack.c.b16 %v6927, %v6923
        %v7800 = vpack.c.b16 %v6928, %v6924
        %v7801 = vpack.c.b16 %v6929, %v6925
        %v7802 = vpack.c.b16 %v6930, %v6926
        %v7803 = vpack.c.b16 %v6935, %v6931
        %v7804 = vpack.c.b16 %v6936, %v6932
        %v7805 = vpack.c.b16 %v6937, %v6933
        %v7806 = vpack.c.b16 %v6938, %v6934
        %v7807 = vpack.c.b16 %v6943, %v6939
        %v7808 = vpack.c.b16 %v6944, %v6940
        %v7809 = vpack.c.b16 %v6945, %v6941
        %v7810 = vpack.c.b16 %v6946, %v6942
        %v7811 = vpack.c.b16 %v6951, %v6947
        %v7812 = vpack.c.b16 %v6952, %v6948
        %v7813 = vpack.c.b16 %v6953, %v6949
        %v7814 = vpack.c.b16 %v6954, %v6950
        %v7815 = vpack.c.b16 %v6959, %v6955
        %v7816 = vpack.c.b16 %v6960, %v6956
        %v7817 = vpack.c.b16 %v6961, %v6957
        %v7818 = vpack.c.b16 %v6962, %v6958
        %v7819 = vpack.c.b16 %v6967, %v6963
        %v7820 = vpack.c.b16 %v6968, %v6964
        %v7821 = vpack.c.b16 %v6969, %v6965
        %v7822 = vpack.c.b16 %v6970, %v6966
        %v7823 = vpack.c.b16 %v6975, %v6971
        %v7824 = vpack.c.b16 %v6976, %v6972
        %v7825 = vpack.c.b16 %v6977, %v6973
        %v7826 = vpack.c.b16 %v6978, %v6974
        %v7827 = vpack.c.b16 %v6983, %v6979
        %v7828 = vpack.c.b16 %v6984, %v6980
        %v7829 = vpack.c.b16 %v6985, %v6981
        %v7830 = vpack.c.b16 %v6986, %v6982
        %v7831 = vpack.c.b16 %v6991, %v6987
        %v7832 = vpack.c.b16 %v6992, %v6988
        %v7833 = vpack.c.b16 %v6993, %v6989
        %v7834 = vpack.c.b16 %v6994, %v6990
        %v7835 = vpack.c.b16 %v6999, %v6995
        %v7836 = vpack.c.b16 %v7000, %v6996
        %v7837 = vpack.c.b16 %v7001, %v6997
        %v7838 = vpack.c.b16 %v7002, %v6998
        %v7839 = vpack.c.b16 %v7007, %v7003
        %v7840 = vpack.c.b16 %v7008, %v7004
        %v7841 = vpack.c.b16 %v7009, %v7005
        %v7842 = vpack.c.b16 %v7010, %v7006
        %v7843 = vpack.c.b16 %v7015, %v7011
        %v7844 = vpack.c.b16 %v7016, %v7012
        %v7845 = vpack.c.b16 %v7017, %v7013
        %v7846 = vpack.c.b16 %v7018, %v7014
        %v7847 = vpack.c.b16 %v7023, %v7019
        %v7848 = vpack.c.b16 %v7024, %v7020
        %v7849 = vpack.c.b16 %v7025, %v7021
        %v7850 = vpack.c.b16 %v7026, %v7022
        %v7851 = vpack.c.b16 %v7031, %v7027
        %v7852 = vpack.c.b16 %v7032, %v7028
        %v7853 = vpack.c.b16 %v7033, %v7029
        %v7854 = vpack.c.b16 %v7034, %v7030
        %v7855 = vpack.c.b16 %v7039, %v7035
        %v7856 = vpack.c.b16 %v7040, %v7036
        %v7857 = vpack.c.b16 %v7041, %v7037
        %v7858 = vpack.c.b16 %v7042, %v7038
        %v7859 = vpack.c.b16 %v7047, %v7043
        %v7860 = vpack.c.b16 %v7048, %v7044
        %v7861 = vpack.c.b16 %v7049, %v7045
        %v7862 = vpack.c.b16 %v7050, %v7046
        %v7863 = vpack.c.b16 %v7055, %v7051
        %v7864 = vpack.c.b16 %v7056, %v7052
        %v7865 = vpack.c.b16 %v7057, %v7053
        %v7866 = vpack.c.b16 %v7058, %v7054
        %v7867 = vpack.c.b16 %v7063, %v7059
        %v7868 = vpack.c.b16 %v7064, %v7060
        %v7869 = vpack.c.b16 %v7065, %v7061
        %v7870 = vpack.c.b16 %v7066, %v7062
        %v7871 = vpack.c.b16 %v7071, %v7067
        %v7872 = vpack.c.b16 %v7072, %v7068
        %v7873 = vpack.c.b16 %v7073, %v7069
        %v7874 = vpack.c.b16 %v7074, %v7070
        %v7875 = vpack.c.b16 %v7079, %v7075
        %v7876 = vpack.c.b16 %v7080, %v7076
        %v7877 = vpack.c.b16 %v7081, %v7077
        %v7878 = vpack.c.b16 %v7082, %v7078
        %v7879 = vpack.c.b16 %v7087, %v7083
        %v7880 = vpack.c.b16 %v7088, %v7084
        %v7881 = vpack.c.b16 %v7089, %v7085
        %v7882 = vpack.c.b16 %v7090, %v7086
        %v7883 = vpack.c.b16 %v7095, %v7091
        %v7884 = vpack.c.b16 %v7096, %v7092
        %v7885 = vpack.c.b16 %v7097, %v7093
        %v7886 = vpack.c.b16 %v7098, %v7094
        %v7887 = vpack.c.b16 %v7103, %v7099
        %v7888 = vpack.c.b16 %v7104, %v7100
        %v7889 = vpack.c.b16 %v7105, %v7101
        %v7890 = vpack.c.b16 %v7106, %v7102
        %v7891 = vpack.c.b16 %v7111, %v7107
        %v7892 = vpack.c.b16 %v7112, %v7108
        %v7893 = vpack.c.b16 %v7113, %v7109
        %v7894 = vpack.c.b16 %v7114, %v7110
        %v7895 = vpack.c.b16 %v7119, %v7115
        %v7896 = vpack.c.b16 %v7120, %v7116
        %v7897 = vpack.c.b16 %v7121, %v7117
        %v7898 = vpack.c.b16 %v7122, %v7118
        %v7899 = vpack.c.b16 %v7127, %v7123
        %v7900 = vpack.c.b16 %v7128, %v7124
        %v7901 = vpack.c.b16 %v7129, %v7125
        %v7902 = vpack.c.b16 %v7130, %v7126
        %v7903 = vpack.c.b16 %v7135, %v7131
        %v7904 = vpack.c.b16 %v7136, %v7132
        %v7905 = vpack.c.b16 %v7137, %v7133
        %v7906 = vpack.c.b16 %v7138, %v7134
        %v7907 = vpack.c.b16 %v7143, %v7139
        %v7908 = vpack.c.b16 %v7144, %v7140
        %v7909 = vpack.c.b16 %v7145, %v7141
        %v7910 = vpack.c.b16 %v7146, %v7142
        %v7911 = vpack.c.b16 %v7151, %v7147
        %v7912 = vpack.c.b16 %v7152, %v7148
        %v7913 = vpack.c.b16 %v7153, %v7149
        %v7914 = vpack.c.b16 %v7154, %v7150
        %v7915 = vpack.c.b16 %v7159, %v7155
        %v7916 = vpack.c.b16 %v7160, %v7156
        %v7917 = vpack.c.b16 %v7161, %v7157
        %v7918 = vpack.c.b16 %v7162, %v7158
        %v7919 = vpack.c.b16 %v7167, %v7163
        %v7920 = vpack.c.b16 %v7168, %v7164
        %v7921 = vpack.c.b16 %v7169, %v7165
        %v7922 = vpack.c.b16 %v7170, %v7166
        %v7923 = vpack.c.b16 %v7175, %v7171
        %v7924 = vpack.c.b16 %v7176, %v7172
        %v7925 = vpack.c.b16 %v7177, %v7173
        %v7926 = vpack.c.b16 %v7178, %v7174
        %v7927 = vpack.c.b16 %v7183, %v7179
        %v7928 = vpack.c.b16 %v7184, %v7180
        %v7929 = vpack.c.b16 %v7185, %v7181
        %v7930 = vpack.c.b16 %v7186, %v7182
        %v7931 = vpack.c.b16 %v7191, %v7187
        %v7932 = vpack.c.b16 %v7192, %v7188
        %v7933 = vpack.c.b16 %v7193, %v7189
        %v7934 = vpack.c.b16 %v7194, %v7190
        %v7935 = vpack.c.b16 %v7199, %v7195
        %v7936 = vpack.c.b16 %v7200, %v7196
        %v7937 = vpack.c.b16 %v7201, %v7197
        %v7938 = vpack.c.b16 %v7202, %v7198
        %v7939 = vpack.c.b16 %v7207, %v7203
        %v7940 = vpack.c.b16 %v7208, %v7204
        %v7941 = vpack.c.b16 %v7209, %v7205
        %v7942 = vpack.c.b16 %v7210, %v7206
        %v7943 = vpack.c.b16 %v7215, %v7211
        %v7944 = vpack.c.b16 %v7216, %v7212
        %v7945 = vpack.c.b16 %v7217, %v7213
        %v7946 = vpack.c.b16 %v7218, %v7214
        %v7947 = vpack.c.b16 %v7223, %v7219
        %v7948 = vpack.c.b16 %v7224, %v7220
        %v7949 = vpack.c.b16 %v7225, %v7221
        %v7950 = vpack.c.b16 %v7226, %v7222
        %v7951 = vpack.c.b16 %v7231, %v7227
        %v7952 = vpack.c.b16 %v7232, %v7228
        %v7953 = vpack.c.b16 %v7233, %v7229
        %v7954 = vpack.c.b16 %v7234, %v7230
        %v7955 = vpack.c.b16 %v7239, %v7235
        %v7956 = vpack.c.b16 %v7240, %v7236
        %v7957 = vpack.c.b16 %v7241, %v7237
        %v7958 = vpack.c.b16 %v7242, %v7238
        %v7959 = vpack.c.b16 %v7247, %v7243
        %v7960 = vpack.c.b16 %v7248, %v7244
        %v7961 = vpack.c.b16 %v7249, %v7245
        %v7962 = vpack.c.b16 %v7250, %v7246
        %v7963 = vpack.c.b16 %v7255, %v7251
        %v7964 = vpack.c.b16 %v7256, %v7252
        %v7965 = vpack.c.b16 %v7257, %v7253
        %v7966 = vpack.c.b16 %v7258, %v7254
        %v7967 = vpack.c.b16 %v7263, %v7259
        %v7968 = vpack.c.b16 %v7264, %v7260
        %v7969 = vpack.c.b16 %v7265, %v7261
        %v7970 = vpack.c.b16 %v7266, %v7262
        %v7971 = vpack.c.b16 %v7271, %v7267
        %v7972 = vpack.c.b16 %v7272, %v7268
        %v7973 = vpack.c.b16 %v7273, %v7269
        %v7974 = vpack.c.b16 %v7274, %v7270
        %v7975 = vpack.c.b16 %v7279, %v7275
        %v7976 = vpack.c.b16 %v7280, %v7276
        %v7977 = vpack.c.b16 %v7281, %v7277
        %v7978 = vpack.c.b16 %v7282, %v7278
        %v7979 = vpack.c.b16 %v7287, %v7283
        %v7980 = vpack.c.b16 %v7288, %v7284
        %v7981 = vpack.c.b16 %v7289, %v7285
        %v7982 = vpack.c.b16 %v7290, %v7286
        %v7983 = vpack.c.b16 %v7295, %v7291
        %v7984 = vpack.c.b16 %v7296, %v7292
        %v7985 = vpack.c.b16 %v7297, %v7293
        %v7986 = vpack.c.b16 %v7298, %v7294
        %v7987 = vpack.c.b16 %v7303, %v7299
        %v7988 = vpack.c.b16 %v7304, %v7300
        %v7989 = vpack.c.b16 %v7305, %v7301
        %v7990 = vpack.c.b16 %v7306, %v7302
        %v7991 = vpack.c.b16 %v7311, %v7307
        %v7992 = vpack.c.b16 %v7312, %v7308
        %v7993 = vpack.c.b16 %v7313, %v7309
        %v7994 = vpack.c.b16 %v7314, %v7310
        %v7995 = vpack.c.b16 %v7319, %v7315
        %v7996 = vpack.c.b16 %v7320, %v7316
        %v7997 = vpack.c.b16 %v7321, %v7317
        %v7998 = vpack.c.b16 %v7322, %v7318
        %v7999 = vpack.c.b16 %v7327, %v7323
        %v8000 = vpack.c.b16 %v7328, %v7324
        %v8001 = vpack.c.b16 %v7329, %v7325
        %v8002 = vpack.c.b16 %v7330, %v7326
        %v8003 = vpack.c.b16 %v7335, %v7331
        %v8004 = vpack.c.b16 %v7336, %v7332
        %v8005 = vpack.c.b16 %v7337, %v7333
        %v8006 = vpack.c.b16 %v7338, %v7334
        %v8007 = vpack.c.b16 %v7343, %v7339
        %v8008 = vpack.c.b16 %v7344, %v7340
        %v8009 = vpack.c.b16 %v7345, %v7341
        %v8010 = vpack.c.b16 %v7346, %v7342
        %v8011 = vpack.c.b16 %v7351, %v7347
        %v8012 = vpack.c.b16 %v7352, %v7348
        %v8013 = vpack.c.b16 %v7353, %v7349
        %v8014 = vpack.c.b16 %v7354, %v7350
        %v8015 = vpack.c.b16 %v7359, %v7355
        %v8016 = vpack.c.b16 %v7360, %v7356
        %v8017 = vpack.c.b16 %v7361, %v7357
        %v8018 = vpack.c.b16 %v7362, %v7358
        %v8019 = vpack.c.b16 %v7367, %v7363
        %v8020 = vpack.c.b16 %v7368, %v7364
        %v8021 = vpack.c.b16 %v7369, %v7365
        %v8022 = vpack.c.b16 %v7370, %v7366
        %v8023 = vpack.c.b16 %v7375, %v7371
        %v8024 = vpack.c.b16 %v7376, %v7372
        %v8025 = vpack.c.b16 %v7377, %v7373
        %v8026 = vpack.c.b16 %v7378, %v7374
        %v8027 = vpack.c.b16 %v7383, %v7379
        %v8028 = vpack.c.b16 %v7384, %v7380
        %v8029 = vpack.c.b16 %v7385, %v7381
        %v8030 = vpack.c.b16 %v7386, %v7382
        %v8031 = vpack.c.b16 %v7391, %v7387
        %v8032 = vpack.c.b16 %v7392, %v7388
        %v8033 = vpack.c.b16 %v7393, %v7389
        %v8034 = vpack.c.b16 %v7394, %v7390
        %v8035 = vpack.c.b16 %v7399, %v7395
        %v8036 = vpack.c.b16 %v7400, %v7396
        %v8037 = vpack.c.b16 %v7401, %v7397
        %v8038 = vpack.c.b16 %v7402, %v7398
        %v8039 = vpack.c.b16 %v7407, %v7403
        %v8040 = vpack.c.b16 %v7408, %v7404
        %v8041 = vpack.c.b16 %v7409, %v7405
        %v8042 = vpack.c.b16 %v7410, %v7406
        %v8043 = vpack.c.b16 %v7415, %v7411
        %v8044 = vpack.c.b16 %v7416, %v7412
        %v8045 = vpack.c.b16 %v7417, %v7413
        %v8046 = vpack.c.b16 %v7418, %v7414
        %v8047 = vpack.c.b16 %v7423, %v7419
        %v8048 = vpack.c.b16 %v7424, %v7420
        %v8049 = vpack.c.b16 %v7425, %v7421
        %v8050 = vpack.c.b16 %v7426, %v7422
        %v8051 = vpack.c.b16 %v7431, %v7427
        %v8052 = vpack.c.b16 %v7432, %v7428
        %v8053 = vpack.c.b16 %v7433, %v7429
        %v8054 = vpack.c.b16 %v7434, %v7430
        %v8055 = vpack.c.b16 %v7439, %v7435
        %v8056 = vpack.c.b16 %v7440, %v7436
        %v8057 = vpack.c.b16 %v7441, %v7437
        %v8058 = vpack.c.b16 %v7442, %v7438
        %v8059 = vpack.c.b16 %v7447, %v7443
        %v8060 = vpack.c.b16 %v7448, %v7444
        %v8061 = vpack.c.b16 %v7449, %v7445
        %v8062 = vpack.c.b16 %v7450, %v7446
        %v8063 = vpack.c.b16 %v7455, %v7451
        %v8064 = vpack.c.b16 %v7456, %v7452
        %v8065 = vpack.c.b16 %v7457, %v7453
        %v8066 = vpack.c.b16 %v7458, %v7454
        %v8067 = vpack.c.b16 %v7463, %v7459
        %v8068 = vpack.c.b16 %v7464, %v7460
        %v8069 = vpack.c.b16 %v7465, %v7461
        %v8070 = vpack.c.b16 %v7466, %v7462
        %v8071 = vpack.c.b16 %v7471, %v7467
        %v8072 = vpack.c.b16 %v7472, %v7468
        %v8073 = vpack.c.b16 %v7473, %v7469
        %v8074 = vpack.c.b16 %v7474, %v7470
        %v8075 = vpack.c.b16 %v7479, %v7475
        %v8076 = vpack.c.b16 %v7480, %v7476
        %v8077 = vpack.c.b16 %v7481, %v7477
        %v8078 = vpack.c.b16 %v7482, %v7478
        %v8079 = vpack.c.b16 %v7487, %v7483
        %v8080 = vpack.c.b16 %v7488, %v7484
        %v8081 = vpack.c.b16 %v7489, %v7485
        %v8082 = vpack.c.b16 %v7490, %v7486
        %v8083 = vpack.c.b16 %v7495, %v7491
        %v8084 = vpack.c.b16 %v7496, %v7492
        %v8085 = vpack.c.b16 %v7497, %v7493
        %v8086 = vpack.c.b16 %v7498, %v7494
        %v8087 = vpack.c.b16 %v7503, %v7499
        %v8088 = vpack.c.b16 %v7504, %v7500
        %v8089 = vpack.c.b16 %v7505, %v7501
        %v8090 = vpack.c.b16 %v7506, %v7502
        %v8091 = vpack.c.b16 %v7511, %v7507
        %v8092 = vpack.c.b16 %v7512, %v7508
        %v8093 = vpack.c.b16 %v7513, %v7509
        %v8094 = vpack.c.b16 %v7514, %v7510
        %v8095 = vpack.c.b16 %v7519, %v7515
        %v8096 = vpack.c.b16 %v7520, %v7516
        %v8097 = vpack.c.b16 %v7521, %v7517
        %v8098 = vpack.c.b16 %v7522, %v7518
        %v8099 = vpack.c.b16 %v7527, %v7523
        %v8100 = vpack.c.b16 %v7528, %v7524
        %v8101 = vpack.c.b16 %v7529, %v7525
        %v8102 = vpack.c.b16 %v7530, %v7526
        %v8103 = vpack.c.b16 %v7535, %v7531
        %v8104 = vpack.c.b16 %v7536, %v7532
        %v8105 = vpack.c.b16 %v7537, %v7533
        %v8106 = vpack.c.b16 %v7538, %v7534
        %v8107 = vpack.c.b16 %v7543, %v7539
        %v8108 = vpack.c.b16 %v7544, %v7540
        %v8109 = vpack.c.b16 %v7545, %v7541
        %v8110 = vpack.c.b16 %v7546, %v7542
        %v8111 = vpack.c.b16 %v7551, %v7547
        %v8112 = vpack.c.b16 %v7552, %v7548
        %v8113 = vpack.c.b16 %v7553, %v7549
        %v8114 = vpack.c.b16 %v7554, %v7550
        %v8115 = vpack.c.b16 %v7559, %v7555
        %v8116 = vpack.c.b16 %v7560, %v7556
        %v8117 = vpack.c.b16 %v7561, %v7557
        %v8118 = vpack.c.b16 %v7562, %v7558
        %v8119 = vpack.c.b16 %v7567, %v7563
        %v8120 = vpack.c.b16 %v7568, %v7564
        %v8121 = vpack.c.b16 %v7569, %v7565
        %v8122 = vpack.c.b16 %v7570, %v7566
        %v8123 = vpack.c.b16 %v7575, %v7571
        %v8124 = vpack.c.b16 %v7576, %v7572
        %v8125 = vpack.c.b16 %v7577, %v7573
        %v8126 = vpack.c.b16 %v7578, %v7574
        %v8127 = vpack.c.b16 %v7583, %v7579
        %v8128 = vpack.c.b16 %v7584, %v7580
        %v8129 = vpack.c.b16 %v7585, %v7581
        %v8130 = vpack.c.b16 %v7586, %v7582
        %v8131 = vpack.c.b16 %v7591, %v7587
        %v8132 = vpack.c.b16 %v7592, %v7588
        %v8133 = vpack.c.b16 %v7593, %v7589
        %v8134 = vpack.c.b16 %v7594, %v7590
        %v8135 = vpack.c.b16 %v7599, %v7595
        %v8136 = vpack.c.b16 %v7600, %v7596
        %v8137 = vpack.c.b16 %v7601, %v7597
        %v8138 = vpack.c.b16 %v7602, %v7598
        %v8139 = vpack.c.b16 %v7607, %v7603
        %v8140 = vpack.c.b16 %v7608, %v7604
        %v8141 = vpack.c.b16 %v7609, %v7605
        %v8142 = vpack.c.b16 %v7610, %v7606
        %v8143 = vpack.c.b16 %v7615, %v7611
        %v8144 = vpack.c.b16 %v7616, %v7612
        %v8145 = vpack.c.b16 %v7617, %v7613
        %v8146 = vpack.c.b16 %v7618, %v7614
        %v8147 = vpack.c.b16 %v7623, %v7619
        %v8148 = vpack.c.b16 %v7624, %v7620
        %v8149 = vpack.c.b16 %v7625, %v7621
        %v8150 = vpack.c.b16 %v7626, %v7622
        %v8151 = vpack.c.b16 %v7631, %v7627
        %v8152 = vpack.c.b16 %v7632, %v7628
        %v8153 = vpack.c.b16 %v7633, %v7629
        %v8154 = vpack.c.b16 %v7634, %v7630
        %v8155 = vpack.c.b16 %v7639, %v7635
        %v8156 = vpack.c.b16 %v7640, %v7636
        %v8157 = vpack.c.b16 %v7641, %v7637
        %v8158 = vpack.c.b16 %v7642, %v7638
        %v8159 = vpack.c.b16 %v7647, %v7643
        %v8160 = vpack.c.b16 %v7648, %v7644
        %v8161 = vpack.c.b16 %v7649, %v7645
        %v8162 = vpack.c.b16 %v7650, %v7646
        %v8163 = vpack.c.b16 %v7655, %v7651
        %v8164 = vpack.c.b16 %v7656, %v7652
        %v8165 = vpack.c.b16 %v7657, %v7653
        %v8166 = vpack.c.b16 %v7658, %v7654
        %v8167 = vpack.c.b16 %v7663, %v7659
        %v8168 = vpack.c.b16 %v7664, %v7660
        %v8169 = vpack.c.b16 %v7665, %v7661
        %v8170 = vpack.c.b16 %v7666, %v7662
        %v8171 = vpack.c.b16 %v7671, %v7667
        %v8172 = vpack.c.b16 %v7672, %v7668
        %v8173 = vpack.c.b16 %v7673, %v7669
        %v8174 = vpack.c.b16 %v7674, %v7670
        %v8175 = vpack.c.b16 %v7679, %v7675
        %v8176 = vpack.c.b16 %v7680, %v7676
        %v8177 = vpack.c.b16 %v7681, %v7677
        %v8178 = vpack.c.b16 %v7682, %v7678
        %v8179 = vpack.c.b16 %v7687, %v7683
        %v8180 = vpack.c.b16 %v7688, %v7684
        %v8181 = vpack.c.b16 %v7689, %v7685
        %v8182 = vpack.c.b16 %v7690, %v7686
        %v8183 = vpack.c.b16 %v7695, %v7691
        %v8184 = vpack.c.b16 %v7696, %v7692
        %v8185 = vpack.c.b16 %v7697, %v7693
        %v8186 = vpack.c.b16 %v7698, %v7694
        %v8187 = vpack.c.b16 %v7703, %v7699
        %v8188 = vpack.c.b16 %v7704, %v7700
        %v8189 = vpack.c.b16 %v7705, %v7701
        %v8190 = vpack.c.b16 %v7706, %v7702
        %v8191 = vpack.c.b16 %v7711, %v7707
        %v8192 = vpack.c.b16 %v7712, %v7708
        %v8193 = vpack.c.b16 %v7713, %v7709
        %v8194 = vpack.c.b16 %v7714, %v7710
        %v8195 = vpack.c.b16 %v7719, %v7715
        %v8196 = vpack.c.b16 %v7720, %v7716
        %v8197 = vpack.c.b16 %v7721, %v7717
        %v8198 = vpack.c.b16 %v7722, %v7718
        %v8199 = vpack.c.b16 %v7727, %v7723
        %v8200 = vpack.c.b16 %v7728, %v7724
        %v8201 = vpack.c.b16 %v7729, %v7725
        %v8202 = vpack.c.b16 %v7730, %v7726
        %v8203 = vpack.c.b16 %v7735, %v7731
        %v8204 = vpack.c.b16 %v7736, %v7732
        %v8205 = vpack.c.b16 %v7737, %v7733
        %v8206 = vpack.c.b16 %v7738, %v7734
        %v8207 = vpack.c.b16 %v7743, %v7739
        %v8208 = vpack.c.b16 %v7744, %v7740
        %v8209 = vpack.c.b16 %v7745, %v7741
        %v8210 = vpack.c.b16 %v7746, %v7742
        %v8211 = vpack.c.b16 %v7751, %v7747
        %v8212 = vpack.c.b16 %v7752, %v7748
        %v8213 = vpack.c.b16 %v7753, %v7749
        %v8214 = vpack.c.b16 %v7754, %v7750
        %v8215 = vpack.c.b16 %v7759, %v7755
        %v8216 = vpack.c.b16 %v7760, %v7756
        %v8217 = vpack.c.b16 %v7761, %v7757
        %v8218 = vpack.c.b16 %v7762, %v7758
        %v8219 = vpack.c.b16 %v7767, %v7763
        %v8220 = vpack.c.b16 %v7768, %v7764
        %v8221 = vpack.c.b16 %v7769, %v7765
        %v8222 = vpack.c.b16 %v7770, %v7766
        %v8223 = vpack.c.b16 %v7775, %v7771
        %v8224 = vpack.c.b16 %v7776, %v7772
        %v8225 = vpack.c.b16 %v7777, %v7773
        %v8226 = vpack.c.b16 %v7778, %v7774
        %8675 = vmatprep.subr.bf16.mxu0 %v7808
        %8676 = vmatpush1.bf16.msra.mxu0 %v7807
        %8677 = vmatprep.subr.bf16.mxu0 %v7804
        %8678 = vmatpush1.bf16.msra.mxu0 %v7803
        %8679 = vmatprep.subr.bf16.mxu0 %v7800
        %8680 = vmatpush1.bf16.msra.mxu0 %v7799
        %8681 = vmatprep.subr.bf16.mxu0 %v7796
        %8682 = vmatpush1.bf16.msra.mxu0 %v7795
        %8683 = vmatprep.subr.bf16.mxu0 %v7792
        %8684 = vmatpush1.bf16.msra.mxu0 %v7791
        %8685 = vmatprep.subr.bf16.mxu0 %v7788
        %8686 = vmatpush1.bf16.msra.mxu0 %v7787
        %8687 = vmatprep.subr.bf16.mxu0 %v7784
        %8688 = vmatpush1.bf16.msra.mxu0 %v7783
        %8689 = vmatprep.subr.bf16.mxu0 %v7780
        %8690 = vmatpush1.bf16.msra.mxu0 %v7779
        %8691 = vmatprep.subr.bf16.mxu0 %v7840
        %8692 = vmatpush2.bf16.msra.mxu0 %v7839
        %8693 = vmatprep.subr.bf16.mxu0 %v7836
        %8694 = vmatpush2.bf16.msra.mxu0 %v7835
        %8695 = vmatprep.subr.bf16.mxu0 %v7832
        %8696 = vmatpush2.bf16.msra.mxu0 %v7831
        %8697 = vmatprep.subr.bf16.mxu0 %v7828
        %8698 = vmatpush2.bf16.msra.mxu0 %v7827
        %8699 = vmatprep.subr.bf16.mxu0 %v7824
        %8700 = vmatpush2.bf16.msra.mxu0 %v7823
        %8701 = vmatprep.subr.bf16.mxu0 %v7820
        %8702 = vmatpush2.bf16.msra.mxu0 %v7819
        %8703 = vmatprep.subr.bf16.mxu0 %v7816
        %8704 = vmatpush2.bf16.msra.mxu0 %v7815
        %8705 = vmatprep.subr.bf16.mxu0 %v7812
        %8706 = vmatpush2.bf16.msra.mxu0 %v7811
        %8707 = vmatprep.mubr.bf16.mxu0 %v6324
        %8708 = vmatmul.mubr.bf16.gmra.mxu0 %v6316
        %v8709 = vpop.f32.mrf.mxu0
        %v8710 = vadd.f32 %v6292, %v8709
        %v8711 = vpop.f32.mrf.mxu0
        %v8712 = vadd.f32 %v6296, %v8711
        %v8713 = vpop.f32.mrf.mxu0
        %v8714 = vpop.f32.mrf.mxu0
        %8715 = vdwg.mxu0
        %8716 = vmatprep.subr.bf16.mxu0 %v7872
        %8717 = vmatpush1.bf16.msra.mxu0 %v7871
        %8718 = vmatprep.subr.bf16.mxu0 %v7868
        %8719 = vmatpush1.bf16.msra.mxu0 %v7867
        %8720 = vmatprep.subr.bf16.mxu0 %v7864
        %8721 = vmatpush1.bf16.msra.mxu0 %v7863
        %8722 = vmatprep.subr.bf16.mxu0 %v7860
        %8723 = vmatpush1.bf16.msra.mxu0 %v7859
        %8724 = vmatprep.subr.bf16.mxu0 %v7856
        %8725 = vmatpush1.bf16.msra.mxu0 %v7855
        %8726 = vmatprep.subr.bf16.mxu0 %v7852
        %8727 = vmatpush1.bf16.msra.mxu0 %v7851
        %8728 = vmatprep.subr.bf16.mxu0 %v7848
        %8729 = vmatpush1.bf16.msra.mxu0 %v7847
        %8730 = vmatprep.subr.bf16.mxu0 %v7844
        %8731 = vmatpush1.bf16.msra.mxu0 %v7843
        %8732 = vmatprep.subr.bf16.mxu0 %v7904
        %8733 = vmatpush2.bf16.msra.mxu0 %v7903
        %8734 = vmatprep.subr.bf16.mxu0 %v7900
        %8735 = vmatpush2.bf16.msra.mxu0 %v7899
        %8736 = vmatprep.subr.bf16.mxu0 %v7896
        %8737 = vmatpush2.bf16.msra.mxu0 %v7895
        %8738 = vmatprep.subr.bf16.mxu0 %v7892
        %8739 = vmatpush2.bf16.msra.mxu0 %v7891
        %8740 = vmatprep.subr.bf16.mxu0 %v7888
        %8741 = vmatpush2.bf16.msra.mxu0 %v7887
        %8742 = vmatprep.subr.bf16.mxu0 %v7884
        %8743 = vmatpush2.bf16.msra.mxu0 %v7883
        %8744 = vmatprep.subr.bf16.mxu0 %v7880
        %8745 = vmatpush2.bf16.msra.mxu0 %v7879
        %8746 = vmatprep.subr.bf16.mxu0 %v7876
        %8747 = vmatpush2.bf16.msra.mxu0 %v7875
        %8748 = vmatprep.mubr.bf16.mxu0 %v6340
        %8749 = vmatmul.mubr.bf16.gmra.mxu0 %v6332
        %v8750 = vpop.f32.mrf.mxu0
        %v8751 = vadd.f32 %v8710, %v8750
        %v8752 = vpop.f32.mrf.mxu0
        %v8753 = vadd.f32 %v8712, %v8752
        %v8754 = vpop.f32.mrf.mxu0
        %v8755 = vpop.f32.mrf.mxu0
        %8756 = vdwg.mxu0
        %8757 = vmatprep.subr.bf16.mxu0 %v7936
        %8758 = vmatpush1.bf16.msra.mxu0 %v7935
        %8759 = vmatprep.subr.bf16.mxu0 %v7932
        %8760 = vmatpush1.bf16.msra.mxu0 %v7931
        %8761 = vmatprep.subr.bf16.mxu0 %v7928
        %8762 = vmatpush1.bf16.msra.mxu0 %v7927
        %8763 = vmatprep.subr.bf16.mxu0 %v7924
        %8764 = vmatpush1.bf16.msra.mxu0 %v7923
        %8765 = vmatprep.subr.bf16.mxu0 %v7920
        %8766 = vmatpush1.bf16.msra.mxu0 %v7919
        %8767 = vmatprep.subr.bf16.mxu0 %v7916
        %8768 = vmatpush1.bf16.msra.mxu0 %v7915
        %8769 = vmatprep.subr.bf16.mxu0 %v7912
        %8770 = vmatpush1.bf16.msra.mxu0 %v7911
        %8771 = vmatprep.subr.bf16.mxu0 %v7908
        %8772 = vmatpush1.bf16.msra.mxu0 %v7907
        %8773 = vmatprep.subr.bf16.mxu0 %v7968
        %8774 = vmatpush2.bf16.msra.mxu0 %v7967
        %8775 = vmatprep.subr.bf16.mxu0 %v7964
        %8776 = vmatpush2.bf16.msra.mxu0 %v7963
        %8777 = vmatprep.subr.bf16.mxu0 %v7960
        %8778 = vmatpush2.bf16.msra.mxu0 %v7959
        %8779 = vmatprep.subr.bf16.mxu0 %v7956
        %8780 = vmatpush2.bf16.msra.mxu0 %v7955
        %8781 = vmatprep.subr.bf16.mxu0 %v7952
        %8782 = vmatpush2.bf16.msra.mxu0 %v7951
        %8783 = vmatprep.subr.bf16.mxu0 %v7948
        %8784 = vmatpush2.bf16.msra.mxu0 %v7947
        %8785 = vmatprep.subr.bf16.mxu0 %v7944
        %8786 = vmatpush2.bf16.msra.mxu0 %v7943
        %8787 = vmatprep.subr.bf16.mxu0 %v7940
        %8788 = vmatpush2.bf16.msra.mxu0 %v7939
        %8789 = vmatprep.mubr.bf16.mxu0 %v6356
        %8790 = vmatmul.mubr.bf16.gmra.mxu0 %v6348
        %v8791 = vpop.f32.mrf.mxu0
        %v8792 = vadd.f32 %v8751, %v8791
        %v8793 = vpop.f32.mrf.mxu0
        %v8794 = vadd.f32 %v8753, %v8793
        %v8795 = vpop.f32.mrf.mxu0
        %v8796 = vpop.f32.mrf.mxu0
        %8797 = vdwg.mxu0
        %8798 = vmatprep.subr.bf16.mxu0 %v8000
        %8799 = vmatpush1.bf16.msra.mxu0 %v7999
        %8800 = vmatprep.subr.bf16.mxu0 %v7996
        %8801 = vmatpush1.bf16.msra.mxu0 %v7995
        %8802 = vmatprep.subr.bf16.mxu0 %v7992
        %8803 = vmatpush1.bf16.msra.mxu0 %v7991
        %8804 = vmatprep.subr.bf16.mxu0 %v7988
        %8805 = vmatpush1.bf16.msra.mxu0 %v7987
        %8806 = vmatprep.subr.bf16.mxu0 %v7984
        %8807 = vmatpush1.bf16.msra.mxu0 %v7983
        %8808 = vmatprep.subr.bf16.mxu0 %v7980
        %8809 = vmatpush1.bf16.msra.mxu0 %v7979
        %8810 = vmatprep.subr.bf16.mxu0 %v7976
        %8811 = vmatpush1.bf16.msra.mxu0 %v7975
        %8812 = vmatprep.subr.bf16.mxu0 %v7972
        %8813 = vmatpush1.bf16.msra.mxu0 %v7971
        %8814 = vmatprep.subr.bf16.mxu0 %v8032
        %8815 = vmatpush2.bf16.msra.mxu0 %v8031
        %8816 = vmatprep.subr.bf16.mxu0 %v8028
        %8817 = vmatpush2.bf16.msra.mxu0 %v8027
        %8818 = vmatprep.subr.bf16.mxu0 %v8024
        %8819 = vmatpush2.bf16.msra.mxu0 %v8023
        %8820 = vmatprep.subr.bf16.mxu0 %v8020
        %8821 = vmatpush2.bf16.msra.mxu0 %v8019
        %8822 = vmatprep.subr.bf16.mxu0 %v8016
        %8823 = vmatpush2.bf16.msra.mxu0 %v8015
        %8824 = vmatprep.subr.bf16.mxu0 %v8012
        %8825 = vmatpush2.bf16.msra.mxu0 %v8011
        %8826 = vmatprep.subr.bf16.mxu0 %v8008
        %8827 = vmatpush2.bf16.msra.mxu0 %v8007
        %8828 = vmatprep.subr.bf16.mxu0 %v8004
        %8829 = vmatpush2.bf16.msra.mxu0 %v8003
        %8830 = vmatprep.mubr.bf16.mxu0 %v6372
        %8831 = vmatmul.mubr.bf16.gmra.mxu0 %v6364
        %v8832 = vpop.f32.mrf.mxu0
        %v8833 = vadd.f32 %v8792, %v8832
        %v8834 = vpop.f32.mrf.mxu0
        %v8835 = vadd.f32 %v8794, %v8834
        %v8836 = vpop.f32.mrf.mxu0
        %v8837 = vpop.f32.mrf.mxu0
        %8838 = vdwg.mxu0
        %8839 = vmatprep.subr.bf16.mxu0 %v8064
        %8840 = vmatpush1.bf16.msra.mxu0 %v8063
        %8841 = vmatprep.subr.bf16.mxu0 %v8060
        %8842 = vmatpush1.bf16.msra.mxu0 %v8059
        %8843 = vmatprep.subr.bf16.mxu0 %v8056
        %8844 = vmatpush1.bf16.msra.mxu0 %v8055
        %8845 = vmatprep.subr.bf16.mxu0 %v8052
        %8846 = vmatpush1.bf16.msra.mxu0 %v8051
        %8847 = vmatprep.subr.bf16.mxu0 %v8048
        %8848 = vmatpush1.bf16.msra.mxu0 %v8047
        %8849 = vmatprep.subr.bf16.mxu0 %v8044
        %8850 = vmatpush1.bf16.msra.mxu0 %v8043
        %8851 = vmatprep.subr.bf16.mxu0 %v8040
        %8852 = vmatpush1.bf16.msra.mxu0 %v8039
        %8853 = vmatprep.subr.bf16.mxu0 %v8036
        %8854 = vmatpush1.bf16.msra.mxu0 %v8035
        %8855 = vmatprep.subr.bf16.mxu0 %v8096
        %8856 = vmatpush2.bf16.msra.mxu0 %v8095
        %8857 = vmatprep.subr.bf16.mxu0 %v8092
        %8858 = vmatpush2.bf16.msra.mxu0 %v8091
        %8859 = vmatprep.subr.bf16.mxu0 %v8088
        %8860 = vmatpush2.bf16.msra.mxu0 %v8087
        %8861 = vmatprep.subr.bf16.mxu0 %v8084
        %8862 = vmatpush2.bf16.msra.mxu0 %v8083
        %8863 = vmatprep.subr.bf16.mxu0 %v8080
        %8864 = vmatpush2.bf16.msra.mxu0 %v8079
        %8865 = vmatprep.subr.bf16.mxu0 %v8076
        %8866 = vmatpush2.bf16.msra.mxu0 %v8075
        %8867 = vmatprep.subr.bf16.mxu0 %v8072
        %8868 = vmatpush2.bf16.msra.mxu0 %v8071
        %8869 = vmatprep.subr.bf16.mxu0 %v8068
        %8870 = vmatpush2.bf16.msra.mxu0 %v8067
        %8871 = vmatprep.mubr.bf16.mxu0 %v6388
        %8872 = vmatmul.mubr.bf16.gmra.mxu0 %v6380
        %v8873 = vpop.f32.mrf.mxu0
        %v8874 = vadd.f32 %v8833, %v8873
        %v8875 = vpop.f32.mrf.mxu0
        %v8876 = vadd.f32 %v8835, %v8875
        %v8877 = vpop.f32.mrf.mxu0
        %v8878 = vpop.f32.mrf.mxu0
        %8879 = vdwg.mxu0
        %8880 = vmatprep.subr.bf16.mxu0 %v8128
        %8881 = vmatpush1.bf16.msra.mxu0 %v8127
        %8882 = vmatprep.subr.bf16.mxu0 %v8124
        %8883 = vmatpush1.bf16.msra.mxu0 %v8123
        %8884 = vmatprep.subr.bf16.mxu0 %v8120
        %8885 = vmatpush1.bf16.msra.mxu0 %v8119
        %8886 = vmatprep.subr.bf16.mxu0 %v8116
        %8887 = vmatpush1.bf16.msra.mxu0 %v8115
        %8888 = vmatprep.subr.bf16.mxu0 %v8112
        %8889 = vmatpush1.bf16.msra.mxu0 %v8111
        %8890 = vmatprep.subr.bf16.mxu0 %v8108
        %8891 = vmatpush1.bf16.msra.mxu0 %v8107
        %8892 = vmatprep.subr.bf16.mxu0 %v8104
        %8893 = vmatpush1.bf16.msra.mxu0 %v8103
        %8894 = vmatprep.subr.bf16.mxu0 %v8100
        %8895 = vmatpush1.bf16.msra.mxu0 %v8099
        %8896 = vmatprep.subr.bf16.mxu0 %v8160
        %8897 = vmatpush2.bf16.msra.mxu0 %v8159
        %8898 = vmatprep.subr.bf16.mxu0 %v8156
        %8899 = vmatpush2.bf16.msra.mxu0 %v8155
        %8900 = vmatprep.subr.bf16.mxu0 %v8152
        %8901 = vmatpush2.bf16.msra.mxu0 %v8151
        %8902 = vmatprep.subr.bf16.mxu0 %v8148
        %8903 = vmatpush2.bf16.msra.mxu0 %v8147
        %8904 = vmatprep.subr.bf16.mxu0 %v8144
        %8905 = vmatpush2.bf16.msra.mxu0 %v8143
        %8906 = vmatprep.subr.bf16.mxu0 %v8140
        %8907 = vmatpush2.bf16.msra.mxu0 %v8139
        %8908 = vmatprep.subr.bf16.mxu0 %v8136
        %8909 = vmatpush2.bf16.msra.mxu0 %v8135
        %8910 = vmatprep.subr.bf16.mxu0 %v8132
        %8911 = vmatpush2.bf16.msra.mxu0 %v8131
        %8912 = vmatprep.mubr.bf16.mxu0 %v6404
        %8913 = vmatmul.mubr.bf16.gmra.mxu0 %v6396
        %v8914 = vpop.f32.mrf.mxu0
        %v8915 = vadd.f32 %v8874, %v8914
        %v8916 = vpop.f32.mrf.mxu0
        %v8917 = vadd.f32 %v8876, %v8916
        %v8918 = vpop.f32.mrf.mxu0
        %v8919 = vpop.f32.mrf.mxu0
        %8920 = vdwg.mxu0
        %8921 = vmatprep.subr.bf16.mxu0 %v8192
        %8922 = vmatpush1.bf16.msra.mxu0 %v8191
        %8923 = vmatprep.subr.bf16.mxu0 %v8188
        %8924 = vmatpush1.bf16.msra.mxu0 %v8187
        %8925 = vmatprep.subr.bf16.mxu0 %v8184
        %8926 = vmatpush1.bf16.msra.mxu0 %v8183
        %8927 = vmatprep.subr.bf16.mxu0 %v8180
        %8928 = vmatpush1.bf16.msra.mxu0 %v8179
        %8929 = vmatprep.subr.bf16.mxu0 %v8176
        %8930 = vmatpush1.bf16.msra.mxu0 %v8175
        %8931 = vmatprep.subr.bf16.mxu0 %v8172
        %8932 = vmatpush1.bf16.msra.mxu0 %v8171
        %8933 = vmatprep.subr.bf16.mxu0 %v8168
        %8934 = vmatpush1.bf16.msra.mxu0 %v8167
        %8935 = vmatprep.subr.bf16.mxu0 %v8164
        %8936 = vmatpush1.bf16.msra.mxu0 %v8163
        %8937 = vmatprep.subr.bf16.mxu0 %v8224
        %8938 = vmatpush2.bf16.msra.mxu0 %v8223
        %8939 = vmatprep.subr.bf16.mxu0 %v8220
        %8940 = vmatpush2.bf16.msra.mxu0 %v8219
        %8941 = vmatprep.subr.bf16.mxu0 %v8216
        %8942 = vmatpush2.bf16.msra.mxu0 %v8215
        %8943 = vmatprep.subr.bf16.mxu0 %v8212
        %8944 = vmatpush2.bf16.msra.mxu0 %v8211
        %8945 = vmatprep.subr.bf16.mxu0 %v8208
        %8946 = vmatpush2.bf16.msra.mxu0 %v8207
        %8947 = vmatprep.subr.bf16.mxu0 %v8204
        %8948 = vmatpush2.bf16.msra.mxu0 %v8203
        %8949 = vmatprep.subr.bf16.mxu0 %v8200
        %8950 = vmatpush2.bf16.msra.mxu0 %v8199
        %8951 = vmatprep.subr.bf16.mxu0 %v8196
        %8952 = vmatpush2.bf16.msra.mxu0 %v8195
        %8953 = vmatprep.mubr.bf16.mxu0 %v6420
        %8954 = vmatmul.mubr.bf16.gmra.mxu0 %v6412
        %v8955 = vpop.f32.mrf.mxu0
        %v8956 = vadd.f32 %v8915, %v8955
        %v8957 = vpop.f32.mrf.mxu0
        %v8958 = vadd.f32 %v8917, %v8957
        %v8959 = vpop.f32.mrf.mxu0
        %v8960 = vpop.f32.mrf.mxu0
        %8961 = vdwg.mxu0
        %8962 = vmatprep.subr.bf16.mxu0 %v7810
        %8963 = vmatpush1.bf16.msra.mxu0 %v7809
        %8964 = vmatprep.subr.bf16.mxu0 %v7806
        %8965 = vmatpush1.bf16.msra.mxu0 %v7805
        %8966 = vmatprep.subr.bf16.mxu0 %v7802
        %8967 = vmatpush1.bf16.msra.mxu0 %v7801
        %8968 = vmatprep.subr.bf16.mxu0 %v7798
        %8969 = vmatpush1.bf16.msra.mxu0 %v7797
        %8970 = vmatprep.subr.bf16.mxu0 %v7794
        %8971 = vmatpush1.bf16.msra.mxu0 %v7793
        %8972 = vmatprep.subr.bf16.mxu0 %v7790
        %8973 = vmatpush1.bf16.msra.mxu0 %v7789
        %8974 = vmatprep.subr.bf16.mxu0 %v7786
        %8975 = vmatpush1.bf16.msra.mxu0 %v7785
        %8976 = vmatprep.subr.bf16.mxu0 %v7782
        %8977 = vmatpush1.bf16.msra.mxu0 %v7781
        %8978 = vmatprep.subr.bf16.mxu0 %v7842
        %8979 = vmatpush2.bf16.msra.mxu0 %v7841
        %8980 = vmatprep.subr.bf16.mxu0 %v7838
        %8981 = vmatpush2.bf16.msra.mxu0 %v7837
        %8982 = vmatprep.subr.bf16.mxu0 %v7834
        %8983 = vmatpush2.bf16.msra.mxu0 %v7833
        %8984 = vmatprep.subr.bf16.mxu0 %v7830
        %8985 = vmatpush2.bf16.msra.mxu0 %v7829
        %8986 = vmatprep.subr.bf16.mxu0 %v7826
        %8987 = vmatpush2.bf16.msra.mxu0 %v7825
        %8988 = vmatprep.subr.bf16.mxu0 %v7822
        %8989 = vmatpush2.bf16.msra.mxu0 %v7821
        %8990 = vmatprep.subr.bf16.mxu0 %v7818
        %8991 = vmatpush2.bf16.msra.mxu0 %v7817
        %8992 = vmatprep.subr.bf16.mxu0 %v7814
        %8993 = vmatpush2.bf16.msra.mxu0 %v7813
        %8994 = vmatprep.mubr.bf16.mxu0 %v6324
        %8995 = vmatmul.mubr.bf16.gmra.mxu0 %v6316
        %v8996 = vpop.f32.mrf.mxu0
        %v8997 = vadd.f32 %v6300, %v8996
        %v8998 = vpop.f32.mrf.mxu0
        %v8999 = vadd.f32 %v6304, %v8998
        %v9000 = vpop.f32.mrf.mxu0
        %v9001 = vpop.f32.mrf.mxu0
        %9002 = vdwg.mxu0
        %9003 = vmatprep.subr.bf16.mxu0 %v7874
        %9004 = vmatpush1.bf16.msra.mxu0 %v7873
        %9005 = vmatprep.subr.bf16.mxu0 %v7870
        %9006 = vmatpush1.bf16.msra.mxu0 %v7869
        %9007 = vmatprep.subr.bf16.mxu0 %v7866
        %9008 = vmatpush1.bf16.msra.mxu0 %v7865
        %9009 = vmatprep.subr.bf16.mxu0 %v7862
        %9010 = vmatpush1.bf16.msra.mxu0 %v7861
        %9011 = vmatprep.subr.bf16.mxu0 %v7858
        %9012 = vmatpush1.bf16.msra.mxu0 %v7857
        %9013 = vmatprep.subr.bf16.mxu0 %v7854
        %9014 = vmatpush1.bf16.msra.mxu0 %v7853
        %9015 = vmatprep.subr.bf16.mxu0 %v7850
        %9016 = vmatpush1.bf16.msra.mxu0 %v7849
        %9017 = vmatprep.subr.bf16.mxu0 %v7846
        %9018 = vmatpush1.bf16.msra.mxu0 %v7845
        %9019 = vmatprep.subr.bf16.mxu0 %v7906
        %9020 = vmatpush2.bf16.msra.mxu0 %v7905
        %9021 = vmatprep.subr.bf16.mxu0 %v7902
        %9022 = vmatpush2.bf16.msra.mxu0 %v7901
        %9023 = vmatprep.subr.bf16.mxu0 %v7898
        %9024 = vmatpush2.bf16.msra.mxu0 %v7897
        %9025 = vmatprep.subr.bf16.mxu0 %v7894
        %9026 = vmatpush2.bf16.msra.mxu0 %v7893
        %9027 = vmatprep.subr.bf16.mxu0 %v7890
        %9028 = vmatpush2.bf16.msra.mxu0 %v7889
        %9029 = vmatprep.subr.bf16.mxu0 %v7886
        %9030 = vmatpush2.bf16.msra.mxu0 %v7885
        %9031 = vmatprep.subr.bf16.mxu0 %v7882
        %9032 = vmatpush2.bf16.msra.mxu0 %v7881
        %9033 = vmatprep.subr.bf16.mxu0 %v7878
        %9034 = vmatpush2.bf16.msra.mxu0 %v7877
        %9035 = vmatprep.mubr.bf16.mxu0 %v6340
        %9036 = vmatmul.mubr.bf16.gmra.mxu0 %v6332
        %v9037 = vpop.f32.mrf.mxu0
        %v9038 = vadd.f32 %v8997, %v9037
        %v9039 = vpop.f32.mrf.mxu0
        %v9040 = vadd.f32 %v8999, %v9039
        %v9041 = vpop.f32.mrf.mxu0
        %v9042 = vpop.f32.mrf.mxu0
        %9043 = vdwg.mxu0
        %9044 = vmatprep.subr.bf16.mxu0 %v7938
        %9045 = vmatpush1.bf16.msra.mxu0 %v7937
        %9046 = vmatprep.subr.bf16.mxu0 %v7934
        %9047 = vmatpush1.bf16.msra.mxu0 %v7933
        %9048 = vmatprep.subr.bf16.mxu0 %v7930
        %9049 = vmatpush1.bf16.msra.mxu0 %v7929
        %9050 = vmatprep.subr.bf16.mxu0 %v7926
        %9051 = vmatpush1.bf16.msra.mxu0 %v7925
        %9052 = vmatprep.subr.bf16.mxu0 %v7922
        %9053 = vmatpush1.bf16.msra.mxu0 %v7921
        %9054 = vmatprep.subr.bf16.mxu0 %v7918
        %9055 = vmatpush1.bf16.msra.mxu0 %v7917
        %9056 = vmatprep.subr.bf16.mxu0 %v7914
        %9057 = vmatpush1.bf16.msra.mxu0 %v7913
        %9058 = vmatprep.subr.bf16.mxu0 %v7910
        %9059 = vmatpush1.bf16.msra.mxu0 %v7909
        %9060 = vmatprep.subr.bf16.mxu0 %v7970
        %9061 = vmatpush2.bf16.msra.mxu0 %v7969
        %9062 = vmatprep.subr.bf16.mxu0 %v7966
        %9063 = vmatpush2.bf16.msra.mxu0 %v7965
        %9064 = vmatprep.subr.bf16.mxu0 %v7962
        %9065 = vmatpush2.bf16.msra.mxu0 %v7961
        %9066 = vmatprep.subr.bf16.mxu0 %v7958
        %9067 = vmatpush2.bf16.msra.mxu0 %v7957
        %9068 = vmatprep.subr.bf16.mxu0 %v7954
        %9069 = vmatpush2.bf16.msra.mxu0 %v7953
        %9070 = vmatprep.subr.bf16.mxu0 %v7950
        %9071 = vmatpush2.bf16.msra.mxu0 %v7949
        %9072 = vmatprep.subr.bf16.mxu0 %v7946
        %9073 = vmatpush2.bf16.msra.mxu0 %v7945
        %9074 = vmatprep.subr.bf16.mxu0 %v7942
        %9075 = vmatpush2.bf16.msra.mxu0 %v7941
        %9076 = vmatprep.mubr.bf16.mxu0 %v6356
        %9077 = vmatmul.mubr.bf16.gmra.mxu0 %v6348
        %v9078 = vpop.f32.mrf.mxu0
        %v9079 = vadd.f32 %v9038, %v9078
        %v9080 = vpop.f32.mrf.mxu0
        %v9081 = vadd.f32 %v9040, %v9080
        %v9082 = vpop.f32.mrf.mxu0
        %v9083 = vpop.f32.mrf.mxu0
        %9084 = vdwg.mxu0
        %9085 = vmatprep.subr.bf16.mxu0 %v8002
        %9086 = vmatpush1.bf16.msra.mxu0 %v8001
        %9087 = vmatprep.subr.bf16.mxu0 %v7998
        %9088 = vmatpush1.bf16.msra.mxu0 %v7997
        %9089 = vmatprep.subr.bf16.mxu0 %v7994
        %9090 = vmatpush1.bf16.msra.mxu0 %v7993
        %9091 = vmatprep.subr.bf16.mxu0 %v7990
        %9092 = vmatpush1.bf16.msra.mxu0 %v7989
        %9093 = vmatprep.subr.bf16.mxu0 %v7986
        %9094 = vmatpush1.bf16.msra.mxu0 %v7985
        %9095 = vmatprep.subr.bf16.mxu0 %v7982
        %9096 = vmatpush1.bf16.msra.mxu0 %v7981
        %9097 = vmatprep.subr.bf16.mxu0 %v7978
        %9098 = vmatpush1.bf16.msra.mxu0 %v7977
        %9099 = vmatprep.subr.bf16.mxu0 %v7974
        %9100 = vmatpush1.bf16.msra.mxu0 %v7973
        %9101 = vmatprep.subr.bf16.mxu0 %v8034
        %9102 = vmatpush2.bf16.msra.mxu0 %v8033
        %9103 = vmatprep.subr.bf16.mxu0 %v8030
        %9104 = vmatpush2.bf16.msra.mxu0 %v8029
        %9105 = vmatprep.subr.bf16.mxu0 %v8026
        %9106 = vmatpush2.bf16.msra.mxu0 %v8025
        %9107 = vmatprep.subr.bf16.mxu0 %v8022
        %9108 = vmatpush2.bf16.msra.mxu0 %v8021
        %9109 = vmatprep.subr.bf16.mxu0 %v8018
        %9110 = vmatpush2.bf16.msra.mxu0 %v8017
        %9111 = vmatprep.subr.bf16.mxu0 %v8014
        %9112 = vmatpush2.bf16.msra.mxu0 %v8013
        %9113 = vmatprep.subr.bf16.mxu0 %v8010
        %9114 = vmatpush2.bf16.msra.mxu0 %v8009
        %9115 = vmatprep.subr.bf16.mxu0 %v8006
        %9116 = vmatpush2.bf16.msra.mxu0 %v8005
        %9117 = vmatprep.mubr.bf16.mxu0 %v6372
        %9118 = vmatmul.mubr.bf16.gmra.mxu0 %v6364
        %v9119 = vpop.f32.mrf.mxu0
        %v9120 = vadd.f32 %v9079, %v9119
        %v9121 = vpop.f32.mrf.mxu0
        %v9122 = vadd.f32 %v9081, %v9121
        %v9123 = vpop.f32.mrf.mxu0
        %v9124 = vpop.f32.mrf.mxu0
        %9125 = vdwg.mxu0
        %9126 = vmatprep.subr.bf16.mxu0 %v8066
        %9127 = vmatpush1.bf16.msra.mxu0 %v8065
        %9128 = vmatprep.subr.bf16.mxu0 %v8062
        %9129 = vmatpush1.bf16.msra.mxu0 %v8061
        %9130 = vmatprep.subr.bf16.mxu0 %v8058
        %9131 = vmatpush1.bf16.msra.mxu0 %v8057
        %9132 = vmatprep.subr.bf16.mxu0 %v8054
        %9133 = vmatpush1.bf16.msra.mxu0 %v8053
        %9134 = vmatprep.subr.bf16.mxu0 %v8050
        %9135 = vmatpush1.bf16.msra.mxu0 %v8049
        %9136 = vmatprep.subr.bf16.mxu0 %v8046
        %9137 = vmatpush1.bf16.msra.mxu0 %v8045
        %9138 = vmatprep.subr.bf16.mxu0 %v8042
        %9139 = vmatpush1.bf16.msra.mxu0 %v8041
        %9140 = vmatprep.subr.bf16.mxu0 %v8038
        %9141 = vmatpush1.bf16.msra.mxu0 %v8037
        %9142 = vmatprep.subr.bf16.mxu0 %v8098
        %9143 = vmatpush2.bf16.msra.mxu0 %v8097
        %9144 = vmatprep.subr.bf16.mxu0 %v8094
        %9145 = vmatpush2.bf16.msra.mxu0 %v8093
        %9146 = vmatprep.subr.bf16.mxu0 %v8090
        %9147 = vmatpush2.bf16.msra.mxu0 %v8089
        %9148 = vmatprep.subr.bf16.mxu0 %v8086
        %9149 = vmatpush2.bf16.msra.mxu0 %v8085
        %9150 = vmatprep.subr.bf16.mxu0 %v8082
        %9151 = vmatpush2.bf16.msra.mxu0 %v8081
        %9152 = vmatprep.subr.bf16.mxu0 %v8078
        %9153 = vmatpush2.bf16.msra.mxu0 %v8077
        %9154 = vmatprep.subr.bf16.mxu0 %v8074
        %9155 = vmatpush2.bf16.msra.mxu0 %v8073
        %9156 = vmatprep.subr.bf16.mxu0 %v8070
        %9157 = vmatpush2.bf16.msra.mxu0 %v8069
        %9158 = vmatprep.mubr.bf16.mxu0 %v6388
        %9159 = vmatmul.mubr.bf16.gmra.mxu0 %v6380
        %v9160 = vpop.f32.mrf.mxu0
        %v9161 = vadd.f32 %v9120, %v9160
        %v9162 = vpop.f32.mrf.mxu0
        %v9163 = vadd.f32 %v9122, %v9162
        %v9164 = vpop.f32.mrf.mxu0
        %v9165 = vpop.f32.mrf.mxu0
        %9166 = vdwg.mxu0
        %9167 = vmatprep.subr.bf16.mxu0 %v8130
        %9168 = vmatpush1.bf16.msra.mxu0 %v8129
        %9169 = vmatprep.subr.bf16.mxu0 %v8126
        %9170 = vmatpush1.bf16.msra.mxu0 %v8125
        %9171 = vmatprep.subr.bf16.mxu0 %v8122
        %9172 = vmatpush1.bf16.msra.mxu0 %v8121
        %9173 = vmatprep.subr.bf16.mxu0 %v8118
        %9174 = vmatpush1.bf16.msra.mxu0 %v8117
        %9175 = vmatprep.subr.bf16.mxu0 %v8114
        %9176 = vmatpush1.bf16.msra.mxu0 %v8113
        %9177 = vmatprep.subr.bf16.mxu0 %v8110
        %9178 = vmatpush1.bf16.msra.mxu0 %v8109
        %9179 = vmatprep.subr.bf16.mxu0 %v8106
        %9180 = vmatpush1.bf16.msra.mxu0 %v8105
        %9181 = vmatprep.subr.bf16.mxu0 %v8102
        %9182 = vmatpush1.bf16.msra.mxu0 %v8101
        %9183 = vmatprep.subr.bf16.mxu0 %v8162
        %9184 = vmatpush2.bf16.msra.mxu0 %v8161
        %9185 = vmatprep.subr.bf16.mxu0 %v8158
        %9186 = vmatpush2.bf16.msra.mxu0 %v8157
        %9187 = vmatprep.subr.bf16.mxu0 %v8154
        %9188 = vmatpush2.bf16.msra.mxu0 %v8153
        %9189 = vmatprep.subr.bf16.mxu0 %v8150
        %9190 = vmatpush2.bf16.msra.mxu0 %v8149
        %9191 = vmatprep.subr.bf16.mxu0 %v8146
        %9192 = vmatpush2.bf16.msra.mxu0 %v8145
        %9193 = vmatprep.subr.bf16.mxu0 %v8142
        %9194 = vmatpush2.bf16.msra.mxu0 %v8141
        %9195 = vmatprep.subr.bf16.mxu0 %v8138
        %9196 = vmatpush2.bf16.msra.mxu0 %v8137
        %9197 = vmatprep.subr.bf16.mxu0 %v8134
        %9198 = vmatpush2.bf16.msra.mxu0 %v8133
        %9199 = vmatprep.mubr.bf16.mxu0 %v6404
        %9200 = vmatmul.mubr.bf16.gmra.mxu0 %v6396
        %v9201 = vpop.f32.mrf.mxu0
        %v9202 = vadd.f32 %v9161, %v9201
        %v9203 = vpop.f32.mrf.mxu0
        %v9204 = vadd.f32 %v9163, %v9203
        %v9205 = vpop.f32.mrf.mxu0
        %v9206 = vpop.f32.mrf.mxu0
        %9207 = vdwg.mxu0
        %9208 = vmatprep.subr.bf16.mxu0 %v8194
        %9209 = vmatpush1.bf16.msra.mxu0 %v8193
        %9210 = vmatprep.subr.bf16.mxu0 %v8190
        %9211 = vmatpush1.bf16.msra.mxu0 %v8189
        %9212 = vmatprep.subr.bf16.mxu0 %v8186
        %9213 = vmatpush1.bf16.msra.mxu0 %v8185
        %9214 = vmatprep.subr.bf16.mxu0 %v8182
        %9215 = vmatpush1.bf16.msra.mxu0 %v8181
        %9216 = vmatprep.subr.bf16.mxu0 %v8178
        %9217 = vmatpush1.bf16.msra.mxu0 %v8177
        %9218 = vmatprep.subr.bf16.mxu0 %v8174
        %9219 = vmatpush1.bf16.msra.mxu0 %v8173
        %9220 = vmatprep.subr.bf16.mxu0 %v8170
        %9221 = vmatpush1.bf16.msra.mxu0 %v8169
        %9222 = vmatprep.subr.bf16.mxu0 %v8166
        %9223 = vmatpush1.bf16.msra.mxu0 %v8165
        %9224 = vmatprep.subr.bf16.mxu0 %v8226
        %9225 = vmatpush2.bf16.msra.mxu0 %v8225
        %9226 = vmatprep.subr.bf16.mxu0 %v8222
        %9227 = vmatpush2.bf16.msra.mxu0 %v8221
        %9228 = vmatprep.subr.bf16.mxu0 %v8218
        %9229 = vmatpush2.bf16.msra.mxu0 %v8217
        %9230 = vmatprep.subr.bf16.mxu0 %v8214
        %9231 = vmatpush2.bf16.msra.mxu0 %v8213
        %9232 = vmatprep.subr.bf16.mxu0 %v8210
        %9233 = vmatpush2.bf16.msra.mxu0 %v8209
        %9234 = vmatprep.subr.bf16.mxu0 %v8206
        %9235 = vmatpush2.bf16.msra.mxu0 %v8205
        %9236 = vmatprep.subr.bf16.mxu0 %v8202
        %9237 = vmatpush2.bf16.msra.mxu0 %v8201
        %9238 = vmatprep.subr.bf16.mxu0 %v8198
        %9239 = vmatpush2.bf16.msra.mxu0 %v8197
        %9240 = vmatprep.mubr.bf16.mxu0 %v6420
        %9241 = vmatmul.mubr.bf16.gmra.mxu0 %v6412
        %v9242 = vpop.f32.mrf.mxu0
        %v9243 = vadd.f32 %v9202, %v9242
        %v9244 = vpop.f32.mrf.mxu0
        %v9245 = vadd.f32 %v9204, %v9244
        %v9246 = vpop.f32.mrf.mxu0
        %v9247 = vpop.f32.mrf.mxu0
        %9248 = vdwg.mxu0
        %v9249 = vmax.f32 %v8956, 0.0
        %v9250 = vmax.f32 %v8958, 0.0
        %v9251 = vmax.f32 %v9243, 0.0
        %v9252 = vmax.f32 %v9245, 0.0
        %v9253 = vpack.c.bf16 %v9249, %v9249
        %v9254 = vpack.c.bf16 %v9250, %v9250
        %v9255 = vpack.c.bf16 %v9251, %v9251
        %v9256 = vpack.c.bf16 %v9252, %v9252
        %v9257 = vld [vmem:[#allocation31] sm:$0xf]
        %v9258 = vld [vmem:[#allocation31 + $0x4] sm:$0xf]
        %v9259 = vld [vmem:[#allocation31 + $0x8] sm:$0xf]
        %v9260 = vld [vmem:[#allocation31 + $0xc] sm:$0xf]
        %v9261 = vld [vmem:[#allocation31 + $0x10] sm:$0xf]
        %v9262 = vld [vmem:[#allocation31 + $0x14] sm:$0xf]
        %v9263 = vld [vmem:[#allocation31 + $0x18] sm:$0xf]
        %v9264 = vld [vmem:[#allocation31 + $0x1c] sm:$0xf]
        %v9265 = vld [vmem:[#allocation31 + $0x20] sm:$0xf]
        %v9266 = vld [vmem:[#allocation31 + $0x24] sm:$0xf]
        %v9267 = vld [vmem:[#allocation31 + $0x28] sm:$0xf]
        %v9268 = vld [vmem:[#allocation31 + $0x2c] sm:$0xf]
        %v9269 = vld [vmem:[#allocation31 + $0x30] sm:$0xf]
        %v9270 = vld [vmem:[#allocation31 + $0x34] sm:$0xf]
        %v9271 = vld [vmem:[#allocation31 + $0x38] sm:$0xf]
        %v9272 = vld [vmem:[#allocation31 + $0x3c] sm:$0xf]
        %v9273 = vld [vmem:[#allocation31 + $0x40] sm:$0xf]
        %v9274 = vld [vmem:[#allocation31 + $0x44] sm:$0xf]
        %v9275 = vld [vmem:[#allocation31 + $0x48] sm:$0xf]
        %v9276 = vld [vmem:[#allocation31 + $0x4c] sm:$0xf]
        %v9277 = vld [vmem:[#allocation31 + $0x50] sm:$0xf]
        %v9278 = vld [vmem:[#allocation31 + $0x54] sm:$0xf]
        %v9279 = vld [vmem:[#allocation31 + $0x58] sm:$0xf]
        %v9280 = vld [vmem:[#allocation31 + $0x5c] sm:$0xf]
        %v9281 = vld [vmem:[#allocation31 + $0x60] sm:$0xf]
        %v9282 = vld [vmem:[#allocation31 + $0x64] sm:$0xf]
        %v9283 = vld [vmem:[#allocation31 + $0x68] sm:$0xf]
        %v9284 = vld [vmem:[#allocation31 + $0x6c] sm:$0xf]
        %v9285 = vld [vmem:[#allocation31 + $0x70] sm:$0xf]
        %v9286 = vld [vmem:[#allocation31 + $0x74] sm:$0xf]
        %v9287 = vld [vmem:[#allocation31 + $0x78] sm:$0xf]
        %v9288 = vld [vmem:[#allocation31 + $0x7c] sm:$0xf]
        %v9289 = vld [vmem:[#allocation31 + $0x80] sm:$0xf]
        %v9290 = vld [vmem:[#allocation31 + $0x84] sm:$0xf]
        %v9291 = vld [vmem:[#allocation31 + $0x88] sm:$0xf]
        %v9292 = vld [vmem:[#allocation31 + $0x8c] sm:$0xf]
        %v9293 = vld [vmem:[#allocation31 + $0x90] sm:$0xf]
        %v9294 = vld [vmem:[#allocation31 + $0x94] sm:$0xf]
        %v9295 = vld [vmem:[#allocation31 + $0x98] sm:$0xf]
        %v9296 = vld [vmem:[#allocation31 + $0x9c] sm:$0xf]
        %v9297 = vld [vmem:[#allocation31 + $0xa0] sm:$0xf]
        %v9298 = vld [vmem:[#allocation31 + $0xa4] sm:$0xf]
        %v9299 = vld [vmem:[#allocation31 + $0xa8] sm:$0xf]
        %v9300 = vld [vmem:[#allocation31 + $0xac] sm:$0xf]
        %v9301 = vld [vmem:[#allocation31 + $0xb0] sm:$0xf]
        %v9302 = vld [vmem:[#allocation31 + $0xb4] sm:$0xf]
        %v9303 = vld [vmem:[#allocation31 + $0xb8] sm:$0xf]
        %v9304 = vld [vmem:[#allocation31 + $0xbc] sm:$0xf]
        %v9305 = vld [vmem:[#allocation31 + $0xc0] sm:$0xf]
        %v9306 = vld [vmem:[#allocation31 + $0xc4] sm:$0xf]
        %v9307 = vld [vmem:[#allocation31 + $0xc8] sm:$0xf]
        %v9308 = vld [vmem:[#allocation31 + $0xcc] sm:$0xf]
        %v9309 = vld [vmem:[#allocation31 + $0xd0] sm:$0xf]
        %v9310 = vld [vmem:[#allocation31 + $0xd4] sm:$0xf]
        %v9311 = vld [vmem:[#allocation31 + $0xd8] sm:$0xf]
        %v9312 = vld [vmem:[#allocation31 + $0xdc] sm:$0xf]
        %v9313 = vld [vmem:[#allocation31 + $0xe0] sm:$0xf]
        %v9314 = vld [vmem:[#allocation31 + $0xe4] sm:$0xf]
        %v9315 = vld [vmem:[#allocation31 + $0xe8] sm:$0xf]
        %v9316 = vld [vmem:[#allocation31 + $0xec] sm:$0xf]
        %v9317 = vld [vmem:[#allocation31 + $0xf0] sm:$0xf]
        %v9318 = vld [vmem:[#allocation31 + $0xf4] sm:$0xf]
        %v9319 = vld [vmem:[#allocation31 + $0xf8] sm:$0xf]
        %v9320 = vld [vmem:[#allocation31 + $0xfc] sm:$0xf]
        %v9321 = vld [vmem:[#allocation33] sm:$0x1]
        %v9323 = vlaneseq
        %v9324 = vshrl.u32 %v9323, 7
        %v9325 = vsub.s32 0, %v9324
        %v9326 = vrot.slane %v9321, %v9325
        %v9392 = vunpack.c.l.b16 %v9257
        %v9393 = vunpack.c.l.b16 %v9258
        %v9394 = vunpack.c.l.b16 %v9259
        %v9395 = vunpack.c.l.b16 %v9260
        %v9396 = vunpack.c.l.b16 %v9261
        %v9397 = vunpack.c.l.b16 %v9262
        %v9398 = vunpack.c.l.b16 %v9263
        %v9399 = vunpack.c.l.b16 %v9264
        %v9400 = vunpack.c.l.b16 %v9265
        %v9401 = vunpack.c.l.b16 %v9266
        %v9402 = vunpack.c.l.b16 %v9267
        %v9403 = vunpack.c.l.b16 %v9268
        %v9404 = vunpack.c.l.b16 %v9269
        %v9405 = vunpack.c.l.b16 %v9270
        %v9406 = vunpack.c.l.b16 %v9271
        %v9407 = vunpack.c.l.b16 %v9272
        %v9408 = vunpack.c.l.b16 %v9273
        %v9409 = vunpack.c.l.b16 %v9274
        %v9410 = vunpack.c.l.b16 %v9275
        %v9411 = vunpack.c.l.b16 %v9276
        %v9412 = vunpack.c.l.b16 %v9277
        %v9413 = vunpack.c.l.b16 %v9278
        %v9414 = vunpack.c.l.b16 %v9279
        %v9415 = vunpack.c.l.b16 %v9280
        %v9416 = vunpack.c.l.b16 %v9281
        %v9417 = vunpack.c.l.b16 %v9282
        %v9418 = vunpack.c.l.b16 %v9283
        %v9419 = vunpack.c.l.b16 %v9284
        %v9420 = vunpack.c.l.b16 %v9285
        %v9421 = vunpack.c.l.b16 %v9286
        %v9422 = vunpack.c.l.b16 %v9287
        %v9423 = vunpack.c.l.b16 %v9288
        %v9424 = vunpack.c.l.b16 %v9289
        %v9425 = vunpack.c.l.b16 %v9290
        %v9426 = vunpack.c.l.b16 %v9291
        %v9427 = vunpack.c.l.b16 %v9292
        %v9428 = vunpack.c.l.b16 %v9293
        %v9429 = vunpack.c.l.b16 %v9294
        %v9430 = vunpack.c.l.b16 %v9295
        %v9431 = vunpack.c.l.b16 %v9296
        %v9432 = vunpack.c.l.b16 %v9297
        %v9433 = vunpack.c.l.b16 %v9298
        %v9434 = vunpack.c.l.b16 %v9299
        %v9435 = vunpack.c.l.b16 %v9300
        %v9436 = vunpack.c.l.b16 %v9301
        %v9437 = vunpack.c.l.b16 %v9302
        %v9438 = vunpack.c.l.b16 %v9303
        %v9439 = vunpack.c.l.b16 %v9304
        %v9440 = vunpack.c.l.b16 %v9305
        %v9441 = vunpack.c.l.b16 %v9306
        %v9442 = vunpack.c.l.b16 %v9307
        %v9443 = vunpack.c.l.b16 %v9308
        %v9444 = vunpack.c.l.b16 %v9309
        %v9445 = vunpack.c.l.b16 %v9310
        %v9446 = vunpack.c.l.b16 %v9311
        %v9447 = vunpack.c.l.b16 %v9312
        %v9448 = vunpack.c.l.b16 %v9313
        %v9449 = vunpack.c.l.b16 %v9314
        %v9450 = vunpack.c.l.b16 %v9315
        %v9451 = vunpack.c.l.b16 %v9316
        %v9452 = vunpack.c.l.b16 %v9317
        %v9453 = vunpack.c.l.b16 %v9318
        %v9454 = vunpack.c.l.b16 %v9319
        %v9455 = vunpack.c.l.b16 %v9320
        %v9456 = vpack.c.b16 %v9393, %v9392
        %v9457 = vpack.c.b16 %v9395, %v9394
        %v9458 = vpack.c.b16 %v9397, %v9396
        %v9459 = vpack.c.b16 %v9399, %v9398
        %v9460 = vpack.c.b16 %v9401, %v9400
        %v9461 = vpack.c.b16 %v9403, %v9402
        %v9462 = vpack.c.b16 %v9405, %v9404
        %v9463 = vpack.c.b16 %v9407, %v9406
        %v9464 = vpack.c.b16 %v9409, %v9408
        %v9465 = vpack.c.b16 %v9411, %v9410
        %v9466 = vpack.c.b16 %v9413, %v9412
        %v9467 = vpack.c.b16 %v9415, %v9414
        %v9468 = vpack.c.b16 %v9417, %v9416
        %v9469 = vpack.c.b16 %v9419, %v9418
        %v9470 = vpack.c.b16 %v9421, %v9420
        %v9471 = vpack.c.b16 %v9423, %v9422
        %v9472 = vpack.c.b16 %v9425, %v9424
        %v9473 = vpack.c.b16 %v9427, %v9426
        %v9474 = vpack.c.b16 %v9429, %v9428
        %v9475 = vpack.c.b16 %v9431, %v9430
        %v9476 = vpack.c.b16 %v9433, %v9432
        %v9477 = vpack.c.b16 %v9435, %v9434
        %v9478 = vpack.c.b16 %v9437, %v9436
        %v9479 = vpack.c.b16 %v9439, %v9438
        %v9480 = vpack.c.b16 %v9441, %v9440
        %v9481 = vpack.c.b16 %v9443, %v9442
        %v9482 = vpack.c.b16 %v9445, %v9444
        %v9483 = vpack.c.b16 %v9447, %v9446
        %v9484 = vpack.c.b16 %v9449, %v9448
        %v9485 = vpack.c.b16 %v9451, %v9450
        %v9486 = vpack.c.b16 %v9453, %v9452
        %v9487 = vpack.c.b16 %v9455, %v9454
        %9520 = vmatprep.subr.bf16.mxu0 0
        %9521 = vmatpush1.bf16.msra.mxu0 %v9463
        %9522 = vmatprep.subr.bf16.mxu0 0
        %9523 = vmatpush1.bf16.msra.mxu0 %v9462
        %9524 = vmatprep.subr.bf16.mxu0 0
        %9525 = vmatpush1.bf16.msra.mxu0 %v9461
        %9526 = vmatprep.subr.bf16.mxu0 0
        %9527 = vmatpush1.bf16.msra.mxu0 %v9460
        %9528 = vmatprep.subr.bf16.mxu0 0
        %9529 = vmatpush1.bf16.msra.mxu0 %v9459
        %9530 = vmatprep.subr.bf16.mxu0 0
        %9531 = vmatpush1.bf16.msra.mxu0 %v9458
        %9532 = vmatprep.subr.bf16.mxu0 0
        %9533 = vmatpush1.bf16.msra.mxu0 %v9457
        %9534 = vmatprep.subr.bf16.mxu0 0
        %9535 = vmatpush1.bf16.msra.mxu0 %v9456
        %9536 = vmatprep.subr.bf16.mxu0 0
        %9537 = vmatpush2.bf16.msra.mxu0 %v9471
        %9538 = vmatprep.subr.bf16.mxu0 0
        %9539 = vmatpush2.bf16.msra.mxu0 %v9470
        %9540 = vmatprep.subr.bf16.mxu0 0
        %9541 = vmatpush2.bf16.msra.mxu0 %v9469
        %9542 = vmatprep.subr.bf16.mxu0 0
        %9543 = vmatpush2.bf16.msra.mxu0 %v9468
        %9544 = vmatprep.subr.bf16.mxu0 0
        %9545 = vmatpush2.bf16.msra.mxu0 %v9467
        %9546 = vmatprep.subr.bf16.mxu0 0
        %9547 = vmatpush2.bf16.msra.mxu0 %v9466
        %9548 = vmatprep.subr.bf16.mxu0 0
        %9549 = vmatpush2.bf16.msra.mxu0 %v9465
        %9550 = vmatprep.subr.bf16.mxu0 0
        %9551 = vmatpush2.bf16.msra.mxu0 %v9464
        %9552 = vmatprep.mubr.bf16.mxu0 %v9254
        %9553 = vmatmul.mubr.bf16.gmra.mxu0 %v9253
        %v9554 = vpop.f32.mrf.mxu0
        %v9555 = vadd.f32 %v9326, %v9554
        %v9556 = vpop.f32.mrf.mxu0
        %v9557 = vpop.f32.mrf.mxu0
        %v9558 = vpop.f32.mrf.mxu0
        %9559 = vdwg.mxu0
        %9560 = vmatprep.subr.bf16.mxu0 0
        %9561 = vmatpush1.bf16.msra.mxu0 %v9479
        %9562 = vmatprep.subr.bf16.mxu0 0
        %9563 = vmatpush1.bf16.msra.mxu0 %v9478
        %9564 = vmatprep.subr.bf16.mxu0 0
        %9565 = vmatpush1.bf16.msra.mxu0 %v9477
        %9566 = vmatprep.subr.bf16.mxu0 0
        %9567 = vmatpush1.bf16.msra.mxu0 %v9476
        %9568 = vmatprep.subr.bf16.mxu0 0
        %9569 = vmatpush1.bf16.msra.mxu0 %v9475
        %9570 = vmatprep.subr.bf16.mxu0 0
        %9571 = vmatpush1.bf16.msra.mxu0 %v9474
        %9572 = vmatprep.subr.bf16.mxu0 0
        %9573 = vmatpush1.bf16.msra.mxu0 %v9473
        %9574 = vmatprep.subr.bf16.mxu0 0
        %9575 = vmatpush1.bf16.msra.mxu0 %v9472
        %9576 = vmatprep.subr.bf16.mxu0 0
        %9577 = vmatpush2.bf16.msra.mxu0 %v9487
        %9578 = vmatprep.subr.bf16.mxu0 0
        %9579 = vmatpush2.bf16.msra.mxu0 %v9486
        %9580 = vmatprep.subr.bf16.mxu0 0
        %9581 = vmatpush2.bf16.msra.mxu0 %v9485
        %9582 = vmatprep.subr.bf16.mxu0 0
        %9583 = vmatpush2.bf16.msra.mxu0 %v9484
        %9584 = vmatprep.subr.bf16.mxu0 0
        %9585 = vmatpush2.bf16.msra.mxu0 %v9483
        %9586 = vmatprep.subr.bf16.mxu0 0
        %9587 = vmatpush2.bf16.msra.mxu0 %v9482
        %9588 = vmatprep.subr.bf16.mxu0 0
        %9589 = vmatpush2.bf16.msra.mxu0 %v9481
        %9590 = vmatprep.subr.bf16.mxu0 0
        %9591 = vmatpush2.bf16.msra.mxu0 %v9480
        %9592 = vmatprep.mubr.bf16.mxu0 %v9256
        %9593 = vmatmul.mubr.bf16.gmra.mxu0 %v9255
        %v9594 = vpop.f32.mrf.mxu0
        %v9595 = vadd.f32 %v9555, %v9594
        %v9596 = vpop.f32.mrf.mxu0
        %v9597 = vpop.f32.mrf.mxu0
        %v9598 = vpop.f32.mrf.mxu0
        %9599 = vdwg.mxu0
        %9600 = vst [vmem:[%s940] sm:$0xff] %v9595
        %s9601 = sand.u32 %s563, 1
        %s9602 = scalar_lea.sflag [#allocation12], %s9601
        %s9603 = sand.u32 %s563, 1
        %s9604 = smul.addr %s9603, 8
        %s9605 = scalar_lea.vmem [#allocation34], %s9604
        // Predicated region
        $region177: #{forward.1} parent=115 // pred_check
          %p9606 = pneg %p573
        $region178: #{forward.1} parent=115 // pred_check_branch
          %9608 = sbr.rel (%p9606) target = $region180
        $region179: #{forward.1} parent=115 // pred_region
          %s9610 = ssub.s32 128, 128
          %9611 = vsyncadd %s9602, %s9610
          %s9612 = smul.addr %s46, 128
          %s9613 = scalar_lea.hbm %s24, %s9612
          %s9615 = sshll.u32 %s9605, 4
          %s9616 = int_to_ptr.vmem [resolvable:$true] %s9615
          %9618 = dma.vmem_to_hbm [thread:$0]  %s9616, 128, %s9613, %s9602
        $region180: #{forward.1} parent=115 // pred_fallthru
          _
      $region116: #{forward.1} parent=5 // pred_fallthru
        _
      %p9619 = scmp.le.s32.totalorder 2, %s41
      // Predicated region
      $region181: #{forward.1} parent=5 // pred_check
        %p9620 = pneg %p9619
      $region182: #{forward.1} parent=5 // pred_check_branch
        %9622 = sbr.rel (%p9620) target = $region184
      $region183: #{forward.1} parent=5 // pred_region
        %s9623 = ssub.s32 %s41, 2
        // Predicated region
        $region185: #{forward.1} parent=183 // pred_check
          %p9624 = pneg %p579
        $region186: #{forward.1} parent=183 // pred_check_branch
          %9626 = sbr.rel (%p9624) target = $region188
        $region187: #{forward.1} parent=183 // pred_region
          %s9627 = sand.u32 %s564, 1
          %s9628 = scalar_lea.sflag [#allocation12], %s9627
          %s9629 = sand.u32 %s564, 1
          %s9630 = smul.addr %s9629, 8
          %s9631 = scalar_lea.vmem [#allocation34], %s9630
          %9632 = dma.done %s9628, 128
        $region188: #{forward.1} parent=183 // pred_fallthru
          _
      $region184: #{forward.1} parent=5 // pred_fallthru
        _
    $region6: #{forward.1} parent=1 // loop_footer
      %s45 = sadd.s32 1, %s41
    $region7: #{forward.1} parent=1 // loop_footer_branch
      %40 = sbr.rel target = $region3
    $region8: #{forward.1} parent=1 // loop_exit
      _
    %9633 = vsyncpa [#allocation11], 1
    %s9634 = scalar_lea.sflag [#allocation11], 1
    %9635 = vsyncpa %s9634, 1
    %9636 = vsyncpa [#allocation14], 1
    %9637 = vsyncpa [#allocation17], 1
    %9638 = vsyncpa [#allocation20], 1
    %9639 = vsyncpa [#allocation23], 1
    %9640 = vsyncpa [#allocation26], 1
    %9641 = vsyncpa [#allocation29], 1
    %9642 = vsyncpa [#allocation32], 1
    %9643 = vsyncpa [#allocation12], 1
    %s9644 = scalar_lea.sflag [#allocation12], 1
    %9645 = vsyncpa %s9644, 1

</llo_original>
